<compile_context>
chip_gen: v7x
topology: tpu7x:2x2x1
jax: 0.10.0
libtpu: 0.0.40
codegen_flags: <defaults>
</compile_context>

<pallas_src>
import jax
import jax.numpy as jnp
from jax.experimental import pallas as pl
from jax.experimental.pallas import tpu as pltpu

BN_EPS = 1e-5

# Optional: cast MXU operands to bf16 (full-rate MXU on v6e/v7x).  Left off by
# default so training-mode BN output matches the f32 reference to tight
# tolerance; flip on for compute-bound problem sizes (accumulation stays f32).
MATMUL_IN_BF16 = False


# ----------------------------------------------------------------------------
# In-kernel building blocks (operate on VMEM refs / values, traced once)
# ----------------------------------------------------------------------------
def _conv_bn_relu(pad_ref, w_ref, gamma_ref, beta_ref):
    """3x3 'same' conv (one im2col matmul) + training-mode BN + ReLU.

    pad_ref  : (N, H+2, W+2, Cin)  zero-padded activation (VMEM scratch ref)
    w_ref    : (9*Cin, Cout)       HWIO weight flattened as (kh, kw, ci) x co
    gamma_ref: (1, Cout)           BN scale
    beta_ref : (1, Cout)           BN shift
    returns  : (N, H, W, Cout)     value (stays in VMEM / vregs)
    """
    N, Hp, Wp, Cin = pad_ref.shape
    H, W = Hp - 2, Wp - 2
    Cout = w_ref.shape[-1]
    rows = N * H * W

    # im2col: gather the 9 taps once into a (rows, 9*Cin) patch matrix so the
    # MXU sees a single large-K matmul instead of 9 shallow ones.
    cols = []
    for dh in range(3):
        for dw in range(3):
            cols.append(pad_ref[:, dh:dh + H, dw:dw + W, :].reshape(rows, Cin))
    patches = jnp.concatenate(cols, axis=-1)                      # (rows, 9*Cin)

    w = w_ref[...]
    if MATMUL_IN_BF16:
        patches = patches.astype(jnp.bfloat16)
        w = w.astype(jnp.bfloat16)
    acc = jnp.dot(patches, w, preferred_element_type=jnp.float32)  # (rows, Cout)

    # Conv bias intentionally omitted: cancelled exactly by the BN mean.
    # BatchNorm2d (training): one-pass biased stats, folded scale/shift + ReLU.
    inv_n = 1.0 / rows
    mean = jnp.sum(acc, axis=0, keepdims=True) * inv_n             # (1, Cout)
    ex2 = jnp.sum(acc * acc, axis=0, keepdims=True) * inv_n        # (1, Cout)
    var = jnp.maximum(ex2 - mean * mean, 0.0)
    scale = gamma_ref[...] * jax.lax.rsqrt(var + BN_EPS)           # (1, Cout)
    shift = beta_ref[...] - mean * scale                           # (1, Cout)
    y = jnp.maximum(acc * scale + shift, 0.0)
    return y.reshape(N, H, W, Cout)


def _maxpool2(y):
    """MaxPool2d(2, 2) on an NHWC value using only static slices / concats."""
    N, H, W, C = y.shape
    H2, W2 = H // 2, W // 2
    # pool along H (leading axis): elementwise max of adjacent row pairs
    rows = [jnp.maximum(y[:, 2 * i:2 * i + 1], y[:, 2 * i + 1:2 * i + 2])
            for i in range(H2)]
    yh = jnp.concatenate(rows, axis=1)                             # (N, H2, W, C)
    # pool along W (sublane axis): reduce each 2-wide window
    cols = [jnp.max(yh[:, :, 2 * j:2 * j + 2, :], axis=2, keepdims=True)
            for j in range(W2)]
    return jnp.concatenate(cols, axis=2)                           # (N, H2, W2, C)


def _write_padded(pad_ref, y):
    """Zero a padded VMEM scratch ref and write `y` into its 1-px-halo interior."""
    N, H, W, _ = y.shape
    pad_ref[...] = jnp.zeros_like(pad_ref)
    pad_ref[:, 1:H + 1, 1:W + 1, :] = y


def _fused_ae_kernel(x_ref,
                     w1, g1, b1, w2, g2, b2, w3, g3, b3,
                     w4, g4, b4, w5, g5, b5, w6, g6, b6,
                     out_ref,
                     p1, p2, p3, p4, p5, p6):
    """Entire ImprovedSimpleAE forward, fully VMEM-resident."""
    # encoder
    _write_padded(p1, x_ref[...])
    y = _conv_bn_relu(p1, w1, g1, b1)                 # (N, 16, 16, 32)
    _write_padded(p2, _maxpool2(y))                   # /2
    y = _conv_bn_relu(p2, w2, g2, b2)                 # (N,  8,  8, 64)
    _write_padded(p3, _maxpool2(y))                   # /2
    y = _conv_bn_relu(p3, w3, g3, b3)                 # (N,  4,  4, 128)
    # decoder (ConvTranspose2d stride=1/pad=1/k=3 == same-size conv with
    # flipped kernel + swapped channel axes; weights converted in init)
    _write_padded(p4, y)
    y = _conv_bn_relu(p4, w4, g4, b4)                 # (N,  4,  4, 64)
    _write_padded(p5, y)
    y = _conv_bn_relu(p5, w5, g5, b5)                 # (N,  4,  4, 32)
    _write_padded(p6, y)
    out_ref[...] = _conv_bn_relu(p6, w6, g6, b6)      # (N,  4,  4, 3)


# ----------------------------------------------------------------------------
# Wrapper (single pallas_call; only layout conversion happens in XLA)
# ----------------------------------------------------------------------------
_VMEM_SPEC = pl.BlockSpec(memory_space=pltpu.MemorySpace.VMEM)


def improved_simple_ae_forward(x_nchw, layers):
    """Forward pass of ImprovedSimpleAE. Input/output are NCHW like PyTorch."""
    x = jnp.transpose(x_nchw, (0, 2, 3, 1)).astype(jnp.float32)    # NCHW -> NHWC
    N, H, W, Cin = x.shape

    flat_params = []
    channels = []
    for (w_hwio, _b, gamma, beta) in layers:   # conv bias dropped (cancelled by BN)
        kh, kw, ci, co = w_hwio.shape
        channels.append(co)
        flat_params += [w_hwio.reshape(kh * kw * ci, co),
                        gamma.reshape(1, co), beta.reshape(1, co)]
    c1, c2, c3, c4, c5, _c6 = channels
    H2, W2, H4, W4 = H // 2, W // 2, H // 4, W // 4

    scratch = [
        pltpu.VMEM((N, H + 2, W + 2, Cin), jnp.float32),    # padded input, layer 1
        pltpu.VMEM((N, H2 + 2, W2 + 2, c1), jnp.float32),   # padded pooled, layer 2
        pltpu.VMEM((N, H4 + 2, W4 + 2, c2), jnp.float32),   # padded pooled, layer 3
        pltpu.VMEM((N, H4 + 2, W4 + 2, c3), jnp.float32),   # padded, layer 4
        pltpu.VMEM((N, H4 + 2, W4 + 2, c4), jnp.float32),   # padded, layer 5
        pltpu.VMEM((N, H4 + 2, W4 + 2, c5), jnp.float32),   # padded, layer 6
    ]

    out_nhwc = pl.pallas_call(
        _fused_ae_kernel,
        out_shape=jax.ShapeDtypeStruct((N, H4, W4, channels[-1]), jnp.float32),
        in_specs=[_VMEM_SPEC] * (1 + len(flat_params)),
        out_specs=_VMEM_SPEC,
        scratch_shapes=scratch,
        compiler_params=pltpu.CompilerParams(
            # total VMEM footprint is ~2 MiB; 32 MiB is safe on v5e/v6e/v7x
            vmem_limit_bytes=32 * 1024 * 1024),
    )(x, *flat_params)
    return jnp.transpose(out_nhwc, (0, 3, 1, 2))                    # NHWC -> NCHW


# ----------------------------------------------------------------------------
# Deterministic parameter construction (shapes mirror the module's __init__)
# ----------------------------------------------------------------------------
def init_params(key):
    keys = iter(jax.random.split(key, 64))

    def nrm(shape, scale=0.1):
        return scale * jax.random.normal(next(keys), shape, dtype=jnp.float32)

    def conv_to_hwio(w_oihw):                  # nn.Conv2d weight (O, I, kH, kW)
        return jnp.transpose(w_oihw, (2, 3, 1, 0))

    def deconv_to_hwio(w_iohw):                # nn.ConvTranspose2d weight (I, O, kH, kW)
        # stride=1, pad=1, k=3: equivalent conv = spatially flipped kernel with
        # in/out channels swapped, same padding.
        return jnp.transpose(jnp.flip(w_iohw, (2, 3)), (2, 3, 0, 1))

    layers = []
    spec = [(3, 32, "conv"), (32, 64, "conv"), (64, 128, "conv"),
            (128, 64, "deconv"), (64, 32, "deconv"), (32, 3, "deconv")]
    for cin, cout, kind in spec:
        if kind == "conv":
            w_native = nrm((cout, cin, 3, 3))      # Conv2d weight shape
            w_hwio = conv_to_hwio(w_native)
        else:
            w_native = nrm((cin, cout, 3, 3))      # ConvTranspose2d weight shape
            w_hwio = deconv_to_hwio(w_native)
        b = nrm((cout,))                           # conv / deconv bias
        gamma = 1.0 + nrm((cout,))                 # BatchNorm2d.weight
        beta = nrm((cout,))                        # BatchNorm2d.bias
        layers.append((w_hwio, b, gamma, beta))
    return layers


# ----------------------------------------------------------------------------
# Pure-JAX reference (correctness check against the fused Pallas kernel)
# ----------------------------------------------------------------------------
def _ref_conv_bn_relu(x, w_hwio, b, gamma, beta):
    y = jax.lax.conv_general_dilated(
        x, w_hwio, window_strides=(1, 1), padding="SAME",
        dimension_numbers=("NHWC", "HWIO", "NHWC"))
    y = y + b                                  # bias kept here; BN cancels it
    mean = jnp.mean(y, axis=(0, 1, 2))
    var = jnp.mean((y - mean) ** 2, axis=(0, 1, 2))
    y = (y - mean) * gamma * jax.lax.rsqrt(var + BN_EPS) + beta
    return jnp.maximum(y, 0.0)


def _ref_pool(x):
    N, H, W, C = x.shape
    return jnp.max(x.reshape(N, H // 2, 2, W // 2, 2, C), axis=(2, 4))


def reference_forward(x_nchw, layers):
    x = jnp.transpose(x_nchw, (0, 2, 3, 1))
    x = _ref_conv_bn_relu(x, *layers[0]); x = _ref_pool(x)
    x = _ref_conv_bn_relu(x, *layers[1]); x = _ref_pool(x)
    for i in range(2, 6):
        x = _ref_conv_bn_relu(x, *layers[i])
    return jnp.transpose(x, (0, 3, 1, 2))


# ----------------------------------------------------------------------------
if __name__ == "__main__":
    key = jax.random.PRNGKey(0)
    kx, kp = jax.random.split(key)

    # Small NCHW input consistent with the module (3 input channels).
    x = jax.random.normal(kx, (2, 3, 16, 16), dtype=jnp.float32)
    layers = init_params(kp)

    out = jax.jit(improved_simple_ae_forward)(x, layers)
    out = jax.block_until_ready(out)

    assert out.shape == (2, 3, 4, 4), f"unexpected output shape {out.shape}"
    assert bool(jnp.all(jnp.isfinite(out)))

    ref = reference_forward(x, layers)
    max_err = float(jnp.max(jnp.abs(out - ref)))
    if not jnp.allclose(out, ref, rtol=1e-2, atol=1e-2):
        raise AssertionError(f"Pallas output mismatch vs reference (max abs err {max_err})")

    print("KERNEL_OK")
</pallas_src>

<mosaic_0001>
module attributes {stable_mosaic.version = 11 : i64} {
  func.func @_fused_ae_kernel(%arg0: memref<2x16x16x3xf32, #tpu.memory_space<vmem>>, %arg1: memref<27x32xf32, #tpu.memory_space<vmem>>, %arg2: memref<1x32xf32, #tpu.memory_space<vmem>>, %arg3: memref<1x32xf32, #tpu.memory_space<vmem>>, %arg4: memref<288x64xf32, #tpu.memory_space<vmem>>, %arg5: memref<1x64xf32, #tpu.memory_space<vmem>>, %arg6: memref<1x64xf32, #tpu.memory_space<vmem>>, %arg7: memref<576x128xf32, #tpu.memory_space<vmem>>, %arg8: memref<1x128xf32, #tpu.memory_space<vmem>>, %arg9: memref<1x128xf32, #tpu.memory_space<vmem>>, %arg10: memref<1152x64xf32, #tpu.memory_space<vmem>>, %arg11: memref<1x64xf32, #tpu.memory_space<vmem>>, %arg12: memref<1x64xf32, #tpu.memory_space<vmem>>, %arg13: memref<576x32xf32, #tpu.memory_space<vmem>>, %arg14: memref<1x32xf32, #tpu.memory_space<vmem>>, %arg15: memref<1x32xf32, #tpu.memory_space<vmem>>, %arg16: memref<288x3xf32, #tpu.memory_space<vmem>>, %arg17: memref<1x3xf32, #tpu.memory_space<vmem>>, %arg18: memref<1x3xf32, #tpu.memory_space<vmem>>, %arg19: memref<2x4x4x3xf32, #tpu.memory_space<vmem>>, %arg20: memref<2x18x18x3xf32, #tpu.memory_space<vmem>>, %arg21: memref<2x10x10x32xf32, #tpu.memory_space<vmem>>, %arg22: memref<2x6x6x64xf32, #tpu.memory_space<vmem>>, %arg23: memref<2x6x6x128xf32, #tpu.memory_space<vmem>>, %arg24: memref<2x6x6x64xf32, #tpu.memory_space<vmem>>, %arg25: memref<2x6x6x32xf32, #tpu.memory_space<vmem>>) attributes {dimension_semantics = [], scalar_prefetch = 0 : i64, scratch_operands = 6 : i64, tpu.core_type = #tpu.core_type<tc>} {
    %c0 = arith.constant 0 : index
    %c0_0 = arith.constant 0 : index
    %c0_1 = arith.constant 0 : index
    %c0_2 = arith.constant 0 : index
    %0 = vector.load %arg0[%c0, %c0_0, %c0_1, %c0_2] : memref<2x16x16x3xf32, #tpu.memory_space<vmem>>, vector<2x16x16x3xf32>
    %cst = arith.constant 0.000000e+00 : f32
    %1 = vector.broadcast %cst : f32 to vector<2x18x18x3xf32>
    %c0_3 = arith.constant 0 : index
    %c0_4 = arith.constant 0 : index
    %c0_5 = arith.constant 0 : index
    %c0_6 = arith.constant 0 : index
    %2 = vector.load %arg20[%c0_3, %c0_4, %c0_5, %c0_6] : memref<2x18x18x3xf32, #tpu.memory_space<vmem>>, vector<2x18x18x3xf32>
    tpu.vector_store %arg20[%c0_3, %c0_4, %c0_5, %c0_6], %1 {strides = array<i32>} : memref<2x18x18x3xf32, #tpu.memory_space<vmem>>, vector<2x18x18x3xf32>,
    %c0_7 = arith.constant 0 : index
    %c1 = arith.constant 1 : index
    %c1_8 = arith.constant 1 : index
    %c0_9 = arith.constant 0 : index
    %3 = vector.load %arg20[%c0_7, %c1, %c1_8, %c0_9] : memref<2x18x18x3xf32, #tpu.memory_space<vmem>>, vector<2x16x16x3xf32>
    tpu.vector_store %arg20[%c0_7, %c1, %c1_8, %c0_9], %0 {strides = array<i32>} : memref<2x18x18x3xf32, #tpu.memory_space<vmem>>, vector<2x16x16x3xf32>,
    %c0_10 = arith.constant 0 : index
    %c0_11 = arith.constant 0 : index
    %c0_12 = arith.constant 0 : index
    %c0_13 = arith.constant 0 : index
    %4 = vector.load %arg20[%c0_10, %c0_11, %c0_12, %c0_13] : memref<2x18x18x3xf32, #tpu.memory_space<vmem>>, vector<2x16x16x3xf32>
    %5 = vector.shape_cast %4 : vector<2x16x16x3xf32> to vector<512x3xf32>
    %c0_14 = arith.constant 0 : index
    %c0_15 = arith.constant 0 : index
    %c1_16 = arith.constant 1 : index
    %c0_17 = arith.constant 0 : index
    %6 = vector.load %arg20[%c0_14, %c0_15, %c1_16, %c0_17] : memref<2x18x18x3xf32, #tpu.memory_space<vmem>>, vector<2x16x16x3xf32>
    %7 = vector.shape_cast %6 : vector<2x16x16x3xf32> to vector<512x3xf32>
    %c0_18 = arith.constant 0 : index
    %c0_19 = arith.constant 0 : index
    %c2 = arith.constant 2 : index
    %c0_20 = arith.constant 0 : index
    %8 = vector.load %arg20[%c0_18, %c0_19, %c2, %c0_20] : memref<2x18x18x3xf32, #tpu.memory_space<vmem>>, vector<2x16x16x3xf32>
    %9 = vector.shape_cast %8 : vector<2x16x16x3xf32> to vector<512x3xf32>
    %c0_21 = arith.constant 0 : index
    %c1_22 = arith.constant 1 : index
    %c0_23 = arith.constant 0 : index
    %c0_24 = arith.constant 0 : index
    %10 = vector.load %arg20[%c0_21, %c1_22, %c0_23, %c0_24] : memref<2x18x18x3xf32, #tpu.memory_space<vmem>>, vector<2x16x16x3xf32>
    %11 = vector.shape_cast %10 : vector<2x16x16x3xf32> to vector<512x3xf32>
    %c0_25 = arith.constant 0 : index
    %c1_26 = arith.constant 1 : index
    %c1_27 = arith.constant 1 : index
    %c0_28 = arith.constant 0 : index
    %12 = vector.load %arg20[%c0_25, %c1_26, %c1_27, %c0_28] : memref<2x18x18x3xf32, #tpu.memory_space<vmem>>, vector<2x16x16x3xf32>
    %13 = vector.shape_cast %12 : vector<2x16x16x3xf32> to vector<512x3xf32>
    %c0_29 = arith.constant 0 : index
    %c1_30 = arith.constant 1 : index
    %c2_31 = arith.constant 2 : index
    %c0_32 = arith.constant 0 : index
    %14 = vector.load %arg20[%c0_29, %c1_30, %c2_31, %c0_32] : memref<2x18x18x3xf32, #tpu.memory_space<vmem>>, vector<2x16x16x3xf32>
    %15 = vector.shape_cast %14 : vector<2x16x16x3xf32> to vector<512x3xf32>
    %c0_33 = arith.constant 0 : index
    %c2_34 = arith.constant 2 : index
    %c0_35 = arith.constant 0 : index
    %c0_36 = arith.constant 0 : index
    %16 = vector.load %arg20[%c0_33, %c2_34, %c0_35, %c0_36] : memref<2x18x18x3xf32, #tpu.memory_space<vmem>>, vector<2x16x16x3xf32>
    %17 = vector.shape_cast %16 : vector<2x16x16x3xf32> to vector<512x3xf32>
    %c0_37 = arith.constant 0 : index
    %c2_38 = arith.constant 2 : index
    %c1_39 = arith.constant 1 : index
    %c0_40 = arith.constant 0 : index
    %18 = vector.load %arg20[%c0_37, %c2_38, %c1_39, %c0_40] : memref<2x18x18x3xf32, #tpu.memory_space<vmem>>, vector<2x16x16x3xf32>
    %19 = vector.shape_cast %18 : vector<2x16x16x3xf32> to vector<512x3xf32>
    %c0_41 = arith.constant 0 : index
    %c2_42 = arith.constant 2 : index
    %c2_43 = arith.constant 2 : index
    %c0_44 = arith.constant 0 : index
    %20 = vector.load %arg20[%c0_41, %c2_42, %c2_43, %c0_44] : memref<2x18x18x3xf32, #tpu.memory_space<vmem>>, vector<2x16x16x3xf32>
    %21 = vector.shape_cast %20 : vector<2x16x16x3xf32> to vector<512x3xf32>
    %22 = tpu.concatenate %5, %7, %9, %11, %13, %15, %17, %19, %21 in 1 : vector<512x3xf32>, vector<512x3xf32>, vector<512x3xf32>, vector<512x3xf32>, vector<512x3xf32>, vector<512x3xf32>, vector<512x3xf32>, vector<512x3xf32>, vector<512x3xf32> -> vector<512x27xf32>
    %c0_45 = arith.constant 0 : index
    %c0_46 = arith.constant 0 : index
    %23 = vector.load %arg1[%c0_45, %c0_46] : memref<27x32xf32, #tpu.memory_space<vmem>>, vector<27x32xf32>
    %cst_47 = arith.constant dense<0.000000e+00> : vector<512x32xf32>
    %24 = tpu.matmul %22, %23, %cst_47 {dimension_numbers = #tpu.dot_dimension_numbers<[1], [0], [0], [1], [0, 0, 1, 1], [], []>} : vector<512x27xf32>, vector<27x32xf32>, vector<512x32xf32> -> vector<512x32xf32>
    %cst_48 = arith.constant dense<0.000000e+00> : vector<32xf32>
    %25 = vector.multi_reduction <add>, %24, %cst_48 [0] : vector<512x32xf32> to vector<32xf32>
    %26 = vector.shape_cast %25 : vector<32xf32> to vector<1x32xf32>
    %cst_49 = arith.constant 0.001953125 : f32
    %27 = vector.broadcast %cst_49 : f32 to vector<1x32xf32>
    %28 = arith.mulf %26, %27 : vector<1x32xf32>
    %29 = arith.mulf %24, %24 : vector<512x32xf32>
    %cst_50 = arith.constant dense<0.000000e+00> : vector<32xf32>
    %30 = vector.multi_reduction <add>, %29, %cst_50 [0] : vector<512x32xf32> to vector<32xf32>
    %31 = vector.shape_cast %30 : vector<32xf32> to vector<1x32xf32>
    %cst_51 = arith.constant 0.001953125 : f32
    %32 = vector.broadcast %cst_51 : f32 to vector<1x32xf32>
    %33 = arith.mulf %31, %32 : vector<1x32xf32>
    %34 = arith.mulf %28, %28 : vector<1x32xf32>
    %35 = arith.subf %33, %34 : vector<1x32xf32>
    %cst_52 = arith.constant 0.000000e+00 : f32
    %36 = vector.broadcast %cst_52 : f32 to vector<1x32xf32>
    %37 = arith.maximumf %35, %36 : vector<1x32xf32>
    %c0_53 = arith.constant 0 : index
    %c0_54 = arith.constant 0 : index
    %38 = vector.load %arg2[%c0_53, %c0_54] : memref<1x32xf32, #tpu.memory_space<vmem>>, vector<1x32xf32>
    %cst_55 = arith.constant 9.99999974E-6 : f32
    %39 = vector.broadcast %cst_55 : f32 to vector<1x32xf32>
    %40 = arith.addf %37, %39 : vector<1x32xf32>
    %41 = math.rsqrt %40 : vector<1x32xf32>
    %42 = arith.mulf %38, %41 : vector<1x32xf32>
    %c0_56 = arith.constant 0 : index
    %c0_57 = arith.constant 0 : index
    %43 = vector.load %arg3[%c0_56, %c0_57] : memref<1x32xf32, #tpu.memory_space<vmem>>, vector<1x32xf32>
    %44 = arith.mulf %28, %42 : vector<1x32xf32>
    %45 = arith.subf %43, %44 : vector<1x32xf32>
    %46 = vector.broadcast %42 : vector<1x32xf32> to vector<512x32xf32>
    %47 = arith.mulf %24, %46 : vector<512x32xf32>
    %48 = vector.broadcast %45 : vector<1x32xf32> to vector<512x32xf32>
    %49 = arith.addf %47, %48 : vector<512x32xf32>
    %cst_58 = arith.constant 0.000000e+00 : f32
    %50 = vector.broadcast %cst_58 : f32 to vector<512x32xf32>
    %51 = arith.maximumf %49, %50 : vector<512x32xf32>
    %52 = vector.shape_cast %51 : vector<512x32xf32> to vector<2x16x16x32xf32>
    %53 = vector.extract_strided_slice %52 {offsets = [0, 0, 0, 0], sizes = [2, 1, 16, 32], strides = [1, 1, 1, 1]} : vector<2x16x16x32xf32> to vector<2x1x16x32xf32>
    %54 = vector.extract_strided_slice %52 {offsets = [0, 1, 0, 0], sizes = [2, 1, 16, 32], strides = [1, 1, 1, 1]} : vector<2x16x16x32xf32> to vector<2x1x16x32xf32>
    %55 = arith.maximumf %53, %54 : vector<2x1x16x32xf32>
    %56 = vector.extract_strided_slice %52 {offsets = [0, 2, 0, 0], sizes = [2, 1, 16, 32], strides = [1, 1, 1, 1]} : vector<2x16x16x32xf32> to vector<2x1x16x32xf32>
    %57 = vector.extract_strided_slice %52 {offsets = [0, 3, 0, 0], sizes = [2, 1, 16, 32], strides = [1, 1, 1, 1]} : vector<2x16x16x32xf32> to vector<2x1x16x32xf32>
    %58 = arith.maximumf %56, %57 : vector<2x1x16x32xf32>
    %59 = vector.extract_strided_slice %52 {offsets = [0, 4, 0, 0], sizes = [2, 1, 16, 32], strides = [1, 1, 1, 1]} : vector<2x16x16x32xf32> to vector<2x1x16x32xf32>
    %60 = vector.extract_strided_slice %52 {offsets = [0, 5, 0, 0], sizes = [2, 1, 16, 32], strides = [1, 1, 1, 1]} : vector<2x16x16x32xf32> to vector<2x1x16x32xf32>
    %61 = arith.maximumf %59, %60 : vector<2x1x16x32xf32>
    %62 = vector.extract_strided_slice %52 {offsets = [0, 6, 0, 0], sizes = [2, 1, 16, 32], strides = [1, 1, 1, 1]} : vector<2x16x16x32xf32> to vector<2x1x16x32xf32>
    %63 = vector.extract_strided_slice %52 {offsets = [0, 7, 0, 0], sizes = [2, 1, 16, 32], strides = [1, 1, 1, 1]} : vector<2x16x16x32xf32> to vector<2x1x16x32xf32>
    %64 = arith.maximumf %62, %63 : vector<2x1x16x32xf32>
    %65 = vector.extract_strided_slice %52 {offsets = [0, 8, 0, 0], sizes = [2, 1, 16, 32], strides = [1, 1, 1, 1]} : vector<2x16x16x32xf32> to vector<2x1x16x32xf32>
    %66 = vector.extract_strided_slice %52 {offsets = [0, 9, 0, 0], sizes = [2, 1, 16, 32], strides = [1, 1, 1, 1]} : vector<2x16x16x32xf32> to vector<2x1x16x32xf32>
    %67 = arith.maximumf %65, %66 : vector<2x1x16x32xf32>
    %68 = vector.extract_strided_slice %52 {offsets = [0, 10, 0, 0], sizes = [2, 1, 16, 32], strides = [1, 1, 1, 1]} : vector<2x16x16x32xf32> to vector<2x1x16x32xf32>
    %69 = vector.extract_strided_slice %52 {offsets = [0, 11, 0, 0], sizes = [2, 1, 16, 32], strides = [1, 1, 1, 1]} : vector<2x16x16x32xf32> to vector<2x1x16x32xf32>
    %70 = arith.maximumf %68, %69 : vector<2x1x16x32xf32>
    %71 = vector.extract_strided_slice %52 {offsets = [0, 12, 0, 0], sizes = [2, 1, 16, 32], strides = [1, 1, 1, 1]} : vector<2x16x16x32xf32> to vector<2x1x16x32xf32>
    %72 = vector.extract_strided_slice %52 {offsets = [0, 13, 0, 0], sizes = [2, 1, 16, 32], strides = [1, 1, 1, 1]} : vector<2x16x16x32xf32> to vector<2x1x16x32xf32>
    %73 = arith.maximumf %71, %72 : vector<2x1x16x32xf32>
    %74 = vector.extract_strided_slice %52 {offsets = [0, 14, 0, 0], sizes = [2, 1, 16, 32], strides = [1, 1, 1, 1]} : vector<2x16x16x32xf32> to vector<2x1x16x32xf32>
    %75 = vector.extract_strided_slice %52 {offsets = [0, 15, 0, 0], sizes = [2, 1, 16, 32], strides = [1, 1, 1, 1]} : vector<2x16x16x32xf32> to vector<2x1x16x32xf32>
    %76 = arith.maximumf %74, %75 : vector<2x1x16x32xf32>
    %77 = tpu.concatenate %55, %58, %61, %64, %67, %70, %73, %76 in 1 : vector<2x1x16x32xf32>, vector<2x1x16x32xf32>, vector<2x1x16x32xf32>, vector<2x1x16x32xf32>, vector<2x1x16x32xf32>, vector<2x1x16x32xf32>, vector<2x1x16x32xf32>, vector<2x1x16x32xf32> -> vector<2x8x16x32xf32>
    %78 = vector.extract_strided_slice %77 {offsets = [0, 0, 0, 0], sizes = [2, 8, 2, 32], strides = [1, 1, 1, 1]} : vector<2x8x16x32xf32> to vector<2x8x2x32xf32>
    %cst_59 = arith.constant dense<0xFF800000> : vector<2x8x32xf32>
    %79 = vector.multi_reduction <maximumf>, %78, %cst_59 [2] : vector<2x8x2x32xf32> to vector<2x8x32xf32>
    %80 = vector.shape_cast %79 : vector<2x8x32xf32> to vector<2x8x1x32xf32>
    %81 = vector.extract_strided_slice %77 {offsets = [0, 0, 2, 0], sizes = [2, 8, 2, 32], strides = [1, 1, 1, 1]} : vector<2x8x16x32xf32> to vector<2x8x2x32xf32>
    %cst_60 = arith.constant dense<0xFF800000> : vector<2x8x32xf32>
    %82 = vector.multi_reduction <maximumf>, %81, %cst_60 [2] : vector<2x8x2x32xf32> to vector<2x8x32xf32>
    %83 = vector.shape_cast %82 : vector<2x8x32xf32> to vector<2x8x1x32xf32>
    %84 = vector.extract_strided_slice %77 {offsets = [0, 0, 4, 0], sizes = [2, 8, 2, 32], strides = [1, 1, 1, 1]} : vector<2x8x16x32xf32> to vector<2x8x2x32xf32>
    %cst_61 = arith.constant dense<0xFF800000> : vector<2x8x32xf32>
    %85 = vector.multi_reduction <maximumf>, %84, %cst_61 [2] : vector<2x8x2x32xf32> to vector<2x8x32xf32>
    %86 = vector.shape_cast %85 : vector<2x8x32xf32> to vector<2x8x1x32xf32>
    %87 = vector.extract_strided_slice %77 {offsets = [0, 0, 6, 0], sizes = [2, 8, 2, 32], strides = [1, 1, 1, 1]} : vector<2x8x16x32xf32> to vector<2x8x2x32xf32>
    %cst_62 = arith.constant dense<0xFF800000> : vector<2x8x32xf32>
    %88 = vector.multi_reduction <maximumf>, %87, %cst_62 [2] : vector<2x8x2x32xf32> to vector<2x8x32xf32>
    %89 = vector.shape_cast %88 : vector<2x8x32xf32> to vector<2x8x1x32xf32>
    %90 = vector.extract_strided_slice %77 {offsets = [0, 0, 8, 0], sizes = [2, 8, 2, 32], strides = [1, 1, 1, 1]} : vector<2x8x16x32xf32> to vector<2x8x2x32xf32>
    %cst_63 = arith.constant dense<0xFF800000> : vector<2x8x32xf32>
    %91 = vector.multi_reduction <maximumf>, %90, %cst_63 [2] : vector<2x8x2x32xf32> to vector<2x8x32xf32>
    %92 = vector.shape_cast %91 : vector<2x8x32xf32> to vector<2x8x1x32xf32>
    %93 = vector.extract_strided_slice %77 {offsets = [0, 0, 10, 0], sizes = [2, 8, 2, 32], strides = [1, 1, 1, 1]} : vector<2x8x16x32xf32> to vector<2x8x2x32xf32>
    %cst_64 = arith.constant dense<0xFF800000> : vector<2x8x32xf32>
    %94 = vector.multi_reduction <maximumf>, %93, %cst_64 [2] : vector<2x8x2x32xf32> to vector<2x8x32xf32>
    %95 = vector.shape_cast %94 : vector<2x8x32xf32> to vector<2x8x1x32xf32>
    %96 = vector.extract_strided_slice %77 {offsets = [0, 0, 12, 0], sizes = [2, 8, 2, 32], strides = [1, 1, 1, 1]} : vector<2x8x16x32xf32> to vector<2x8x2x32xf32>
    %cst_65 = arith.constant dense<0xFF800000> : vector<2x8x32xf32>
    %97 = vector.multi_reduction <maximumf>, %96, %cst_65 [2] : vector<2x8x2x32xf32> to vector<2x8x32xf32>
    %98 = vector.shape_cast %97 : vector<2x8x32xf32> to vector<2x8x1x32xf32>
    %99 = vector.extract_strided_slice %77 {offsets = [0, 0, 14, 0], sizes = [2, 8, 2, 32], strides = [1, 1, 1, 1]} : vector<2x8x16x32xf32> to vector<2x8x2x32xf32>
    %cst_66 = arith.constant dense<0xFF800000> : vector<2x8x32xf32>
    %100 = vector.multi_reduction <maximumf>, %99, %cst_66 [2] : vector<2x8x2x32xf32> to vector<2x8x32xf32>
    %101 = vector.shape_cast %100 : vector<2x8x32xf32> to vector<2x8x1x32xf32>
    %102 = tpu.concatenate %80, %83, %86, %89, %92, %95, %98, %101 in 2 : vector<2x8x1x32xf32>, vector<2x8x1x32xf32>, vector<2x8x1x32xf32>, vector<2x8x1x32xf32>, vector<2x8x1x32xf32>, vector<2x8x1x32xf32>, vector<2x8x1x32xf32>, vector<2x8x1x32xf32> -> vector<2x8x8x32xf32>
    %cst_67 = arith.constant 0.000000e+00 : f32
    %103 = vector.broadcast %cst_67 : f32 to vector<2x10x10x32xf32>
    %c0_68 = arith.constant 0 : index
    %c0_69 = arith.constant 0 : index
    %c0_70 = arith.constant 0 : index
    %c0_71 = arith.constant 0 : index
    %104 = vector.load %arg21[%c0_68, %c0_69, %c0_70, %c0_71] : memref<2x10x10x32xf32, #tpu.memory_space<vmem>>, vector<2x10x10x32xf32>
    tpu.vector_store %arg21[%c0_68, %c0_69, %c0_70, %c0_71], %103 {strides = array<i32>} : memref<2x10x10x32xf32, #tpu.memory_space<vmem>>, vector<2x10x10x32xf32>,
    %c0_72 = arith.constant 0 : index
    %c1_73 = arith.constant 1 : index
    %c1_74 = arith.constant 1 : index
    %c0_75 = arith.constant 0 : index
    %105 = vector.load %arg21[%c0_72, %c1_73, %c1_74, %c0_75] : memref<2x10x10x32xf32, #tpu.memory_space<vmem>>, vector<2x8x8x32xf32>
    tpu.vector_store %arg21[%c0_72, %c1_73, %c1_74, %c0_75], %102 {strides = array<i32>} : memref<2x10x10x32xf32, #tpu.memory_space<vmem>>, vector<2x8x8x32xf32>,
    %c0_76 = arith.constant 0 : index
    %c0_77 = arith.constant 0 : index
    %c0_78 = arith.constant 0 : index
    %c0_79 = arith.constant 0 : index
    %106 = vector.load %arg21[%c0_76, %c0_77, %c0_78, %c0_79] : memref<2x10x10x32xf32, #tpu.memory_space<vmem>>, vector<2x8x8x32xf32>
    %107 = vector.shape_cast %106 : vector<2x8x8x32xf32> to vector<128x32xf32>
    %c0_80 = arith.constant 0 : index
    %c0_81 = arith.constant 0 : index
    %c1_82 = arith.constant 1 : index
    %c0_83 = arith.constant 0 : index
    %108 = vector.load %arg21[%c0_80, %c0_81, %c1_82, %c0_83] : memref<2x10x10x32xf32, #tpu.memory_space<vmem>>, vector<2x8x8x32xf32>
    %109 = vector.shape_cast %108 : vector<2x8x8x32xf32> to vector<128x32xf32>
    %c0_84 = arith.constant 0 : index
    %c0_85 = arith.constant 0 : index
    %c2_86 = arith.constant 2 : index
    %c0_87 = arith.constant 0 : index
    %110 = vector.load %arg21[%c0_84, %c0_85, %c2_86, %c0_87] : memref<2x10x10x32xf32, #tpu.memory_space<vmem>>, vector<2x8x8x32xf32>
    %111 = vector.shape_cast %110 : vector<2x8x8x32xf32> to vector<128x32xf32>
    %c0_88 = arith.constant 0 : index
    %c1_89 = arith.constant 1 : index
    %c0_90 = arith.constant 0 : index
    %c0_91 = arith.constant 0 : index
    %112 = vector.load %arg21[%c0_88, %c1_89, %c0_90, %c0_91] : memref<2x10x10x32xf32, #tpu.memory_space<vmem>>, vector<2x8x8x32xf32>
    %113 = vector.shape_cast %112 : vector<2x8x8x32xf32> to vector<128x32xf32>
    %c0_92 = arith.constant 0 : index
    %c1_93 = arith.constant 1 : index
    %c1_94 = arith.constant 1 : index
    %c0_95 = arith.constant 0 : index
    %114 = vector.load %arg21[%c0_92, %c1_93, %c1_94, %c0_95] : memref<2x10x10x32xf32, #tpu.memory_space<vmem>>, vector<2x8x8x32xf32>
    %115 = vector.shape_cast %114 : vector<2x8x8x32xf32> to vector<128x32xf32>
    %c0_96 = arith.constant 0 : index
    %c1_97 = arith.constant 1 : index
    %c2_98 = arith.constant 2 : index
    %c0_99 = arith.constant 0 : index
    %116 = vector.load %arg21[%c0_96, %c1_97, %c2_98, %c0_99] : memref<2x10x10x32xf32, #tpu.memory_space<vmem>>, vector<2x8x8x32xf32>
    %117 = vector.shape_cast %116 : vector<2x8x8x32xf32> to vector<128x32xf32>
    %c0_100 = arith.constant 0 : index
    %c2_101 = arith.constant 2 : index
    %c0_102 = arith.constant 0 : index
    %c0_103 = arith.constant 0 : index
    %118 = vector.load %arg21[%c0_100, %c2_101, %c0_102, %c0_103] : memref<2x10x10x32xf32, #tpu.memory_space<vmem>>, vector<2x8x8x32xf32>
    %119 = vector.shape_cast %118 : vector<2x8x8x32xf32> to vector<128x32xf32>
    %c0_104 = arith.constant 0 : index
    %c2_105 = arith.constant 2 : index
    %c1_106 = arith.constant 1 : index
    %c0_107 = arith.constant 0 : index
    %120 = vector.load %arg21[%c0_104, %c2_105, %c1_106, %c0_107] : memref<2x10x10x32xf32, #tpu.memory_space<vmem>>, vector<2x8x8x32xf32>
    %121 = vector.shape_cast %120 : vector<2x8x8x32xf32> to vector<128x32xf32>
    %c0_108 = arith.constant 0 : index
    %c2_109 = arith.constant 2 : index
    %c2_110 = arith.constant 2 : index
    %c0_111 = arith.constant 0 : index
    %122 = vector.load %arg21[%c0_108, %c2_109, %c2_110, %c0_111] : memref<2x10x10x32xf32, #tpu.memory_space<vmem>>, vector<2x8x8x32xf32>
    %123 = vector.shape_cast %122 : vector<2x8x8x32xf32> to vector<128x32xf32>
    %124 = tpu.concatenate %107, %109, %111, %113, %115, %117, %119, %121, %123 in 1 : vector<128x32xf32>, vector<128x32xf32>, vector<128x32xf32>, vector<128x32xf32>, vector<128x32xf32>, vector<128x32xf32>, vector<128x32xf32>, vector<128x32xf32>, vector<128x32xf32> -> vector<128x288xf32>
    %c0_112 = arith.constant 0 : index
    %c0_113 = arith.constant 0 : index
    %125 = vector.load %arg4[%c0_112, %c0_113] : memref<288x64xf32, #tpu.memory_space<vmem>>, vector<288x64xf32>
    %cst_114 = arith.constant dense<0.000000e+00> : vector<128x64xf32>
    %126 = tpu.matmul %124, %125, %cst_114 {dimension_numbers = #tpu.dot_dimension_numbers<[1], [0], [0], [1], [0, 0, 1, 1], [], []>} : vector<128x288xf32>, vector<288x64xf32>, vector<128x64xf32> -> vector<128x64xf32>
    %cst_115 = arith.constant dense<0.000000e+00> : vector<64xf32>
    %127 = vector.multi_reduction <add>, %126, %cst_115 [0] : vector<128x64xf32> to vector<64xf32>
    %128 = vector.shape_cast %127 : vector<64xf32> to vector<1x64xf32>
    %cst_116 = arith.constant 7.812500e-03 : f32
    %129 = vector.broadcast %cst_116 : f32 to vector<1x64xf32>
    %130 = arith.mulf %128, %129 : vector<1x64xf32>
    %131 = arith.mulf %126, %126 : vector<128x64xf32>
    %cst_117 = arith.constant dense<0.000000e+00> : vector<64xf32>
    %132 = vector.multi_reduction <add>, %131, %cst_117 [0] : vector<128x64xf32> to vector<64xf32>
    %133 = vector.shape_cast %132 : vector<64xf32> to vector<1x64xf32>
    %cst_118 = arith.constant 7.812500e-03 : f32
    %134 = vector.broadcast %cst_118 : f32 to vector<1x64xf32>
    %135 = arith.mulf %133, %134 : vector<1x64xf32>
    %136 = arith.mulf %130, %130 : vector<1x64xf32>
    %137 = arith.subf %135, %136 : vector<1x64xf32>
    %cst_119 = arith.constant 0.000000e+00 : f32
    %138 = vector.broadcast %cst_119 : f32 to vector<1x64xf32>
    %139 = arith.maximumf %137, %138 : vector<1x64xf32>
    %c0_120 = arith.constant 0 : index
    %c0_121 = arith.constant 0 : index
    %140 = vector.load %arg5[%c0_120, %c0_121] : memref<1x64xf32, #tpu.memory_space<vmem>>, vector<1x64xf32>
    %cst_122 = arith.constant 9.99999974E-6 : f32
    %141 = vector.broadcast %cst_122 : f32 to vector<1x64xf32>
    %142 = arith.addf %139, %141 : vector<1x64xf32>
    %143 = math.rsqrt %142 : vector<1x64xf32>
    %144 = arith.mulf %140, %143 : vector<1x64xf32>
    %c0_123 = arith.constant 0 : index
    %c0_124 = arith.constant 0 : index
    %145 = vector.load %arg6[%c0_123, %c0_124] : memref<1x64xf32, #tpu.memory_space<vmem>>, vector<1x64xf32>
    %146 = arith.mulf %130, %144 : vector<1x64xf32>
    %147 = arith.subf %145, %146 : vector<1x64xf32>
    %148 = vector.broadcast %144 : vector<1x64xf32> to vector<128x64xf32>
    %149 = arith.mulf %126, %148 : vector<128x64xf32>
    %150 = vector.broadcast %147 : vector<1x64xf32> to vector<128x64xf32>
    %151 = arith.addf %149, %150 : vector<128x64xf32>
    %cst_125 = arith.constant 0.000000e+00 : f32
    %152 = vector.broadcast %cst_125 : f32 to vector<128x64xf32>
    %153 = arith.maximumf %151, %152 : vector<128x64xf32>
    %154 = vector.shape_cast %153 : vector<128x64xf32> to vector<2x8x8x64xf32>
    %155 = vector.extract_strided_slice %154 {offsets = [0, 0, 0, 0], sizes = [2, 1, 8, 64], strides = [1, 1, 1, 1]} : vector<2x8x8x64xf32> to vector<2x1x8x64xf32>
    %156 = vector.extract_strided_slice %154 {offsets = [0, 1, 0, 0], sizes = [2, 1, 8, 64], strides = [1, 1, 1, 1]} : vector<2x8x8x64xf32> to vector<2x1x8x64xf32>
    %157 = arith.maximumf %155, %156 : vector<2x1x8x64xf32>
    %158 = vector.extract_strided_slice %154 {offsets = [0, 2, 0, 0], sizes = [2, 1, 8, 64], strides = [1, 1, 1, 1]} : vector<2x8x8x64xf32> to vector<2x1x8x64xf32>
    %159 = vector.extract_strided_slice %154 {offsets = [0, 3, 0, 0], sizes = [2, 1, 8, 64], strides = [1, 1, 1, 1]} : vector<2x8x8x64xf32> to vector<2x1x8x64xf32>
    %160 = arith.maximumf %158, %159 : vector<2x1x8x64xf32>
    %161 = vector.extract_strided_slice %154 {offsets = [0, 4, 0, 0], sizes = [2, 1, 8, 64], strides = [1, 1, 1, 1]} : vector<2x8x8x64xf32> to vector<2x1x8x64xf32>
    %162 = vector.extract_strided_slice %154 {offsets = [0, 5, 0, 0], sizes = [2, 1, 8, 64], strides = [1, 1, 1, 1]} : vector<2x8x8x64xf32> to vector<2x1x8x64xf32>
    %163 = arith.maximumf %161, %162 : vector<2x1x8x64xf32>
    %164 = vector.extract_strided_slice %154 {offsets = [0, 6, 0, 0], sizes = [2, 1, 8, 64], strides = [1, 1, 1, 1]} : vector<2x8x8x64xf32> to vector<2x1x8x64xf32>
    %165 = vector.extract_strided_slice %154 {offsets = [0, 7, 0, 0], sizes = [2, 1, 8, 64], strides = [1, 1, 1, 1]} : vector<2x8x8x64xf32> to vector<2x1x8x64xf32>
    %166 = arith.maximumf %164, %165 : vector<2x1x8x64xf32>
    %167 = tpu.concatenate %157, %160, %163, %166 in 1 : vector<2x1x8x64xf32>, vector<2x1x8x64xf32>, vector<2x1x8x64xf32>, vector<2x1x8x64xf32> -> vector<2x4x8x64xf32>
    %168 = vector.extract_strided_slice %167 {offsets = [0, 0, 0, 0], sizes = [2, 4, 2, 64], strides = [1, 1, 1, 1]} : vector<2x4x8x64xf32> to vector<2x4x2x64xf32>
    %cst_126 = arith.constant dense<0xFF800000> : vector<2x4x64xf32>
    %169 = vector.multi_reduction <maximumf>, %168, %cst_126 [2] : vector<2x4x2x64xf32> to vector<2x4x64xf32>
    %170 = vector.shape_cast %169 : vector<2x4x64xf32> to vector<2x4x1x64xf32>
    %171 = vector.extract_strided_slice %167 {offsets = [0, 0, 2, 0], sizes = [2, 4, 2, 64], strides = [1, 1, 1, 1]} : vector<2x4x8x64xf32> to vector<2x4x2x64xf32>
    %cst_127 = arith.constant dense<0xFF800000> : vector<2x4x64xf32>
    %172 = vector.multi_reduction <maximumf>, %171, %cst_127 [2] : vector<2x4x2x64xf32> to vector<2x4x64xf32>
    %173 = vector.shape_cast %172 : vector<2x4x64xf32> to vector<2x4x1x64xf32>
    %174 = vector.extract_strided_slice %167 {offsets = [0, 0, 4, 0], sizes = [2, 4, 2, 64], strides = [1, 1, 1, 1]} : vector<2x4x8x64xf32> to vector<2x4x2x64xf32>
    %cst_128 = arith.constant dense<0xFF800000> : vector<2x4x64xf32>
    %175 = vector.multi_reduction <maximumf>, %174, %cst_128 [2] : vector<2x4x2x64xf32> to vector<2x4x64xf32>
    %176 = vector.shape_cast %175 : vector<2x4x64xf32> to vector<2x4x1x64xf32>
    %177 = vector.extract_strided_slice %167 {offsets = [0, 0, 6, 0], sizes = [2, 4, 2, 64], strides = [1, 1, 1, 1]} : vector<2x4x8x64xf32> to vector<2x4x2x64xf32>
    %cst_129 = arith.constant dense<0xFF800000> : vector<2x4x64xf32>
    %178 = vector.multi_reduction <maximumf>, %177, %cst_129 [2] : vector<2x4x2x64xf32> to vector<2x4x64xf32>
    %179 = vector.shape_cast %178 : vector<2x4x64xf32> to vector<2x4x1x64xf32>
    %180 = tpu.concatenate %170, %173, %176, %179 in 2 : vector<2x4x1x64xf32>, vector<2x4x1x64xf32>, vector<2x4x1x64xf32>, vector<2x4x1x64xf32> -> vector<2x4x4x64xf32>
    %cst_130 = arith.constant 0.000000e+00 : f32
    %181 = vector.broadcast %cst_130 : f32 to vector<2x6x6x64xf32>
    %c0_131 = arith.constant 0 : index
    %c0_132 = arith.constant 0 : index
    %c0_133 = arith.constant 0 : index
    %c0_134 = arith.constant 0 : index
    %182 = vector.load %arg22[%c0_131, %c0_132, %c0_133, %c0_134] : memref<2x6x6x64xf32, #tpu.memory_space<vmem>>, vector<2x6x6x64xf32>
    tpu.vector_store %arg22[%c0_131, %c0_132, %c0_133, %c0_134], %181 {strides = array<i32>} : memref<2x6x6x64xf32, #tpu.memory_space<vmem>>, vector<2x6x6x64xf32>,
    %c0_135 = arith.constant 0 : index
    %c1_136 = arith.constant 1 : index
    %c1_137 = arith.constant 1 : index
    %c0_138 = arith.constant 0 : index
    %183 = vector.load %arg22[%c0_135, %c1_136, %c1_137, %c0_138] : memref<2x6x6x64xf32, #tpu.memory_space<vmem>>, vector<2x4x4x64xf32>
    tpu.vector_store %arg22[%c0_135, %c1_136, %c1_137, %c0_138], %180 {strides = array<i32>} : memref<2x6x6x64xf32, #tpu.memory_space<vmem>>, vector<2x4x4x64xf32>,
    %c0_139 = arith.constant 0 : index
    %c0_140 = arith.constant 0 : index
    %c0_141 = arith.constant 0 : index
    %c0_142 = arith.constant 0 : index
    %184 = vector.load %arg22[%c0_139, %c0_140, %c0_141, %c0_142] : memref<2x6x6x64xf32, #tpu.memory_space<vmem>>, vector<2x4x4x64xf32>
    %185 = vector.shape_cast %184 : vector<2x4x4x64xf32> to vector<32x64xf32>
    %c0_143 = arith.constant 0 : index
    %c0_144 = arith.constant 0 : index
    %c1_145 = arith.constant 1 : index
    %c0_146 = arith.constant 0 : index
    %186 = vector.load %arg22[%c0_143, %c0_144, %c1_145, %c0_146] : memref<2x6x6x64xf32, #tpu.memory_space<vmem>>, vector<2x4x4x64xf32>
    %187 = vector.shape_cast %186 : vector<2x4x4x64xf32> to vector<32x64xf32>
    %c0_147 = arith.constant 0 : index
    %c0_148 = arith.constant 0 : index
    %c2_149 = arith.constant 2 : index
    %c0_150 = arith.constant 0 : index
    %188 = vector.load %arg22[%c0_147, %c0_148, %c2_149, %c0_150] : memref<2x6x6x64xf32, #tpu.memory_space<vmem>>, vector<2x4x4x64xf32>
    %189 = vector.shape_cast %188 : vector<2x4x4x64xf32> to vector<32x64xf32>
    %c0_151 = arith.constant 0 : index
    %c1_152 = arith.constant 1 : index
    %c0_153 = arith.constant 0 : index
    %c0_154 = arith.constant 0 : index
    %190 = vector.load %arg22[%c0_151, %c1_152, %c0_153, %c0_154] : memref<2x6x6x64xf32, #tpu.memory_space<vmem>>, vector<2x4x4x64xf32>
    %191 = vector.shape_cast %190 : vector<2x4x4x64xf32> to vector<32x64xf32>
    %c0_155 = arith.constant 0 : index
    %c1_156 = arith.constant 1 : index
    %c1_157 = arith.constant 1 : index
    %c0_158 = arith.constant 0 : index
    %192 = vector.load %arg22[%c0_155, %c1_156, %c1_157, %c0_158] : memref<2x6x6x64xf32, #tpu.memory_space<vmem>>, vector<2x4x4x64xf32>
    %193 = vector.shape_cast %192 : vector<2x4x4x64xf32> to vector<32x64xf32>
    %c0_159 = arith.constant 0 : index
    %c1_160 = arith.constant 1 : index
    %c2_161 = arith.constant 2 : index
    %c0_162 = arith.constant 0 : index
    %194 = vector.load %arg22[%c0_159, %c1_160, %c2_161, %c0_162] : memref<2x6x6x64xf32, #tpu.memory_space<vmem>>, vector<2x4x4x64xf32>
    %195 = vector.shape_cast %194 : vector<2x4x4x64xf32> to vector<32x64xf32>
    %c0_163 = arith.constant 0 : index
    %c2_164 = arith.constant 2 : index
    %c0_165 = arith.constant 0 : index
    %c0_166 = arith.constant 0 : index
    %196 = vector.load %arg22[%c0_163, %c2_164, %c0_165, %c0_166] : memref<2x6x6x64xf32, #tpu.memory_space<vmem>>, vector<2x4x4x64xf32>
    %197 = vector.shape_cast %196 : vector<2x4x4x64xf32> to vector<32x64xf32>
    %c0_167 = arith.constant 0 : index
    %c2_168 = arith.constant 2 : index
    %c1_169 = arith.constant 1 : index
    %c0_170 = arith.constant 0 : index
    %198 = vector.load %arg22[%c0_167, %c2_168, %c1_169, %c0_170] : memref<2x6x6x64xf32, #tpu.memory_space<vmem>>, vector<2x4x4x64xf32>
    %199 = vector.shape_cast %198 : vector<2x4x4x64xf32> to vector<32x64xf32>
    %c0_171 = arith.constant 0 : index
    %c2_172 = arith.constant 2 : index
    %c2_173 = arith.constant 2 : index
    %c0_174 = arith.constant 0 : index
    %200 = vector.load %arg22[%c0_171, %c2_172, %c2_173, %c0_174] : memref<2x6x6x64xf32, #tpu.memory_space<vmem>>, vector<2x4x4x64xf32>
    %201 = vector.shape_cast %200 : vector<2x4x4x64xf32> to vector<32x64xf32>
    %202 = tpu.concatenate %185, %187, %189, %191, %193, %195, %197, %199, %201 in 1 : vector<32x64xf32>, vector<32x64xf32>, vector<32x64xf32>, vector<32x64xf32>, vector<32x64xf32>, vector<32x64xf32>, vector<32x64xf32>, vector<32x64xf32>, vector<32x64xf32> -> vector<32x576xf32>
    %c0_175 = arith.constant 0 : index
    %c0_176 = arith.constant 0 : index
    %203 = vector.load %arg7[%c0_175, %c0_176] : memref<576x128xf32, #tpu.memory_space<vmem>>, vector<576x128xf32>
    %cst_177 = arith.constant dense<0.000000e+00> : vector<32x128xf32>
    %204 = tpu.matmul %202, %203, %cst_177 {dimension_numbers = #tpu.dot_dimension_numbers<[1], [0], [0], [1], [0, 0, 1, 1], [], []>} : vector<32x576xf32>, vector<576x128xf32>, vector<32x128xf32> -> vector<32x128xf32>
    %cst_178 = arith.constant dense<0.000000e+00> : vector<128xf32>
    %205 = vector.multi_reduction <add>, %204, %cst_178 [0] : vector<32x128xf32> to vector<128xf32>
    %206 = vector.shape_cast %205 : vector<128xf32> to vector<1x128xf32>
    %cst_179 = arith.constant 3.125000e-02 : f32
    %207 = vector.broadcast %cst_179 : f32 to vector<1x128xf32>
    %208 = arith.mulf %206, %207 : vector<1x128xf32>
    %209 = arith.mulf %204, %204 : vector<32x128xf32>
    %cst_180 = arith.constant dense<0.000000e+00> : vector<128xf32>
    %210 = vector.multi_reduction <add>, %209, %cst_180 [0] : vector<32x128xf32> to vector<128xf32>
    %211 = vector.shape_cast %210 : vector<128xf32> to vector<1x128xf32>
    %cst_181 = arith.constant 3.125000e-02 : f32
    %212 = vector.broadcast %cst_181 : f32 to vector<1x128xf32>
    %213 = arith.mulf %211, %212 : vector<1x128xf32>
    %214 = arith.mulf %208, %208 : vector<1x128xf32>
    %215 = arith.subf %213, %214 : vector<1x128xf32>
    %cst_182 = arith.constant 0.000000e+00 : f32
    %216 = vector.broadcast %cst_182 : f32 to vector<1x128xf32>
    %217 = arith.maximumf %215, %216 : vector<1x128xf32>
    %c0_183 = arith.constant 0 : index
    %c0_184 = arith.constant 0 : index
    %218 = vector.load %arg8[%c0_183, %c0_184] : memref<1x128xf32, #tpu.memory_space<vmem>>, vector<1x128xf32>
    %cst_185 = arith.constant 9.99999974E-6 : f32
    %219 = vector.broadcast %cst_185 : f32 to vector<1x128xf32>
    %220 = arith.addf %217, %219 : vector<1x128xf32>
    %221 = math.rsqrt %220 : vector<1x128xf32>
    %222 = arith.mulf %218, %221 : vector<1x128xf32>
    %c0_186 = arith.constant 0 : index
    %c0_187 = arith.constant 0 : index
    %223 = vector.load %arg9[%c0_186, %c0_187] : memref<1x128xf32, #tpu.memory_space<vmem>>, vector<1x128xf32>
    %224 = arith.mulf %208, %222 : vector<1x128xf32>
    %225 = arith.subf %223, %224 : vector<1x128xf32>
    %226 = vector.broadcast %222 : vector<1x128xf32> to vector<32x128xf32>
    %227 = arith.mulf %204, %226 : vector<32x128xf32>
    %228 = vector.broadcast %225 : vector<1x128xf32> to vector<32x128xf32>
    %229 = arith.addf %227, %228 : vector<32x128xf32>
    %cst_188 = arith.constant 0.000000e+00 : f32
    %230 = vector.broadcast %cst_188 : f32 to vector<32x128xf32>
    %231 = arith.maximumf %229, %230 : vector<32x128xf32>
    %232 = vector.shape_cast %231 : vector<32x128xf32> to vector<2x4x4x128xf32>
    %cst_189 = arith.constant 0.000000e+00 : f32
    %233 = vector.broadcast %cst_189 : f32 to vector<2x6x6x128xf32>
    %c0_190 = arith.constant 0 : index
    %c0_191 = arith.constant 0 : index
    %c0_192 = arith.constant 0 : index
    %c0_193 = arith.constant 0 : index
    %234 = vector.load %arg23[%c0_190, %c0_191, %c0_192, %c0_193] : memref<2x6x6x128xf32, #tpu.memory_space<vmem>>, vector<2x6x6x128xf32>
    tpu.vector_store %arg23[%c0_190, %c0_191, %c0_192, %c0_193], %233 {strides = array<i32>} : memref<2x6x6x128xf32, #tpu.memory_space<vmem>>, vector<2x6x6x128xf32>,
    %c0_194 = arith.constant 0 : index
    %c1_195 = arith.constant 1 : index
    %c1_196 = arith.constant 1 : index
    %c0_197 = arith.constant 0 : index
    %235 = vector.load %arg23[%c0_194, %c1_195, %c1_196, %c0_197] : memref<2x6x6x128xf32, #tpu.memory_space<vmem>>, vector<2x4x4x128xf32>
    tpu.vector_store %arg23[%c0_194, %c1_195, %c1_196, %c0_197], %232 {strides = array<i32>} : memref<2x6x6x128xf32, #tpu.memory_space<vmem>>, vector<2x4x4x128xf32>,
    %c0_198 = arith.constant 0 : index
    %c0_199 = arith.constant 0 : index
    %c0_200 = arith.constant 0 : index
    %c0_201 = arith.constant 0 : index
    %236 = vector.load %arg23[%c0_198, %c0_199, %c0_200, %c0_201] : memref<2x6x6x128xf32, #tpu.memory_space<vmem>>, vector<2x4x4x128xf32>
    %237 = vector.shape_cast %236 : vector<2x4x4x128xf32> to vector<32x128xf32>
    %c0_202 = arith.constant 0 : index
    %c0_203 = arith.constant 0 : index
    %c1_204 = arith.constant 1 : index
    %c0_205 = arith.constant 0 : index
    %238 = vector.load %arg23[%c0_202, %c0_203, %c1_204, %c0_205] : memref<2x6x6x128xf32, #tpu.memory_space<vmem>>, vector<2x4x4x128xf32>
    %239 = vector.shape_cast %238 : vector<2x4x4x128xf32> to vector<32x128xf32>
    %c0_206 = arith.constant 0 : index
    %c0_207 = arith.constant 0 : index
    %c2_208 = arith.constant 2 : index
    %c0_209 = arith.constant 0 : index
    %240 = vector.load %arg23[%c0_206, %c0_207, %c2_208, %c0_209] : memref<2x6x6x128xf32, #tpu.memory_space<vmem>>, vector<2x4x4x128xf32>
    %241 = vector.shape_cast %240 : vector<2x4x4x128xf32> to vector<32x128xf32>
    %c0_210 = arith.constant 0 : index
    %c1_211 = arith.constant 1 : index
    %c0_212 = arith.constant 0 : index
    %c0_213 = arith.constant 0 : index
    %242 = vector.load %arg23[%c0_210, %c1_211, %c0_212, %c0_213] : memref<2x6x6x128xf32, #tpu.memory_space<vmem>>, vector<2x4x4x128xf32>
    %243 = vector.shape_cast %242 : vector<2x4x4x128xf32> to vector<32x128xf32>
    %c0_214 = arith.constant 0 : index
    %c1_215 = arith.constant 1 : index
    %c1_216 = arith.constant 1 : index
    %c0_217 = arith.constant 0 : index
    %244 = vector.load %arg23[%c0_214, %c1_215, %c1_216, %c0_217] : memref<2x6x6x128xf32, #tpu.memory_space<vmem>>, vector<2x4x4x128xf32>
    %245 = vector.shape_cast %244 : vector<2x4x4x128xf32> to vector<32x128xf32>
    %c0_218 = arith.constant 0 : index
    %c1_219 = arith.constant 1 : index
    %c2_220 = arith.constant 2 : index
    %c0_221 = arith.constant 0 : index
    %246 = vector.load %arg23[%c0_218, %c1_219, %c2_220, %c0_221] : memref<2x6x6x128xf32, #tpu.memory_space<vmem>>, vector<2x4x4x128xf32>
    %247 = vector.shape_cast %246 : vector<2x4x4x128xf32> to vector<32x128xf32>
    %c0_222 = arith.constant 0 : index
    %c2_223 = arith.constant 2 : index
    %c0_224 = arith.constant 0 : index
    %c0_225 = arith.constant 0 : index
    %248 = vector.load %arg23[%c0_222, %c2_223, %c0_224, %c0_225] : memref<2x6x6x128xf32, #tpu.memory_space<vmem>>, vector<2x4x4x128xf32>
    %249 = vector.shape_cast %248 : vector<2x4x4x128xf32> to vector<32x128xf32>
    %c0_226 = arith.constant 0 : index
    %c2_227 = arith.constant 2 : index
    %c1_228 = arith.constant 1 : index
    %c0_229 = arith.constant 0 : index
    %250 = vector.load %arg23[%c0_226, %c2_227, %c1_228, %c0_229] : memref<2x6x6x128xf32, #tpu.memory_space<vmem>>, vector<2x4x4x128xf32>
    %251 = vector.shape_cast %250 : vector<2x4x4x128xf32> to vector<32x128xf32>
    %c0_230 = arith.constant 0 : index
    %c2_231 = arith.constant 2 : index
    %c2_232 = arith.constant 2 : index
    %c0_233 = arith.constant 0 : index
    %252 = vector.load %arg23[%c0_230, %c2_231, %c2_232, %c0_233] : memref<2x6x6x128xf32, #tpu.memory_space<vmem>>, vector<2x4x4x128xf32>
    %253 = vector.shape_cast %252 : vector<2x4x4x128xf32> to vector<32x128xf32>
    %254 = tpu.concatenate %237, %239, %241, %243, %245, %247, %249, %251, %253 in 1 : vector<32x128xf32>, vector<32x128xf32>, vector<32x128xf32>, vector<32x128xf32>, vector<32x128xf32>, vector<32x128xf32>, vector<32x128xf32>, vector<32x128xf32>, vector<32x128xf32> -> vector<32x1152xf32>
    %c0_234 = arith.constant 0 : index
    %c0_235 = arith.constant 0 : index
    %255 = vector.load %arg10[%c0_234, %c0_235] : memref<1152x64xf32, #tpu.memory_space<vmem>>, vector<1152x64xf32>
    %cst_236 = arith.constant dense<0.000000e+00> : vector<32x64xf32>
    %256 = tpu.matmul %254, %255, %cst_236 {dimension_numbers = #tpu.dot_dimension_numbers<[1], [0], [0], [1], [0, 0, 1, 1], [], []>} : vector<32x1152xf32>, vector<1152x64xf32>, vector<32x64xf32> -> vector<32x64xf32>
    %cst_237 = arith.constant dense<0.000000e+00> : vector<64xf32>
    %257 = vector.multi_reduction <add>, %256, %cst_237 [0] : vector<32x64xf32> to vector<64xf32>
    %258 = vector.shape_cast %257 : vector<64xf32> to vector<1x64xf32>
    %cst_238 = arith.constant 3.125000e-02 : f32
    %259 = vector.broadcast %cst_238 : f32 to vector<1x64xf32>
    %260 = arith.mulf %258, %259 : vector<1x64xf32>
    %261 = arith.mulf %256, %256 : vector<32x64xf32>
    %cst_239 = arith.constant dense<0.000000e+00> : vector<64xf32>
    %262 = vector.multi_reduction <add>, %261, %cst_239 [0] : vector<32x64xf32> to vector<64xf32>
    %263 = vector.shape_cast %262 : vector<64xf32> to vector<1x64xf32>
    %cst_240 = arith.constant 3.125000e-02 : f32
    %264 = vector.broadcast %cst_240 : f32 to vector<1x64xf32>
    %265 = arith.mulf %263, %264 : vector<1x64xf32>
    %266 = arith.mulf %260, %260 : vector<1x64xf32>
    %267 = arith.subf %265, %266 : vector<1x64xf32>
    %cst_241 = arith.constant 0.000000e+00 : f32
    %268 = vector.broadcast %cst_241 : f32 to vector<1x64xf32>
    %269 = arith.maximumf %267, %268 : vector<1x64xf32>
    %c0_242 = arith.constant 0 : index
    %c0_243 = arith.constant 0 : index
    %270 = vector.load %arg11[%c0_242, %c0_243] : memref<1x64xf32, #tpu.memory_space<vmem>>, vector<1x64xf32>
    %cst_244 = arith.constant 9.99999974E-6 : f32
    %271 = vector.broadcast %cst_244 : f32 to vector<1x64xf32>
    %272 = arith.addf %269, %271 : vector<1x64xf32>
    %273 = math.rsqrt %272 : vector<1x64xf32>
    %274 = arith.mulf %270, %273 : vector<1x64xf32>
    %c0_245 = arith.constant 0 : index
    %c0_246 = arith.constant 0 : index
    %275 = vector.load %arg12[%c0_245, %c0_246] : memref<1x64xf32, #tpu.memory_space<vmem>>, vector<1x64xf32>
    %276 = arith.mulf %260, %274 : vector<1x64xf32>
    %277 = arith.subf %275, %276 : vector<1x64xf32>
    %278 = vector.broadcast %274 : vector<1x64xf32> to vector<32x64xf32>
    %279 = arith.mulf %256, %278 : vector<32x64xf32>
    %280 = vector.broadcast %277 : vector<1x64xf32> to vector<32x64xf32>
    %281 = arith.addf %279, %280 : vector<32x64xf32>
    %cst_247 = arith.constant 0.000000e+00 : f32
    %282 = vector.broadcast %cst_247 : f32 to vector<32x64xf32>
    %283 = arith.maximumf %281, %282 : vector<32x64xf32>
    %284 = vector.shape_cast %283 : vector<32x64xf32> to vector<2x4x4x64xf32>
    %cst_248 = arith.constant 0.000000e+00 : f32
    %285 = vector.broadcast %cst_248 : f32 to vector<2x6x6x64xf32>
    %c0_249 = arith.constant 0 : index
    %c0_250 = arith.constant 0 : index
    %c0_251 = arith.constant 0 : index
    %c0_252 = arith.constant 0 : index
    %286 = vector.load %arg24[%c0_249, %c0_250, %c0_251, %c0_252] : memref<2x6x6x64xf32, #tpu.memory_space<vmem>>, vector<2x6x6x64xf32>
    tpu.vector_store %arg24[%c0_249, %c0_250, %c0_251, %c0_252], %285 {strides = array<i32>} : memref<2x6x6x64xf32, #tpu.memory_space<vmem>>, vector<2x6x6x64xf32>,
    %c0_253 = arith.constant 0 : index
    %c1_254 = arith.constant 1 : index
    %c1_255 = arith.constant 1 : index
    %c0_256 = arith.constant 0 : index
    %287 = vector.load %arg24[%c0_253, %c1_254, %c1_255, %c0_256] : memref<2x6x6x64xf32, #tpu.memory_space<vmem>>, vector<2x4x4x64xf32>
    tpu.vector_store %arg24[%c0_253, %c1_254, %c1_255, %c0_256], %284 {strides = array<i32>} : memref<2x6x6x64xf32, #tpu.memory_space<vmem>>, vector<2x4x4x64xf32>,
    %c0_257 = arith.constant 0 : index
    %c0_258 = arith.constant 0 : index
    %c0_259 = arith.constant 0 : index
    %c0_260 = arith.constant 0 : index
    %288 = vector.load %arg24[%c0_257, %c0_258, %c0_259, %c0_260] : memref<2x6x6x64xf32, #tpu.memory_space<vmem>>, vector<2x4x4x64xf32>
    %289 = vector.shape_cast %288 : vector<2x4x4x64xf32> to vector<32x64xf32>
    %c0_261 = arith.constant 0 : index
    %c0_262 = arith.constant 0 : index
    %c1_263 = arith.constant 1 : index
    %c0_264 = arith.constant 0 : index
    %290 = vector.load %arg24[%c0_261, %c0_262, %c1_263, %c0_264] : memref<2x6x6x64xf32, #tpu.memory_space<vmem>>, vector<2x4x4x64xf32>
    %291 = vector.shape_cast %290 : vector<2x4x4x64xf32> to vector<32x64xf32>
    %c0_265 = arith.constant 0 : index
    %c0_266 = arith.constant 0 : index
    %c2_267 = arith.constant 2 : index
    %c0_268 = arith.constant 0 : index
    %292 = vector.load %arg24[%c0_265, %c0_266, %c2_267, %c0_268] : memref<2x6x6x64xf32, #tpu.memory_space<vmem>>, vector<2x4x4x64xf32>
    %293 = vector.shape_cast %292 : vector<2x4x4x64xf32> to vector<32x64xf32>
    %c0_269 = arith.constant 0 : index
    %c1_270 = arith.constant 1 : index
    %c0_271 = arith.constant 0 : index
    %c0_272 = arith.constant 0 : index
    %294 = vector.load %arg24[%c0_269, %c1_270, %c0_271, %c0_272] : memref<2x6x6x64xf32, #tpu.memory_space<vmem>>, vector<2x4x4x64xf32>
    %295 = vector.shape_cast %294 : vector<2x4x4x64xf32> to vector<32x64xf32>
    %c0_273 = arith.constant 0 : index
    %c1_274 = arith.constant 1 : index
    %c1_275 = arith.constant 1 : index
    %c0_276 = arith.constant 0 : index
    %296 = vector.load %arg24[%c0_273, %c1_274, %c1_275, %c0_276] : memref<2x6x6x64xf32, #tpu.memory_space<vmem>>, vector<2x4x4x64xf32>
    %297 = vector.shape_cast %296 : vector<2x4x4x64xf32> to vector<32x64xf32>
    %c0_277 = arith.constant 0 : index
    %c1_278 = arith.constant 1 : index
    %c2_279 = arith.constant 2 : index
    %c0_280 = arith.constant 0 : index
    %298 = vector.load %arg24[%c0_277, %c1_278, %c2_279, %c0_280] : memref<2x6x6x64xf32, #tpu.memory_space<vmem>>, vector<2x4x4x64xf32>
    %299 = vector.shape_cast %298 : vector<2x4x4x64xf32> to vector<32x64xf32>
    %c0_281 = arith.constant 0 : index
    %c2_282 = arith.constant 2 : index
    %c0_283 = arith.constant 0 : index
    %c0_284 = arith.constant 0 : index
    %300 = vector.load %arg24[%c0_281, %c2_282, %c0_283, %c0_284] : memref<2x6x6x64xf32, #tpu.memory_space<vmem>>, vector<2x4x4x64xf32>
    %301 = vector.shape_cast %300 : vector<2x4x4x64xf32> to vector<32x64xf32>
    %c0_285 = arith.constant 0 : index
    %c2_286 = arith.constant 2 : index
    %c1_287 = arith.constant 1 : index
    %c0_288 = arith.constant 0 : index
    %302 = vector.load %arg24[%c0_285, %c2_286, %c1_287, %c0_288] : memref<2x6x6x64xf32, #tpu.memory_space<vmem>>, vector<2x4x4x64xf32>
    %303 = vector.shape_cast %302 : vector<2x4x4x64xf32> to vector<32x64xf32>
    %c0_289 = arith.constant 0 : index
    %c2_290 = arith.constant 2 : index
    %c2_291 = arith.constant 2 : index
    %c0_292 = arith.constant 0 : index
    %304 = vector.load %arg24[%c0_289, %c2_290, %c2_291, %c0_292] : memref<2x6x6x64xf32, #tpu.memory_space<vmem>>, vector<2x4x4x64xf32>
    %305 = vector.shape_cast %304 : vector<2x4x4x64xf32> to vector<32x64xf32>
    %306 = tpu.concatenate %289, %291, %293, %295, %297, %299, %301, %303, %305 in 1 : vector<32x64xf32>, vector<32x64xf32>, vector<32x64xf32>, vector<32x64xf32>, vector<32x64xf32>, vector<32x64xf32>, vector<32x64xf32>, vector<32x64xf32>, vector<32x64xf32> -> vector<32x576xf32>
    %c0_293 = arith.constant 0 : index
    %c0_294 = arith.constant 0 : index
    %307 = vector.load %arg13[%c0_293, %c0_294] : memref<576x32xf32, #tpu.memory_space<vmem>>, vector<576x32xf32>
    %cst_295 = arith.constant dense<0.000000e+00> : vector<32x32xf32>
    %308 = tpu.matmul %306, %307, %cst_295 {dimension_numbers = #tpu.dot_dimension_numbers<[1], [0], [0], [1], [0, 0, 1, 1], [], []>} : vector<32x576xf32>, vector<576x32xf32>, vector<32x32xf32> -> vector<32x32xf32>
    %cst_296 = arith.constant dense<0.000000e+00> : vector<32xf32>
    %309 = vector.multi_reduction <add>, %308, %cst_296 [0] : vector<32x32xf32> to vector<32xf32>
    %310 = vector.shape_cast %309 : vector<32xf32> to vector<1x32xf32>
    %cst_297 = arith.constant 3.125000e-02 : f32
    %311 = vector.broadcast %cst_297 : f32 to vector<1x32xf32>
    %312 = arith.mulf %310, %311 : vector<1x32xf32>
    %313 = arith.mulf %308, %308 : vector<32x32xf32>
    %cst_298 = arith.constant dense<0.000000e+00> : vector<32xf32>
    %314 = vector.multi_reduction <add>, %313, %cst_298 [0] : vector<32x32xf32> to vector<32xf32>
    %315 = vector.shape_cast %314 : vector<32xf32> to vector<1x32xf32>
    %cst_299 = arith.constant 3.125000e-02 : f32
    %316 = vector.broadcast %cst_299 : f32 to vector<1x32xf32>
    %317 = arith.mulf %315, %316 : vector<1x32xf32>
    %318 = arith.mulf %312, %312 : vector<1x32xf32>
    %319 = arith.subf %317, %318 : vector<1x32xf32>
    %cst_300 = arith.constant 0.000000e+00 : f32
    %320 = vector.broadcast %cst_300 : f32 to vector<1x32xf32>
    %321 = arith.maximumf %319, %320 : vector<1x32xf32>
    %c0_301 = arith.constant 0 : index
    %c0_302 = arith.constant 0 : index
    %322 = vector.load %arg14[%c0_301, %c0_302] : memref<1x32xf32, #tpu.memory_space<vmem>>, vector<1x32xf32>
    %cst_303 = arith.constant 9.99999974E-6 : f32
    %323 = vector.broadcast %cst_303 : f32 to vector<1x32xf32>
    %324 = arith.addf %321, %323 : vector<1x32xf32>
    %325 = math.rsqrt %324 : vector<1x32xf32>
    %326 = arith.mulf %322, %325 : vector<1x32xf32>
    %c0_304 = arith.constant 0 : index
    %c0_305 = arith.constant 0 : index
    %327 = vector.load %arg15[%c0_304, %c0_305] : memref<1x32xf32, #tpu.memory_space<vmem>>, vector<1x32xf32>
    %328 = arith.mulf %312, %326 : vector<1x32xf32>
    %329 = arith.subf %327, %328 : vector<1x32xf32>
    %330 = vector.broadcast %326 : vector<1x32xf32> to vector<32x32xf32>
    %331 = arith.mulf %308, %330 : vector<32x32xf32>
    %332 = vector.broadcast %329 : vector<1x32xf32> to vector<32x32xf32>
    %333 = arith.addf %331, %332 : vector<32x32xf32>
    %cst_306 = arith.constant 0.000000e+00 : f32
    %334 = vector.broadcast %cst_306 : f32 to vector<32x32xf32>
    %335 = arith.maximumf %333, %334 : vector<32x32xf32>
    %336 = vector.shape_cast %335 : vector<32x32xf32> to vector<2x4x4x32xf32>
    %cst_307 = arith.constant 0.000000e+00 : f32
    %337 = vector.broadcast %cst_307 : f32 to vector<2x6x6x32xf32>
    %c0_308 = arith.constant 0 : index
    %c0_309 = arith.constant 0 : index
    %c0_310 = arith.constant 0 : index
    %c0_311 = arith.constant 0 : index
    %338 = vector.load %arg25[%c0_308, %c0_309, %c0_310, %c0_311] : memref<2x6x6x32xf32, #tpu.memory_space<vmem>>, vector<2x6x6x32xf32>
    tpu.vector_store %arg25[%c0_308, %c0_309, %c0_310, %c0_311], %337 {strides = array<i32>} : memref<2x6x6x32xf32, #tpu.memory_space<vmem>>, vector<2x6x6x32xf32>,
    %c0_312 = arith.constant 0 : index
    %c1_313 = arith.constant 1 : index
    %c1_314 = arith.constant 1 : index
    %c0_315 = arith.constant 0 : index
    %339 = vector.load %arg25[%c0_312, %c1_313, %c1_314, %c0_315] : memref<2x6x6x32xf32, #tpu.memory_space<vmem>>, vector<2x4x4x32xf32>
    tpu.vector_store %arg25[%c0_312, %c1_313, %c1_314, %c0_315], %336 {strides = array<i32>} : memref<2x6x6x32xf32, #tpu.memory_space<vmem>>, vector<2x4x4x32xf32>,
    %c0_316 = arith.constant 0 : index
    %c0_317 = arith.constant 0 : index
    %c0_318 = arith.constant 0 : index
    %c0_319 = arith.constant 0 : index
    %340 = vector.load %arg25[%c0_316, %c0_317, %c0_318, %c0_319] : memref<2x6x6x32xf32, #tpu.memory_space<vmem>>, vector<2x4x4x32xf32>
    %341 = vector.shape_cast %340 : vector<2x4x4x32xf32> to vector<32x32xf32>
    %c0_320 = arith.constant 0 : index
    %c0_321 = arith.constant 0 : index
    %c1_322 = arith.constant 1 : index
    %c0_323 = arith.constant 0 : index
    %342 = vector.load %arg25[%c0_320, %c0_321, %c1_322, %c0_323] : memref<2x6x6x32xf32, #tpu.memory_space<vmem>>, vector<2x4x4x32xf32>
    %343 = vector.shape_cast %342 : vector<2x4x4x32xf32> to vector<32x32xf32>
    %c0_324 = arith.constant 0 : index
    %c0_325 = arith.constant 0 : index
    %c2_326 = arith.constant 2 : index
    %c0_327 = arith.constant 0 : index
    %344 = vector.load %arg25[%c0_324, %c0_325, %c2_326, %c0_327] : memref<2x6x6x32xf32, #tpu.memory_space<vmem>>, vector<2x4x4x32xf32>
    %345 = vector.shape_cast %344 : vector<2x4x4x32xf32> to vector<32x32xf32>
    %c0_328 = arith.constant 0 : index
    %c1_329 = arith.constant 1 : index
    %c0_330 = arith.constant 0 : index
    %c0_331 = arith.constant 0 : index
    %346 = vector.load %arg25[%c0_328, %c1_329, %c0_330, %c0_331] : memref<2x6x6x32xf32, #tpu.memory_space<vmem>>, vector<2x4x4x32xf32>
    %347 = vector.shape_cast %346 : vector<2x4x4x32xf32> to vector<32x32xf32>
    %c0_332 = arith.constant 0 : index
    %c1_333 = arith.constant 1 : index
    %c1_334 = arith.constant 1 : index
    %c0_335 = arith.constant 0 : index
    %348 = vector.load %arg25[%c0_332, %c1_333, %c1_334, %c0_335] : memref<2x6x6x32xf32, #tpu.memory_space<vmem>>, vector<2x4x4x32xf32>
    %349 = vector.shape_cast %348 : vector<2x4x4x32xf32> to vector<32x32xf32>
    %c0_336 = arith.constant 0 : index
    %c1_337 = arith.constant 1 : index
    %c2_338 = arith.constant 2 : index
    %c0_339 = arith.constant 0 : index
    %350 = vector.load %arg25[%c0_336, %c1_337, %c2_338, %c0_339] : memref<2x6x6x32xf32, #tpu.memory_space<vmem>>, vector<2x4x4x32xf32>
    %351 = vector.shape_cast %350 : vector<2x4x4x32xf32> to vector<32x32xf32>
    %c0_340 = arith.constant 0 : index
    %c2_341 = arith.constant 2 : index
    %c0_342 = arith.constant 0 : index
    %c0_343 = arith.constant 0 : index
    %352 = vector.load %arg25[%c0_340, %c2_341, %c0_342, %c0_343] : memref<2x6x6x32xf32, #tpu.memory_space<vmem>>, vector<2x4x4x32xf32>
    %353 = vector.shape_cast %352 : vector<2x4x4x32xf32> to vector<32x32xf32>
    %c0_344 = arith.constant 0 : index
    %c2_345 = arith.constant 2 : index
    %c1_346 = arith.constant 1 : index
    %c0_347 = arith.constant 0 : index
    %354 = vector.load %arg25[%c0_344, %c2_345, %c1_346, %c0_347] : memref<2x6x6x32xf32, #tpu.memory_space<vmem>>, vector<2x4x4x32xf32>
    %355 = vector.shape_cast %354 : vector<2x4x4x32xf32> to vector<32x32xf32>
    %c0_348 = arith.constant 0 : index
    %c2_349 = arith.constant 2 : index
    %c2_350 = arith.constant 2 : index
    %c0_351 = arith.constant 0 : index
    %356 = vector.load %arg25[%c0_348, %c2_349, %c2_350, %c0_351] : memref<2x6x6x32xf32, #tpu.memory_space<vmem>>, vector<2x4x4x32xf32>
    %357 = vector.shape_cast %356 : vector<2x4x4x32xf32> to vector<32x32xf32>
    %358 = tpu.concatenate %341, %343, %345, %347, %349, %351, %353, %355, %357 in 1 : vector<32x32xf32>, vector<32x32xf32>, vector<32x32xf32>, vector<32x32xf32>, vector<32x32xf32>, vector<32x32xf32>, vector<32x32xf32>, vector<32x32xf32>, vector<32x32xf32> -> vector<32x288xf32>
    %c0_352 = arith.constant 0 : index
    %c0_353 = arith.constant 0 : index
    %359 = vector.load %arg16[%c0_352, %c0_353] : memref<288x3xf32, #tpu.memory_space<vmem>>, vector<288x3xf32>
    %cst_354 = arith.constant dense<0.000000e+00> : vector<32x3xf32>
    %360 = tpu.matmul %358, %359, %cst_354 {dimension_numbers = #tpu.dot_dimension_numbers<[1], [0], [0], [1], [0, 0, 1, 1], [], []>} : vector<32x288xf32>, vector<288x3xf32>, vector<32x3xf32> -> vector<32x3xf32>
    %cst_355 = arith.constant dense<0.000000e+00> : vector<3xf32>
    %361 = vector.multi_reduction <add>, %360, %cst_355 [0] : vector<32x3xf32> to vector<3xf32>
    %362 = vector.shape_cast %361 : vector<3xf32> to vector<1x3xf32>
    %cst_356 = arith.constant 3.125000e-02 : f32
    %363 = vector.broadcast %cst_356 : f32 to vector<1x3xf32>
    %364 = arith.mulf %362, %363 : vector<1x3xf32>
    %365 = arith.mulf %360, %360 : vector<32x3xf32>
    %cst_357 = arith.constant dense<0.000000e+00> : vector<3xf32>
    %366 = vector.multi_reduction <add>, %365, %cst_357 [0] : vector<32x3xf32> to vector<3xf32>
    %367 = vector.shape_cast %366 : vector<3xf32> to vector<1x3xf32>
    %cst_358 = arith.constant 3.125000e-02 : f32
    %368 = vector.broadcast %cst_358 : f32 to vector<1x3xf32>
    %369 = arith.mulf %367, %368 : vector<1x3xf32>
    %370 = arith.mulf %364, %364 : vector<1x3xf32>
    %371 = arith.subf %369, %370 : vector<1x3xf32>
    %cst_359 = arith.constant 0.000000e+00 : f32
    %372 = vector.broadcast %cst_359 : f32 to vector<1x3xf32>
    %373 = arith.maximumf %371, %372 : vector<1x3xf32>
    %c0_360 = arith.constant 0 : index
    %c0_361 = arith.constant 0 : index
    %374 = vector.load %arg17[%c0_360, %c0_361] : memref<1x3xf32, #tpu.memory_space<vmem>>, vector<1x3xf32>
    %cst_362 = arith.constant 9.99999974E-6 : f32
    %375 = vector.broadcast %cst_362 : f32 to vector<1x3xf32>
    %376 = arith.addf %373, %375 : vector<1x3xf32>
    %377 = math.rsqrt %376 : vector<1x3xf32>
    %378 = arith.mulf %374, %377 : vector<1x3xf32>
    %c0_363 = arith.constant 0 : index
    %c0_364 = arith.constant 0 : index
    %379 = vector.load %arg18[%c0_363, %c0_364] : memref<1x3xf32, #tpu.memory_space<vmem>>, vector<1x3xf32>
    %380 = arith.mulf %364, %378 : vector<1x3xf32>
    %381 = arith.subf %379, %380 : vector<1x3xf32>
    %382 = vector.broadcast %378 : vector<1x3xf32> to vector<32x3xf32>
    %383 = arith.mulf %360, %382 : vector<32x3xf32>
    %384 = vector.broadcast %381 : vector<1x3xf32> to vector<32x3xf32>
    %385 = arith.addf %383, %384 : vector<32x3xf32>
    %cst_365 = arith.constant 0.000000e+00 : f32
    %386 = vector.broadcast %cst_365 : f32 to vector<32x3xf32>
    %387 = arith.maximumf %385, %386 : vector<32x3xf32>
    %388 = vector.shape_cast %387 : vector<32x3xf32> to vector<2x4x4x3xf32>
    %c0_366 = arith.constant 0 : index
    %c0_367 = arith.constant 0 : index
    %c0_368 = arith.constant 0 : index
    %c0_369 = arith.constant 0 : index
    %389 = vector.load %arg19[%c0_366, %c0_367, %c0_368, %c0_369] : memref<2x4x4x3xf32, #tpu.memory_space<vmem>>, vector<2x4x4x3xf32>
    tpu.vector_store %arg19[%c0_366, %c0_367, %c0_368, %c0_369], %388 {strides = array<i32>} : memref<2x4x4x3xf32, #tpu.memory_space<vmem>>, vector<2x4x4x3xf32>,
    return
  }
}

</mosaic_0001>

<llo_original>
// kernel: improved_simple_ae_forward.1
$region0: #{improved_simple_ae_forward.1}
  #allocation0 [shape = 'u32[]', space=smem, size = 0x4, offset = 0x4, fixed_abs, tag = 'smem constant byte address 0x4 - core index']
  #allocation1 [shape = 'u32[144,128]{1,0:T(1,128)}', space=vmem, size = 0x12000, scoped, tag = 'internal scratch']
  #allocation2 [shape = 'f32[2,18,18,3]{3,2,1,0:T(8,128)}', space=vmem, size = 0x6c000, scoped, tag = 'scratch operand']
  #allocation3 [shape = 'f32[2,10,10,32]{3,2,1,0:T(8,128)}', space=vmem, size = 0x28000, scoped, tag = 'scratch operand']
  #allocation4 [shape = 'f32[2,6,6,64]{3,2,1,0:T(8,128)}', space=vmem, size = 0xc000, scoped, tag = 'scratch operand']
  #allocation5 [shape = 'f32[2,6,6,128]{3,2,1,0:T(8,128)}', space=vmem, size = 0xc000, scoped, tag = 'scratch operand']
  #allocation6 [shape = 'f32[2,6,6,64]{3,2,1,0:T(8,128)}', space=vmem, size = 0xc000, scoped, tag = 'scratch operand']
  #allocation7 [shape = 'f32[2,6,6,32]{3,2,1,0:T(8,128)}', space=vmem, size = 0xc000, scoped, tag = 'scratch operand']
  %s0 = inlined_call_operand.vmem [shape: f32[2,16,16,3], index: 0, kind: input, shape index: {}]
  %s1 = inlined_call_operand.vmem [shape: f32[27,32], index: 1, kind: input, shape index: {}]
  %s2 = inlined_call_operand.vmem [shape: f32[1,32], index: 2, kind: input, shape index: {}]
  %s3 = inlined_call_operand.vmem [shape: f32[1,32], index: 3, kind: input, shape index: {}]
  %s4 = inlined_call_operand.vmem [shape: f32[288,64], index: 4, kind: input, shape index: {}]
  %s5 = inlined_call_operand.vmem [shape: f32[1,64], index: 5, kind: input, shape index: {}]
  %s6 = inlined_call_operand.vmem [shape: f32[1,64], index: 6, kind: input, shape index: {}]
  %s7 = inlined_call_operand.vmem [shape: f32[576,128], index: 7, kind: input, shape index: {}]
  %s8 = inlined_call_operand.vmem [shape: f32[1,128], index: 8, kind: input, shape index: {}]
  %s9 = inlined_call_operand.vmem [shape: f32[1,128], index: 9, kind: input, shape index: {}]
  %s10 = inlined_call_operand.vmem [shape: f32[1152,64], index: 10, kind: input, shape index: {}]
  %s11 = inlined_call_operand.vmem [shape: f32[1,64], index: 11, kind: input, shape index: {}]
  %s12 = inlined_call_operand.vmem [shape: f32[1,64], index: 12, kind: input, shape index: {}]
  %s13 = inlined_call_operand.vmem [shape: f32[576,32], index: 13, kind: input, shape index: {}]
  %s14 = inlined_call_operand.vmem [shape: f32[1,32], index: 14, kind: input, shape index: {}]
  %s15 = inlined_call_operand.vmem [shape: f32[1,32], index: 15, kind: input, shape index: {}]
  %s16 = inlined_call_operand.vmem [shape: f32[288,3], index: 16, kind: input, shape index: {}]
  %s17 = inlined_call_operand.vmem [shape: f32[1,3], index: 17, kind: input, shape index: {}]
  %s18 = inlined_call_operand.vmem [shape: f32[1,3], index: 18, kind: input, shape index: {}]
  %s19 = inlined_call_operand.vmem [shape: f32[2,4,4,3], index: 19, kind: output, shape index: {}]
  %s20 = sld [smem:[#allocation0]]
  $region86: #{improved_simple_ae_forward.1} parent=0
    _
  %s22 = ssub.s32 1, %s20
  %s23 = scalar_select 0, %s22, %s20
  // Predicated region
  $region2: #{improved_simple_ae_forward.1} parent=0 // pred_check
    _
  $region3: #{improved_simple_ae_forward.1} parent=0 // pred_check_branch
    %25 = sbr.rel (0) target = $region5
  $region4: #{improved_simple_ae_forward.1} parent=0 // pred_region
    _
  $region5: #{improved_simple_ae_forward.1} parent=0 // pred_fallthru
    _
  // Predicated region
  $region6: #{improved_simple_ae_forward.1} parent=0 // pred_check
    _
  $region7: #{improved_simple_ae_forward.1} parent=0 // pred_check_branch
    %27 = sbr.rel (0) target = $region9
  $region8: #{improved_simple_ae_forward.1} parent=0 // pred_region
    _
  $region9: #{improved_simple_ae_forward.1} parent=0 // pred_fallthru
    _
  // Predicated region
  $region10: #{improved_simple_ae_forward.1} parent=0 // pred_check
    _
  $region11: #{improved_simple_ae_forward.1} parent=0 // pred_check_branch
    %29 = sbr.rel (0) target = $region13
  $region12: #{improved_simple_ae_forward.1} parent=0 // pred_region
    _
  $region13: #{improved_simple_ae_forward.1} parent=0 // pred_fallthru
    _
  // Predicated region
  $region14: #{improved_simple_ae_forward.1} parent=0 // pred_check
    _
  $region15: #{improved_simple_ae_forward.1} parent=0 // pred_check_branch
    %31 = sbr.rel (0) target = $region17
  $region16: #{improved_simple_ae_forward.1} parent=0 // pred_region
    _
  $region17: #{improved_simple_ae_forward.1} parent=0 // pred_fallthru
    _
  // Predicated region
  $region18: #{improved_simple_ae_forward.1} parent=0 // pred_check
    _
  $region19: #{improved_simple_ae_forward.1} parent=0 // pred_check_branch
    %33 = sbr.rel (0) target = $region21
  $region20: #{improved_simple_ae_forward.1} parent=0 // pred_region
    _
  $region21: #{improved_simple_ae_forward.1} parent=0 // pred_fallthru
    _
  // Predicated region
  $region22: #{improved_simple_ae_forward.1} parent=0 // pred_check
    _
  $region23: #{improved_simple_ae_forward.1} parent=0 // pred_check_branch
    %35 = sbr.rel (0) target = $region25
  $region24: #{improved_simple_ae_forward.1} parent=0 // pred_region
    _
  $region25: #{improved_simple_ae_forward.1} parent=0 // pred_fallthru
    _
  // Predicated region
  $region26: #{improved_simple_ae_forward.1} parent=0 // pred_check
    _
  $region27: #{improved_simple_ae_forward.1} parent=0 // pred_check_branch
    %37 = sbr.rel (0) target = $region29
  $region28: #{improved_simple_ae_forward.1} parent=0 // pred_region
    _
  $region29: #{improved_simple_ae_forward.1} parent=0 // pred_fallthru
    _
  // Predicated region
  $region30: #{improved_simple_ae_forward.1} parent=0 // pred_check
    _
  $region31: #{improved_simple_ae_forward.1} parent=0 // pred_check_branch
    %39 = sbr.rel (0) target = $region33
  $region32: #{improved_simple_ae_forward.1} parent=0 // pred_region
    _
  $region33: #{improved_simple_ae_forward.1} parent=0 // pred_fallthru
    _
  // Predicated region
  $region34: #{improved_simple_ae_forward.1} parent=0 // pred_check
    _
  $region35: #{improved_simple_ae_forward.1} parent=0 // pred_check_branch
    %41 = sbr.rel (0) target = $region37
  $region36: #{improved_simple_ae_forward.1} parent=0 // pred_region
    _
  $region37: #{improved_simple_ae_forward.1} parent=0 // pred_fallthru
    _
  // Predicated region
  $region38: #{improved_simple_ae_forward.1} parent=0 // pred_check
    _
  $region39: #{improved_simple_ae_forward.1} parent=0 // pred_check_branch
    %43 = sbr.rel (0) target = $region41
  $region40: #{improved_simple_ae_forward.1} parent=0 // pred_region
    _
  $region41: #{improved_simple_ae_forward.1} parent=0 // pred_fallthru
    _
  // Predicated region
  $region42: #{improved_simple_ae_forward.1} parent=0 // pred_check
    _
  $region43: #{improved_simple_ae_forward.1} parent=0 // pred_check_branch
    %45 = sbr.rel (0) target = $region45
  $region44: #{improved_simple_ae_forward.1} parent=0 // pred_region
    _
  $region45: #{improved_simple_ae_forward.1} parent=0 // pred_fallthru
    _
  // Predicated region
  $region46: #{improved_simple_ae_forward.1} parent=0 // pred_check
    _
  $region47: #{improved_simple_ae_forward.1} parent=0 // pred_check_branch
    %47 = sbr.rel (0) target = $region49
  $region48: #{improved_simple_ae_forward.1} parent=0 // pred_region
    _
  $region49: #{improved_simple_ae_forward.1} parent=0 // pred_fallthru
    _
  // Predicated region
  $region50: #{improved_simple_ae_forward.1} parent=0 // pred_check
    _
  $region51: #{improved_simple_ae_forward.1} parent=0 // pred_check_branch
    %49 = sbr.rel (0) target = $region53
  $region52: #{improved_simple_ae_forward.1} parent=0 // pred_region
    _
  $region53: #{improved_simple_ae_forward.1} parent=0 // pred_fallthru
    _
  // Predicated region
  $region54: #{improved_simple_ae_forward.1} parent=0 // pred_check
    _
  $region55: #{improved_simple_ae_forward.1} parent=0 // pred_check_branch
    %51 = sbr.rel (0) target = $region57
  $region56: #{improved_simple_ae_forward.1} parent=0 // pred_region
    _
  $region57: #{improved_simple_ae_forward.1} parent=0 // pred_fallthru
    _
  // Predicated region
  $region58: #{improved_simple_ae_forward.1} parent=0 // pred_check
    _
  $region59: #{improved_simple_ae_forward.1} parent=0 // pred_check_branch
    %53 = sbr.rel (0) target = $region61
  $region60: #{improved_simple_ae_forward.1} parent=0 // pred_region
    _
  $region61: #{improved_simple_ae_forward.1} parent=0 // pred_fallthru
    _
  // Predicated region
  $region62: #{improved_simple_ae_forward.1} parent=0 // pred_check
    _
  $region63: #{improved_simple_ae_forward.1} parent=0 // pred_check_branch
    %55 = sbr.rel (0) target = $region65
  $region64: #{improved_simple_ae_forward.1} parent=0 // pred_region
    _
  $region65: #{improved_simple_ae_forward.1} parent=0 // pred_fallthru
    _
  // Predicated region
  $region66: #{improved_simple_ae_forward.1} parent=0 // pred_check
    _
  $region67: #{improved_simple_ae_forward.1} parent=0 // pred_check_branch
    %57 = sbr.rel (0) target = $region69
  $region68: #{improved_simple_ae_forward.1} parent=0 // pred_region
    _
  $region69: #{improved_simple_ae_forward.1} parent=0 // pred_fallthru
    _
  // Predicated region
  $region70: #{improved_simple_ae_forward.1} parent=0 // pred_check
    _
  $region71: #{improved_simple_ae_forward.1} parent=0 // pred_check_branch
    %59 = sbr.rel (0) target = $region73
  $region72: #{improved_simple_ae_forward.1} parent=0 // pred_region
    _
  $region73: #{improved_simple_ae_forward.1} parent=0 // pred_fallthru
    _
  // Predicated region
  $region74: #{improved_simple_ae_forward.1} parent=0 // pred_check
    _
  $region75: #{improved_simple_ae_forward.1} parent=0 // pred_check_branch
    %61 = sbr.rel (0) target = $region77
  $region76: #{improved_simple_ae_forward.1} parent=0 // pred_region
    _
  $region77: #{improved_simple_ae_forward.1} parent=0 // pred_fallthru
    _
  %v62 = vld [vmem:[%s0] sm:$0xff]
  %v63 = vld [vmem:[%s0 + $0x8] sm:$0xff]
  %v64 = vld [vmem:[%s0 + $0x10] sm:$0xff]
  %v65 = vld [vmem:[%s0 + $0x18] sm:$0xff]
  %v66 = vld [vmem:[%s0 + $0x20] sm:$0xff]
  %v67 = vld [vmem:[%s0 + $0x28] sm:$0xff]
  %v68 = vld [vmem:[%s0 + $0x30] sm:$0xff]
  %v69 = vld [vmem:[%s0 + $0x38] sm:$0xff]
  %v70 = vld [vmem:[%s0 + $0x40] sm:$0xff]
  %v71 = vld [vmem:[%s0 + $0x48] sm:$0xff]
  %v72 = vld [vmem:[%s0 + $0x50] sm:$0xff]
  %v73 = vld [vmem:[%s0 + $0x58] sm:$0xff]
  %v74 = vld [vmem:[%s0 + $0x60] sm:$0xff]
  %v75 = vld [vmem:[%s0 + $0x68] sm:$0xff]
  %v76 = vld [vmem:[%s0 + $0x70] sm:$0xff]
  %v77 = vld [vmem:[%s0 + $0x78] sm:$0xff]
  %v78 = vld [vmem:[%s0 + $0x80] sm:$0xff]
  %v79 = vld [vmem:[%s0 + $0x88] sm:$0xff]
  %v80 = vld [vmem:[%s0 + $0x90] sm:$0xff]
  %v81 = vld [vmem:[%s0 + $0x98] sm:$0xff]
  %v82 = vld [vmem:[%s0 + $0xa0] sm:$0xff]
  %v83 = vld [vmem:[%s0 + $0xa8] sm:$0xff]
  %v84 = vld [vmem:[%s0 + $0xb0] sm:$0xff]
  %v85 = vld [vmem:[%s0 + $0xb8] sm:$0xff]
  %v86 = vld [vmem:[%s0 + $0xc0] sm:$0xff]
  %v87 = vld [vmem:[%s0 + $0xc8] sm:$0xff]
  %v88 = vld [vmem:[%s0 + $0xd0] sm:$0xff]
  %v89 = vld [vmem:[%s0 + $0xd8] sm:$0xff]
  %v90 = vld [vmem:[%s0 + $0xe0] sm:$0xff]
  %v91 = vld [vmem:[%s0 + $0xe8] sm:$0xff]
  %v92 = vld [vmem:[%s0 + $0xf0] sm:$0xff]
  %v93 = vld [vmem:[%s0 + $0xf8] sm:$0xff]
  %v94 = vld [vmem:[%s0 + $0x100] sm:$0xff]
  %v95 = vld [vmem:[%s0 + $0x108] sm:$0xff]
  %v96 = vld [vmem:[%s0 + $0x110] sm:$0xff]
  %v97 = vld [vmem:[%s0 + $0x118] sm:$0xff]
  %v98 = vld [vmem:[%s0 + $0x120] sm:$0xff]
  %v99 = vld [vmem:[%s0 + $0x128] sm:$0xff]
  %v100 = vld [vmem:[%s0 + $0x130] sm:$0xff]
  %v101 = vld [vmem:[%s0 + $0x138] sm:$0xff]
  %v102 = vld [vmem:[%s0 + $0x140] sm:$0xff]
  %v103 = vld [vmem:[%s0 + $0x148] sm:$0xff]
  %v104 = vld [vmem:[%s0 + $0x150] sm:$0xff]
  %v105 = vld [vmem:[%s0 + $0x158] sm:$0xff]
  %v106 = vld [vmem:[%s0 + $0x160] sm:$0xff]
  %v107 = vld [vmem:[%s0 + $0x168] sm:$0xff]
  %v108 = vld [vmem:[%s0 + $0x170] sm:$0xff]
  %v109 = vld [vmem:[%s0 + $0x178] sm:$0xff]
  %v110 = vld [vmem:[%s0 + $0x180] sm:$0xff]
  %v111 = vld [vmem:[%s0 + $0x188] sm:$0xff]
  %v112 = vld [vmem:[%s0 + $0x190] sm:$0xff]
  %v113 = vld [vmem:[%s0 + $0x198] sm:$0xff]
  %v114 = vld [vmem:[%s0 + $0x1a0] sm:$0xff]
  %v115 = vld [vmem:[%s0 + $0x1a8] sm:$0xff]
  %v116 = vld [vmem:[%s0 + $0x1b0] sm:$0xff]
  %v117 = vld [vmem:[%s0 + $0x1b8] sm:$0xff]
  %v118 = vld [vmem:[%s0 + $0x1c0] sm:$0xff]
  %v119 = vld [vmem:[%s0 + $0x1c8] sm:$0xff]
  %v120 = vld [vmem:[%s0 + $0x1d0] sm:$0xff]
  %v121 = vld [vmem:[%s0 + $0x1d8] sm:$0xff]
  %v122 = vld [vmem:[%s0 + $0x1e0] sm:$0xff]
  %v123 = vld [vmem:[%s0 + $0x1e8] sm:$0xff]
  %v124 = vld [vmem:[%s0 + $0x1f0] sm:$0xff]
  %v125 = vld [vmem:[%s0 + $0x1f8] sm:$0xff]
  %vm126 = vcmask 23552
  %127 = vst.msk [vmem:[#allocation2] sm:$0xff] %vm126, 0.0
  %128 = vst.msk [vmem:[#allocation2 + $0x8] sm:$0xff] %vm126, 0.0
  %vm129 = vcmask 17408
  %130 = vst.msk [vmem:[#allocation2 + $0x10] sm:$0x3] %vm129, 0.0
  %131 = vst.msk [vmem:[#allocation2 + $0x18] sm:$0xff] %vm126, 0.0
  %132 = vst.msk [vmem:[#allocation2 + $0x20] sm:$0xff] %vm126, 0.0
  %133 = vst.msk [vmem:[#allocation2 + $0x28] sm:$0x3] %vm129, 0.0
  %134 = vst.msk [vmem:[#allocation2 + $0x30] sm:$0xff] %vm126, 0.0
  %135 = vst.msk [vmem:[#allocation2 + $0x38] sm:$0xff] %vm126, 0.0
  %136 = vst.msk [vmem:[#allocation2 + $0x40] sm:$0x3] %vm129, 0.0
  %137 = vst.msk [vmem:[#allocation2 + $0x48] sm:$0xff] %vm126, 0.0
  %138 = vst.msk [vmem:[#allocation2 + $0x50] sm:$0xff] %vm126, 0.0
  %139 = vst.msk [vmem:[#allocation2 + $0x58] sm:$0x3] %vm129, 0.0
  %140 = vst.msk [vmem:[#allocation2 + $0x60] sm:$0xff] %vm126, 0.0
  %141 = vst.msk [vmem:[#allocation2 + $0x68] sm:$0xff] %vm126, 0.0
  %142 = vst.msk [vmem:[#allocation2 + $0x70] sm:$0x3] %vm129, 0.0
  %143 = vst.msk [vmem:[#allocation2 + $0x78] sm:$0xff] %vm126, 0.0
  %144 = vst.msk [vmem:[#allocation2 + $0x80] sm:$0xff] %vm126, 0.0
  %145 = vst.msk [vmem:[#allocation2 + $0x88] sm:$0x3] %vm129, 0.0
  %146 = vst.msk [vmem:[#allocation2 + $0x90] sm:$0xff] %vm126, 0.0
  %147 = vst.msk [vmem:[#allocation2 + $0x98] sm:$0xff] %vm126, 0.0
  %148 = vst.msk [vmem:[#allocation2 + $0xa0] sm:$0x3] %vm129, 0.0
  %149 = vst.msk [vmem:[#allocation2 + $0xa8] sm:$0xff] %vm126, 0.0
  %150 = vst.msk [vmem:[#allocation2 + $0xb0] sm:$0xff] %vm126, 0.0
  %151 = vst.msk [vmem:[#allocation2 + $0xb8] sm:$0x3] %vm129, 0.0
  %152 = vst.msk [vmem:[#allocation2 + $0xc0] sm:$0xff] %vm126, 0.0
  %153 = vst.msk [vmem:[#allocation2 + $0xc8] sm:$0xff] %vm126, 0.0
  %154 = vst.msk [vmem:[#allocation2 + $0xd0] sm:$0x3] %vm129, 0.0
  %155 = vst.msk [vmem:[#allocation2 + $0xd8] sm:$0xff] %vm126, 0.0
  %156 = vst.msk [vmem:[#allocation2 + $0xe0] sm:$0xff] %vm126, 0.0
  %157 = vst.msk [vmem:[#allocation2 + $0xe8] sm:$0x3] %vm129, 0.0
  %158 = vst.msk [vmem:[#allocation2 + $0xf0] sm:$0xff] %vm126, 0.0
  %159 = vst.msk [vmem:[#allocation2 + $0xf8] sm:$0xff] %vm126, 0.0
  %160 = vst.msk [vmem:[#allocation2 + $0x100] sm:$0x3] %vm129, 0.0
  %161 = vst.msk [vmem:[#allocation2 + $0x108] sm:$0xff] %vm126, 0.0
  %162 = vst.msk [vmem:[#allocation2 + $0x110] sm:$0xff] %vm126, 0.0
  %163 = vst.msk [vmem:[#allocation2 + $0x118] sm:$0x3] %vm129, 0.0
  %164 = vst.msk [vmem:[#allocation2 + $0x120] sm:$0xff] %vm126, 0.0
  %165 = vst.msk [vmem:[#allocation2 + $0x128] sm:$0xff] %vm126, 0.0
  %166 = vst.msk [vmem:[#allocation2 + $0x130] sm:$0x3] %vm129, 0.0
  %167 = vst.msk [vmem:[#allocation2 + $0x138] sm:$0xff] %vm126, 0.0
  %168 = vst.msk [vmem:[#allocation2 + $0x140] sm:$0xff] %vm126, 0.0
  %169 = vst.msk [vmem:[#allocation2 + $0x148] sm:$0x3] %vm129, 0.0
  %170 = vst.msk [vmem:[#allocation2 + $0x150] sm:$0xff] %vm126, 0.0
  %171 = vst.msk [vmem:[#allocation2 + $0x158] sm:$0xff] %vm126, 0.0
  %172 = vst.msk [vmem:[#allocation2 + $0x160] sm:$0x3] %vm129, 0.0
  %173 = vst.msk [vmem:[#allocation2 + $0x168] sm:$0xff] %vm126, 0.0
  %174 = vst.msk [vmem:[#allocation2 + $0x170] sm:$0xff] %vm126, 0.0
  %175 = vst.msk [vmem:[#allocation2 + $0x178] sm:$0x3] %vm129, 0.0
  %176 = vst.msk [vmem:[#allocation2 + $0x180] sm:$0xff] %vm126, 0.0
  %177 = vst.msk [vmem:[#allocation2 + $0x188] sm:$0xff] %vm126, 0.0
  %178 = vst.msk [vmem:[#allocation2 + $0x190] sm:$0x3] %vm129, 0.0
  %179 = vst.msk [vmem:[#allocation2 + $0x198] sm:$0xff] %vm126, 0.0
  %180 = vst.msk [vmem:[#allocation2 + $0x1a0] sm:$0xff] %vm126, 0.0
  %181 = vst.msk [vmem:[#allocation2 + $0x1a8] sm:$0x3] %vm129, 0.0
  %182 = vst.msk [vmem:[#allocation2 + $0x1b0] sm:$0xff] %vm126, 0.0
  %183 = vst.msk [vmem:[#allocation2 + $0x1b8] sm:$0xff] %vm126, 0.0
  %184 = vst.msk [vmem:[#allocation2 + $0x1c0] sm:$0x3] %vm129, 0.0
  %185 = vst.msk [vmem:[#allocation2 + $0x1c8] sm:$0xff] %vm126, 0.0
  %186 = vst.msk [vmem:[#allocation2 + $0x1d0] sm:$0xff] %vm126, 0.0
  %187 = vst.msk [vmem:[#allocation2 + $0x1d8] sm:$0x3] %vm129, 0.0
  %188 = vst.msk [vmem:[#allocation2 + $0x1e0] sm:$0xff] %vm126, 0.0
  %189 = vst.msk [vmem:[#allocation2 + $0x1e8] sm:$0xff] %vm126, 0.0
  %190 = vst.msk [vmem:[#allocation2 + $0x1f0] sm:$0x3] %vm129, 0.0
  %191 = vst.msk [vmem:[#allocation2 + $0x1f8] sm:$0xff] %vm126, 0.0
  %192 = vst.msk [vmem:[#allocation2 + $0x200] sm:$0xff] %vm126, 0.0
  %193 = vst.msk [vmem:[#allocation2 + $0x208] sm:$0x3] %vm129, 0.0
  %194 = vst.msk [vmem:[#allocation2 + $0x210] sm:$0xff] %vm126, 0.0
  %195 = vst.msk [vmem:[#allocation2 + $0x218] sm:$0xff] %vm126, 0.0
  %196 = vst.msk [vmem:[#allocation2 + $0x220] sm:$0x3] %vm129, 0.0
  %197 = vst.msk [vmem:[#allocation2 + $0x228] sm:$0xff] %vm126, 0.0
  %198 = vst.msk [vmem:[#allocation2 + $0x230] sm:$0xff] %vm126, 0.0
  %199 = vst.msk [vmem:[#allocation2 + $0x238] sm:$0x3] %vm129, 0.0
  %200 = vst.msk [vmem:[#allocation2 + $0x240] sm:$0xff] %vm126, 0.0
  %201 = vst.msk [vmem:[#allocation2 + $0x248] sm:$0xff] %vm126, 0.0
  %202 = vst.msk [vmem:[#allocation2 + $0x250] sm:$0x3] %vm129, 0.0
  %203 = vst.msk [vmem:[#allocation2 + $0x258] sm:$0xff] %vm126, 0.0
  %204 = vst.msk [vmem:[#allocation2 + $0x260] sm:$0xff] %vm126, 0.0
  %205 = vst.msk [vmem:[#allocation2 + $0x268] sm:$0x3] %vm129, 0.0
  %206 = vst.msk [vmem:[#allocation2 + $0x270] sm:$0xff] %vm126, 0.0
  %207 = vst.msk [vmem:[#allocation2 + $0x278] sm:$0xff] %vm126, 0.0
  %208 = vst.msk [vmem:[#allocation2 + $0x280] sm:$0x3] %vm129, 0.0
  %209 = vst.msk [vmem:[#allocation2 + $0x288] sm:$0xff] %vm126, 0.0
  %210 = vst.msk [vmem:[#allocation2 + $0x290] sm:$0xff] %vm126, 0.0
  %211 = vst.msk [vmem:[#allocation2 + $0x298] sm:$0x3] %vm129, 0.0
  %212 = vst.msk [vmem:[#allocation2 + $0x2a0] sm:$0xff] %vm126, 0.0
  %213 = vst.msk [vmem:[#allocation2 + $0x2a8] sm:$0xff] %vm126, 0.0
  %214 = vst.msk [vmem:[#allocation2 + $0x2b0] sm:$0x3] %vm129, 0.0
  %215 = vst.msk [vmem:[#allocation2 + $0x2b8] sm:$0xff] %vm126, 0.0
  %216 = vst.msk [vmem:[#allocation2 + $0x2c0] sm:$0xff] %vm126, 0.0
  %217 = vst.msk [vmem:[#allocation2 + $0x2c8] sm:$0x3] %vm129, 0.0
  %218 = vst.msk [vmem:[#allocation2 + $0x2d0] sm:$0xff] %vm126, 0.0
  %219 = vst.msk [vmem:[#allocation2 + $0x2d8] sm:$0xff] %vm126, 0.0
  %220 = vst.msk [vmem:[#allocation2 + $0x2e0] sm:$0x3] %vm129, 0.0
  %221 = vst.msk [vmem:[#allocation2 + $0x2e8] sm:$0xff] %vm126, 0.0
  %222 = vst.msk [vmem:[#allocation2 + $0x2f0] sm:$0xff] %vm126, 0.0
  %223 = vst.msk [vmem:[#allocation2 + $0x2f8] sm:$0x3] %vm129, 0.0
  %224 = vst.msk [vmem:[#allocation2 + $0x300] sm:$0xff] %vm126, 0.0
  %225 = vst.msk [vmem:[#allocation2 + $0x308] sm:$0xff] %vm126, 0.0
  %226 = vst.msk [vmem:[#allocation2 + $0x310] sm:$0x3] %vm129, 0.0
  %227 = vst.msk [vmem:[#allocation2 + $0x318] sm:$0xff] %vm126, 0.0
  %228 = vst.msk [vmem:[#allocation2 + $0x320] sm:$0xff] %vm126, 0.0
  %229 = vst.msk [vmem:[#allocation2 + $0x328] sm:$0x3] %vm129, 0.0
  %230 = vst.msk [vmem:[#allocation2 + $0x330] sm:$0xff] %vm126, 0.0
  %231 = vst.msk [vmem:[#allocation2 + $0x338] sm:$0xff] %vm126, 0.0
  %232 = vst.msk [vmem:[#allocation2 + $0x340] sm:$0x3] %vm129, 0.0
  %233 = vst.msk [vmem:[#allocation2 + $0x348] sm:$0xff] %vm126, 0.0
  %234 = vst.msk [vmem:[#allocation2 + $0x350] sm:$0xff] %vm126, 0.0
  %235 = vst.msk [vmem:[#allocation2 + $0x358] sm:$0x3] %vm129, 0.0
  %s236 = scalar_lea.vmem [#allocation2], 24
  %237 = vst.msk [vmem:[%s236 + $0x1] sm:$0xff] %vm126, %v62
  %238 = vst.msk [vmem:[%s236 + $0x9] sm:$0xff] %vm126, %v63
  %239 = vst.msk [vmem:[%s236 + $0x19] sm:$0xff] %vm126, %v64
  %240 = vst.msk [vmem:[%s236 + $0x21] sm:$0xff] %vm126, %v65
  %241 = vst.msk [vmem:[%s236 + $0x31] sm:$0xff] %vm126, %v66
  %242 = vst.msk [vmem:[%s236 + $0x39] sm:$0xff] %vm126, %v67
  %243 = vst.msk [vmem:[%s236 + $0x49] sm:$0xff] %vm126, %v68
  %244 = vst.msk [vmem:[%s236 + $0x51] sm:$0xff] %vm126, %v69
  %245 = vst.msk [vmem:[%s236 + $0x61] sm:$0xff] %vm126, %v70
  %246 = vst.msk [vmem:[%s236 + $0x69] sm:$0xff] %vm126, %v71
  %247 = vst.msk [vmem:[%s236 + $0x79] sm:$0xff] %vm126, %v72
  %248 = vst.msk [vmem:[%s236 + $0x81] sm:$0xff] %vm126, %v73
  %249 = vst.msk [vmem:[%s236 + $0x91] sm:$0xff] %vm126, %v74
  %250 = vst.msk [vmem:[%s236 + $0x99] sm:$0xff] %vm126, %v75
  %251 = vst.msk [vmem:[%s236 + $0xa9] sm:$0xff] %vm126, %v76
  %252 = vst.msk [vmem:[%s236 + $0xb1] sm:$0xff] %vm126, %v77
  %253 = vst.msk [vmem:[%s236 + $0xc1] sm:$0xff] %vm126, %v78
  %254 = vst.msk [vmem:[%s236 + $0xc9] sm:$0xff] %vm126, %v79
  %255 = vst.msk [vmem:[%s236 + $0xd9] sm:$0xff] %vm126, %v80
  %256 = vst.msk [vmem:[%s236 + $0xe1] sm:$0xff] %vm126, %v81
  %257 = vst.msk [vmem:[%s236 + $0xf1] sm:$0xff] %vm126, %v82
  %258 = vst.msk [vmem:[%s236 + $0xf9] sm:$0xff] %vm126, %v83
  %259 = vst.msk [vmem:[%s236 + $0x109] sm:$0xff] %vm126, %v84
  %260 = vst.msk [vmem:[%s236 + $0x111] sm:$0xff] %vm126, %v85
  %261 = vst.msk [vmem:[%s236 + $0x121] sm:$0xff] %vm126, %v86
  %262 = vst.msk [vmem:[%s236 + $0x129] sm:$0xff] %vm126, %v87
  %263 = vst.msk [vmem:[%s236 + $0x139] sm:$0xff] %vm126, %v88
  %264 = vst.msk [vmem:[%s236 + $0x141] sm:$0xff] %vm126, %v89
  %265 = vst.msk [vmem:[%s236 + $0x151] sm:$0xff] %vm126, %v90
  %266 = vst.msk [vmem:[%s236 + $0x159] sm:$0xff] %vm126, %v91
  %267 = vst.msk [vmem:[%s236 + $0x169] sm:$0xff] %vm126, %v92
  %268 = vst.msk [vmem:[%s236 + $0x171] sm:$0xff] %vm126, %v93
  %269 = vst.msk [vmem:[%s236 + $0x1b1] sm:$0xff] %vm126, %v94
  %270 = vst.msk [vmem:[%s236 + $0x1b9] sm:$0xff] %vm126, %v95
  %271 = vst.msk [vmem:[%s236 + $0x1c9] sm:$0xff] %vm126, %v96
  %272 = vst.msk [vmem:[%s236 + $0x1d1] sm:$0xff] %vm126, %v97
  %273 = vst.msk [vmem:[%s236 + $0x1e1] sm:$0xff] %vm126, %v98
  %274 = vst.msk [vmem:[%s236 + $0x1e9] sm:$0xff] %vm126, %v99
  %275 = vst.msk [vmem:[%s236 + $0x1f9] sm:$0xff] %vm126, %v100
  %276 = vst.msk [vmem:[%s236 + $0x201] sm:$0xff] %vm126, %v101
  %277 = vst.msk [vmem:[%s236 + $0x211] sm:$0xff] %vm126, %v102
  %278 = vst.msk [vmem:[%s236 + $0x219] sm:$0xff] %vm126, %v103
  %279 = vst.msk [vmem:[%s236 + $0x229] sm:$0xff] %vm126, %v104
  %280 = vst.msk [vmem:[%s236 + $0x231] sm:$0xff] %vm126, %v105
  %281 = vst.msk [vmem:[%s236 + $0x241] sm:$0xff] %vm126, %v106
  %282 = vst.msk [vmem:[%s236 + $0x249] sm:$0xff] %vm126, %v107
  %283 = vst.msk [vmem:[%s236 + $0x259] sm:$0xff] %vm126, %v108
  %284 = vst.msk [vmem:[%s236 + $0x261] sm:$0xff] %vm126, %v109
  %285 = vst.msk [vmem:[%s236 + $0x271] sm:$0xff] %vm126, %v110
  %286 = vst.msk [vmem:[%s236 + $0x279] sm:$0xff] %vm126, %v111
  %287 = vst.msk [vmem:[%s236 + $0x289] sm:$0xff] %vm126, %v112
  %288 = vst.msk [vmem:[%s236 + $0x291] sm:$0xff] %vm126, %v113
  %289 = vst.msk [vmem:[%s236 + $0x2a1] sm:$0xff] %vm126, %v114
  %290 = vst.msk [vmem:[%s236 + $0x2a9] sm:$0xff] %vm126, %v115
  %291 = vst.msk [vmem:[%s236 + $0x2b9] sm:$0xff] %vm126, %v116
  %292 = vst.msk [vmem:[%s236 + $0x2c1] sm:$0xff] %vm126, %v117
  %293 = vst.msk [vmem:[%s236 + $0x2d1] sm:$0xff] %vm126, %v118
  %294 = vst.msk [vmem:[%s236 + $0x2d9] sm:$0xff] %vm126, %v119
  %295 = vst.msk [vmem:[%s236 + $0x2e9] sm:$0xff] %vm126, %v120
  %296 = vst.msk [vmem:[%s236 + $0x2f1] sm:$0xff] %vm126, %v121
  %297 = vst.msk [vmem:[%s236 + $0x301] sm:$0xff] %vm126, %v122
  %298 = vst.msk [vmem:[%s236 + $0x309] sm:$0xff] %vm126, %v123
  %299 = vst.msk [vmem:[%s236 + $0x319] sm:$0xff] %vm126, %v124
  %300 = vst.msk [vmem:[%s236 + $0x321] sm:$0xff] %vm126, %v125
  %v301 = vld [vmem:[#allocation2] sm:$0xff]
  %v302 = vld [vmem:[#allocation2 + $0x8] sm:$0xff]
  %v303 = vld [vmem:[#allocation2 + $0x18] sm:$0xff]
  %v304 = vld [vmem:[#allocation2 + $0x20] sm:$0xff]
  %v305 = vld [vmem:[#allocation2 + $0x30] sm:$0xff]
  %v306 = vld [vmem:[#allocation2 + $0x38] sm:$0xff]
  %v307 = vld [vmem:[#allocation2 + $0x48] sm:$0xff]
  %v308 = vld [vmem:[#allocation2 + $0x50] sm:$0xff]
  %v309 = vld [vmem:[#allocation2 + $0x60] sm:$0xff]
  %v310 = vld [vmem:[#allocation2 + $0x68] sm:$0xff]
  %v311 = vld [vmem:[#allocation2 + $0x78] sm:$0xff]
  %v312 = vld [vmem:[#allocation2 + $0x80] sm:$0xff]
  %v313 = vld [vmem:[#allocation2 + $0x90] sm:$0xff]
  %v314 = vld [vmem:[#allocation2 + $0x98] sm:$0xff]
  %v315 = vld [vmem:[#allocation2 + $0xa8] sm:$0xff]
  %v316 = vld [vmem:[#allocation2 + $0xb0] sm:$0xff]
  %v317 = vld [vmem:[#allocation2 + $0xc0] sm:$0xff]
  %v318 = vld [vmem:[#allocation2 + $0xc8] sm:$0xff]
  %v319 = vld [vmem:[#allocation2 + $0xd8] sm:$0xff]
  %v320 = vld [vmem:[#allocation2 + $0xe0] sm:$0xff]
  %v321 = vld [vmem:[#allocation2 + $0xf0] sm:$0xff]
  %v322 = vld [vmem:[#allocation2 + $0xf8] sm:$0xff]
  %v323 = vld [vmem:[#allocation2 + $0x108] sm:$0xff]
  %v324 = vld [vmem:[#allocation2 + $0x110] sm:$0xff]
  %v325 = vld [vmem:[#allocation2 + $0x120] sm:$0xff]
  %v326 = vld [vmem:[#allocation2 + $0x128] sm:$0xff]
  %v327 = vld [vmem:[#allocation2 + $0x138] sm:$0xff]
  %v328 = vld [vmem:[#allocation2 + $0x140] sm:$0xff]
  %v329 = vld [vmem:[#allocation2 + $0x150] sm:$0xff]
  %v330 = vld [vmem:[#allocation2 + $0x158] sm:$0xff]
  %v331 = vld [vmem:[#allocation2 + $0x168] sm:$0xff]
  %v332 = vld [vmem:[#allocation2 + $0x170] sm:$0xff]
  %v333 = vld [vmem:[#allocation2 + $0x1b0] sm:$0xff]
  %v334 = vld [vmem:[#allocation2 + $0x1b8] sm:$0xff]
  %v335 = vld [vmem:[#allocation2 + $0x1c8] sm:$0xff]
  %v336 = vld [vmem:[#allocation2 + $0x1d0] sm:$0xff]
  %v337 = vld [vmem:[#allocation2 + $0x1e0] sm:$0xff]
  %v338 = vld [vmem:[#allocation2 + $0x1e8] sm:$0xff]
  %v339 = vld [vmem:[#allocation2 + $0x1f8] sm:$0xff]
  %v340 = vld [vmem:[#allocation2 + $0x200] sm:$0xff]
  %v341 = vld [vmem:[#allocation2 + $0x210] sm:$0xff]
  %v342 = vld [vmem:[#allocation2 + $0x218] sm:$0xff]
  %v343 = vld [vmem:[#allocation2 + $0x228] sm:$0xff]
  %v344 = vld [vmem:[#allocation2 + $0x230] sm:$0xff]
  %v345 = vld [vmem:[#allocation2 + $0x240] sm:$0xff]
  %v346 = vld [vmem:[#allocation2 + $0x248] sm:$0xff]
  %v347 = vld [vmem:[#allocation2 + $0x258] sm:$0xff]
  %v348 = vld [vmem:[#allocation2 + $0x260] sm:$0xff]
  %v349 = vld [vmem:[#allocation2 + $0x270] sm:$0xff]
  %v350 = vld [vmem:[#allocation2 + $0x278] sm:$0xff]
  %v351 = vld [vmem:[#allocation2 + $0x288] sm:$0xff]
  %v352 = vld [vmem:[#allocation2 + $0x290] sm:$0xff]
  %v353 = vld [vmem:[#allocation2 + $0x2a0] sm:$0xff]
  %v354 = vld [vmem:[#allocation2 + $0x2a8] sm:$0xff]
  %v355 = vld [vmem:[#allocation2 + $0x2b8] sm:$0xff]
  %v356 = vld [vmem:[#allocation2 + $0x2c0] sm:$0xff]
  %v357 = vld [vmem:[#allocation2 + $0x2d0] sm:$0xff]
  %v358 = vld [vmem:[#allocation2 + $0x2d8] sm:$0xff]
  %v359 = vld [vmem:[#allocation2 + $0x2e8] sm:$0xff]
  %v360 = vld [vmem:[#allocation2 + $0x2f0] sm:$0xff]
  %v361 = vld [vmem:[#allocation2 + $0x300] sm:$0xff]
  %v362 = vld [vmem:[#allocation2 + $0x308] sm:$0xff]
  %v363 = vld [vmem:[#allocation2 + $0x318] sm:$0xff]
  %v364 = vld [vmem:[#allocation2 + $0x320] sm:$0xff]
  %v365 = vld [vmem:[#allocation2 + $0x1] sm:$0xff]
  %v366 = vld [vmem:[#allocation2 + $0x9] sm:$0xff]
  %v367 = vld [vmem:[#allocation2 + $0x19] sm:$0xff]
  %v368 = vld [vmem:[#allocation2 + $0x21] sm:$0xff]
  %v369 = vld [vmem:[#allocation2 + $0x31] sm:$0xff]
  %v370 = vld [vmem:[#allocation2 + $0x39] sm:$0xff]
  %v371 = vld [vmem:[#allocation2 + $0x49] sm:$0xff]
  %v372 = vld [vmem:[#allocation2 + $0x51] sm:$0xff]
  %v373 = vld [vmem:[#allocation2 + $0x61] sm:$0xff]
  %v374 = vld [vmem:[#allocation2 + $0x69] sm:$0xff]
  %v375 = vld [vmem:[#allocation2 + $0x79] sm:$0xff]
  %v376 = vld [vmem:[#allocation2 + $0x81] sm:$0xff]
  %v377 = vld [vmem:[#allocation2 + $0x91] sm:$0xff]
  %v378 = vld [vmem:[#allocation2 + $0x99] sm:$0xff]
  %v379 = vld [vmem:[#allocation2 + $0xa9] sm:$0xff]
  %v380 = vld [vmem:[#allocation2 + $0xb1] sm:$0xff]
  %v381 = vld [vmem:[#allocation2 + $0xc1] sm:$0xff]
  %v382 = vld [vmem:[#allocation2 + $0xc9] sm:$0xff]
  %v383 = vld [vmem:[#allocation2 + $0xd9] sm:$0xff]
  %v384 = vld [vmem:[#allocation2 + $0xe1] sm:$0xff]
  %v385 = vld [vmem:[#allocation2 + $0xf1] sm:$0xff]
  %v386 = vld [vmem:[#allocation2 + $0xf9] sm:$0xff]
  %v387 = vld [vmem:[#allocation2 + $0x109] sm:$0xff]
  %v388 = vld [vmem:[#allocation2 + $0x111] sm:$0xff]
  %v389 = vld [vmem:[#allocation2 + $0x121] sm:$0xff]
  %v390 = vld [vmem:[#allocation2 + $0x129] sm:$0xff]
  %v391 = vld [vmem:[#allocation2 + $0x139] sm:$0xff]
  %v392 = vld [vmem:[#allocation2 + $0x141] sm:$0xff]
  %v393 = vld [vmem:[#allocation2 + $0x151] sm:$0xff]
  %v394 = vld [vmem:[#allocation2 + $0x159] sm:$0xff]
  %v395 = vld [vmem:[#allocation2 + $0x169] sm:$0xff]
  %v396 = vld [vmem:[#allocation2 + $0x171] sm:$0xff]
  %v397 = vld [vmem:[#allocation2 + $0x1b1] sm:$0xff]
  %v398 = vld [vmem:[#allocation2 + $0x1b9] sm:$0xff]
  %v399 = vld [vmem:[#allocation2 + $0x1c9] sm:$0xff]
  %v400 = vld [vmem:[#allocation2 + $0x1d1] sm:$0xff]
  %v401 = vld [vmem:[#allocation2 + $0x1e1] sm:$0xff]
  %v402 = vld [vmem:[#allocation2 + $0x1e9] sm:$0xff]
  %v403 = vld [vmem:[#allocation2 + $0x1f9] sm:$0xff]
  %v404 = vld [vmem:[#allocation2 + $0x201] sm:$0xff]
  %v405 = vld [vmem:[#allocation2 + $0x211] sm:$0xff]
  %v406 = vld [vmem:[#allocation2 + $0x219] sm:$0xff]
  %v407 = vld [vmem:[#allocation2 + $0x229] sm:$0xff]
  %v408 = vld [vmem:[#allocation2 + $0x231] sm:$0xff]
  %v409 = vld [vmem:[#allocation2 + $0x241] sm:$0xff]
  %v410 = vld [vmem:[#allocation2 + $0x249] sm:$0xff]
  %v411 = vld [vmem:[#allocation2 + $0x259] sm:$0xff]
  %v412 = vld [vmem:[#allocation2 + $0x261] sm:$0xff]
  %v413 = vld [vmem:[#allocation2 + $0x271] sm:$0xff]
  %v414 = vld [vmem:[#allocation2 + $0x279] sm:$0xff]
  %v415 = vld [vmem:[#allocation2 + $0x289] sm:$0xff]
  %v416 = vld [vmem:[#allocation2 + $0x291] sm:$0xff]
  %v417 = vld [vmem:[#allocation2 + $0x2a1] sm:$0xff]
  %v418 = vld [vmem:[#allocation2 + $0x2a9] sm:$0xff]
  %v419 = vld [vmem:[#allocation2 + $0x2b9] sm:$0xff]
  %v420 = vld [vmem:[#allocation2 + $0x2c1] sm:$0xff]
  %v421 = vld [vmem:[#allocation2 + $0x2d1] sm:$0xff]
  %v422 = vld [vmem:[#allocation2 + $0x2d9] sm:$0xff]
  %v423 = vld [vmem:[#allocation2 + $0x2e9] sm:$0xff]
  %v424 = vld [vmem:[#allocation2 + $0x2f1] sm:$0xff]
  %v425 = vld [vmem:[#allocation2 + $0x301] sm:$0xff]
  %v426 = vld [vmem:[#allocation2 + $0x309] sm:$0xff]
  %v427 = vld [vmem:[#allocation2 + $0x319] sm:$0xff]
  %v428 = vld [vmem:[#allocation2 + $0x321] sm:$0xff]
  %v429 = vld [vmem:[#allocation2 + $0x2] sm:$0xff]
  %v430 = vld [vmem:[#allocation2 + $0xa] sm:$0xff]
  %v431 = vld [vmem:[#allocation2 + $0x1a] sm:$0xff]
  %v432 = vld [vmem:[#allocation2 + $0x22] sm:$0xff]
  %v433 = vld [vmem:[#allocation2 + $0x32] sm:$0xff]
  %v434 = vld [vmem:[#allocation2 + $0x3a] sm:$0xff]
  %v435 = vld [vmem:[#allocation2 + $0x4a] sm:$0xff]
  %v436 = vld [vmem:[#allocation2 + $0x52] sm:$0xff]
  %v437 = vld [vmem:[#allocation2 + $0x62] sm:$0xff]
  %v438 = vld [vmem:[#allocation2 + $0x6a] sm:$0xff]
  %v439 = vld [vmem:[#allocation2 + $0x7a] sm:$0xff]
  %v440 = vld [vmem:[#allocation2 + $0x82] sm:$0xff]
  %v441 = vld [vmem:[#allocation2 + $0x92] sm:$0xff]
  %v442 = vld [vmem:[#allocation2 + $0x9a] sm:$0xff]
  %v443 = vld [vmem:[#allocation2 + $0xaa] sm:$0xff]
  %v444 = vld [vmem:[#allocation2 + $0xb2] sm:$0xff]
  %v445 = vld [vmem:[#allocation2 + $0xc2] sm:$0xff]
  %v446 = vld [vmem:[#allocation2 + $0xca] sm:$0xff]
  %v447 = vld [vmem:[#allocation2 + $0xda] sm:$0xff]
  %v448 = vld [vmem:[#allocation2 + $0xe2] sm:$0xff]
  %v449 = vld [vmem:[#allocation2 + $0xf2] sm:$0xff]
  %v450 = vld [vmem:[#allocation2 + $0xfa] sm:$0xff]
  %v451 = vld [vmem:[#allocation2 + $0x10a] sm:$0xff]
  %v452 = vld [vmem:[#allocation2 + $0x112] sm:$0xff]
  %v453 = vld [vmem:[#allocation2 + $0x122] sm:$0xff]
  %v454 = vld [vmem:[#allocation2 + $0x12a] sm:$0xff]
  %v455 = vld [vmem:[#allocation2 + $0x13a] sm:$0xff]
  %v456 = vld [vmem:[#allocation2 + $0x142] sm:$0xff]
  %v457 = vld [vmem:[#allocation2 + $0x152] sm:$0xff]
  %v458 = vld [vmem:[#allocation2 + $0x15a] sm:$0xff]
  %v459 = vld [vmem:[#allocation2 + $0x16a] sm:$0xff]
  %v460 = vld [vmem:[#allocation2 + $0x172] sm:$0xff]
  %v461 = vld [vmem:[#allocation2 + $0x1b2] sm:$0xff]
  %v462 = vld [vmem:[#allocation2 + $0x1ba] sm:$0xff]
  %v463 = vld [vmem:[#allocation2 + $0x1ca] sm:$0xff]
  %v464 = vld [vmem:[#allocation2 + $0x1d2] sm:$0xff]
  %v465 = vld [vmem:[#allocation2 + $0x1e2] sm:$0xff]
  %v466 = vld [vmem:[#allocation2 + $0x1ea] sm:$0xff]
  %v467 = vld [vmem:[#allocation2 + $0x1fa] sm:$0xff]
  %v468 = vld [vmem:[#allocation2 + $0x202] sm:$0xff]
  %v469 = vld [vmem:[#allocation2 + $0x212] sm:$0xff]
  %v470 = vld [vmem:[#allocation2 + $0x21a] sm:$0xff]
  %v471 = vld [vmem:[#allocation2 + $0x22a] sm:$0xff]
  %v472 = vld [vmem:[#allocation2 + $0x232] sm:$0xff]
  %v473 = vld [vmem:[#allocation2 + $0x242] sm:$0xff]
  %v474 = vld [vmem:[#allocation2 + $0x24a] sm:$0xff]
  %v475 = vld [vmem:[#allocation2 + $0x25a] sm:$0xff]
  %v476 = vld [vmem:[#allocation2 + $0x262] sm:$0xff]
  %v477 = vld [vmem:[#allocation2 + $0x272] sm:$0xff]
  %v478 = vld [vmem:[#allocation2 + $0x27a] sm:$0xff]
  %v479 = vld [vmem:[#allocation2 + $0x28a] sm:$0xff]
  %v480 = vld [vmem:[#allocation2 + $0x292] sm:$0xff]
  %v481 = vld [vmem:[#allocation2 + $0x2a2] sm:$0xff]
  %v482 = vld [vmem:[#allocation2 + $0x2aa] sm:$0xff]
  %v483 = vld [vmem:[#allocation2 + $0x2ba] sm:$0xff]
  %v484 = vld [vmem:[#allocation2 + $0x2c2] sm:$0xff]
  %v485 = vld [vmem:[#allocation2 + $0x2d2] sm:$0xff]
  %v486 = vld [vmem:[#allocation2 + $0x2da] sm:$0xff]
  %v487 = vld [vmem:[#allocation2 + $0x2ea] sm:$0xff]
  %v488 = vld [vmem:[#allocation2 + $0x2f2] sm:$0xff]
  %v489 = vld [vmem:[#allocation2 + $0x302] sm:$0xff]
  %v490 = vld [vmem:[#allocation2 + $0x30a] sm:$0xff]
  %v491 = vld [vmem:[#allocation2 + $0x31a] sm:$0xff]
  %v492 = vld [vmem:[#allocation2 + $0x322] sm:$0xff]
  %v493 = vld [vmem:[%s236] sm:$0xff]
  %v494 = vld [vmem:[%s236 + $0x8] sm:$0xff]
  %v495 = vld [vmem:[%s236 + $0x18] sm:$0xff]
  %v496 = vld [vmem:[%s236 + $0x20] sm:$0xff]
  %v497 = vld [vmem:[%s236 + $0x30] sm:$0xff]
  %v498 = vld [vmem:[%s236 + $0x38] sm:$0xff]
  %v499 = vld [vmem:[%s236 + $0x48] sm:$0xff]
  %v500 = vld [vmem:[%s236 + $0x50] sm:$0xff]
  %v501 = vld [vmem:[%s236 + $0x60] sm:$0xff]
  %v502 = vld [vmem:[%s236 + $0x68] sm:$0xff]
  %v503 = vld [vmem:[%s236 + $0x78] sm:$0xff]
  %v504 = vld [vmem:[%s236 + $0x80] sm:$0xff]
  %v505 = vld [vmem:[%s236 + $0x90] sm:$0xff]
  %v506 = vld [vmem:[%s236 + $0x98] sm:$0xff]
  %v507 = vld [vmem:[%s236 + $0xa8] sm:$0xff]
  %v508 = vld [vmem:[%s236 + $0xb0] sm:$0xff]
  %v509 = vld [vmem:[%s236 + $0xc0] sm:$0xff]
  %v510 = vld [vmem:[%s236 + $0xc8] sm:$0xff]
  %v511 = vld [vmem:[%s236 + $0xd8] sm:$0xff]
  %v512 = vld [vmem:[%s236 + $0xe0] sm:$0xff]
  %v513 = vld [vmem:[%s236 + $0xf0] sm:$0xff]
  %v514 = vld [vmem:[%s236 + $0xf8] sm:$0xff]
  %v515 = vld [vmem:[%s236 + $0x108] sm:$0xff]
  %v516 = vld [vmem:[%s236 + $0x110] sm:$0xff]
  %v517 = vld [vmem:[%s236 + $0x120] sm:$0xff]
  %v518 = vld [vmem:[%s236 + $0x128] sm:$0xff]
  %v519 = vld [vmem:[%s236 + $0x138] sm:$0xff]
  %v520 = vld [vmem:[%s236 + $0x140] sm:$0xff]
  %v521 = vld [vmem:[%s236 + $0x150] sm:$0xff]
  %v522 = vld [vmem:[%s236 + $0x158] sm:$0xff]
  %v523 = vld [vmem:[%s236 + $0x168] sm:$0xff]
  %v524 = vld [vmem:[%s236 + $0x170] sm:$0xff]
  %v525 = vld [vmem:[%s236 + $0x1b0] sm:$0xff]
  %v526 = vld [vmem:[%s236 + $0x1b8] sm:$0xff]
  %v527 = vld [vmem:[%s236 + $0x1c8] sm:$0xff]
  %v528 = vld [vmem:[%s236 + $0x1d0] sm:$0xff]
  %v529 = vld [vmem:[%s236 + $0x1e0] sm:$0xff]
  %v530 = vld [vmem:[%s236 + $0x1e8] sm:$0xff]
  %v531 = vld [vmem:[%s236 + $0x1f8] sm:$0xff]
  %v532 = vld [vmem:[%s236 + $0x200] sm:$0xff]
  %v533 = vld [vmem:[%s236 + $0x210] sm:$0xff]
  %v534 = vld [vmem:[%s236 + $0x218] sm:$0xff]
  %v535 = vld [vmem:[%s236 + $0x228] sm:$0xff]
  %v536 = vld [vmem:[%s236 + $0x230] sm:$0xff]
  %v537 = vld [vmem:[%s236 + $0x240] sm:$0xff]
  %v538 = vld [vmem:[%s236 + $0x248] sm:$0xff]
  %v539 = vld [vmem:[%s236 + $0x258] sm:$0xff]
  %v540 = vld [vmem:[%s236 + $0x260] sm:$0xff]
  %v541 = vld [vmem:[%s236 + $0x270] sm:$0xff]
  %v542 = vld [vmem:[%s236 + $0x278] sm:$0xff]
  %v543 = vld [vmem:[%s236 + $0x288] sm:$0xff]
  %v544 = vld [vmem:[%s236 + $0x290] sm:$0xff]
  %v545 = vld [vmem:[%s236 + $0x2a0] sm:$0xff]
  %v546 = vld [vmem:[%s236 + $0x2a8] sm:$0xff]
  %v547 = vld [vmem:[%s236 + $0x2b8] sm:$0xff]
  %v548 = vld [vmem:[%s236 + $0x2c0] sm:$0xff]
  %v549 = vld [vmem:[%s236 + $0x2d0] sm:$0xff]
  %v550 = vld [vmem:[%s236 + $0x2d8] sm:$0xff]
  %v551 = vld [vmem:[%s236 + $0x2e8] sm:$0xff]
  %v552 = vld [vmem:[%s236 + $0x2f0] sm:$0xff]
  %v553 = vld [vmem:[%s236 + $0x300] sm:$0xff]
  %v554 = vld [vmem:[%s236 + $0x308] sm:$0xff]
  %v555 = vld [vmem:[%s236 + $0x318] sm:$0xff]
  %v556 = vld [vmem:[%s236 + $0x320] sm:$0xff]
  %v557 = vld [vmem:[%s236 + $0x1] sm:$0xff]
  %v558 = vld [vmem:[%s236 + $0x9] sm:$0xff]
  %v559 = vld [vmem:[%s236 + $0x19] sm:$0xff]
  %v560 = vld [vmem:[%s236 + $0x21] sm:$0xff]
  %v561 = vld [vmem:[%s236 + $0x31] sm:$0xff]
  %v562 = vld [vmem:[%s236 + $0x39] sm:$0xff]
  %v563 = vld [vmem:[%s236 + $0x49] sm:$0xff]
  %v564 = vld [vmem:[%s236 + $0x51] sm:$0xff]
  %v565 = vld [vmem:[%s236 + $0x61] sm:$0xff]
  %v566 = vld [vmem:[%s236 + $0x69] sm:$0xff]
  %v567 = vld [vmem:[%s236 + $0x79] sm:$0xff]
  %v568 = vld [vmem:[%s236 + $0x81] sm:$0xff]
  %v569 = vld [vmem:[%s236 + $0x91] sm:$0xff]
  %v570 = vld [vmem:[%s236 + $0x99] sm:$0xff]
  %v571 = vld [vmem:[%s236 + $0xa9] sm:$0xff]
  %v572 = vld [vmem:[%s236 + $0xb1] sm:$0xff]
  %v573 = vld [vmem:[%s236 + $0xc1] sm:$0xff]
  %v574 = vld [vmem:[%s236 + $0xc9] sm:$0xff]
  %v575 = vld [vmem:[%s236 + $0xd9] sm:$0xff]
  %v576 = vld [vmem:[%s236 + $0xe1] sm:$0xff]
  %v577 = vld [vmem:[%s236 + $0xf1] sm:$0xff]
  %v578 = vld [vmem:[%s236 + $0xf9] sm:$0xff]
  %v579 = vld [vmem:[%s236 + $0x109] sm:$0xff]
  %v580 = vld [vmem:[%s236 + $0x111] sm:$0xff]
  %v581 = vld [vmem:[%s236 + $0x121] sm:$0xff]
  %v582 = vld [vmem:[%s236 + $0x129] sm:$0xff]
  %v583 = vld [vmem:[%s236 + $0x139] sm:$0xff]
  %v584 = vld [vmem:[%s236 + $0x141] sm:$0xff]
  %v585 = vld [vmem:[%s236 + $0x151] sm:$0xff]
  %v586 = vld [vmem:[%s236 + $0x159] sm:$0xff]
  %v587 = vld [vmem:[%s236 + $0x169] sm:$0xff]
  %v588 = vld [vmem:[%s236 + $0x171] sm:$0xff]
  %v589 = vld [vmem:[%s236 + $0x1b1] sm:$0xff]
  %v590 = vld [vmem:[%s236 + $0x1b9] sm:$0xff]
  %v591 = vld [vmem:[%s236 + $0x1c9] sm:$0xff]
  %v592 = vld [vmem:[%s236 + $0x1d1] sm:$0xff]
  %v593 = vld [vmem:[%s236 + $0x1e1] sm:$0xff]
  %v594 = vld [vmem:[%s236 + $0x1e9] sm:$0xff]
  %v595 = vld [vmem:[%s236 + $0x1f9] sm:$0xff]
  %v596 = vld [vmem:[%s236 + $0x201] sm:$0xff]
  %v597 = vld [vmem:[%s236 + $0x211] sm:$0xff]
  %v598 = vld [vmem:[%s236 + $0x219] sm:$0xff]
  %v599 = vld [vmem:[%s236 + $0x229] sm:$0xff]
  %v600 = vld [vmem:[%s236 + $0x231] sm:$0xff]
  %v601 = vld [vmem:[%s236 + $0x241] sm:$0xff]
  %v602 = vld [vmem:[%s236 + $0x249] sm:$0xff]
  %v603 = vld [vmem:[%s236 + $0x259] sm:$0xff]
  %v604 = vld [vmem:[%s236 + $0x261] sm:$0xff]
  %v605 = vld [vmem:[%s236 + $0x271] sm:$0xff]
  %v606 = vld [vmem:[%s236 + $0x279] sm:$0xff]
  %v607 = vld [vmem:[%s236 + $0x289] sm:$0xff]
  %v608 = vld [vmem:[%s236 + $0x291] sm:$0xff]
  %v609 = vld [vmem:[%s236 + $0x2a1] sm:$0xff]
  %v610 = vld [vmem:[%s236 + $0x2a9] sm:$0xff]
  %v611 = vld [vmem:[%s236 + $0x2b9] sm:$0xff]
  %v612 = vld [vmem:[%s236 + $0x2c1] sm:$0xff]
  %v613 = vld [vmem:[%s236 + $0x2d1] sm:$0xff]
  %v614 = vld [vmem:[%s236 + $0x2d9] sm:$0xff]
  %v615 = vld [vmem:[%s236 + $0x2e9] sm:$0xff]
  %v616 = vld [vmem:[%s236 + $0x2f1] sm:$0xff]
  %v617 = vld [vmem:[%s236 + $0x301] sm:$0xff]
  %v618 = vld [vmem:[%s236 + $0x309] sm:$0xff]
  %v619 = vld [vmem:[%s236 + $0x319] sm:$0xff]
  %v620 = vld [vmem:[%s236 + $0x321] sm:$0xff]
  %v621 = vld [vmem:[%s236 + $0x2] sm:$0xff]
  %v622 = vld [vmem:[%s236 + $0xa] sm:$0xff]
  %v623 = vld [vmem:[%s236 + $0x1a] sm:$0xff]
  %v624 = vld [vmem:[%s236 + $0x22] sm:$0xff]
  %v625 = vld [vmem:[%s236 + $0x32] sm:$0xff]
  %v626 = vld [vmem:[%s236 + $0x3a] sm:$0xff]
  %v627 = vld [vmem:[%s236 + $0x4a] sm:$0xff]
  %v628 = vld [vmem:[%s236 + $0x52] sm:$0xff]
  %v629 = vld [vmem:[%s236 + $0x62] sm:$0xff]
  %v630 = vld [vmem:[%s236 + $0x6a] sm:$0xff]
  %v631 = vld [vmem:[%s236 + $0x7a] sm:$0xff]
  %v632 = vld [vmem:[%s236 + $0x82] sm:$0xff]
  %v633 = vld [vmem:[%s236 + $0x92] sm:$0xff]
  %v634 = vld [vmem:[%s236 + $0x9a] sm:$0xff]
  %v635 = vld [vmem:[%s236 + $0xaa] sm:$0xff]
  %v636 = vld [vmem:[%s236 + $0xb2] sm:$0xff]
  %v637 = vld [vmem:[%s236 + $0xc2] sm:$0xff]
  %v638 = vld [vmem:[%s236 + $0xca] sm:$0xff]
  %v639 = vld [vmem:[%s236 + $0xda] sm:$0xff]
  %v640 = vld [vmem:[%s236 + $0xe2] sm:$0xff]
  %v641 = vld [vmem:[%s236 + $0xf2] sm:$0xff]
  %v642 = vld [vmem:[%s236 + $0xfa] sm:$0xff]
  %v643 = vld [vmem:[%s236 + $0x10a] sm:$0xff]
  %v644 = vld [vmem:[%s236 + $0x112] sm:$0xff]
  %v645 = vld [vmem:[%s236 + $0x122] sm:$0xff]
  %v646 = vld [vmem:[%s236 + $0x12a] sm:$0xff]
  %v647 = vld [vmem:[%s236 + $0x13a] sm:$0xff]
  %v648 = vld [vmem:[%s236 + $0x142] sm:$0xff]
  %v649 = vld [vmem:[%s236 + $0x152] sm:$0xff]
  %v650 = vld [vmem:[%s236 + $0x15a] sm:$0xff]
  %v651 = vld [vmem:[%s236 + $0x16a] sm:$0xff]
  %v652 = vld [vmem:[%s236 + $0x172] sm:$0xff]
  %v653 = vld [vmem:[%s236 + $0x1b2] sm:$0xff]
  %v654 = vld [vmem:[%s236 + $0x1ba] sm:$0xff]
  %v655 = vld [vmem:[%s236 + $0x1ca] sm:$0xff]
  %v656 = vld [vmem:[%s236 + $0x1d2] sm:$0xff]
  %v657 = vld [vmem:[%s236 + $0x1e2] sm:$0xff]
  %v658 = vld [vmem:[%s236 + $0x1ea] sm:$0xff]
  %v659 = vld [vmem:[%s236 + $0x1fa] sm:$0xff]
  %v660 = vld [vmem:[%s236 + $0x202] sm:$0xff]
  %v661 = vld [vmem:[%s236 + $0x212] sm:$0xff]
  %v662 = vld [vmem:[%s236 + $0x21a] sm:$0xff]
  %v663 = vld [vmem:[%s236 + $0x22a] sm:$0xff]
  %v664 = vld [vmem:[%s236 + $0x232] sm:$0xff]
  %v665 = vld [vmem:[%s236 + $0x242] sm:$0xff]
  %v666 = vld [vmem:[%s236 + $0x24a] sm:$0xff]
  %v667 = vld [vmem:[%s236 + $0x25a] sm:$0xff]
  %v668 = vld [vmem:[%s236 + $0x262] sm:$0xff]
  %v669 = vld [vmem:[%s236 + $0x272] sm:$0xff]
  %v670 = vld [vmem:[%s236 + $0x27a] sm:$0xff]
  %v671 = vld [vmem:[%s236 + $0x28a] sm:$0xff]
  %v672 = vld [vmem:[%s236 + $0x292] sm:$0xff]
  %v673 = vld [vmem:[%s236 + $0x2a2] sm:$0xff]
  %v674 = vld [vmem:[%s236 + $0x2aa] sm:$0xff]
  %v675 = vld [vmem:[%s236 + $0x2ba] sm:$0xff]
  %v676 = vld [vmem:[%s236 + $0x2c2] sm:$0xff]
  %v677 = vld [vmem:[%s236 + $0x2d2] sm:$0xff]
  %v678 = vld [vmem:[%s236 + $0x2da] sm:$0xff]
  %v679 = vld [vmem:[%s236 + $0x2ea] sm:$0xff]
  %v680 = vld [vmem:[%s236 + $0x2f2] sm:$0xff]
  %v681 = vld [vmem:[%s236 + $0x302] sm:$0xff]
  %v682 = vld [vmem:[%s236 + $0x30a] sm:$0xff]
  %v683 = vld [vmem:[%s236 + $0x31a] sm:$0xff]
  %v684 = vld [vmem:[%s236 + $0x322] sm:$0xff]
  %s685 = scalar_lea.vmem [#allocation2], 48
  %v686 = vld [vmem:[%s685] sm:$0xff]
  %v687 = vld [vmem:[%s685 + $0x8] sm:$0xff]
  %v688 = vld [vmem:[%s685 + $0x18] sm:$0xff]
  %v689 = vld [vmem:[%s685 + $0x20] sm:$0xff]
  %v690 = vld [vmem:[%s685 + $0x30] sm:$0xff]
  %v691 = vld [vmem:[%s685 + $0x38] sm:$0xff]
  %v692 = vld [vmem:[%s685 + $0x48] sm:$0xff]
  %v693 = vld [vmem:[%s685 + $0x50] sm:$0xff]
  %v694 = vld [vmem:[%s685 + $0x60] sm:$0xff]
  %v695 = vld [vmem:[%s685 + $0x68] sm:$0xff]
  %v696 = vld [vmem:[%s685 + $0x78] sm:$0xff]
  %v697 = vld [vmem:[%s685 + $0x80] sm:$0xff]
  %v698 = vld [vmem:[%s685 + $0x90] sm:$0xff]
  %v699 = vld [vmem:[%s685 + $0x98] sm:$0xff]
  %v700 = vld [vmem:[%s685 + $0xa8] sm:$0xff]
  %v701 = vld [vmem:[%s685 + $0xb0] sm:$0xff]
  %v702 = vld [vmem:[%s685 + $0xc0] sm:$0xff]
  %v703 = vld [vmem:[%s685 + $0xc8] sm:$0xff]
  %v704 = vld [vmem:[%s685 + $0xd8] sm:$0xff]
  %v705 = vld [vmem:[%s685 + $0xe0] sm:$0xff]
  %v706 = vld [vmem:[%s685 + $0xf0] sm:$0xff]
  %v707 = vld [vmem:[%s685 + $0xf8] sm:$0xff]
  %v708 = vld [vmem:[%s685 + $0x108] sm:$0xff]
  %v709 = vld [vmem:[%s685 + $0x110] sm:$0xff]
  %v710 = vld [vmem:[%s685 + $0x120] sm:$0xff]
  %v711 = vld [vmem:[%s685 + $0x128] sm:$0xff]
  %v712 = vld [vmem:[%s685 + $0x138] sm:$0xff]
  %v713 = vld [vmem:[%s685 + $0x140] sm:$0xff]
  %v714 = vld [vmem:[%s685 + $0x150] sm:$0xff]
  %v715 = vld [vmem:[%s685 + $0x158] sm:$0xff]
  %v716 = vld [vmem:[%s685 + $0x168] sm:$0xff]
  %v717 = vld [vmem:[%s685 + $0x170] sm:$0xff]
  %v718 = vld [vmem:[%s685 + $0x1b0] sm:$0xff]
  %v719 = vld [vmem:[%s685 + $0x1b8] sm:$0xff]
  %v720 = vld [vmem:[%s685 + $0x1c8] sm:$0xff]
  %v721 = vld [vmem:[%s685 + $0x1d0] sm:$0xff]
  %v722 = vld [vmem:[%s685 + $0x1e0] sm:$0xff]
  %v723 = vld [vmem:[%s685 + $0x1e8] sm:$0xff]
  %v724 = vld [vmem:[%s685 + $0x1f8] sm:$0xff]
  %v725 = vld [vmem:[%s685 + $0x200] sm:$0xff]
  %v726 = vld [vmem:[%s685 + $0x210] sm:$0xff]
  %v727 = vld [vmem:[%s685 + $0x218] sm:$0xff]
  %v728 = vld [vmem:[%s685 + $0x228] sm:$0xff]
  %v729 = vld [vmem:[%s685 + $0x230] sm:$0xff]
  %v730 = vld [vmem:[%s685 + $0x240] sm:$0xff]
  %v731 = vld [vmem:[%s685 + $0x248] sm:$0xff]
  %v732 = vld [vmem:[%s685 + $0x258] sm:$0xff]
  %v733 = vld [vmem:[%s685 + $0x260] sm:$0xff]
  %v734 = vld [vmem:[%s685 + $0x270] sm:$0xff]
  %v735 = vld [vmem:[%s685 + $0x278] sm:$0xff]
  %v736 = vld [vmem:[%s685 + $0x288] sm:$0xff]
  %v737 = vld [vmem:[%s685 + $0x290] sm:$0xff]
  %v738 = vld [vmem:[%s685 + $0x2a0] sm:$0xff]
  %v739 = vld [vmem:[%s685 + $0x2a8] sm:$0xff]
  %v740 = vld [vmem:[%s685 + $0x2b8] sm:$0xff]
  %v741 = vld [vmem:[%s685 + $0x2c0] sm:$0xff]
  %v742 = vld [vmem:[%s685 + $0x2d0] sm:$0xff]
  %v743 = vld [vmem:[%s685 + $0x2d8] sm:$0xff]
  %v744 = vld [vmem:[%s685 + $0x2e8] sm:$0xff]
  %v745 = vld [vmem:[%s685 + $0x2f0] sm:$0xff]
  %v746 = vld [vmem:[%s685 + $0x300] sm:$0xff]
  %v747 = vld [vmem:[%s685 + $0x308] sm:$0xff]
  %v748 = vld [vmem:[%s685 + $0x318] sm:$0xff]
  %v749 = vld [vmem:[%s685 + $0x320] sm:$0xff]
  %v750 = vld [vmem:[%s685 + $0x1] sm:$0xff]
  %v751 = vld [vmem:[%s685 + $0x9] sm:$0xff]
  %v752 = vld [vmem:[%s685 + $0x19] sm:$0xff]
  %v753 = vld [vmem:[%s685 + $0x21] sm:$0xff]
  %v754 = vld [vmem:[%s685 + $0x31] sm:$0xff]
  %v755 = vld [vmem:[%s685 + $0x39] sm:$0xff]
  %v756 = vld [vmem:[%s685 + $0x49] sm:$0xff]
  %v757 = vld [vmem:[%s685 + $0x51] sm:$0xff]
  %v758 = vld [vmem:[%s685 + $0x61] sm:$0xff]
  %v759 = vld [vmem:[%s685 + $0x69] sm:$0xff]
  %v760 = vld [vmem:[%s685 + $0x79] sm:$0xff]
  %v761 = vld [vmem:[%s685 + $0x81] sm:$0xff]
  %v762 = vld [vmem:[%s685 + $0x91] sm:$0xff]
  %v763 = vld [vmem:[%s685 + $0x99] sm:$0xff]
  %v764 = vld [vmem:[%s685 + $0xa9] sm:$0xff]
  %v765 = vld [vmem:[%s685 + $0xb1] sm:$0xff]
  %v766 = vld [vmem:[%s685 + $0xc1] sm:$0xff]
  %v767 = vld [vmem:[%s685 + $0xc9] sm:$0xff]
  %v768 = vld [vmem:[%s685 + $0xd9] sm:$0xff]
  %v769 = vld [vmem:[%s685 + $0xe1] sm:$0xff]
  %v770 = vld [vmem:[%s685 + $0xf1] sm:$0xff]
  %v771 = vld [vmem:[%s685 + $0xf9] sm:$0xff]
  %v772 = vld [vmem:[%s685 + $0x109] sm:$0xff]
  %v773 = vld [vmem:[%s685 + $0x111] sm:$0xff]
  %v774 = vld [vmem:[%s685 + $0x121] sm:$0xff]
  %v775 = vld [vmem:[%s685 + $0x129] sm:$0xff]
  %v776 = vld [vmem:[%s685 + $0x139] sm:$0xff]
  %v777 = vld [vmem:[%s685 + $0x141] sm:$0xff]
  %v778 = vld [vmem:[%s685 + $0x151] sm:$0xff]
  %v779 = vld [vmem:[%s685 + $0x159] sm:$0xff]
  %v780 = vld [vmem:[%s685 + $0x169] sm:$0xff]
  %v781 = vld [vmem:[%s685 + $0x171] sm:$0xff]
  %v782 = vld [vmem:[%s685 + $0x1b1] sm:$0xff]
  %v783 = vld [vmem:[%s685 + $0x1b9] sm:$0xff]
  %v784 = vld [vmem:[%s685 + $0x1c9] sm:$0xff]
  %v785 = vld [vmem:[%s685 + $0x1d1] sm:$0xff]
  %v786 = vld [vmem:[%s685 + $0x1e1] sm:$0xff]
  %v787 = vld [vmem:[%s685 + $0x1e9] sm:$0xff]
  %v788 = vld [vmem:[%s685 + $0x1f9] sm:$0xff]
  %v789 = vld [vmem:[%s685 + $0x201] sm:$0xff]
  %v790 = vld [vmem:[%s685 + $0x211] sm:$0xff]
  %v791 = vld [vmem:[%s685 + $0x219] sm:$0xff]
  %v792 = vld [vmem:[%s685 + $0x229] sm:$0xff]
  %v793 = vld [vmem:[%s685 + $0x231] sm:$0xff]
  %v794 = vld [vmem:[%s685 + $0x241] sm:$0xff]
  %v795 = vld [vmem:[%s685 + $0x249] sm:$0xff]
  %v796 = vld [vmem:[%s685 + $0x259] sm:$0xff]
  %v797 = vld [vmem:[%s685 + $0x261] sm:$0xff]
  %v798 = vld [vmem:[%s685 + $0x271] sm:$0xff]
  %v799 = vld [vmem:[%s685 + $0x279] sm:$0xff]
  %v800 = vld [vmem:[%s685 + $0x289] sm:$0xff]
  %v801 = vld [vmem:[%s685 + $0x291] sm:$0xff]
  %v802 = vld [vmem:[%s685 + $0x2a1] sm:$0xff]
  %v803 = vld [vmem:[%s685 + $0x2a9] sm:$0xff]
  %v804 = vld [vmem:[%s685 + $0x2b9] sm:$0xff]
  %v805 = vld [vmem:[%s685 + $0x2c1] sm:$0xff]
  %v806 = vld [vmem:[%s685 + $0x2d1] sm:$0xff]
  %v807 = vld [vmem:[%s685 + $0x2d9] sm:$0xff]
  %v808 = vld [vmem:[%s685 + $0x2e9] sm:$0xff]
  %v809 = vld [vmem:[%s685 + $0x2f1] sm:$0xff]
  %v810 = vld [vmem:[%s685 + $0x301] sm:$0xff]
  %v811 = vld [vmem:[%s685 + $0x309] sm:$0xff]
  %v812 = vld [vmem:[%s685 + $0x319] sm:$0xff]
  %v813 = vld [vmem:[%s685 + $0x321] sm:$0xff]
  %v814 = vld [vmem:[%s685 + $0x2] sm:$0xff]
  %v815 = vld [vmem:[%s685 + $0xa] sm:$0xff]
  %v816 = vld [vmem:[%s685 + $0x1a] sm:$0xff]
  %v817 = vld [vmem:[%s685 + $0x22] sm:$0xff]
  %v818 = vld [vmem:[%s685 + $0x32] sm:$0xff]
  %v819 = vld [vmem:[%s685 + $0x3a] sm:$0xff]
  %v820 = vld [vmem:[%s685 + $0x4a] sm:$0xff]
  %v821 = vld [vmem:[%s685 + $0x52] sm:$0xff]
  %v822 = vld [vmem:[%s685 + $0x62] sm:$0xff]
  %v823 = vld [vmem:[%s685 + $0x6a] sm:$0xff]
  %v824 = vld [vmem:[%s685 + $0x7a] sm:$0xff]
  %v825 = vld [vmem:[%s685 + $0x82] sm:$0xff]
  %v826 = vld [vmem:[%s685 + $0x92] sm:$0xff]
  %v827 = vld [vmem:[%s685 + $0x9a] sm:$0xff]
  %v828 = vld [vmem:[%s685 + $0xaa] sm:$0xff]
  %v829 = vld [vmem:[%s685 + $0xb2] sm:$0xff]
  %v830 = vld [vmem:[%s685 + $0xc2] sm:$0xff]
  %v831 = vld [vmem:[%s685 + $0xca] sm:$0xff]
  %v832 = vld [vmem:[%s685 + $0xda] sm:$0xff]
  %v833 = vld [vmem:[%s685 + $0xe2] sm:$0xff]
  %v834 = vld [vmem:[%s685 + $0xf2] sm:$0xff]
  %v835 = vld [vmem:[%s685 + $0xfa] sm:$0xff]
  %v836 = vld [vmem:[%s685 + $0x10a] sm:$0xff]
  %v837 = vld [vmem:[%s685 + $0x112] sm:$0xff]
  %v838 = vld [vmem:[%s685 + $0x122] sm:$0xff]
  %v839 = vld [vmem:[%s685 + $0x12a] sm:$0xff]
  %v840 = vld [vmem:[%s685 + $0x13a] sm:$0xff]
  %v841 = vld [vmem:[%s685 + $0x142] sm:$0xff]
  %v842 = vld [vmem:[%s685 + $0x152] sm:$0xff]
  %v843 = vld [vmem:[%s685 + $0x15a] sm:$0xff]
  %v844 = vld [vmem:[%s685 + $0x16a] sm:$0xff]
  %v845 = vld [vmem:[%s685 + $0x172] sm:$0xff]
  %v846 = vld [vmem:[%s685 + $0x1b2] sm:$0xff]
  %v847 = vld [vmem:[%s685 + $0x1ba] sm:$0xff]
  %v848 = vld [vmem:[%s685 + $0x1ca] sm:$0xff]
  %v849 = vld [vmem:[%s685 + $0x1d2] sm:$0xff]
  %v850 = vld [vmem:[%s685 + $0x1e2] sm:$0xff]
  %v851 = vld [vmem:[%s685 + $0x1ea] sm:$0xff]
  %v852 = vld [vmem:[%s685 + $0x1fa] sm:$0xff]
  %v853 = vld [vmem:[%s685 + $0x202] sm:$0xff]
  %v854 = vld [vmem:[%s685 + $0x212] sm:$0xff]
  %v855 = vld [vmem:[%s685 + $0x21a] sm:$0xff]
  %v856 = vld [vmem:[%s685 + $0x22a] sm:$0xff]
  %v857 = vld [vmem:[%s685 + $0x232] sm:$0xff]
  %v858 = vld [vmem:[%s685 + $0x242] sm:$0xff]
  %v859 = vld [vmem:[%s685 + $0x24a] sm:$0xff]
  %v860 = vld [vmem:[%s685 + $0x25a] sm:$0xff]
  %v861 = vld [vmem:[%s685 + $0x262] sm:$0xff]
  %v862 = vld [vmem:[%s685 + $0x272] sm:$0xff]
  %v863 = vld [vmem:[%s685 + $0x27a] sm:$0xff]
  %v864 = vld [vmem:[%s685 + $0x28a] sm:$0xff]
  %v865 = vld [vmem:[%s685 + $0x292] sm:$0xff]
  %v866 = vld [vmem:[%s685 + $0x2a2] sm:$0xff]
  %v867 = vld [vmem:[%s685 + $0x2aa] sm:$0xff]
  %v868 = vld [vmem:[%s685 + $0x2ba] sm:$0xff]
  %v869 = vld [vmem:[%s685 + $0x2c2] sm:$0xff]
  %v870 = vld [vmem:[%s685 + $0x2d2] sm:$0xff]
  %v871 = vld [vmem:[%s685 + $0x2da] sm:$0xff]
  %v872 = vld [vmem:[%s685 + $0x2ea] sm:$0xff]
  %v873 = vld [vmem:[%s685 + $0x2f2] sm:$0xff]
  %v874 = vld [vmem:[%s685 + $0x302] sm:$0xff]
  %v875 = vld [vmem:[%s685 + $0x30a] sm:$0xff]
  %v876 = vld [vmem:[%s685 + $0x31a] sm:$0xff]
  %v877 = vld [vmem:[%s685 + $0x322] sm:$0xff]
  %942 = vrot.lane.b32.xlu0 %v365, 3
  %v943 = vpop.permute.xlu0 %942
  %944 = vrot.lane.b32.xlu0 %v366, 3
  %v945 = vpop.permute.xlu0 %944
  %946 = vrot.lane.b32.xlu0 %v367, 3
  %v947 = vpop.permute.xlu0 %946
  %948 = vrot.lane.b32.xlu0 %v368, 3
  %v949 = vpop.permute.xlu0 %948
  %950 = vrot.lane.b32.xlu0 %v369, 3
  %v951 = vpop.permute.xlu0 %950
  %952 = vrot.lane.b32.xlu0 %v370, 3
  %v953 = vpop.permute.xlu0 %952
  %954 = vrot.lane.b32.xlu0 %v371, 3
  %v955 = vpop.permute.xlu0 %954
  %956 = vrot.lane.b32.xlu0 %v372, 3
  %v957 = vpop.permute.xlu0 %956
  %958 = vrot.lane.b32.xlu0 %v373, 3
  %v959 = vpop.permute.xlu0 %958
  %960 = vrot.lane.b32.xlu0 %v374, 3
  %v961 = vpop.permute.xlu0 %960
  %962 = vrot.lane.b32.xlu0 %v375, 3
  %v963 = vpop.permute.xlu0 %962
  %964 = vrot.lane.b32.xlu0 %v376, 3
  %v965 = vpop.permute.xlu0 %964
  %966 = vrot.lane.b32.xlu0 %v377, 3
  %v967 = vpop.permute.xlu0 %966
  %968 = vrot.lane.b32.xlu0 %v378, 3
  %v969 = vpop.permute.xlu0 %968
  %970 = vrot.lane.b32.xlu0 %v379, 3
  %v971 = vpop.permute.xlu0 %970
  %972 = vrot.lane.b32.xlu0 %v380, 3
  %v973 = vpop.permute.xlu0 %972
  %974 = vrot.lane.b32.xlu0 %v381, 3
  %v975 = vpop.permute.xlu0 %974
  %976 = vrot.lane.b32.xlu0 %v382, 3
  %v977 = vpop.permute.xlu0 %976
  %978 = vrot.lane.b32.xlu0 %v383, 3
  %v979 = vpop.permute.xlu0 %978
  %980 = vrot.lane.b32.xlu0 %v384, 3
  %v981 = vpop.permute.xlu0 %980
  %982 = vrot.lane.b32.xlu0 %v385, 3
  %v983 = vpop.permute.xlu0 %982
  %984 = vrot.lane.b32.xlu0 %v386, 3
  %v985 = vpop.permute.xlu0 %984
  %986 = vrot.lane.b32.xlu0 %v387, 3
  %v987 = vpop.permute.xlu0 %986
  %988 = vrot.lane.b32.xlu0 %v388, 3
  %v989 = vpop.permute.xlu0 %988
  %990 = vrot.lane.b32.xlu0 %v389, 3
  %v991 = vpop.permute.xlu0 %990
  %992 = vrot.lane.b32.xlu0 %v390, 3
  %v993 = vpop.permute.xlu0 %992
  %994 = vrot.lane.b32.xlu0 %v391, 3
  %v995 = vpop.permute.xlu0 %994
  %996 = vrot.lane.b32.xlu0 %v392, 3
  %v997 = vpop.permute.xlu0 %996
  %998 = vrot.lane.b32.xlu0 %v393, 3
  %v999 = vpop.permute.xlu0 %998
  %1000 = vrot.lane.b32.xlu0 %v394, 3
  %v1001 = vpop.permute.xlu0 %1000
  %1002 = vrot.lane.b32.xlu0 %v395, 3
  %v1003 = vpop.permute.xlu0 %1002
  %1004 = vrot.lane.b32.xlu0 %v396, 3
  %v1005 = vpop.permute.xlu0 %1004
  %1006 = vrot.lane.b32.xlu0 %v397, 3
  %v1007 = vpop.permute.xlu0 %1006
  %1008 = vrot.lane.b32.xlu0 %v398, 3
  %v1009 = vpop.permute.xlu0 %1008
  %1010 = vrot.lane.b32.xlu0 %v399, 3
  %v1011 = vpop.permute.xlu0 %1010
  %1012 = vrot.lane.b32.xlu0 %v400, 3
  %v1013 = vpop.permute.xlu0 %1012
  %1014 = vrot.lane.b32.xlu0 %v401, 3
  %v1015 = vpop.permute.xlu0 %1014
  %1016 = vrot.lane.b32.xlu0 %v402, 3
  %v1017 = vpop.permute.xlu0 %1016
  %1018 = vrot.lane.b32.xlu0 %v403, 3
  %v1019 = vpop.permute.xlu0 %1018
  %1020 = vrot.lane.b32.xlu0 %v404, 3
  %v1021 = vpop.permute.xlu0 %1020
  %1022 = vrot.lane.b32.xlu0 %v405, 3
  %v1023 = vpop.permute.xlu0 %1022
  %1024 = vrot.lane.b32.xlu0 %v406, 3
  %v1025 = vpop.permute.xlu0 %1024
  %1026 = vrot.lane.b32.xlu0 %v407, 3
  %v1027 = vpop.permute.xlu0 %1026
  %1028 = vrot.lane.b32.xlu0 %v408, 3
  %v1029 = vpop.permute.xlu0 %1028
  %1030 = vrot.lane.b32.xlu0 %v409, 3
  %v1031 = vpop.permute.xlu0 %1030
  %1032 = vrot.lane.b32.xlu0 %v410, 3
  %v1033 = vpop.permute.xlu0 %1032
  %1034 = vrot.lane.b32.xlu0 %v411, 3
  %v1035 = vpop.permute.xlu0 %1034
  %1036 = vrot.lane.b32.xlu0 %v412, 3
  %v1037 = vpop.permute.xlu0 %1036
  %1038 = vrot.lane.b32.xlu0 %v413, 3
  %v1039 = vpop.permute.xlu0 %1038
  %1040 = vrot.lane.b32.xlu0 %v414, 3
  %v1041 = vpop.permute.xlu0 %1040
  %1042 = vrot.lane.b32.xlu0 %v415, 3
  %v1043 = vpop.permute.xlu0 %1042
  %1044 = vrot.lane.b32.xlu0 %v416, 3
  %v1045 = vpop.permute.xlu0 %1044
  %1046 = vrot.lane.b32.xlu0 %v417, 3
  %v1047 = vpop.permute.xlu0 %1046
  %1048 = vrot.lane.b32.xlu0 %v418, 3
  %v1049 = vpop.permute.xlu0 %1048
  %1050 = vrot.lane.b32.xlu0 %v419, 3
  %v1051 = vpop.permute.xlu0 %1050
  %1052 = vrot.lane.b32.xlu0 %v420, 3
  %v1053 = vpop.permute.xlu0 %1052
  %1054 = vrot.lane.b32.xlu0 %v421, 3
  %v1055 = vpop.permute.xlu0 %1054
  %1056 = vrot.lane.b32.xlu0 %v422, 3
  %v1057 = vpop.permute.xlu0 %1056
  %1058 = vrot.lane.b32.xlu0 %v423, 3
  %v1059 = vpop.permute.xlu0 %1058
  %1060 = vrot.lane.b32.xlu0 %v424, 3
  %v1061 = vpop.permute.xlu0 %1060
  %1062 = vrot.lane.b32.xlu0 %v425, 3
  %v1063 = vpop.permute.xlu0 %1062
  %1064 = vrot.lane.b32.xlu0 %v426, 3
  %v1065 = vpop.permute.xlu0 %1064
  %1066 = vrot.lane.b32.xlu0 %v427, 3
  %v1067 = vpop.permute.xlu0 %1066
  %1068 = vrot.lane.b32.xlu0 %v428, 3
  %v1069 = vpop.permute.xlu0 %1068
  %1198 = vrot.lane.b32.xlu0 %v429, 6
  %v1199 = vpop.permute.xlu0 %1198
  %1200 = vrot.lane.b32.xlu0 %v430, 6
  %v1201 = vpop.permute.xlu0 %1200
  %1202 = vrot.lane.b32.xlu0 %v431, 6
  %v1203 = vpop.permute.xlu0 %1202
  %1204 = vrot.lane.b32.xlu0 %v432, 6
  %v1205 = vpop.permute.xlu0 %1204
  %1206 = vrot.lane.b32.xlu0 %v433, 6
  %v1207 = vpop.permute.xlu0 %1206
  %1208 = vrot.lane.b32.xlu0 %v434, 6
  %v1209 = vpop.permute.xlu0 %1208
  %1210 = vrot.lane.b32.xlu0 %v435, 6
  %v1211 = vpop.permute.xlu0 %1210
  %1212 = vrot.lane.b32.xlu0 %v436, 6
  %v1213 = vpop.permute.xlu0 %1212
  %1214 = vrot.lane.b32.xlu0 %v437, 6
  %v1215 = vpop.permute.xlu0 %1214
  %1216 = vrot.lane.b32.xlu0 %v438, 6
  %v1217 = vpop.permute.xlu0 %1216
  %1218 = vrot.lane.b32.xlu0 %v439, 6
  %v1219 = vpop.permute.xlu0 %1218
  %1220 = vrot.lane.b32.xlu0 %v440, 6
  %v1221 = vpop.permute.xlu0 %1220
  %1222 = vrot.lane.b32.xlu0 %v441, 6
  %v1223 = vpop.permute.xlu0 %1222
  %1224 = vrot.lane.b32.xlu0 %v442, 6
  %v1225 = vpop.permute.xlu0 %1224
  %1226 = vrot.lane.b32.xlu0 %v443, 6
  %v1227 = vpop.permute.xlu0 %1226
  %1228 = vrot.lane.b32.xlu0 %v444, 6
  %v1229 = vpop.permute.xlu0 %1228
  %1230 = vrot.lane.b32.xlu0 %v445, 6
  %v1231 = vpop.permute.xlu0 %1230
  %1232 = vrot.lane.b32.xlu0 %v446, 6
  %v1233 = vpop.permute.xlu0 %1232
  %1234 = vrot.lane.b32.xlu0 %v447, 6
  %v1235 = vpop.permute.xlu0 %1234
  %1236 = vrot.lane.b32.xlu0 %v448, 6
  %v1237 = vpop.permute.xlu0 %1236
  %1238 = vrot.lane.b32.xlu0 %v449, 6
  %v1239 = vpop.permute.xlu0 %1238
  %1240 = vrot.lane.b32.xlu0 %v450, 6
  %v1241 = vpop.permute.xlu0 %1240
  %1242 = vrot.lane.b32.xlu0 %v451, 6
  %v1243 = vpop.permute.xlu0 %1242
  %1244 = vrot.lane.b32.xlu0 %v452, 6
  %v1245 = vpop.permute.xlu0 %1244
  %1246 = vrot.lane.b32.xlu0 %v453, 6
  %v1247 = vpop.permute.xlu0 %1246
  %1248 = vrot.lane.b32.xlu0 %v454, 6
  %v1249 = vpop.permute.xlu0 %1248
  %1250 = vrot.lane.b32.xlu0 %v455, 6
  %v1251 = vpop.permute.xlu0 %1250
  %1252 = vrot.lane.b32.xlu0 %v456, 6
  %v1253 = vpop.permute.xlu0 %1252
  %1254 = vrot.lane.b32.xlu0 %v457, 6
  %v1255 = vpop.permute.xlu0 %1254
  %1256 = vrot.lane.b32.xlu0 %v458, 6
  %v1257 = vpop.permute.xlu0 %1256
  %1258 = vrot.lane.b32.xlu0 %v459, 6
  %v1259 = vpop.permute.xlu0 %1258
  %1260 = vrot.lane.b32.xlu0 %v460, 6
  %v1261 = vpop.permute.xlu0 %1260
  %1262 = vrot.lane.b32.xlu0 %v461, 6
  %v1263 = vpop.permute.xlu0 %1262
  %1264 = vrot.lane.b32.xlu0 %v462, 6
  %v1265 = vpop.permute.xlu0 %1264
  %1266 = vrot.lane.b32.xlu0 %v463, 6
  %v1267 = vpop.permute.xlu0 %1266
  %1268 = vrot.lane.b32.xlu0 %v464, 6
  %v1269 = vpop.permute.xlu0 %1268
  %1270 = vrot.lane.b32.xlu0 %v465, 6
  %v1271 = vpop.permute.xlu0 %1270
  %1272 = vrot.lane.b32.xlu0 %v466, 6
  %v1273 = vpop.permute.xlu0 %1272
  %1274 = vrot.lane.b32.xlu0 %v467, 6
  %v1275 = vpop.permute.xlu0 %1274
  %1276 = vrot.lane.b32.xlu0 %v468, 6
  %v1277 = vpop.permute.xlu0 %1276
  %1278 = vrot.lane.b32.xlu0 %v469, 6
  %v1279 = vpop.permute.xlu0 %1278
  %1280 = vrot.lane.b32.xlu0 %v470, 6
  %v1281 = vpop.permute.xlu0 %1280
  %1282 = vrot.lane.b32.xlu0 %v471, 6
  %v1283 = vpop.permute.xlu0 %1282
  %1284 = vrot.lane.b32.xlu0 %v472, 6
  %v1285 = vpop.permute.xlu0 %1284
  %1286 = vrot.lane.b32.xlu0 %v473, 6
  %v1287 = vpop.permute.xlu0 %1286
  %1288 = vrot.lane.b32.xlu0 %v474, 6
  %v1289 = vpop.permute.xlu0 %1288
  %1290 = vrot.lane.b32.xlu0 %v475, 6
  %v1291 = vpop.permute.xlu0 %1290
  %1292 = vrot.lane.b32.xlu0 %v476, 6
  %v1293 = vpop.permute.xlu0 %1292
  %1294 = vrot.lane.b32.xlu0 %v477, 6
  %v1295 = vpop.permute.xlu0 %1294
  %1296 = vrot.lane.b32.xlu0 %v478, 6
  %v1297 = vpop.permute.xlu0 %1296
  %1298 = vrot.lane.b32.xlu0 %v479, 6
  %v1299 = vpop.permute.xlu0 %1298
  %1300 = vrot.lane.b32.xlu0 %v480, 6
  %v1301 = vpop.permute.xlu0 %1300
  %1302 = vrot.lane.b32.xlu0 %v481, 6
  %v1303 = vpop.permute.xlu0 %1302
  %1304 = vrot.lane.b32.xlu0 %v482, 6
  %v1305 = vpop.permute.xlu0 %1304
  %1306 = vrot.lane.b32.xlu0 %v483, 6
  %v1307 = vpop.permute.xlu0 %1306
  %1308 = vrot.lane.b32.xlu0 %v484, 6
  %v1309 = vpop.permute.xlu0 %1308
  %1310 = vrot.lane.b32.xlu0 %v485, 6
  %v1311 = vpop.permute.xlu0 %1310
  %1312 = vrot.lane.b32.xlu0 %v486, 6
  %v1313 = vpop.permute.xlu0 %1312
  %1314 = vrot.lane.b32.xlu0 %v487, 6
  %v1315 = vpop.permute.xlu0 %1314
  %1316 = vrot.lane.b32.xlu0 %v488, 6
  %v1317 = vpop.permute.xlu0 %1316
  %1318 = vrot.lane.b32.xlu0 %v489, 6
  %v1319 = vpop.permute.xlu0 %1318
  %1320 = vrot.lane.b32.xlu0 %v490, 6
  %v1321 = vpop.permute.xlu0 %1320
  %1322 = vrot.lane.b32.xlu0 %v491, 6
  %v1323 = vpop.permute.xlu0 %1322
  %1324 = vrot.lane.b32.xlu0 %v492, 6
  %v1325 = vpop.permute.xlu0 %1324
  %1454 = vrot.lane.b32.xlu0 %v493, 9
  %v1455 = vpop.permute.xlu0 %1454
  %1456 = vrot.lane.b32.xlu0 %v494, 9
  %v1457 = vpop.permute.xlu0 %1456
  %1458 = vrot.lane.b32.xlu0 %v495, 9
  %v1459 = vpop.permute.xlu0 %1458
  %1460 = vrot.lane.b32.xlu0 %v496, 9
  %v1461 = vpop.permute.xlu0 %1460
  %1462 = vrot.lane.b32.xlu0 %v497, 9
  %v1463 = vpop.permute.xlu0 %1462
  %1464 = vrot.lane.b32.xlu0 %v498, 9
  %v1465 = vpop.permute.xlu0 %1464
  %1466 = vrot.lane.b32.xlu0 %v499, 9
  %v1467 = vpop.permute.xlu0 %1466
  %1468 = vrot.lane.b32.xlu0 %v500, 9
  %v1469 = vpop.permute.xlu0 %1468
  %1470 = vrot.lane.b32.xlu0 %v501, 9
  %v1471 = vpop.permute.xlu0 %1470
  %1472 = vrot.lane.b32.xlu0 %v502, 9
  %v1473 = vpop.permute.xlu0 %1472
  %1474 = vrot.lane.b32.xlu0 %v503, 9
  %v1475 = vpop.permute.xlu0 %1474
  %1476 = vrot.lane.b32.xlu0 %v504, 9
  %v1477 = vpop.permute.xlu0 %1476
  %1478 = vrot.lane.b32.xlu0 %v505, 9
  %v1479 = vpop.permute.xlu0 %1478
  %1480 = vrot.lane.b32.xlu0 %v506, 9
  %v1481 = vpop.permute.xlu0 %1480
  %1482 = vrot.lane.b32.xlu0 %v507, 9
  %v1483 = vpop.permute.xlu0 %1482
  %1484 = vrot.lane.b32.xlu0 %v508, 9
  %v1485 = vpop.permute.xlu0 %1484
  %1486 = vrot.lane.b32.xlu0 %v509, 9
  %v1487 = vpop.permute.xlu0 %1486
  %1488 = vrot.lane.b32.xlu0 %v510, 9
  %v1489 = vpop.permute.xlu0 %1488
  %1490 = vrot.lane.b32.xlu0 %v511, 9
  %v1491 = vpop.permute.xlu0 %1490
  %1492 = vrot.lane.b32.xlu0 %v512, 9
  %v1493 = vpop.permute.xlu0 %1492
  %1494 = vrot.lane.b32.xlu0 %v513, 9
  %v1495 = vpop.permute.xlu0 %1494
  %1496 = vrot.lane.b32.xlu0 %v514, 9
  %v1497 = vpop.permute.xlu0 %1496
  %1498 = vrot.lane.b32.xlu0 %v515, 9
  %v1499 = vpop.permute.xlu0 %1498
  %1500 = vrot.lane.b32.xlu0 %v516, 9
  %v1501 = vpop.permute.xlu0 %1500
  %1502 = vrot.lane.b32.xlu0 %v517, 9
  %v1503 = vpop.permute.xlu0 %1502
  %1504 = vrot.lane.b32.xlu0 %v518, 9
  %v1505 = vpop.permute.xlu0 %1504
  %1506 = vrot.lane.b32.xlu0 %v519, 9
  %v1507 = vpop.permute.xlu0 %1506
  %1508 = vrot.lane.b32.xlu0 %v520, 9
  %v1509 = vpop.permute.xlu0 %1508
  %1510 = vrot.lane.b32.xlu0 %v521, 9
  %v1511 = vpop.permute.xlu0 %1510
  %1512 = vrot.lane.b32.xlu0 %v522, 9
  %v1513 = vpop.permute.xlu0 %1512
  %1514 = vrot.lane.b32.xlu0 %v523, 9
  %v1515 = vpop.permute.xlu0 %1514
  %1516 = vrot.lane.b32.xlu0 %v524, 9
  %v1517 = vpop.permute.xlu0 %1516
  %1518 = vrot.lane.b32.xlu0 %v525, 9
  %v1519 = vpop.permute.xlu0 %1518
  %1520 = vrot.lane.b32.xlu0 %v526, 9
  %v1521 = vpop.permute.xlu0 %1520
  %1522 = vrot.lane.b32.xlu0 %v527, 9
  %v1523 = vpop.permute.xlu0 %1522
  %1524 = vrot.lane.b32.xlu0 %v528, 9
  %v1525 = vpop.permute.xlu0 %1524
  %1526 = vrot.lane.b32.xlu0 %v529, 9
  %v1527 = vpop.permute.xlu0 %1526
  %1528 = vrot.lane.b32.xlu0 %v530, 9
  %v1529 = vpop.permute.xlu0 %1528
  %1530 = vrot.lane.b32.xlu0 %v531, 9
  %v1531 = vpop.permute.xlu0 %1530
  %1532 = vrot.lane.b32.xlu0 %v532, 9
  %v1533 = vpop.permute.xlu0 %1532
  %1534 = vrot.lane.b32.xlu0 %v533, 9
  %v1535 = vpop.permute.xlu0 %1534
  %1536 = vrot.lane.b32.xlu0 %v534, 9
  %v1537 = vpop.permute.xlu0 %1536
  %1538 = vrot.lane.b32.xlu0 %v535, 9
  %v1539 = vpop.permute.xlu0 %1538
  %1540 = vrot.lane.b32.xlu0 %v536, 9
  %v1541 = vpop.permute.xlu0 %1540
  %1542 = vrot.lane.b32.xlu0 %v537, 9
  %v1543 = vpop.permute.xlu0 %1542
  %1544 = vrot.lane.b32.xlu0 %v538, 9
  %v1545 = vpop.permute.xlu0 %1544
  %1546 = vrot.lane.b32.xlu0 %v539, 9
  %v1547 = vpop.permute.xlu0 %1546
  %1548 = vrot.lane.b32.xlu0 %v540, 9
  %v1549 = vpop.permute.xlu0 %1548
  %1550 = vrot.lane.b32.xlu0 %v541, 9
  %v1551 = vpop.permute.xlu0 %1550
  %1552 = vrot.lane.b32.xlu0 %v542, 9
  %v1553 = vpop.permute.xlu0 %1552
  %1554 = vrot.lane.b32.xlu0 %v543, 9
  %v1555 = vpop.permute.xlu0 %1554
  %1556 = vrot.lane.b32.xlu0 %v544, 9
  %v1557 = vpop.permute.xlu0 %1556
  %1558 = vrot.lane.b32.xlu0 %v545, 9
  %v1559 = vpop.permute.xlu0 %1558
  %1560 = vrot.lane.b32.xlu0 %v546, 9
  %v1561 = vpop.permute.xlu0 %1560
  %1562 = vrot.lane.b32.xlu0 %v547, 9
  %v1563 = vpop.permute.xlu0 %1562
  %1564 = vrot.lane.b32.xlu0 %v548, 9
  %v1565 = vpop.permute.xlu0 %1564
  %1566 = vrot.lane.b32.xlu0 %v549, 9
  %v1567 = vpop.permute.xlu0 %1566
  %1568 = vrot.lane.b32.xlu0 %v550, 9
  %v1569 = vpop.permute.xlu0 %1568
  %1570 = vrot.lane.b32.xlu0 %v551, 9
  %v1571 = vpop.permute.xlu0 %1570
  %1572 = vrot.lane.b32.xlu0 %v552, 9
  %v1573 = vpop.permute.xlu0 %1572
  %1574 = vrot.lane.b32.xlu0 %v553, 9
  %v1575 = vpop.permute.xlu0 %1574
  %1576 = vrot.lane.b32.xlu0 %v554, 9
  %v1577 = vpop.permute.xlu0 %1576
  %1578 = vrot.lane.b32.xlu0 %v555, 9
  %v1579 = vpop.permute.xlu0 %1578
  %1580 = vrot.lane.b32.xlu0 %v556, 9
  %v1581 = vpop.permute.xlu0 %1580
  %1710 = vrot.lane.b32.xlu0 %v557, 12
  %v1711 = vpop.permute.xlu0 %1710
  %1712 = vrot.lane.b32.xlu0 %v558, 12
  %v1713 = vpop.permute.xlu0 %1712
  %1714 = vrot.lane.b32.xlu0 %v559, 12
  %v1715 = vpop.permute.xlu0 %1714
  %1716 = vrot.lane.b32.xlu0 %v560, 12
  %v1717 = vpop.permute.xlu0 %1716
  %1718 = vrot.lane.b32.xlu0 %v561, 12
  %v1719 = vpop.permute.xlu0 %1718
  %1720 = vrot.lane.b32.xlu0 %v562, 12
  %v1721 = vpop.permute.xlu0 %1720
  %1722 = vrot.lane.b32.xlu0 %v563, 12
  %v1723 = vpop.permute.xlu0 %1722
  %1724 = vrot.lane.b32.xlu0 %v564, 12
  %v1725 = vpop.permute.xlu0 %1724
  %1726 = vrot.lane.b32.xlu0 %v565, 12
  %v1727 = vpop.permute.xlu0 %1726
  %1728 = vrot.lane.b32.xlu0 %v566, 12
  %v1729 = vpop.permute.xlu0 %1728
  %1730 = vrot.lane.b32.xlu0 %v567, 12
  %v1731 = vpop.permute.xlu0 %1730
  %1732 = vrot.lane.b32.xlu0 %v568, 12
  %v1733 = vpop.permute.xlu0 %1732
  %1734 = vrot.lane.b32.xlu0 %v569, 12
  %v1735 = vpop.permute.xlu0 %1734
  %1736 = vrot.lane.b32.xlu0 %v570, 12
  %v1737 = vpop.permute.xlu0 %1736
  %1738 = vrot.lane.b32.xlu0 %v571, 12
  %v1739 = vpop.permute.xlu0 %1738
  %1740 = vrot.lane.b32.xlu0 %v572, 12
  %v1741 = vpop.permute.xlu0 %1740
  %1742 = vrot.lane.b32.xlu0 %v573, 12
  %v1743 = vpop.permute.xlu0 %1742
  %1744 = vrot.lane.b32.xlu0 %v574, 12
  %v1745 = vpop.permute.xlu0 %1744
  %1746 = vrot.lane.b32.xlu0 %v575, 12
  %v1747 = vpop.permute.xlu0 %1746
  %1748 = vrot.lane.b32.xlu0 %v576, 12
  %v1749 = vpop.permute.xlu0 %1748
  %1750 = vrot.lane.b32.xlu0 %v577, 12
  %v1751 = vpop.permute.xlu0 %1750
  %1752 = vrot.lane.b32.xlu0 %v578, 12
  %v1753 = vpop.permute.xlu0 %1752
  %1754 = vrot.lane.b32.xlu0 %v579, 12
  %v1755 = vpop.permute.xlu0 %1754
  %1756 = vrot.lane.b32.xlu0 %v580, 12
  %v1757 = vpop.permute.xlu0 %1756
  %1758 = vrot.lane.b32.xlu0 %v581, 12
  %v1759 = vpop.permute.xlu0 %1758
  %1760 = vrot.lane.b32.xlu0 %v582, 12
  %v1761 = vpop.permute.xlu0 %1760
  %1762 = vrot.lane.b32.xlu0 %v583, 12
  %v1763 = vpop.permute.xlu0 %1762
  %1764 = vrot.lane.b32.xlu0 %v584, 12
  %v1765 = vpop.permute.xlu0 %1764
  %1766 = vrot.lane.b32.xlu0 %v585, 12
  %v1767 = vpop.permute.xlu0 %1766
  %1768 = vrot.lane.b32.xlu0 %v586, 12
  %v1769 = vpop.permute.xlu0 %1768
  %1770 = vrot.lane.b32.xlu0 %v587, 12
  %v1771 = vpop.permute.xlu0 %1770
  %1772 = vrot.lane.b32.xlu0 %v588, 12
  %v1773 = vpop.permute.xlu0 %1772
  %1774 = vrot.lane.b32.xlu0 %v589, 12
  %v1775 = vpop.permute.xlu0 %1774
  %1776 = vrot.lane.b32.xlu0 %v590, 12
  %v1777 = vpop.permute.xlu0 %1776
  %1778 = vrot.lane.b32.xlu0 %v591, 12
  %v1779 = vpop.permute.xlu0 %1778
  %1780 = vrot.lane.b32.xlu0 %v592, 12
  %v1781 = vpop.permute.xlu0 %1780
  %1782 = vrot.lane.b32.xlu0 %v593, 12
  %v1783 = vpop.permute.xlu0 %1782
  %1784 = vrot.lane.b32.xlu0 %v594, 12
  %v1785 = vpop.permute.xlu0 %1784
  %1786 = vrot.lane.b32.xlu0 %v595, 12
  %v1787 = vpop.permute.xlu0 %1786
  %1788 = vrot.lane.b32.xlu0 %v596, 12
  %v1789 = vpop.permute.xlu0 %1788
  %1790 = vrot.lane.b32.xlu0 %v597, 12
  %v1791 = vpop.permute.xlu0 %1790
  %1792 = vrot.lane.b32.xlu0 %v598, 12
  %v1793 = vpop.permute.xlu0 %1792
  %1794 = vrot.lane.b32.xlu0 %v599, 12
  %v1795 = vpop.permute.xlu0 %1794
  %1796 = vrot.lane.b32.xlu0 %v600, 12
  %v1797 = vpop.permute.xlu0 %1796
  %1798 = vrot.lane.b32.xlu0 %v601, 12
  %v1799 = vpop.permute.xlu0 %1798
  %1800 = vrot.lane.b32.xlu0 %v602, 12
  %v1801 = vpop.permute.xlu0 %1800
  %1802 = vrot.lane.b32.xlu0 %v603, 12
  %v1803 = vpop.permute.xlu0 %1802
  %1804 = vrot.lane.b32.xlu0 %v604, 12
  %v1805 = vpop.permute.xlu0 %1804
  %1806 = vrot.lane.b32.xlu0 %v605, 12
  %v1807 = vpop.permute.xlu0 %1806
  %1808 = vrot.lane.b32.xlu0 %v606, 12
  %v1809 = vpop.permute.xlu0 %1808
  %1810 = vrot.lane.b32.xlu0 %v607, 12
  %v1811 = vpop.permute.xlu0 %1810
  %1812 = vrot.lane.b32.xlu0 %v608, 12
  %v1813 = vpop.permute.xlu0 %1812
  %1814 = vrot.lane.b32.xlu0 %v609, 12
  %v1815 = vpop.permute.xlu0 %1814
  %1816 = vrot.lane.b32.xlu0 %v610, 12
  %v1817 = vpop.permute.xlu0 %1816
  %1818 = vrot.lane.b32.xlu0 %v611, 12
  %v1819 = vpop.permute.xlu0 %1818
  %1820 = vrot.lane.b32.xlu0 %v612, 12
  %v1821 = vpop.permute.xlu0 %1820
  %1822 = vrot.lane.b32.xlu0 %v613, 12
  %v1823 = vpop.permute.xlu0 %1822
  %1824 = vrot.lane.b32.xlu0 %v614, 12
  %v1825 = vpop.permute.xlu0 %1824
  %1826 = vrot.lane.b32.xlu0 %v615, 12
  %v1827 = vpop.permute.xlu0 %1826
  %1828 = vrot.lane.b32.xlu0 %v616, 12
  %v1829 = vpop.permute.xlu0 %1828
  %1830 = vrot.lane.b32.xlu0 %v617, 12
  %v1831 = vpop.permute.xlu0 %1830
  %1832 = vrot.lane.b32.xlu0 %v618, 12
  %v1833 = vpop.permute.xlu0 %1832
  %1834 = vrot.lane.b32.xlu0 %v619, 12
  %v1835 = vpop.permute.xlu0 %1834
  %1836 = vrot.lane.b32.xlu0 %v620, 12
  %v1837 = vpop.permute.xlu0 %1836
  %1966 = vrot.lane.b32.xlu0 %v621, 15
  %v1967 = vpop.permute.xlu0 %1966
  %1968 = vrot.lane.b32.xlu0 %v622, 15
  %v1969 = vpop.permute.xlu0 %1968
  %1970 = vrot.lane.b32.xlu0 %v623, 15
  %v1971 = vpop.permute.xlu0 %1970
  %1972 = vrot.lane.b32.xlu0 %v624, 15
  %v1973 = vpop.permute.xlu0 %1972
  %1974 = vrot.lane.b32.xlu0 %v625, 15
  %v1975 = vpop.permute.xlu0 %1974
  %1976 = vrot.lane.b32.xlu0 %v626, 15
  %v1977 = vpop.permute.xlu0 %1976
  %1978 = vrot.lane.b32.xlu0 %v627, 15
  %v1979 = vpop.permute.xlu0 %1978
  %1980 = vrot.lane.b32.xlu0 %v628, 15
  %v1981 = vpop.permute.xlu0 %1980
  %1982 = vrot.lane.b32.xlu0 %v629, 15
  %v1983 = vpop.permute.xlu0 %1982
  %1984 = vrot.lane.b32.xlu0 %v630, 15
  %v1985 = vpop.permute.xlu0 %1984
  %1986 = vrot.lane.b32.xlu0 %v631, 15
  %v1987 = vpop.permute.xlu0 %1986
  %1988 = vrot.lane.b32.xlu0 %v632, 15
  %v1989 = vpop.permute.xlu0 %1988
  %1990 = vrot.lane.b32.xlu0 %v633, 15
  %v1991 = vpop.permute.xlu0 %1990
  %1992 = vrot.lane.b32.xlu0 %v634, 15
  %v1993 = vpop.permute.xlu0 %1992
  %1994 = vrot.lane.b32.xlu0 %v635, 15
  %v1995 = vpop.permute.xlu0 %1994
  %1996 = vrot.lane.b32.xlu0 %v636, 15
  %v1997 = vpop.permute.xlu0 %1996
  %1998 = vrot.lane.b32.xlu0 %v637, 15
  %v1999 = vpop.permute.xlu0 %1998
  %2000 = vrot.lane.b32.xlu0 %v638, 15
  %v2001 = vpop.permute.xlu0 %2000
  %2002 = vrot.lane.b32.xlu0 %v639, 15
  %v2003 = vpop.permute.xlu0 %2002
  %2004 = vrot.lane.b32.xlu0 %v640, 15
  %v2005 = vpop.permute.xlu0 %2004
  %2006 = vrot.lane.b32.xlu0 %v641, 15
  %v2007 = vpop.permute.xlu0 %2006
  %2008 = vrot.lane.b32.xlu0 %v642, 15
  %v2009 = vpop.permute.xlu0 %2008
  %2010 = vrot.lane.b32.xlu0 %v643, 15
  %v2011 = vpop.permute.xlu0 %2010
  %2012 = vrot.lane.b32.xlu0 %v644, 15
  %v2013 = vpop.permute.xlu0 %2012
  %2014 = vrot.lane.b32.xlu0 %v645, 15
  %v2015 = vpop.permute.xlu0 %2014
  %2016 = vrot.lane.b32.xlu0 %v646, 15
  %v2017 = vpop.permute.xlu0 %2016
  %2018 = vrot.lane.b32.xlu0 %v647, 15
  %v2019 = vpop.permute.xlu0 %2018
  %2020 = vrot.lane.b32.xlu0 %v648, 15
  %v2021 = vpop.permute.xlu0 %2020
  %2022 = vrot.lane.b32.xlu0 %v649, 15
  %v2023 = vpop.permute.xlu0 %2022
  %2024 = vrot.lane.b32.xlu0 %v650, 15
  %v2025 = vpop.permute.xlu0 %2024
  %2026 = vrot.lane.b32.xlu0 %v651, 15
  %v2027 = vpop.permute.xlu0 %2026
  %2028 = vrot.lane.b32.xlu0 %v652, 15
  %v2029 = vpop.permute.xlu0 %2028
  %2030 = vrot.lane.b32.xlu0 %v653, 15
  %v2031 = vpop.permute.xlu0 %2030
  %2032 = vrot.lane.b32.xlu0 %v654, 15
  %v2033 = vpop.permute.xlu0 %2032
  %2034 = vrot.lane.b32.xlu0 %v655, 15
  %v2035 = vpop.permute.xlu0 %2034
  %2036 = vrot.lane.b32.xlu0 %v656, 15
  %v2037 = vpop.permute.xlu0 %2036
  %2038 = vrot.lane.b32.xlu0 %v657, 15
  %v2039 = vpop.permute.xlu0 %2038
  %2040 = vrot.lane.b32.xlu0 %v658, 15
  %v2041 = vpop.permute.xlu0 %2040
  %2042 = vrot.lane.b32.xlu0 %v659, 15
  %v2043 = vpop.permute.xlu0 %2042
  %2044 = vrot.lane.b32.xlu0 %v660, 15
  %v2045 = vpop.permute.xlu0 %2044
  %2046 = vrot.lane.b32.xlu0 %v661, 15
  %v2047 = vpop.permute.xlu0 %2046
  %2048 = vrot.lane.b32.xlu0 %v662, 15
  %v2049 = vpop.permute.xlu0 %2048
  %2050 = vrot.lane.b32.xlu0 %v663, 15
  %v2051 = vpop.permute.xlu0 %2050
  %2052 = vrot.lane.b32.xlu0 %v664, 15
  %v2053 = vpop.permute.xlu0 %2052
  %2054 = vrot.lane.b32.xlu0 %v665, 15
  %v2055 = vpop.permute.xlu0 %2054
  %2056 = vrot.lane.b32.xlu0 %v666, 15
  %v2057 = vpop.permute.xlu0 %2056
  %2058 = vrot.lane.b32.xlu0 %v667, 15
  %v2059 = vpop.permute.xlu0 %2058
  %2060 = vrot.lane.b32.xlu0 %v668, 15
  %v2061 = vpop.permute.xlu0 %2060
  %2062 = vrot.lane.b32.xlu0 %v669, 15
  %v2063 = vpop.permute.xlu0 %2062
  %2064 = vrot.lane.b32.xlu0 %v670, 15
  %v2065 = vpop.permute.xlu0 %2064
  %2066 = vrot.lane.b32.xlu0 %v671, 15
  %v2067 = vpop.permute.xlu0 %2066
  %2068 = vrot.lane.b32.xlu0 %v672, 15
  %v2069 = vpop.permute.xlu0 %2068
  %2070 = vrot.lane.b32.xlu0 %v673, 15
  %v2071 = vpop.permute.xlu0 %2070
  %2072 = vrot.lane.b32.xlu0 %v674, 15
  %v2073 = vpop.permute.xlu0 %2072
  %2074 = vrot.lane.b32.xlu0 %v675, 15
  %v2075 = vpop.permute.xlu0 %2074
  %2076 = vrot.lane.b32.xlu0 %v676, 15
  %v2077 = vpop.permute.xlu0 %2076
  %2078 = vrot.lane.b32.xlu0 %v677, 15
  %v2079 = vpop.permute.xlu0 %2078
  %2080 = vrot.lane.b32.xlu0 %v678, 15
  %v2081 = vpop.permute.xlu0 %2080
  %2082 = vrot.lane.b32.xlu0 %v679, 15
  %v2083 = vpop.permute.xlu0 %2082
  %2084 = vrot.lane.b32.xlu0 %v680, 15
  %v2085 = vpop.permute.xlu0 %2084
  %2086 = vrot.lane.b32.xlu0 %v681, 15
  %v2087 = vpop.permute.xlu0 %2086
  %2088 = vrot.lane.b32.xlu0 %v682, 15
  %v2089 = vpop.permute.xlu0 %2088
  %2090 = vrot.lane.b32.xlu0 %v683, 15
  %v2091 = vpop.permute.xlu0 %2090
  %2092 = vrot.lane.b32.xlu0 %v684, 15
  %v2093 = vpop.permute.xlu0 %2092
  %2222 = vrot.lane.b32.xlu0 %v686, 18
  %v2223 = vpop.permute.xlu0 %2222
  %2224 = vrot.lane.b32.xlu0 %v687, 18
  %v2225 = vpop.permute.xlu0 %2224
  %2226 = vrot.lane.b32.xlu0 %v688, 18
  %v2227 = vpop.permute.xlu0 %2226
  %2228 = vrot.lane.b32.xlu0 %v689, 18
  %v2229 = vpop.permute.xlu0 %2228
  %2230 = vrot.lane.b32.xlu0 %v690, 18
  %v2231 = vpop.permute.xlu0 %2230
  %2232 = vrot.lane.b32.xlu0 %v691, 18
  %v2233 = vpop.permute.xlu0 %2232
  %2234 = vrot.lane.b32.xlu0 %v692, 18
  %v2235 = vpop.permute.xlu0 %2234
  %2236 = vrot.lane.b32.xlu0 %v693, 18
  %v2237 = vpop.permute.xlu0 %2236
  %2238 = vrot.lane.b32.xlu0 %v694, 18
  %v2239 = vpop.permute.xlu0 %2238
  %2240 = vrot.lane.b32.xlu0 %v695, 18
  %v2241 = vpop.permute.xlu0 %2240
  %2242 = vrot.lane.b32.xlu0 %v696, 18
  %v2243 = vpop.permute.xlu0 %2242
  %2244 = vrot.lane.b32.xlu0 %v697, 18
  %v2245 = vpop.permute.xlu0 %2244
  %2246 = vrot.lane.b32.xlu0 %v698, 18
  %v2247 = vpop.permute.xlu0 %2246
  %2248 = vrot.lane.b32.xlu0 %v699, 18
  %v2249 = vpop.permute.xlu0 %2248
  %2250 = vrot.lane.b32.xlu0 %v700, 18
  %v2251 = vpop.permute.xlu0 %2250
  %2252 = vrot.lane.b32.xlu0 %v701, 18
  %v2253 = vpop.permute.xlu0 %2252
  %2254 = vrot.lane.b32.xlu0 %v702, 18
  %v2255 = vpop.permute.xlu0 %2254
  %2256 = vrot.lane.b32.xlu0 %v703, 18
  %v2257 = vpop.permute.xlu0 %2256
  %2258 = vrot.lane.b32.xlu0 %v704, 18
  %v2259 = vpop.permute.xlu0 %2258
  %2260 = vrot.lane.b32.xlu0 %v705, 18
  %v2261 = vpop.permute.xlu0 %2260
  %2262 = vrot.lane.b32.xlu0 %v706, 18
  %v2263 = vpop.permute.xlu0 %2262
  %2264 = vrot.lane.b32.xlu0 %v707, 18
  %v2265 = vpop.permute.xlu0 %2264
  %2266 = vrot.lane.b32.xlu0 %v708, 18
  %v2267 = vpop.permute.xlu0 %2266
  %2268 = vrot.lane.b32.xlu0 %v709, 18
  %v2269 = vpop.permute.xlu0 %2268
  %2270 = vrot.lane.b32.xlu0 %v710, 18
  %v2271 = vpop.permute.xlu0 %2270
  %2272 = vrot.lane.b32.xlu0 %v711, 18
  %v2273 = vpop.permute.xlu0 %2272
  %2274 = vrot.lane.b32.xlu0 %v712, 18
  %v2275 = vpop.permute.xlu0 %2274
  %2276 = vrot.lane.b32.xlu0 %v713, 18
  %v2277 = vpop.permute.xlu0 %2276
  %2278 = vrot.lane.b32.xlu0 %v714, 18
  %v2279 = vpop.permute.xlu0 %2278
  %2280 = vrot.lane.b32.xlu0 %v715, 18
  %v2281 = vpop.permute.xlu0 %2280
  %2282 = vrot.lane.b32.xlu0 %v716, 18
  %v2283 = vpop.permute.xlu0 %2282
  %2284 = vrot.lane.b32.xlu0 %v717, 18
  %v2285 = vpop.permute.xlu0 %2284
  %2286 = vrot.lane.b32.xlu0 %v718, 18
  %v2287 = vpop.permute.xlu0 %2286
  %2288 = vrot.lane.b32.xlu0 %v719, 18
  %v2289 = vpop.permute.xlu0 %2288
  %2290 = vrot.lane.b32.xlu0 %v720, 18
  %v2291 = vpop.permute.xlu0 %2290
  %2292 = vrot.lane.b32.xlu0 %v721, 18
  %v2293 = vpop.permute.xlu0 %2292
  %2294 = vrot.lane.b32.xlu0 %v722, 18
  %v2295 = vpop.permute.xlu0 %2294
  %2296 = vrot.lane.b32.xlu0 %v723, 18
  %v2297 = vpop.permute.xlu0 %2296
  %2298 = vrot.lane.b32.xlu0 %v724, 18
  %v2299 = vpop.permute.xlu0 %2298
  %2300 = vrot.lane.b32.xlu0 %v725, 18
  %v2301 = vpop.permute.xlu0 %2300
  %2302 = vrot.lane.b32.xlu0 %v726, 18
  %v2303 = vpop.permute.xlu0 %2302
  %2304 = vrot.lane.b32.xlu0 %v727, 18
  %v2305 = vpop.permute.xlu0 %2304
  %2306 = vrot.lane.b32.xlu0 %v728, 18
  %v2307 = vpop.permute.xlu0 %2306
  %2308 = vrot.lane.b32.xlu0 %v729, 18
  %v2309 = vpop.permute.xlu0 %2308
  %2310 = vrot.lane.b32.xlu0 %v730, 18
  %v2311 = vpop.permute.xlu0 %2310
  %2312 = vrot.lane.b32.xlu0 %v731, 18
  %v2313 = vpop.permute.xlu0 %2312
  %2314 = vrot.lane.b32.xlu0 %v732, 18
  %v2315 = vpop.permute.xlu0 %2314
  %2316 = vrot.lane.b32.xlu0 %v733, 18
  %v2317 = vpop.permute.xlu0 %2316
  %2318 = vrot.lane.b32.xlu0 %v734, 18
  %v2319 = vpop.permute.xlu0 %2318
  %2320 = vrot.lane.b32.xlu0 %v735, 18
  %v2321 = vpop.permute.xlu0 %2320
  %2322 = vrot.lane.b32.xlu0 %v736, 18
  %v2323 = vpop.permute.xlu0 %2322
  %2324 = vrot.lane.b32.xlu0 %v737, 18
  %v2325 = vpop.permute.xlu0 %2324
  %2326 = vrot.lane.b32.xlu0 %v738, 18
  %v2327 = vpop.permute.xlu0 %2326
  %2328 = vrot.lane.b32.xlu0 %v739, 18
  %v2329 = vpop.permute.xlu0 %2328
  %2330 = vrot.lane.b32.xlu0 %v740, 18
  %v2331 = vpop.permute.xlu0 %2330
  %2332 = vrot.lane.b32.xlu0 %v741, 18
  %v2333 = vpop.permute.xlu0 %2332
  %2334 = vrot.lane.b32.xlu0 %v742, 18
  %v2335 = vpop.permute.xlu0 %2334
  %2336 = vrot.lane.b32.xlu0 %v743, 18
  %v2337 = vpop.permute.xlu0 %2336
  %2338 = vrot.lane.b32.xlu0 %v744, 18
  %v2339 = vpop.permute.xlu0 %2338
  %2340 = vrot.lane.b32.xlu0 %v745, 18
  %v2341 = vpop.permute.xlu0 %2340
  %2342 = vrot.lane.b32.xlu0 %v746, 18
  %v2343 = vpop.permute.xlu0 %2342
  %2344 = vrot.lane.b32.xlu0 %v747, 18
  %v2345 = vpop.permute.xlu0 %2344
  %2346 = vrot.lane.b32.xlu0 %v748, 18
  %v2347 = vpop.permute.xlu0 %2346
  %2348 = vrot.lane.b32.xlu0 %v749, 18
  %v2349 = vpop.permute.xlu0 %2348
  %2478 = vrot.lane.b32.xlu0 %v750, 21
  %v2479 = vpop.permute.xlu0 %2478
  %2480 = vrot.lane.b32.xlu0 %v751, 21
  %v2481 = vpop.permute.xlu0 %2480
  %2482 = vrot.lane.b32.xlu0 %v752, 21
  %v2483 = vpop.permute.xlu0 %2482
  %2484 = vrot.lane.b32.xlu0 %v753, 21
  %v2485 = vpop.permute.xlu0 %2484
  %2486 = vrot.lane.b32.xlu0 %v754, 21
  %v2487 = vpop.permute.xlu0 %2486
  %2488 = vrot.lane.b32.xlu0 %v755, 21
  %v2489 = vpop.permute.xlu0 %2488
  %2490 = vrot.lane.b32.xlu0 %v756, 21
  %v2491 = vpop.permute.xlu0 %2490
  %2492 = vrot.lane.b32.xlu0 %v757, 21
  %v2493 = vpop.permute.xlu0 %2492
  %2494 = vrot.lane.b32.xlu0 %v758, 21
  %v2495 = vpop.permute.xlu0 %2494
  %2496 = vrot.lane.b32.xlu0 %v759, 21
  %v2497 = vpop.permute.xlu0 %2496
  %2498 = vrot.lane.b32.xlu0 %v760, 21
  %v2499 = vpop.permute.xlu0 %2498
  %2500 = vrot.lane.b32.xlu0 %v761, 21
  %v2501 = vpop.permute.xlu0 %2500
  %2502 = vrot.lane.b32.xlu0 %v762, 21
  %v2503 = vpop.permute.xlu0 %2502
  %2504 = vrot.lane.b32.xlu0 %v763, 21
  %v2505 = vpop.permute.xlu0 %2504
  %2506 = vrot.lane.b32.xlu0 %v764, 21
  %v2507 = vpop.permute.xlu0 %2506
  %2508 = vrot.lane.b32.xlu0 %v765, 21
  %v2509 = vpop.permute.xlu0 %2508
  %2510 = vrot.lane.b32.xlu0 %v766, 21
  %v2511 = vpop.permute.xlu0 %2510
  %2512 = vrot.lane.b32.xlu0 %v767, 21
  %v2513 = vpop.permute.xlu0 %2512
  %2514 = vrot.lane.b32.xlu0 %v768, 21
  %v2515 = vpop.permute.xlu0 %2514
  %2516 = vrot.lane.b32.xlu0 %v769, 21
  %v2517 = vpop.permute.xlu0 %2516
  %2518 = vrot.lane.b32.xlu0 %v770, 21
  %v2519 = vpop.permute.xlu0 %2518
  %2520 = vrot.lane.b32.xlu0 %v771, 21
  %v2521 = vpop.permute.xlu0 %2520
  %2522 = vrot.lane.b32.xlu0 %v772, 21
  %v2523 = vpop.permute.xlu0 %2522
  %2524 = vrot.lane.b32.xlu0 %v773, 21
  %v2525 = vpop.permute.xlu0 %2524
  %2526 = vrot.lane.b32.xlu0 %v774, 21
  %v2527 = vpop.permute.xlu0 %2526
  %2528 = vrot.lane.b32.xlu0 %v775, 21
  %v2529 = vpop.permute.xlu0 %2528
  %2530 = vrot.lane.b32.xlu0 %v776, 21
  %v2531 = vpop.permute.xlu0 %2530
  %2532 = vrot.lane.b32.xlu0 %v777, 21
  %v2533 = vpop.permute.xlu0 %2532
  %2534 = vrot.lane.b32.xlu0 %v778, 21
  %v2535 = vpop.permute.xlu0 %2534
  %2536 = vrot.lane.b32.xlu0 %v779, 21
  %v2537 = vpop.permute.xlu0 %2536
  %2538 = vrot.lane.b32.xlu0 %v780, 21
  %v2539 = vpop.permute.xlu0 %2538
  %2540 = vrot.lane.b32.xlu0 %v781, 21
  %v2541 = vpop.permute.xlu0 %2540
  %2542 = vrot.lane.b32.xlu0 %v782, 21
  %v2543 = vpop.permute.xlu0 %2542
  %2544 = vrot.lane.b32.xlu0 %v783, 21
  %v2545 = vpop.permute.xlu0 %2544
  %2546 = vrot.lane.b32.xlu0 %v784, 21
  %v2547 = vpop.permute.xlu0 %2546
  %2548 = vrot.lane.b32.xlu0 %v785, 21
  %v2549 = vpop.permute.xlu0 %2548
  %2550 = vrot.lane.b32.xlu0 %v786, 21
  %v2551 = vpop.permute.xlu0 %2550
  %2552 = vrot.lane.b32.xlu0 %v787, 21
  %v2553 = vpop.permute.xlu0 %2552
  %2554 = vrot.lane.b32.xlu0 %v788, 21
  %v2555 = vpop.permute.xlu0 %2554
  %2556 = vrot.lane.b32.xlu0 %v789, 21
  %v2557 = vpop.permute.xlu0 %2556
  %2558 = vrot.lane.b32.xlu0 %v790, 21
  %v2559 = vpop.permute.xlu0 %2558
  %2560 = vrot.lane.b32.xlu0 %v791, 21
  %v2561 = vpop.permute.xlu0 %2560
  %2562 = vrot.lane.b32.xlu0 %v792, 21
  %v2563 = vpop.permute.xlu0 %2562
  %2564 = vrot.lane.b32.xlu0 %v793, 21
  %v2565 = vpop.permute.xlu0 %2564
  %2566 = vrot.lane.b32.xlu0 %v794, 21
  %v2567 = vpop.permute.xlu0 %2566
  %2568 = vrot.lane.b32.xlu0 %v795, 21
  %v2569 = vpop.permute.xlu0 %2568
  %2570 = vrot.lane.b32.xlu0 %v796, 21
  %v2571 = vpop.permute.xlu0 %2570
  %2572 = vrot.lane.b32.xlu0 %v797, 21
  %v2573 = vpop.permute.xlu0 %2572
  %2574 = vrot.lane.b32.xlu0 %v798, 21
  %v2575 = vpop.permute.xlu0 %2574
  %2576 = vrot.lane.b32.xlu0 %v799, 21
  %v2577 = vpop.permute.xlu0 %2576
  %2578 = vrot.lane.b32.xlu0 %v800, 21
  %v2579 = vpop.permute.xlu0 %2578
  %2580 = vrot.lane.b32.xlu0 %v801, 21
  %v2581 = vpop.permute.xlu0 %2580
  %2582 = vrot.lane.b32.xlu0 %v802, 21
  %v2583 = vpop.permute.xlu0 %2582
  %2584 = vrot.lane.b32.xlu0 %v803, 21
  %v2585 = vpop.permute.xlu0 %2584
  %2586 = vrot.lane.b32.xlu0 %v804, 21
  %v2587 = vpop.permute.xlu0 %2586
  %2588 = vrot.lane.b32.xlu0 %v805, 21
  %v2589 = vpop.permute.xlu0 %2588
  %2590 = vrot.lane.b32.xlu0 %v806, 21
  %v2591 = vpop.permute.xlu0 %2590
  %2592 = vrot.lane.b32.xlu0 %v807, 21
  %v2593 = vpop.permute.xlu0 %2592
  %2594 = vrot.lane.b32.xlu0 %v808, 21
  %v2595 = vpop.permute.xlu0 %2594
  %2596 = vrot.lane.b32.xlu0 %v809, 21
  %v2597 = vpop.permute.xlu0 %2596
  %2598 = vrot.lane.b32.xlu0 %v810, 21
  %v2599 = vpop.permute.xlu0 %2598
  %2600 = vrot.lane.b32.xlu0 %v811, 21
  %v2601 = vpop.permute.xlu0 %2600
  %2602 = vrot.lane.b32.xlu0 %v812, 21
  %v2603 = vpop.permute.xlu0 %2602
  %2604 = vrot.lane.b32.xlu0 %v813, 21
  %v2605 = vpop.permute.xlu0 %2604
  %2734 = vrot.lane.b32.xlu0 %v814, 24
  %v2735 = vpop.permute.xlu0 %2734
  %2736 = vrot.lane.b32.xlu0 %v815, 24
  %v2737 = vpop.permute.xlu0 %2736
  %2738 = vrot.lane.b32.xlu0 %v816, 24
  %v2739 = vpop.permute.xlu0 %2738
  %2740 = vrot.lane.b32.xlu0 %v817, 24
  %v2741 = vpop.permute.xlu0 %2740
  %2742 = vrot.lane.b32.xlu0 %v818, 24
  %v2743 = vpop.permute.xlu0 %2742
  %2744 = vrot.lane.b32.xlu0 %v819, 24
  %v2745 = vpop.permute.xlu0 %2744
  %2746 = vrot.lane.b32.xlu0 %v820, 24
  %v2747 = vpop.permute.xlu0 %2746
  %2748 = vrot.lane.b32.xlu0 %v821, 24
  %v2749 = vpop.permute.xlu0 %2748
  %2750 = vrot.lane.b32.xlu0 %v822, 24
  %v2751 = vpop.permute.xlu0 %2750
  %2752 = vrot.lane.b32.xlu0 %v823, 24
  %v2753 = vpop.permute.xlu0 %2752
  %2754 = vrot.lane.b32.xlu0 %v824, 24
  %v2755 = vpop.permute.xlu0 %2754
  %2756 = vrot.lane.b32.xlu0 %v825, 24
  %v2757 = vpop.permute.xlu0 %2756
  %2758 = vrot.lane.b32.xlu0 %v826, 24
  %v2759 = vpop.permute.xlu0 %2758
  %2760 = vrot.lane.b32.xlu0 %v827, 24
  %v2761 = vpop.permute.xlu0 %2760
  %2762 = vrot.lane.b32.xlu0 %v828, 24
  %v2763 = vpop.permute.xlu0 %2762
  %2764 = vrot.lane.b32.xlu0 %v829, 24
  %v2765 = vpop.permute.xlu0 %2764
  %2766 = vrot.lane.b32.xlu0 %v830, 24
  %v2767 = vpop.permute.xlu0 %2766
  %2768 = vrot.lane.b32.xlu0 %v831, 24
  %v2769 = vpop.permute.xlu0 %2768
  %2770 = vrot.lane.b32.xlu0 %v832, 24
  %v2771 = vpop.permute.xlu0 %2770
  %2772 = vrot.lane.b32.xlu0 %v833, 24
  %v2773 = vpop.permute.xlu0 %2772
  %2774 = vrot.lane.b32.xlu0 %v834, 24
  %v2775 = vpop.permute.xlu0 %2774
  %2776 = vrot.lane.b32.xlu0 %v835, 24
  %v2777 = vpop.permute.xlu0 %2776
  %2778 = vrot.lane.b32.xlu0 %v836, 24
  %v2779 = vpop.permute.xlu0 %2778
  %2780 = vrot.lane.b32.xlu0 %v837, 24
  %v2781 = vpop.permute.xlu0 %2780
  %2782 = vrot.lane.b32.xlu0 %v838, 24
  %v2783 = vpop.permute.xlu0 %2782
  %2784 = vrot.lane.b32.xlu0 %v839, 24
  %v2785 = vpop.permute.xlu0 %2784
  %2786 = vrot.lane.b32.xlu0 %v840, 24
  %v2787 = vpop.permute.xlu0 %2786
  %2788 = vrot.lane.b32.xlu0 %v841, 24
  %v2789 = vpop.permute.xlu0 %2788
  %2790 = vrot.lane.b32.xlu0 %v842, 24
  %v2791 = vpop.permute.xlu0 %2790
  %2792 = vrot.lane.b32.xlu0 %v843, 24
  %v2793 = vpop.permute.xlu0 %2792
  %2794 = vrot.lane.b32.xlu0 %v844, 24
  %v2795 = vpop.permute.xlu0 %2794
  %2796 = vrot.lane.b32.xlu0 %v845, 24
  %v2797 = vpop.permute.xlu0 %2796
  %2798 = vrot.lane.b32.xlu0 %v846, 24
  %v2799 = vpop.permute.xlu0 %2798
  %2800 = vrot.lane.b32.xlu0 %v847, 24
  %v2801 = vpop.permute.xlu0 %2800
  %2802 = vrot.lane.b32.xlu0 %v848, 24
  %v2803 = vpop.permute.xlu0 %2802
  %2804 = vrot.lane.b32.xlu0 %v849, 24
  %v2805 = vpop.permute.xlu0 %2804
  %2806 = vrot.lane.b32.xlu0 %v850, 24
  %v2807 = vpop.permute.xlu0 %2806
  %2808 = vrot.lane.b32.xlu0 %v851, 24
  %v2809 = vpop.permute.xlu0 %2808
  %2810 = vrot.lane.b32.xlu0 %v852, 24
  %v2811 = vpop.permute.xlu0 %2810
  %2812 = vrot.lane.b32.xlu0 %v853, 24
  %v2813 = vpop.permute.xlu0 %2812
  %2814 = vrot.lane.b32.xlu0 %v854, 24
  %v2815 = vpop.permute.xlu0 %2814
  %2816 = vrot.lane.b32.xlu0 %v855, 24
  %v2817 = vpop.permute.xlu0 %2816
  %2818 = vrot.lane.b32.xlu0 %v856, 24
  %v2819 = vpop.permute.xlu0 %2818
  %2820 = vrot.lane.b32.xlu0 %v857, 24
  %v2821 = vpop.permute.xlu0 %2820
  %2822 = vrot.lane.b32.xlu0 %v858, 24
  %v2823 = vpop.permute.xlu0 %2822
  %2824 = vrot.lane.b32.xlu0 %v859, 24
  %v2825 = vpop.permute.xlu0 %2824
  %2826 = vrot.lane.b32.xlu0 %v860, 24
  %v2827 = vpop.permute.xlu0 %2826
  %2828 = vrot.lane.b32.xlu0 %v861, 24
  %v2829 = vpop.permute.xlu0 %2828
  %2830 = vrot.lane.b32.xlu0 %v862, 24
  %v2831 = vpop.permute.xlu0 %2830
  %2832 = vrot.lane.b32.xlu0 %v863, 24
  %v2833 = vpop.permute.xlu0 %2832
  %2834 = vrot.lane.b32.xlu0 %v864, 24
  %v2835 = vpop.permute.xlu0 %2834
  %2836 = vrot.lane.b32.xlu0 %v865, 24
  %v2837 = vpop.permute.xlu0 %2836
  %2838 = vrot.lane.b32.xlu0 %v866, 24
  %v2839 = vpop.permute.xlu0 %2838
  %2840 = vrot.lane.b32.xlu0 %v867, 24
  %v2841 = vpop.permute.xlu0 %2840
  %2842 = vrot.lane.b32.xlu0 %v868, 24
  %v2843 = vpop.permute.xlu0 %2842
  %2844 = vrot.lane.b32.xlu0 %v869, 24
  %v2845 = vpop.permute.xlu0 %2844
  %2846 = vrot.lane.b32.xlu0 %v870, 24
  %v2847 = vpop.permute.xlu0 %2846
  %2848 = vrot.lane.b32.xlu0 %v871, 24
  %v2849 = vpop.permute.xlu0 %2848
  %2850 = vrot.lane.b32.xlu0 %v872, 24
  %v2851 = vpop.permute.xlu0 %2850
  %2852 = vrot.lane.b32.xlu0 %v873, 24
  %v2853 = vpop.permute.xlu0 %2852
  %2854 = vrot.lane.b32.xlu0 %v874, 24
  %v2855 = vpop.permute.xlu0 %2854
  %2856 = vrot.lane.b32.xlu0 %v875, 24
  %v2857 = vpop.permute.xlu0 %2856
  %2858 = vrot.lane.b32.xlu0 %v876, 24
  %v2859 = vpop.permute.xlu0 %2858
  %2860 = vrot.lane.b32.xlu0 %v877, 24
  %v2861 = vpop.permute.xlu0 %2860
  %v2926 = vsel %vm126, %v301, %v943
  %v2927 = vsel %vm126, %v302, %v945
  %v2928 = vsel %vm126, %v303, %v947
  %v2929 = vsel %vm126, %v304, %v949
  %v2930 = vsel %vm126, %v305, %v951
  %v2931 = vsel %vm126, %v306, %v953
  %v2932 = vsel %vm126, %v307, %v955
  %v2933 = vsel %vm126, %v308, %v957
  %v2934 = vsel %vm126, %v309, %v959
  %v2935 = vsel %vm126, %v310, %v961
  %v2936 = vsel %vm126, %v311, %v963
  %v2937 = vsel %vm126, %v312, %v965
  %v2938 = vsel %vm126, %v313, %v967
  %v2939 = vsel %vm126, %v314, %v969
  %v2940 = vsel %vm126, %v315, %v971
  %v2941 = vsel %vm126, %v316, %v973
  %v2942 = vsel %vm126, %v317, %v975
  %v2943 = vsel %vm126, %v318, %v977
  %v2944 = vsel %vm126, %v319, %v979
  %v2945 = vsel %vm126, %v320, %v981
  %v2946 = vsel %vm126, %v321, %v983
  %v2947 = vsel %vm126, %v322, %v985
  %v2948 = vsel %vm126, %v323, %v987
  %v2949 = vsel %vm126, %v324, %v989
  %v2950 = vsel %vm126, %v325, %v991
  %v2951 = vsel %vm126, %v326, %v993
  %v2952 = vsel %vm126, %v327, %v995
  %v2953 = vsel %vm126, %v328, %v997
  %v2954 = vsel %vm126, %v329, %v999
  %v2955 = vsel %vm126, %v330, %v1001
  %v2956 = vsel %vm126, %v331, %v1003
  %v2957 = vsel %vm126, %v332, %v1005
  %v2958 = vsel %vm126, %v333, %v1007
  %v2959 = vsel %vm126, %v334, %v1009
  %v2960 = vsel %vm126, %v335, %v1011
  %v2961 = vsel %vm126, %v336, %v1013
  %v2962 = vsel %vm126, %v337, %v1015
  %v2963 = vsel %vm126, %v338, %v1017
  %v2964 = vsel %vm126, %v339, %v1019
  %v2965 = vsel %vm126, %v340, %v1021
  %v2966 = vsel %vm126, %v341, %v1023
  %v2967 = vsel %vm126, %v342, %v1025
  %v2968 = vsel %vm126, %v343, %v1027
  %v2969 = vsel %vm126, %v344, %v1029
  %v2970 = vsel %vm126, %v345, %v1031
  %v2971 = vsel %vm126, %v346, %v1033
  %v2972 = vsel %vm126, %v347, %v1035
  %v2973 = vsel %vm126, %v348, %v1037
  %v2974 = vsel %vm126, %v349, %v1039
  %v2975 = vsel %vm126, %v350, %v1041
  %v2976 = vsel %vm126, %v351, %v1043
  %v2977 = vsel %vm126, %v352, %v1045
  %v2978 = vsel %vm126, %v353, %v1047
  %v2979 = vsel %vm126, %v354, %v1049
  %v2980 = vsel %vm126, %v355, %v1051
  %v2981 = vsel %vm126, %v356, %v1053
  %v2982 = vsel %vm126, %v357, %v1055
  %v2983 = vsel %vm126, %v358, %v1057
  %v2984 = vsel %vm126, %v359, %v1059
  %v2985 = vsel %vm126, %v360, %v1061
  %v2986 = vsel %vm126, %v361, %v1063
  %v2987 = vsel %vm126, %v362, %v1065
  %v2988 = vsel %vm126, %v363, %v1067
  %v2989 = vsel %vm126, %v364, %v1069
  %vm2990 = vcmask 48128
  %v2991 = vsel %vm2990, %v2926, %v1199
  %v2992 = vsel %vm2990, %v2927, %v1201
  %v2993 = vsel %vm2990, %v2928, %v1203
  %v2994 = vsel %vm2990, %v2929, %v1205
  %v2995 = vsel %vm2990, %v2930, %v1207
  %v2996 = vsel %vm2990, %v2931, %v1209
  %v2997 = vsel %vm2990, %v2932, %v1211
  %v2998 = vsel %vm2990, %v2933, %v1213
  %v2999 = vsel %vm2990, %v2934, %v1215
  %v3000 = vsel %vm2990, %v2935, %v1217
  %v3001 = vsel %vm2990, %v2936, %v1219
  %v3002 = vsel %vm2990, %v2937, %v1221
  %v3003 = vsel %vm2990, %v2938, %v1223
  %v3004 = vsel %vm2990, %v2939, %v1225
  %v3005 = vsel %vm2990, %v2940, %v1227
  %v3006 = vsel %vm2990, %v2941, %v1229
  %v3007 = vsel %vm2990, %v2942, %v1231
  %v3008 = vsel %vm2990, %v2943, %v1233
  %v3009 = vsel %vm2990, %v2944, %v1235
  %v3010 = vsel %vm2990, %v2945, %v1237
  %v3011 = vsel %vm2990, %v2946, %v1239
  %v3012 = vsel %vm2990, %v2947, %v1241
  %v3013 = vsel %vm2990, %v2948, %v1243
  %v3014 = vsel %vm2990, %v2949, %v1245
  %v3015 = vsel %vm2990, %v2950, %v1247
  %v3016 = vsel %vm2990, %v2951, %v1249
  %v3017 = vsel %vm2990, %v2952, %v1251
  %v3018 = vsel %vm2990, %v2953, %v1253
  %v3019 = vsel %vm2990, %v2954, %v1255
  %v3020 = vsel %vm2990, %v2955, %v1257
  %v3021 = vsel %vm2990, %v2956, %v1259
  %v3022 = vsel %vm2990, %v2957, %v1261
  %v3023 = vsel %vm2990, %v2958, %v1263
  %v3024 = vsel %vm2990, %v2959, %v1265
  %v3025 = vsel %vm2990, %v2960, %v1267
  %v3026 = vsel %vm2990, %v2961, %v1269
  %v3027 = vsel %vm2990, %v2962, %v1271
  %v3028 = vsel %vm2990, %v2963, %v1273
  %v3029 = vsel %vm2990, %v2964, %v1275
  %v3030 = vsel %vm2990, %v2965, %v1277
  %v3031 = vsel %vm2990, %v2966, %v1279
  %v3032 = vsel %vm2990, %v2967, %v1281
  %v3033 = vsel %vm2990, %v2968, %v1283
  %v3034 = vsel %vm2990, %v2969, %v1285
  %v3035 = vsel %vm2990, %v2970, %v1287
  %v3036 = vsel %vm2990, %v2971, %v1289
  %v3037 = vsel %vm2990, %v2972, %v1291
  %v3038 = vsel %vm2990, %v2973, %v1293
  %v3039 = vsel %vm2990, %v2974, %v1295
  %v3040 = vsel %vm2990, %v2975, %v1297
  %v3041 = vsel %vm2990, %v2976, %v1299
  %v3042 = vsel %vm2990, %v2977, %v1301
  %v3043 = vsel %vm2990, %v2978, %v1303
  %v3044 = vsel %vm2990, %v2979, %v1305
  %v3045 = vsel %vm2990, %v2980, %v1307
  %v3046 = vsel %vm2990, %v2981, %v1309
  %v3047 = vsel %vm2990, %v2982, %v1311
  %v3048 = vsel %vm2990, %v2983, %v1313
  %v3049 = vsel %vm2990, %v2984, %v1315
  %v3050 = vsel %vm2990, %v2985, %v1317
  %v3051 = vsel %vm2990, %v2986, %v1319
  %v3052 = vsel %vm2990, %v2987, %v1321
  %v3053 = vsel %vm2990, %v2988, %v1323
  %v3054 = vsel %vm2990, %v2989, %v1325
  %vm3055 = vcmask 72704
  %v3056 = vsel %vm3055, %v2991, %v1455
  %v3057 = vsel %vm3055, %v2992, %v1457
  %v3058 = vsel %vm3055, %v2993, %v1459
  %v3059 = vsel %vm3055, %v2994, %v1461
  %v3060 = vsel %vm3055, %v2995, %v1463
  %v3061 = vsel %vm3055, %v2996, %v1465
  %v3062 = vsel %vm3055, %v2997, %v1467
  %v3063 = vsel %vm3055, %v2998, %v1469
  %v3064 = vsel %vm3055, %v2999, %v1471
  %v3065 = vsel %vm3055, %v3000, %v1473
  %v3066 = vsel %vm3055, %v3001, %v1475
  %v3067 = vsel %vm3055, %v3002, %v1477
  %v3068 = vsel %vm3055, %v3003, %v1479
  %v3069 = vsel %vm3055, %v3004, %v1481
  %v3070 = vsel %vm3055, %v3005, %v1483
  %v3071 = vsel %vm3055, %v3006, %v1485
  %v3072 = vsel %vm3055, %v3007, %v1487
  %v3073 = vsel %vm3055, %v3008, %v1489
  %v3074 = vsel %vm3055, %v3009, %v1491
  %v3075 = vsel %vm3055, %v3010, %v1493
  %v3076 = vsel %vm3055, %v3011, %v1495
  %v3077 = vsel %vm3055, %v3012, %v1497
  %v3078 = vsel %vm3055, %v3013, %v1499
  %v3079 = vsel %vm3055, %v3014, %v1501
  %v3080 = vsel %vm3055, %v3015, %v1503
  %v3081 = vsel %vm3055, %v3016, %v1505
  %v3082 = vsel %vm3055, %v3017, %v1507
  %v3083 = vsel %vm3055, %v3018, %v1509
  %v3084 = vsel %vm3055, %v3019, %v1511
  %v3085 = vsel %vm3055, %v3020, %v1513
  %v3086 = vsel %vm3055, %v3021, %v1515
  %v3087 = vsel %vm3055, %v3022, %v1517
  %v3088 = vsel %vm3055, %v3023, %v1519
  %v3089 = vsel %vm3055, %v3024, %v1521
  %v3090 = vsel %vm3055, %v3025, %v1523
  %v3091 = vsel %vm3055, %v3026, %v1525
  %v3092 = vsel %vm3055, %v3027, %v1527
  %v3093 = vsel %vm3055, %v3028, %v1529
  %v3094 = vsel %vm3055, %v3029, %v1531
  %v3095 = vsel %vm3055, %v3030, %v1533
  %v3096 = vsel %vm3055, %v3031, %v1535
  %v3097 = vsel %vm3055, %v3032, %v1537
  %v3098 = vsel %vm3055, %v3033, %v1539
  %v3099 = vsel %vm3055, %v3034, %v1541
  %v3100 = vsel %vm3055, %v3035, %v1543
  %v3101 = vsel %vm3055, %v3036, %v1545
  %v3102 = vsel %vm3055, %v3037, %v1547
  %v3103 = vsel %vm3055, %v3038, %v1549
  %v3104 = vsel %vm3055, %v3039, %v1551
  %v3105 = vsel %vm3055, %v3040, %v1553
  %v3106 = vsel %vm3055, %v3041, %v1555
  %v3107 = vsel %vm3055, %v3042, %v1557
  %v3108 = vsel %vm3055, %v3043, %v1559
  %v3109 = vsel %vm3055, %v3044, %v1561
  %v3110 = vsel %vm3055, %v3045, %v1563
  %v3111 = vsel %vm3055, %v3046, %v1565
  %v3112 = vsel %vm3055, %v3047, %v1567
  %v3113 = vsel %vm3055, %v3048, %v1569
  %v3114 = vsel %vm3055, %v3049, %v1571
  %v3115 = vsel %vm3055, %v3050, %v1573
  %v3116 = vsel %vm3055, %v3051, %v1575
  %v3117 = vsel %vm3055, %v3052, %v1577
  %v3118 = vsel %vm3055, %v3053, %v1579
  %v3119 = vsel %vm3055, %v3054, %v1581
  %vm3120 = vcmask 97280
  %v3121 = vsel %vm3120, %v3056, %v1711
  %v3122 = vsel %vm3120, %v3057, %v1713
  %v3123 = vsel %vm3120, %v3058, %v1715
  %v3124 = vsel %vm3120, %v3059, %v1717
  %v3125 = vsel %vm3120, %v3060, %v1719
  %v3126 = vsel %vm3120, %v3061, %v1721
  %v3127 = vsel %vm3120, %v3062, %v1723
  %v3128 = vsel %vm3120, %v3063, %v1725
  %v3129 = vsel %vm3120, %v3064, %v1727
  %v3130 = vsel %vm3120, %v3065, %v1729
  %v3131 = vsel %vm3120, %v3066, %v1731
  %v3132 = vsel %vm3120, %v3067, %v1733
  %v3133 = vsel %vm3120, %v3068, %v1735
  %v3134 = vsel %vm3120, %v3069, %v1737
  %v3135 = vsel %vm3120, %v3070, %v1739
  %v3136 = vsel %vm3120, %v3071, %v1741
  %v3137 = vsel %vm3120, %v3072, %v1743
  %v3138 = vsel %vm3120, %v3073, %v1745
  %v3139 = vsel %vm3120, %v3074, %v1747
  %v3140 = vsel %vm3120, %v3075, %v1749
  %v3141 = vsel %vm3120, %v3076, %v1751
  %v3142 = vsel %vm3120, %v3077, %v1753
  %v3143 = vsel %vm3120, %v3078, %v1755
  %v3144 = vsel %vm3120, %v3079, %v1757
  %v3145 = vsel %vm3120, %v3080, %v1759
  %v3146 = vsel %vm3120, %v3081, %v1761
  %v3147 = vsel %vm3120, %v3082, %v1763
  %v3148 = vsel %vm3120, %v3083, %v1765
  %v3149 = vsel %vm3120, %v3084, %v1767
  %v3150 = vsel %vm3120, %v3085, %v1769
  %v3151 = vsel %vm3120, %v3086, %v1771
  %v3152 = vsel %vm3120, %v3087, %v1773
  %v3153 = vsel %vm3120, %v3088, %v1775
  %v3154 = vsel %vm3120, %v3089, %v1777
  %v3155 = vsel %vm3120, %v3090, %v1779
  %v3156 = vsel %vm3120, %v3091, %v1781
  %v3157 = vsel %vm3120, %v3092, %v1783
  %v3158 = vsel %vm3120, %v3093, %v1785
  %v3159 = vsel %vm3120, %v3094, %v1787
  %v3160 = vsel %vm3120, %v3095, %v1789
  %v3161 = vsel %vm3120, %v3096, %v1791
  %v3162 = vsel %vm3120, %v3097, %v1793
  %v3163 = vsel %vm3120, %v3098, %v1795
  %v3164 = vsel %vm3120, %v3099, %v1797
  %v3165 = vsel %vm3120, %v3100, %v1799
  %v3166 = vsel %vm3120, %v3101, %v1801
  %v3167 = vsel %vm3120, %v3102, %v1803
  %v3168 = vsel %vm3120, %v3103, %v1805
  %v3169 = vsel %vm3120, %v3104, %v1807
  %v3170 = vsel %vm3120, %v3105, %v1809
  %v3171 = vsel %vm3120, %v3106, %v1811
  %v3172 = vsel %vm3120, %v3107, %v1813
  %v3173 = vsel %vm3120, %v3108, %v1815
  %v3174 = vsel %vm3120, %v3109, %v1817
  %v3175 = vsel %vm3120, %v3110, %v1819
  %v3176 = vsel %vm3120, %v3111, %v1821
  %v3177 = vsel %vm3120, %v3112, %v1823
  %v3178 = vsel %vm3120, %v3113, %v1825
  %v3179 = vsel %vm3120, %v3114, %v1827
  %v3180 = vsel %vm3120, %v3115, %v1829
  %v3181 = vsel %vm3120, %v3116, %v1831
  %v3182 = vsel %vm3120, %v3117, %v1833
  %v3183 = vsel %vm3120, %v3118, %v1835
  %v3184 = vsel %vm3120, %v3119, %v1837
  %vm3185 = vcmask 121856
  %v3186 = vsel %vm3185, %v3121, %v1967
  %v3187 = vsel %vm3185, %v3122, %v1969
  %v3188 = vsel %vm3185, %v3123, %v1971
  %v3189 = vsel %vm3185, %v3124, %v1973
  %v3190 = vsel %vm3185, %v3125, %v1975
  %v3191 = vsel %vm3185, %v3126, %v1977
  %v3192 = vsel %vm3185, %v3127, %v1979
  %v3193 = vsel %vm3185, %v3128, %v1981
  %v3194 = vsel %vm3185, %v3129, %v1983
  %v3195 = vsel %vm3185, %v3130, %v1985
  %v3196 = vsel %vm3185, %v3131, %v1987
  %v3197 = vsel %vm3185, %v3132, %v1989
  %v3198 = vsel %vm3185, %v3133, %v1991
  %v3199 = vsel %vm3185, %v3134, %v1993
  %v3200 = vsel %vm3185, %v3135, %v1995
  %v3201 = vsel %vm3185, %v3136, %v1997
  %v3202 = vsel %vm3185, %v3137, %v1999
  %v3203 = vsel %vm3185, %v3138, %v2001
  %v3204 = vsel %vm3185, %v3139, %v2003
  %v3205 = vsel %vm3185, %v3140, %v2005
  %v3206 = vsel %vm3185, %v3141, %v2007
  %v3207 = vsel %vm3185, %v3142, %v2009
  %v3208 = vsel %vm3185, %v3143, %v2011
  %v3209 = vsel %vm3185, %v3144, %v2013
  %v3210 = vsel %vm3185, %v3145, %v2015
  %v3211 = vsel %vm3185, %v3146, %v2017
  %v3212 = vsel %vm3185, %v3147, %v2019
  %v3213 = vsel %vm3185, %v3148, %v2021
  %v3214 = vsel %vm3185, %v3149, %v2023
  %v3215 = vsel %vm3185, %v3150, %v2025
  %v3216 = vsel %vm3185, %v3151, %v2027
  %v3217 = vsel %vm3185, %v3152, %v2029
  %v3218 = vsel %vm3185, %v3153, %v2031
  %v3219 = vsel %vm3185, %v3154, %v2033
  %v3220 = vsel %vm3185, %v3155, %v2035
  %v3221 = vsel %vm3185, %v3156, %v2037
  %v3222 = vsel %vm3185, %v3157, %v2039
  %v3223 = vsel %vm3185, %v3158, %v2041
  %v3224 = vsel %vm3185, %v3159, %v2043
  %v3225 = vsel %vm3185, %v3160, %v2045
  %v3226 = vsel %vm3185, %v3161, %v2047
  %v3227 = vsel %vm3185, %v3162, %v2049
  %v3228 = vsel %vm3185, %v3163, %v2051
  %v3229 = vsel %vm3185, %v3164, %v2053
  %v3230 = vsel %vm3185, %v3165, %v2055
  %v3231 = vsel %vm3185, %v3166, %v2057
  %v3232 = vsel %vm3185, %v3167, %v2059
  %v3233 = vsel %vm3185, %v3168, %v2061
  %v3234 = vsel %vm3185, %v3169, %v2063
  %v3235 = vsel %vm3185, %v3170, %v2065
  %v3236 = vsel %vm3185, %v3171, %v2067
  %v3237 = vsel %vm3185, %v3172, %v2069
  %v3238 = vsel %vm3185, %v3173, %v2071
  %v3239 = vsel %vm3185, %v3174, %v2073
  %v3240 = vsel %vm3185, %v3175, %v2075
  %v3241 = vsel %vm3185, %v3176, %v2077
  %v3242 = vsel %vm3185, %v3177, %v2079
  %v3243 = vsel %vm3185, %v3178, %v2081
  %v3244 = vsel %vm3185, %v3179, %v2083
  %v3245 = vsel %vm3185, %v3180, %v2085
  %v3246 = vsel %vm3185, %v3181, %v2087
  %v3247 = vsel %vm3185, %v3182, %v2089
  %v3248 = vsel %vm3185, %v3183, %v2091
  %v3249 = vsel %vm3185, %v3184, %v2093
  %vm3250 = vcmask 146432
  %v3251 = vsel %vm3250, %v3186, %v2223
  %v3252 = vsel %vm3250, %v3187, %v2225
  %v3253 = vsel %vm3250, %v3188, %v2227
  %v3254 = vsel %vm3250, %v3189, %v2229
  %v3255 = vsel %vm3250, %v3190, %v2231
  %v3256 = vsel %vm3250, %v3191, %v2233
  %v3257 = vsel %vm3250, %v3192, %v2235
  %v3258 = vsel %vm3250, %v3193, %v2237
  %v3259 = vsel %vm3250, %v3194, %v2239
  %v3260 = vsel %vm3250, %v3195, %v2241
  %v3261 = vsel %vm3250, %v3196, %v2243
  %v3262 = vsel %vm3250, %v3197, %v2245
  %v3263 = vsel %vm3250, %v3198, %v2247
  %v3264 = vsel %vm3250, %v3199, %v2249
  %v3265 = vsel %vm3250, %v3200, %v2251
  %v3266 = vsel %vm3250, %v3201, %v2253
  %v3267 = vsel %vm3250, %v3202, %v2255
  %v3268 = vsel %vm3250, %v3203, %v2257
  %v3269 = vsel %vm3250, %v3204, %v2259
  %v3270 = vsel %vm3250, %v3205, %v2261
  %v3271 = vsel %vm3250, %v3206, %v2263
  %v3272 = vsel %vm3250, %v3207, %v2265
  %v3273 = vsel %vm3250, %v3208, %v2267
  %v3274 = vsel %vm3250, %v3209, %v2269
  %v3275 = vsel %vm3250, %v3210, %v2271
  %v3276 = vsel %vm3250, %v3211, %v2273
  %v3277 = vsel %vm3250, %v3212, %v2275
  %v3278 = vsel %vm3250, %v3213, %v2277
  %v3279 = vsel %vm3250, %v3214, %v2279
  %v3280 = vsel %vm3250, %v3215, %v2281
  %v3281 = vsel %vm3250, %v3216, %v2283
  %v3282 = vsel %vm3250, %v3217, %v2285
  %v3283 = vsel %vm3250, %v3218, %v2287
  %v3284 = vsel %vm3250, %v3219, %v2289
  %v3285 = vsel %vm3250, %v3220, %v2291
  %v3286 = vsel %vm3250, %v3221, %v2293
  %v3287 = vsel %vm3250, %v3222, %v2295
  %v3288 = vsel %vm3250, %v3223, %v2297
  %v3289 = vsel %vm3250, %v3224, %v2299
  %v3290 = vsel %vm3250, %v3225, %v2301
  %v3291 = vsel %vm3250, %v3226, %v2303
  %v3292 = vsel %vm3250, %v3227, %v2305
  %v3293 = vsel %vm3250, %v3228, %v2307
  %v3294 = vsel %vm3250, %v3229, %v2309
  %v3295 = vsel %vm3250, %v3230, %v2311
  %v3296 = vsel %vm3250, %v3231, %v2313
  %v3297 = vsel %vm3250, %v3232, %v2315
  %v3298 = vsel %vm3250, %v3233, %v2317
  %v3299 = vsel %vm3250, %v3234, %v2319
  %v3300 = vsel %vm3250, %v3235, %v2321
  %v3301 = vsel %vm3250, %v3236, %v2323
  %v3302 = vsel %vm3250, %v3237, %v2325
  %v3303 = vsel %vm3250, %v3238, %v2327
  %v3304 = vsel %vm3250, %v3239, %v2329
  %v3305 = vsel %vm3250, %v3240, %v2331
  %v3306 = vsel %vm3250, %v3241, %v2333
  %v3307 = vsel %vm3250, %v3242, %v2335
  %v3308 = vsel %vm3250, %v3243, %v2337
  %v3309 = vsel %vm3250, %v3244, %v2339
  %v3310 = vsel %vm3250, %v3245, %v2341
  %v3311 = vsel %vm3250, %v3246, %v2343
  %v3312 = vsel %vm3250, %v3247, %v2345
  %v3313 = vsel %vm3250, %v3248, %v2347
  %v3314 = vsel %vm3250, %v3249, %v2349
  %vm3315 = vcmask 171008
  %v3316 = vsel %vm3315, %v3251, %v2479
  %v3317 = vsel %vm3315, %v3252, %v2481
  %v3318 = vsel %vm3315, %v3253, %v2483
  %v3319 = vsel %vm3315, %v3254, %v2485
  %v3320 = vsel %vm3315, %v3255, %v2487
  %v3321 = vsel %vm3315, %v3256, %v2489
  %v3322 = vsel %vm3315, %v3257, %v2491
  %v3323 = vsel %vm3315, %v3258, %v2493
  %v3324 = vsel %vm3315, %v3259, %v2495
  %v3325 = vsel %vm3315, %v3260, %v2497
  %v3326 = vsel %vm3315, %v3261, %v2499
  %v3327 = vsel %vm3315, %v3262, %v2501
  %v3328 = vsel %vm3315, %v3263, %v2503
  %v3329 = vsel %vm3315, %v3264, %v2505
  %v3330 = vsel %vm3315, %v3265, %v2507
  %v3331 = vsel %vm3315, %v3266, %v2509
  %v3332 = vsel %vm3315, %v3267, %v2511
  %v3333 = vsel %vm3315, %v3268, %v2513
  %v3334 = vsel %vm3315, %v3269, %v2515
  %v3335 = vsel %vm3315, %v3270, %v2517
  %v3336 = vsel %vm3315, %v3271, %v2519
  %v3337 = vsel %vm3315, %v3272, %v2521
  %v3338 = vsel %vm3315, %v3273, %v2523
  %v3339 = vsel %vm3315, %v3274, %v2525
  %v3340 = vsel %vm3315, %v3275, %v2527
  %v3341 = vsel %vm3315, %v3276, %v2529
  %v3342 = vsel %vm3315, %v3277, %v2531
  %v3343 = vsel %vm3315, %v3278, %v2533
  %v3344 = vsel %vm3315, %v3279, %v2535
  %v3345 = vsel %vm3315, %v3280, %v2537
  %v3346 = vsel %vm3315, %v3281, %v2539
  %v3347 = vsel %vm3315, %v3282, %v2541
  %v3348 = vsel %vm3315, %v3283, %v2543
  %v3349 = vsel %vm3315, %v3284, %v2545
  %v3350 = vsel %vm3315, %v3285, %v2547
  %v3351 = vsel %vm3315, %v3286, %v2549
  %v3352 = vsel %vm3315, %v3287, %v2551
  %v3353 = vsel %vm3315, %v3288, %v2553
  %v3354 = vsel %vm3315, %v3289, %v2555
  %v3355 = vsel %vm3315, %v3290, %v2557
  %v3356 = vsel %vm3315, %v3291, %v2559
  %v3357 = vsel %vm3315, %v3292, %v2561
  %v3358 = vsel %vm3315, %v3293, %v2563
  %v3359 = vsel %vm3315, %v3294, %v2565
  %v3360 = vsel %vm3315, %v3295, %v2567
  %v3361 = vsel %vm3315, %v3296, %v2569
  %v3362 = vsel %vm3315, %v3297, %v2571
  %v3363 = vsel %vm3315, %v3298, %v2573
  %v3364 = vsel %vm3315, %v3299, %v2575
  %v3365 = vsel %vm3315, %v3300, %v2577
  %v3366 = vsel %vm3315, %v3301, %v2579
  %v3367 = vsel %vm3315, %v3302, %v2581
  %v3368 = vsel %vm3315, %v3303, %v2583
  %v3369 = vsel %vm3315, %v3304, %v2585
  %v3370 = vsel %vm3315, %v3305, %v2587
  %v3371 = vsel %vm3315, %v3306, %v2589
  %v3372 = vsel %vm3315, %v3307, %v2591
  %v3373 = vsel %vm3315, %v3308, %v2593
  %v3374 = vsel %vm3315, %v3309, %v2595
  %v3375 = vsel %vm3315, %v3310, %v2597
  %v3376 = vsel %vm3315, %v3311, %v2599
  %v3377 = vsel %vm3315, %v3312, %v2601
  %v3378 = vsel %vm3315, %v3313, %v2603
  %v3379 = vsel %vm3315, %v3314, %v2605
  %vm3380 = vcmask 195584
  %v3381 = vsel %vm3380, %v3316, %v2735
  %v3382 = vsel %vm3380, %v3317, %v2737
  %v3383 = vsel %vm3380, %v3318, %v2739
  %v3384 = vsel %vm3380, %v3319, %v2741
  %v3385 = vsel %vm3380, %v3320, %v2743
  %v3386 = vsel %vm3380, %v3321, %v2745
  %v3387 = vsel %vm3380, %v3322, %v2747
  %v3388 = vsel %vm3380, %v3323, %v2749
  %v3389 = vsel %vm3380, %v3324, %v2751
  %v3390 = vsel %vm3380, %v3325, %v2753
  %v3391 = vsel %vm3380, %v3326, %v2755
  %v3392 = vsel %vm3380, %v3327, %v2757
  %v3393 = vsel %vm3380, %v3328, %v2759
  %v3394 = vsel %vm3380, %v3329, %v2761
  %v3395 = vsel %vm3380, %v3330, %v2763
  %v3396 = vsel %vm3380, %v3331, %v2765
  %v3397 = vsel %vm3380, %v3332, %v2767
  %v3398 = vsel %vm3380, %v3333, %v2769
  %v3399 = vsel %vm3380, %v3334, %v2771
  %v3400 = vsel %vm3380, %v3335, %v2773
  %v3401 = vsel %vm3380, %v3336, %v2775
  %v3402 = vsel %vm3380, %v3337, %v2777
  %v3403 = vsel %vm3380, %v3338, %v2779
  %v3404 = vsel %vm3380, %v3339, %v2781
  %v3405 = vsel %vm3380, %v3340, %v2783
  %v3406 = vsel %vm3380, %v3341, %v2785
  %v3407 = vsel %vm3380, %v3342, %v2787
  %v3408 = vsel %vm3380, %v3343, %v2789
  %v3409 = vsel %vm3380, %v3344, %v2791
  %v3410 = vsel %vm3380, %v3345, %v2793
  %v3411 = vsel %vm3380, %v3346, %v2795
  %v3412 = vsel %vm3380, %v3347, %v2797
  %v3413 = vsel %vm3380, %v3348, %v2799
  %v3414 = vsel %vm3380, %v3349, %v2801
  %v3415 = vsel %vm3380, %v3350, %v2803
  %v3416 = vsel %vm3380, %v3351, %v2805
  %v3417 = vsel %vm3380, %v3352, %v2807
  %v3418 = vsel %vm3380, %v3353, %v2809
  %v3419 = vsel %vm3380, %v3354, %v2811
  %v3420 = vsel %vm3380, %v3355, %v2813
  %v3421 = vsel %vm3380, %v3356, %v2815
  %v3422 = vsel %vm3380, %v3357, %v2817
  %v3423 = vsel %vm3380, %v3358, %v2819
  %v3424 = vsel %vm3380, %v3359, %v2821
  %v3425 = vsel %vm3380, %v3360, %v2823
  %v3426 = vsel %vm3380, %v3361, %v2825
  %v3427 = vsel %vm3380, %v3362, %v2827
  %v3428 = vsel %vm3380, %v3363, %v2829
  %v3429 = vsel %vm3380, %v3364, %v2831
  %v3430 = vsel %vm3380, %v3365, %v2833
  %v3431 = vsel %vm3380, %v3366, %v2835
  %v3432 = vsel %vm3380, %v3367, %v2837
  %v3433 = vsel %vm3380, %v3368, %v2839
  %v3434 = vsel %vm3380, %v3369, %v2841
  %v3435 = vsel %vm3380, %v3370, %v2843
  %v3436 = vsel %vm3380, %v3371, %v2845
  %v3437 = vsel %vm3380, %v3372, %v2847
  %v3438 = vsel %vm3380, %v3373, %v2849
  %v3439 = vsel %vm3380, %v3374, %v2851
  %v3440 = vsel %vm3380, %v3375, %v2853
  %v3441 = vsel %vm3380, %v3376, %v2855
  %v3442 = vsel %vm3380, %v3377, %v2857
  %v3443 = vsel %vm3380, %v3378, %v2859
  %v3444 = vsel %vm3380, %v3379, %v2861
  %v3445 = vld [vmem:[%s1] sm:$0xff]
  %v3446 = vld [vmem:[%s1 + $0x8] sm:$0xff]
  %v3447 = vld [vmem:[%s1 + $0x10] sm:$0xff]
  %v3448 = vld [vmem:[%s1 + $0x18] sm:$0x7]
  %vm3449 = vcmask 220160
  %v3451 = vsel %vm3449, %v3381, 0
  %v3454 = vsel %vm3449, %v3382, 0
  %v3457 = vsel %vm3449, %v3383, 0
  %v3460 = vsel %vm3449, %v3384, 0
  %v3463 = vsel %vm3449, %v3385, 0
  %v3466 = vsel %vm3449, %v3386, 0
  %v3469 = vsel %vm3449, %v3387, 0
  %v3472 = vsel %vm3449, %v3388, 0
  %v3475 = vsel %vm3449, %v3389, 0
  %v3478 = vsel %vm3449, %v3390, 0
  %v3481 = vsel %vm3449, %v3391, 0
  %v3484 = vsel %vm3449, %v3392, 0
  %v3487 = vsel %vm3449, %v3393, 0
  %v3490 = vsel %vm3449, %v3394, 0
  %v3493 = vsel %vm3449, %v3395, 0
  %v3496 = vsel %vm3449, %v3396, 0
  %v3499 = vsel %vm3449, %v3397, 0
  %v3502 = vsel %vm3449, %v3398, 0
  %v3505 = vsel %vm3449, %v3399, 0
  %v3508 = vsel %vm3449, %v3400, 0
  %v3511 = vsel %vm3449, %v3401, 0
  %v3514 = vsel %vm3449, %v3402, 0
  %v3517 = vsel %vm3449, %v3403, 0
  %v3520 = vsel %vm3449, %v3404, 0
  %v3523 = vsel %vm3449, %v3405, 0
  %v3526 = vsel %vm3449, %v3406, 0
  %v3529 = vsel %vm3449, %v3407, 0
  %v3532 = vsel %vm3449, %v3408, 0
  %v3535 = vsel %vm3449, %v3409, 0
  %v3538 = vsel %vm3449, %v3410, 0
  %v3541 = vsel %vm3449, %v3411, 0
  %v3544 = vsel %vm3449, %v3412, 0
  %v3547 = vsel %vm3449, %v3413, 0
  %v3550 = vsel %vm3449, %v3414, 0
  %v3553 = vsel %vm3449, %v3415, 0
  %v3556 = vsel %vm3449, %v3416, 0
  %v3559 = vsel %vm3449, %v3417, 0
  %v3562 = vsel %vm3449, %v3418, 0
  %v3565 = vsel %vm3449, %v3419, 0
  %v3568 = vsel %vm3449, %v3420, 0
  %v3571 = vsel %vm3449, %v3421, 0
  %v3574 = vsel %vm3449, %v3422, 0
  %v3577 = vsel %vm3449, %v3423, 0
  %v3580 = vsel %vm3449, %v3424, 0
  %v3583 = vsel %vm3449, %v3425, 0
  %v3586 = vsel %vm3449, %v3426, 0
  %v3589 = vsel %vm3449, %v3427, 0
  %v3592 = vsel %vm3449, %v3428, 0
  %v3595 = vsel %vm3449, %v3429, 0
  %v3598 = vsel %vm3449, %v3430, 0
  %v3601 = vsel %vm3449, %v3431, 0
  %v3604 = vsel %vm3449, %v3432, 0
  %v3607 = vsel %vm3449, %v3433, 0
  %v3610 = vsel %vm3449, %v3434, 0
  %v3613 = vsel %vm3449, %v3435, 0
  %v3616 = vsel %vm3449, %v3436, 0
  %v3619 = vsel %vm3449, %v3437, 0
  %v3622 = vsel %vm3449, %v3438, 0
  %v3625 = vsel %vm3449, %v3439, 0
  %v3628 = vsel %vm3449, %v3440, 0
  %v3631 = vsel %vm3449, %v3441, 0
  %v3634 = vsel %vm3449, %v3442, 0
  %v3637 = vsel %vm3449, %v3443, 0
  %v3640 = vsel %vm3449, %v3444, 0
  %vm3642 = vcmask 1042432
  %v3644 = vsel %vm3642, %v3448, 0
  %3646 = vmatprep.subr.mxu0 0.0
  %3647 = vmatpush1.msra.mxu0 %v3445
  %3648 = vmatprep.subr.mxu0 0.0
  %3649 = vmatpush1.msra.mxu0 %v3446
  %3650 = vmatprep.subr.mxu0 0.0
  %3651 = vmatpush1.msra.mxu0 %v3447
  %3652 = vmatprep.subr.mxu0 0.0
  %3653 = vmatpush1.msra.mxu0 %v3644
  %3654 = vmatprep.subr.mxu0 0.0
  %3655 = vmatpush1.msra.mxu0 0.0
  %3656 = vmatprep.subr.mxu0 0.0
  %3657 = vmatpush1.msra.mxu0 0.0
  %3658 = vmatprep.subr.mxu0 0.0
  %3659 = vmatpush1.msra.mxu0 0.0
  %3660 = vmatprep.subr.mxu0 0.0
  %3661 = vmatpush1.msra.mxu0 0.0
  %3662 = vmatprep.subr.mxu0 0.0
  %3663 = vmatpush1.msra.mxu0 0.0
  %3664 = vmatprep.subr.mxu0 0.0
  %3665 = vmatpush1.msra.mxu0 0.0
  %3666 = vmatprep.subr.mxu0 0.0
  %3667 = vmatpush1.msra.mxu0 0.0
  %3668 = vmatprep.subr.mxu0 0.0
  %3669 = vmatpush1.msra.mxu0 0.0
  %3670 = vmatprep.subr.mxu0 0.0
  %3671 = vmatpush1.msra.mxu0 0.0
  %3672 = vmatprep.subr.mxu0 0.0
  %3673 = vmatpush1.msra.mxu0 0.0
  %3674 = vmatprep.subr.mxu0 0.0
  %3675 = vmatpush1.msra.mxu0 0.0
  %3676 = vmatprep.subr.mxu0 0.0
  %3677 = vmatpush1.msra.mxu0 0.0
  %3678 = vmatprep.subr.mxu0 0.0
  %3679 = vmatpush1.msra.mxu0 0.0
  %3680 = vmatprep.subr.mxu0 0.0
  %3681 = vmatpush1.msra.mxu0 0.0
  %3682 = vmatprep.subr.mxu0 0.0
  %3683 = vmatpush1.msra.mxu0 0.0
  %3684 = vmatprep.subr.mxu0 0.0
  %3685 = vmatpush1.msra.mxu0 0.0
  %3686 = vmatprep.subr.mxu0 0.0
  %3687 = vmatpush1.msra.mxu0 0.0
  %3688 = vmatprep.subr.mxu0 0.0
  %3689 = vmatpush1.msra.mxu0 0.0
  %3690 = vmatprep.subr.mxu0 0.0
  %3691 = vmatpush1.msra.mxu0 0.0
  %3692 = vmatprep.subr.mxu0 0.0
  %3693 = vmatpush1.msra.mxu0 0.0
  %3694 = vmatprep.subr.mxu0 0.0
  %3695 = vmatpush1.msra.mxu0 0.0
  %3696 = vmatprep.subr.mxu0 0.0
  %3697 = vmatpush1.msra.mxu0 0.0
  %3698 = vmatprep.subr.mxu0 0.0
  %3699 = vmatpush1.msra.mxu0 0.0
  %3700 = vmatprep.subr.mxu0 0.0
  %3701 = vmatpush1.msra.mxu0 0.0
  %3702 = vmatprep.subr.mxu0 0.0
  %3703 = vmatpush1.msra.mxu0 0.0
  %3704 = vmatprep.subr.mxu0 0.0
  %3705 = vmatpush1.msra.mxu0 0.0
  %3706 = vmatprep.subr.mxu0 0.0
  %3707 = vmatpush1.msra.mxu0 0.0
  %3708 = vmatprep.subr.mxu0 0.0
  %3709 = vmatpush1.msra.mxu0 0.0
  %3710 = vmatprep.mubr.f32.mxu0 0.0
  %3711 = vmatmul.mubr.f32.gmra.mrb[0].mxu0 %v3451
  %v3712 = vpop.f32.mrb[0].mxu0
  %v3713 = vadd.f32 0.0, %v3712
  %v3714 = vpop.f32.mrb[0].mxu0
  %3715 = vmatprep.mubr.f32.mxu0 0.0
  %3716 = vmatmul.mubr.f32.gmra.mrb[0].mxu0 %v3454
  %v3717 = vpop.f32.mrb[0].mxu0
  %v3718 = vadd.f32 0.0, %v3717
  %v3719 = vpop.f32.mrb[0].mxu0
  %3720 = vmatprep.mubr.f32.mxu0 0.0
  %3721 = vmatmul.mubr.f32.gmra.mrb[0].mxu0 %v3457
  %v3722 = vpop.f32.mrb[0].mxu0
  %v3723 = vadd.f32 0.0, %v3722
  %v3724 = vpop.f32.mrb[0].mxu0
  %3725 = vmatprep.mubr.f32.mxu0 0.0
  %3726 = vmatmul.mubr.f32.gmra.mrb[0].mxu0 %v3460
  %v3727 = vpop.f32.mrb[0].mxu0
  %v3728 = vadd.f32 0.0, %v3727
  %v3729 = vpop.f32.mrb[0].mxu0
  %3730 = vmatprep.mubr.f32.mxu0 0.0
  %3731 = vmatmul.mubr.f32.gmra.mrb[0].mxu0 %v3463
  %v3732 = vpop.f32.mrb[0].mxu0
  %v3733 = vadd.f32 0.0, %v3732
  %v3734 = vpop.f32.mrb[0].mxu0
  %3735 = vmatprep.mubr.f32.mxu0 0.0
  %3736 = vmatmul.mubr.f32.gmra.mrb[0].mxu0 %v3466
  %v3737 = vpop.f32.mrb[0].mxu0
  %v3738 = vadd.f32 0.0, %v3737
  %v3739 = vpop.f32.mrb[0].mxu0
  %3740 = vmatprep.mubr.f32.mxu0 0.0
  %3741 = vmatmul.mubr.f32.gmra.mrb[0].mxu0 %v3469
  %v3742 = vpop.f32.mrb[0].mxu0
  %v3743 = vadd.f32 0.0, %v3742
  %v3744 = vpop.f32.mrb[0].mxu0
  %3745 = vmatprep.mubr.f32.mxu0 0.0
  %3746 = vmatmul.mubr.f32.gmra.mrb[0].mxu0 %v3472
  %v3747 = vpop.f32.mrb[0].mxu0
  %v3748 = vadd.f32 0.0, %v3747
  %v3749 = vpop.f32.mrb[0].mxu0
  %3750 = vmatprep.mubr.f32.mxu0 0.0
  %3751 = vmatmul.mubr.f32.gmra.mrb[0].mxu0 %v3475
  %v3752 = vpop.f32.mrb[0].mxu0
  %v3753 = vadd.f32 0.0, %v3752
  %v3754 = vpop.f32.mrb[0].mxu0
  %3755 = vmatprep.mubr.f32.mxu0 0.0
  %3756 = vmatmul.mubr.f32.gmra.mrb[0].mxu0 %v3478
  %v3757 = vpop.f32.mrb[0].mxu0
  %v3758 = vadd.f32 0.0, %v3757
  %v3759 = vpop.f32.mrb[0].mxu0
  %3760 = vmatprep.mubr.f32.mxu0 0.0
  %3761 = vmatmul.mubr.f32.gmra.mrb[0].mxu0 %v3481
  %v3762 = vpop.f32.mrb[0].mxu0
  %v3763 = vadd.f32 0.0, %v3762
  %v3764 = vpop.f32.mrb[0].mxu0
  %3765 = vmatprep.mubr.f32.mxu0 0.0
  %3766 = vmatmul.mubr.f32.gmra.mrb[0].mxu0 %v3484
  %v3767 = vpop.f32.mrb[0].mxu0
  %v3768 = vadd.f32 0.0, %v3767
  %v3769 = vpop.f32.mrb[0].mxu0
  %3770 = vmatprep.mubr.f32.mxu0 0.0
  %3771 = vmatmul.mubr.f32.gmra.mrb[0].mxu0 %v3487
  %v3772 = vpop.f32.mrb[0].mxu0
  %v3773 = vadd.f32 0.0, %v3772
  %v3774 = vpop.f32.mrb[0].mxu0
  %3775 = vmatprep.mubr.f32.mxu0 0.0
  %3776 = vmatmul.mubr.f32.gmra.mrb[0].mxu0 %v3490
  %v3777 = vpop.f32.mrb[0].mxu0
  %v3778 = vadd.f32 0.0, %v3777
  %v3779 = vpop.f32.mrb[0].mxu0
  %3780 = vmatprep.mubr.f32.mxu0 0.0
  %3781 = vmatmul.mubr.f32.gmra.mrb[0].mxu0 %v3493
  %v3782 = vpop.f32.mrb[0].mxu0
  %v3783 = vadd.f32 0.0, %v3782
  %v3784 = vpop.f32.mrb[0].mxu0
  %3785 = vmatprep.mubr.f32.mxu0 0.0
  %3786 = vmatmul.mubr.f32.gmra.mrb[0].mxu0 %v3496
  %v3787 = vpop.f32.mrb[0].mxu0
  %v3788 = vadd.f32 0.0, %v3787
  %v3789 = vpop.f32.mrb[0].mxu0
  %3790 = vmatprep.mubr.f32.mxu0 0.0
  %3791 = vmatmul.mubr.f32.gmra.mrb[0].mxu0 %v3499
  %v3792 = vpop.f32.mrb[0].mxu0
  %v3793 = vadd.f32 0.0, %v3792
  %v3794 = vpop.f32.mrb[0].mxu0
  %3795 = vmatprep.mubr.f32.mxu0 0.0
  %3796 = vmatmul.mubr.f32.gmra.mrb[0].mxu0 %v3502
  %v3797 = vpop.f32.mrb[0].mxu0
  %v3798 = vadd.f32 0.0, %v3797
  %v3799 = vpop.f32.mrb[0].mxu0
  %3800 = vmatprep.mubr.f32.mxu0 0.0
  %3801 = vmatmul.mubr.f32.gmra.mrb[0].mxu0 %v3505
  %v3802 = vpop.f32.mrb[0].mxu0
  %v3803 = vadd.f32 0.0, %v3802
  %v3804 = vpop.f32.mrb[0].mxu0
  %3805 = vmatprep.mubr.f32.mxu0 0.0
  %3806 = vmatmul.mubr.f32.gmra.mrb[0].mxu0 %v3508
  %v3807 = vpop.f32.mrb[0].mxu0
  %v3808 = vadd.f32 0.0, %v3807
  %v3809 = vpop.f32.mrb[0].mxu0
  %3810 = vmatprep.mubr.f32.mxu0 0.0
  %3811 = vmatmul.mubr.f32.gmra.mrb[0].mxu0 %v3511
  %v3812 = vpop.f32.mrb[0].mxu0
  %v3813 = vadd.f32 0.0, %v3812
  %v3814 = vpop.f32.mrb[0].mxu0
  %3815 = vmatprep.mubr.f32.mxu0 0.0
  %3816 = vmatmul.mubr.f32.gmra.mrb[0].mxu0 %v3514
  %v3817 = vpop.f32.mrb[0].mxu0
  %v3818 = vadd.f32 0.0, %v3817
  %v3819 = vpop.f32.mrb[0].mxu0
  %3820 = vmatprep.mubr.f32.mxu0 0.0
  %3821 = vmatmul.mubr.f32.gmra.mrb[0].mxu0 %v3517
  %v3822 = vpop.f32.mrb[0].mxu0
  %v3823 = vadd.f32 0.0, %v3822
  %v3824 = vpop.f32.mrb[0].mxu0
  %3825 = vmatprep.mubr.f32.mxu0 0.0
  %3826 = vmatmul.mubr.f32.gmra.mrb[0].mxu0 %v3520
  %v3827 = vpop.f32.mrb[0].mxu0
  %v3828 = vadd.f32 0.0, %v3827
  %v3829 = vpop.f32.mrb[0].mxu0
  %3830 = vmatprep.mubr.f32.mxu0 0.0
  %3831 = vmatmul.mubr.f32.gmra.mrb[0].mxu0 %v3523
  %v3832 = vpop.f32.mrb[0].mxu0
  %v3833 = vadd.f32 0.0, %v3832
  %v3834 = vpop.f32.mrb[0].mxu0
  %3835 = vmatprep.mubr.f32.mxu0 0.0
  %3836 = vmatmul.mubr.f32.gmra.mrb[0].mxu0 %v3526
  %v3837 = vpop.f32.mrb[0].mxu0
  %v3838 = vadd.f32 0.0, %v3837
  %v3839 = vpop.f32.mrb[0].mxu0
  %3840 = vmatprep.mubr.f32.mxu0 0.0
  %3841 = vmatmul.mubr.f32.gmra.mrb[0].mxu0 %v3529
  %v3842 = vpop.f32.mrb[0].mxu0
  %v3843 = vadd.f32 0.0, %v3842
  %v3844 = vpop.f32.mrb[0].mxu0
  %3845 = vmatprep.mubr.f32.mxu0 0.0
  %3846 = vmatmul.mubr.f32.gmra.mrb[0].mxu0 %v3532
  %v3847 = vpop.f32.mrb[0].mxu0
  %v3848 = vadd.f32 0.0, %v3847
  %v3849 = vpop.f32.mrb[0].mxu0
  %3850 = vmatprep.mubr.f32.mxu0 0.0
  %3851 = vmatmul.mubr.f32.gmra.mrb[0].mxu0 %v3535
  %v3852 = vpop.f32.mrb[0].mxu0
  %v3853 = vadd.f32 0.0, %v3852
  %v3854 = vpop.f32.mrb[0].mxu0
  %3855 = vmatprep.mubr.f32.mxu0 0.0
  %3856 = vmatmul.mubr.f32.gmra.mrb[0].mxu0 %v3538
  %v3857 = vpop.f32.mrb[0].mxu0
  %v3858 = vadd.f32 0.0, %v3857
  %v3859 = vpop.f32.mrb[0].mxu0
  %3860 = vmatprep.mubr.f32.mxu0 0.0
  %3861 = vmatmul.mubr.f32.gmra.mrb[0].mxu0 %v3541
  %v3862 = vpop.f32.mrb[0].mxu0
  %v3863 = vadd.f32 0.0, %v3862
  %v3864 = vpop.f32.mrb[0].mxu0
  %3865 = vmatprep.mubr.f32.mxu0 0.0
  %3866 = vmatmul.mubr.f32.gmra.mrb[0].mxu0 %v3544
  %v3867 = vpop.f32.mrb[0].mxu0
  %v3868 = vadd.f32 0.0, %v3867
  %v3869 = vpop.f32.mrb[0].mxu0
  %3870 = vmatprep.mubr.f32.mxu0 0.0
  %3871 = vmatmul.mubr.f32.gmra.mrb[0].mxu0 %v3547
  %v3872 = vpop.f32.mrb[0].mxu0
  %v3873 = vadd.f32 0.0, %v3872
  %v3874 = vpop.f32.mrb[0].mxu0
  %3875 = vmatprep.mubr.f32.mxu0 0.0
  %3876 = vmatmul.mubr.f32.gmra.mrb[0].mxu0 %v3550
  %v3877 = vpop.f32.mrb[0].mxu0
  %v3878 = vadd.f32 0.0, %v3877
  %v3879 = vpop.f32.mrb[0].mxu0
  %3880 = vmatprep.mubr.f32.mxu0 0.0
  %3881 = vmatmul.mubr.f32.gmra.mrb[0].mxu0 %v3553
  %v3882 = vpop.f32.mrb[0].mxu0
  %v3883 = vadd.f32 0.0, %v3882
  %v3884 = vpop.f32.mrb[0].mxu0
  %3885 = vmatprep.mubr.f32.mxu0 0.0
  %3886 = vmatmul.mubr.f32.gmra.mrb[0].mxu0 %v3556
  %v3887 = vpop.f32.mrb[0].mxu0
  %v3888 = vadd.f32 0.0, %v3887
  %v3889 = vpop.f32.mrb[0].mxu0
  %3890 = vmatprep.mubr.f32.mxu0 0.0
  %3891 = vmatmul.mubr.f32.gmra.mrb[0].mxu0 %v3559
  %v3892 = vpop.f32.mrb[0].mxu0
  %v3893 = vadd.f32 0.0, %v3892
  %v3894 = vpop.f32.mrb[0].mxu0
  %3895 = vmatprep.mubr.f32.mxu0 0.0
  %3896 = vmatmul.mubr.f32.gmra.mrb[0].mxu0 %v3562
  %v3897 = vpop.f32.mrb[0].mxu0
  %v3898 = vadd.f32 0.0, %v3897
  %v3899 = vpop.f32.mrb[0].mxu0
  %3900 = vmatprep.mubr.f32.mxu0 0.0
  %3901 = vmatmul.mubr.f32.gmra.mrb[0].mxu0 %v3565
  %v3902 = vpop.f32.mrb[0].mxu0
  %v3903 = vadd.f32 0.0, %v3902
  %v3904 = vpop.f32.mrb[0].mxu0
  %3905 = vmatprep.mubr.f32.mxu0 0.0
  %3906 = vmatmul.mubr.f32.gmra.mrb[0].mxu0 %v3568
  %v3907 = vpop.f32.mrb[0].mxu0
  %v3908 = vadd.f32 0.0, %v3907
  %v3909 = vpop.f32.mrb[0].mxu0
  %3910 = vmatprep.mubr.f32.mxu0 0.0
  %3911 = vmatmul.mubr.f32.gmra.mrb[0].mxu0 %v3571
  %v3912 = vpop.f32.mrb[0].mxu0
  %v3913 = vadd.f32 0.0, %v3912
  %v3914 = vpop.f32.mrb[0].mxu0
  %3915 = vmatprep.mubr.f32.mxu0 0.0
  %3916 = vmatmul.mubr.f32.gmra.mrb[0].mxu0 %v3574
  %v3917 = vpop.f32.mrb[0].mxu0
  %v3918 = vadd.f32 0.0, %v3917
  %v3919 = vpop.f32.mrb[0].mxu0
  %3920 = vmatprep.mubr.f32.mxu0 0.0
  %3921 = vmatmul.mubr.f32.gmra.mrb[0].mxu0 %v3577
  %v3922 = vpop.f32.mrb[0].mxu0
  %v3923 = vadd.f32 0.0, %v3922
  %v3924 = vpop.f32.mrb[0].mxu0
  %3925 = vmatprep.mubr.f32.mxu0 0.0
  %3926 = vmatmul.mubr.f32.gmra.mrb[0].mxu0 %v3580
  %v3927 = vpop.f32.mrb[0].mxu0
  %v3928 = vadd.f32 0.0, %v3927
  %v3929 = vpop.f32.mrb[0].mxu0
  %3930 = vmatprep.mubr.f32.mxu0 0.0
  %3931 = vmatmul.mubr.f32.gmra.mrb[0].mxu0 %v3583
  %v3932 = vpop.f32.mrb[0].mxu0
  %v3933 = vadd.f32 0.0, %v3932
  %v3934 = vpop.f32.mrb[0].mxu0
  %3935 = vmatprep.mubr.f32.mxu0 0.0
  %3936 = vmatmul.mubr.f32.gmra.mrb[0].mxu0 %v3586
  %v3937 = vpop.f32.mrb[0].mxu0
  %v3938 = vadd.f32 0.0, %v3937
  %v3939 = vpop.f32.mrb[0].mxu0
  %3940 = vmatprep.mubr.f32.mxu0 0.0
  %3941 = vmatmul.mubr.f32.gmra.mrb[0].mxu0 %v3589
  %v3942 = vpop.f32.mrb[0].mxu0
  %v3943 = vadd.f32 0.0, %v3942
  %v3944 = vpop.f32.mrb[0].mxu0
  %3945 = vmatprep.mubr.f32.mxu0 0.0
  %3946 = vmatmul.mubr.f32.gmra.mrb[0].mxu0 %v3592
  %v3947 = vpop.f32.mrb[0].mxu0
  %v3948 = vadd.f32 0.0, %v3947
  %v3949 = vpop.f32.mrb[0].mxu0
  %3950 = vmatprep.mubr.f32.mxu0 0.0
  %3951 = vmatmul.mubr.f32.gmra.mrb[0].mxu0 %v3595
  %v3952 = vpop.f32.mrb[0].mxu0
  %v3953 = vadd.f32 0.0, %v3952
  %v3954 = vpop.f32.mrb[0].mxu0
  %3955 = vmatprep.mubr.f32.mxu0 0.0
  %3956 = vmatmul.mubr.f32.gmra.mrb[0].mxu0 %v3598
  %v3957 = vpop.f32.mrb[0].mxu0
  %v3958 = vadd.f32 0.0, %v3957
  %v3959 = vpop.f32.mrb[0].mxu0
  %3960 = vmatprep.mubr.f32.mxu0 0.0
  %3961 = vmatmul.mubr.f32.gmra.mrb[0].mxu0 %v3601
  %v3962 = vpop.f32.mrb[0].mxu0
  %v3963 = vadd.f32 0.0, %v3962
  %v3964 = vpop.f32.mrb[0].mxu0
  %3965 = vmatprep.mubr.f32.mxu0 0.0
  %3966 = vmatmul.mubr.f32.gmra.mrb[0].mxu0 %v3604
  %v3967 = vpop.f32.mrb[0].mxu0
  %v3968 = vadd.f32 0.0, %v3967
  %v3969 = vpop.f32.mrb[0].mxu0
  %3970 = vmatprep.mubr.f32.mxu0 0.0
  %3971 = vmatmul.mubr.f32.gmra.mrb[0].mxu0 %v3607
  %v3972 = vpop.f32.mrb[0].mxu0
  %v3973 = vadd.f32 0.0, %v3972
  %v3974 = vpop.f32.mrb[0].mxu0
  %3975 = vmatprep.mubr.f32.mxu0 0.0
  %3976 = vmatmul.mubr.f32.gmra.mrb[0].mxu0 %v3610
  %v3977 = vpop.f32.mrb[0].mxu0
  %v3978 = vadd.f32 0.0, %v3977
  %v3979 = vpop.f32.mrb[0].mxu0
  %3980 = vmatprep.mubr.f32.mxu0 0.0
  %3981 = vmatmul.mubr.f32.gmra.mrb[0].mxu0 %v3613
  %v3982 = vpop.f32.mrb[0].mxu0
  %v3983 = vadd.f32 0.0, %v3982
  %v3984 = vpop.f32.mrb[0].mxu0
  %3985 = vmatprep.mubr.f32.mxu0 0.0
  %3986 = vmatmul.mubr.f32.gmra.mrb[0].mxu0 %v3616
  %v3987 = vpop.f32.mrb[0].mxu0
  %v3988 = vadd.f32 0.0, %v3987
  %v3989 = vpop.f32.mrb[0].mxu0
  %3990 = vmatprep.mubr.f32.mxu0 0.0
  %3991 = vmatmul.mubr.f32.gmra.mrb[0].mxu0 %v3619
  %v3992 = vpop.f32.mrb[0].mxu0
  %v3993 = vadd.f32 0.0, %v3992
  %v3994 = vpop.f32.mrb[0].mxu0
  %3995 = vmatprep.mubr.f32.mxu0 0.0
  %3996 = vmatmul.mubr.f32.gmra.mrb[0].mxu0 %v3622
  %v3997 = vpop.f32.mrb[0].mxu0
  %v3998 = vadd.f32 0.0, %v3997
  %v3999 = vpop.f32.mrb[0].mxu0
  %4000 = vmatprep.mubr.f32.mxu0 0.0
  %4001 = vmatmul.mubr.f32.gmra.mrb[0].mxu0 %v3625
  %v4002 = vpop.f32.mrb[0].mxu0
  %v4003 = vadd.f32 0.0, %v4002
  %v4004 = vpop.f32.mrb[0].mxu0
  %4005 = vmatprep.mubr.f32.mxu0 0.0
  %4006 = vmatmul.mubr.f32.gmra.mrb[0].mxu0 %v3628
  %v4007 = vpop.f32.mrb[0].mxu0
  %v4008 = vadd.f32 0.0, %v4007
  %v4009 = vpop.f32.mrb[0].mxu0
  %4010 = vmatprep.mubr.f32.mxu0 0.0
  %4011 = vmatmul.mubr.f32.gmra.mrb[0].mxu0 %v3631
  %v4012 = vpop.f32.mrb[0].mxu0
  %v4013 = vadd.f32 0.0, %v4012
  %v4014 = vpop.f32.mrb[0].mxu0
  %4015 = vmatprep.mubr.f32.mxu0 0.0
  %4016 = vmatmul.mubr.f32.gmra.mrb[0].mxu0 %v3634
  %v4017 = vpop.f32.mrb[0].mxu0
  %v4018 = vadd.f32 0.0, %v4017
  %v4019 = vpop.f32.mrb[0].mxu0
  %4020 = vmatprep.mubr.f32.mxu0 0.0
  %4021 = vmatmul.mubr.f32.gmra.mrb[0].mxu0 %v3637
  %v4022 = vpop.f32.mrb[0].mxu0
  %v4023 = vadd.f32 0.0, %v4022
  %v4024 = vpop.f32.mrb[0].mxu0
  %4025 = vmatprep.mubr.f32.mxu0 0.0
  %4026 = vmatmul.mubr.f32.gmra.mrb[0].mxu0 %v3640
  %v4027 = vpop.f32.mrb[0].mxu0
  %v4028 = vadd.f32 0.0, %v4027
  %v4029 = vpop.f32.mrb[0].mxu0
  %4030 = vdwg.mxu0
  %vm4031 = vcmask 261120
  %v4032 = vsel %vm4031, %v3713, 0.0
  %v4033 = vsel %vm4031, %v3718, 0.0
  %v4034 = vadd.f32 %v4032, %v4033
  %v4035 = vsel %vm4031, %v3723, 0.0
  %v4036 = vadd.f32 %v4034, %v4035
  %v4037 = vsel %vm4031, %v3728, 0.0
  %v4038 = vadd.f32 %v4036, %v4037
  %v4039 = vsel %vm4031, %v3733, 0.0
  %v4040 = vadd.f32 %v4038, %v4039
  %v4041 = vsel %vm4031, %v3738, 0.0
  %v4042 = vadd.f32 %v4040, %v4041
  %v4043 = vsel %vm4031, %v3743, 0.0
  %v4044 = vadd.f32 %v4042, %v4043
  %v4045 = vsel %vm4031, %v3748, 0.0
  %v4046 = vadd.f32 %v4044, %v4045
  %v4047 = vsel %vm4031, %v3753, 0.0
  %v4048 = vadd.f32 %v4046, %v4047
  %v4049 = vsel %vm4031, %v3758, 0.0
  %v4050 = vadd.f32 %v4048, %v4049
  %v4051 = vsel %vm4031, %v3763, 0.0
  %v4052 = vadd.f32 %v4050, %v4051
  %v4053 = vsel %vm4031, %v3768, 0.0
  %v4054 = vadd.f32 %v4052, %v4053
  %v4055 = vsel %vm4031, %v3773, 0.0
  %v4056 = vadd.f32 %v4054, %v4055
  %v4057 = vsel %vm4031, %v3778, 0.0
  %v4058 = vadd.f32 %v4056, %v4057
  %v4059 = vsel %vm4031, %v3783, 0.0
  %v4060 = vadd.f32 %v4058, %v4059
  %v4061 = vsel %vm4031, %v3788, 0.0
  %v4062 = vadd.f32 %v4060, %v4061
  %v4063 = vsel %vm4031, %v3793, 0.0
  %v4064 = vadd.f32 %v4062, %v4063
  %v4065 = vsel %vm4031, %v3798, 0.0
  %v4066 = vadd.f32 %v4064, %v4065
  %v4067 = vsel %vm4031, %v3803, 0.0
  %v4068 = vadd.f32 %v4066, %v4067
  %v4069 = vsel %vm4031, %v3808, 0.0
  %v4070 = vadd.f32 %v4068, %v4069
  %v4071 = vsel %vm4031, %v3813, 0.0
  %v4072 = vadd.f32 %v4070, %v4071
  %v4073 = vsel %vm4031, %v3818, 0.0
  %v4074 = vadd.f32 %v4072, %v4073
  %v4075 = vsel %vm4031, %v3823, 0.0
  %v4076 = vadd.f32 %v4074, %v4075
  %v4077 = vsel %vm4031, %v3828, 0.0
  %v4078 = vadd.f32 %v4076, %v4077
  %v4079 = vsel %vm4031, %v3833, 0.0
  %v4080 = vadd.f32 %v4078, %v4079
  %v4081 = vsel %vm4031, %v3838, 0.0
  %v4082 = vadd.f32 %v4080, %v4081
  %v4083 = vsel %vm4031, %v3843, 0.0
  %v4084 = vadd.f32 %v4082, %v4083
  %v4085 = vsel %vm4031, %v3848, 0.0
  %v4086 = vadd.f32 %v4084, %v4085
  %v4087 = vsel %vm4031, %v3853, 0.0
  %v4088 = vadd.f32 %v4086, %v4087
  %v4089 = vsel %vm4031, %v3858, 0.0
  %v4090 = vadd.f32 %v4088, %v4089
  %v4091 = vsel %vm4031, %v3863, 0.0
  %v4092 = vadd.f32 %v4090, %v4091
  %v4093 = vsel %vm4031, %v3868, 0.0
  %v4094 = vadd.f32 %v4092, %v4093
  %v4095 = vsel %vm4031, %v3873, 0.0
  %v4096 = vadd.f32 %v4094, %v4095
  %v4097 = vsel %vm4031, %v3878, 0.0
  %v4098 = vadd.f32 %v4096, %v4097
  %v4099 = vsel %vm4031, %v3883, 0.0
  %v4100 = vadd.f32 %v4098, %v4099
  %v4101 = vsel %vm4031, %v3888, 0.0
  %v4102 = vadd.f32 %v4100, %v4101
  %v4103 = vsel %vm4031, %v3893, 0.0
  %v4104 = vadd.f32 %v4102, %v4103
  %v4105 = vsel %vm4031, %v3898, 0.0
  %v4106 = vadd.f32 %v4104, %v4105
  %v4107 = vsel %vm4031, %v3903, 0.0
  %v4108 = vadd.f32 %v4106, %v4107
  %v4109 = vsel %vm4031, %v3908, 0.0
  %v4110 = vadd.f32 %v4108, %v4109
  %v4111 = vsel %vm4031, %v3913, 0.0
  %v4112 = vadd.f32 %v4110, %v4111
  %v4113 = vsel %vm4031, %v3918, 0.0
  %v4114 = vadd.f32 %v4112, %v4113
  %v4115 = vsel %vm4031, %v3923, 0.0
  %v4116 = vadd.f32 %v4114, %v4115
  %v4117 = vsel %vm4031, %v3928, 0.0
  %v4118 = vadd.f32 %v4116, %v4117
  %v4119 = vsel %vm4031, %v3933, 0.0
  %v4120 = vadd.f32 %v4118, %v4119
  %v4121 = vsel %vm4031, %v3938, 0.0
  %v4122 = vadd.f32 %v4120, %v4121
  %v4123 = vsel %vm4031, %v3943, 0.0
  %v4124 = vadd.f32 %v4122, %v4123
  %v4125 = vsel %vm4031, %v3948, 0.0
  %v4126 = vadd.f32 %v4124, %v4125
  %v4127 = vsel %vm4031, %v3953, 0.0
  %v4128 = vadd.f32 %v4126, %v4127
  %v4129 = vsel %vm4031, %v3958, 0.0
  %v4130 = vadd.f32 %v4128, %v4129
  %v4131 = vsel %vm4031, %v3963, 0.0
  %v4132 = vadd.f32 %v4130, %v4131
  %v4133 = vsel %vm4031, %v3968, 0.0
  %v4134 = vadd.f32 %v4132, %v4133
  %v4135 = vsel %vm4031, %v3973, 0.0
  %v4136 = vadd.f32 %v4134, %v4135
  %v4137 = vsel %vm4031, %v3978, 0.0
  %v4138 = vadd.f32 %v4136, %v4137
  %v4139 = vsel %vm4031, %v3983, 0.0
  %v4140 = vadd.f32 %v4138, %v4139
  %v4141 = vsel %vm4031, %v3988, 0.0
  %v4142 = vadd.f32 %v4140, %v4141
  %v4143 = vsel %vm4031, %v3993, 0.0
  %v4144 = vadd.f32 %v4142, %v4143
  %v4145 = vsel %vm4031, %v3998, 0.0
  %v4146 = vadd.f32 %v4144, %v4145
  %v4147 = vsel %vm4031, %v4003, 0.0
  %v4148 = vadd.f32 %v4146, %v4147
  %v4149 = vsel %vm4031, %v4008, 0.0
  %v4150 = vadd.f32 %v4148, %v4149
  %v4151 = vsel %vm4031, %v4013, 0.0
  %v4152 = vadd.f32 %v4150, %v4151
  %v4153 = vsel %vm4031, %v4018, 0.0
  %v4154 = vadd.f32 %v4152, %v4153
  %v4155 = vsel %vm4031, %v4023, 0.0
  %v4156 = vadd.f32 %v4154, %v4155
  %v4157 = vsel %vm4031, %v4028, 0.0
  %v4158 = vadd.f32 %v4156, %v4157
  %v4159 = vrot.slane %v4158, 4
  %v4160 = vadd.f32 %v4158, %v4159
  %v4161 = vrot.slane %v4160, 2
  %v4162 = vadd.f32 %v4160, %v4161
  %v4163 = vrot.slane %v4162, 1
  %v4164 = vadd.f32 %v4162, %v4163
  %v4165 = vmul.f32 %v4164, 0.001953125
  %v4166 = vmul.f32 %v3713, %v3713
  %v4167 = vmul.f32 %v3718, %v3718
  %v4168 = vmul.f32 %v3723, %v3723
  %v4169 = vmul.f32 %v3728, %v3728
  %v4170 = vmul.f32 %v3733, %v3733
  %v4171 = vmul.f32 %v3738, %v3738
  %v4172 = vmul.f32 %v3743, %v3743
  %v4173 = vmul.f32 %v3748, %v3748
  %v4174 = vmul.f32 %v3753, %v3753
  %v4175 = vmul.f32 %v3758, %v3758
  %v4176 = vmul.f32 %v3763, %v3763
  %v4177 = vmul.f32 %v3768, %v3768
  %v4178 = vmul.f32 %v3773, %v3773
  %v4179 = vmul.f32 %v3778, %v3778
  %v4180 = vmul.f32 %v3783, %v3783
  %v4181 = vmul.f32 %v3788, %v3788
  %v4182 = vmul.f32 %v3793, %v3793
  %v4183 = vmul.f32 %v3798, %v3798
  %v4184 = vmul.f32 %v3803, %v3803
  %v4185 = vmul.f32 %v3808, %v3808
  %v4186 = vmul.f32 %v3813, %v3813
  %v4187 = vmul.f32 %v3818, %v3818
  %v4188 = vmul.f32 %v3823, %v3823
  %v4189 = vmul.f32 %v3828, %v3828
  %v4190 = vmul.f32 %v3833, %v3833
  %v4191 = vmul.f32 %v3838, %v3838
  %v4192 = vmul.f32 %v3843, %v3843
  %v4193 = vmul.f32 %v3848, %v3848
  %v4194 = vmul.f32 %v3853, %v3853
  %v4195 = vmul.f32 %v3858, %v3858
  %v4196 = vmul.f32 %v3863, %v3863
  %v4197 = vmul.f32 %v3868, %v3868
  %v4198 = vmul.f32 %v3873, %v3873
  %v4199 = vmul.f32 %v3878, %v3878
  %v4200 = vmul.f32 %v3883, %v3883
  %v4201 = vmul.f32 %v3888, %v3888
  %v4202 = vmul.f32 %v3893, %v3893
  %v4203 = vmul.f32 %v3898, %v3898
  %v4204 = vmul.f32 %v3903, %v3903
  %v4205 = vmul.f32 %v3908, %v3908
  %v4206 = vmul.f32 %v3913, %v3913
  %v4207 = vmul.f32 %v3918, %v3918
  %v4208 = vmul.f32 %v3923, %v3923
  %v4209 = vmul.f32 %v3928, %v3928
  %v4210 = vmul.f32 %v3933, %v3933
  %v4211 = vmul.f32 %v3938, %v3938
  %v4212 = vmul.f32 %v3943, %v3943
  %v4213 = vmul.f32 %v3948, %v3948
  %v4214 = vmul.f32 %v3953, %v3953
  %v4215 = vmul.f32 %v3958, %v3958
  %v4216 = vmul.f32 %v3963, %v3963
  %v4217 = vmul.f32 %v3968, %v3968
  %v4218 = vmul.f32 %v3973, %v3973
  %v4219 = vmul.f32 %v3978, %v3978
  %v4220 = vmul.f32 %v3983, %v3983
  %v4221 = vmul.f32 %v3988, %v3988
  %v4222 = vmul.f32 %v3993, %v3993
  %v4223 = vmul.f32 %v3998, %v3998
  %v4224 = vmul.f32 %v4003, %v4003
  %v4225 = vmul.f32 %v4008, %v4008
  %v4226 = vmul.f32 %v4013, %v4013
  %v4227 = vmul.f32 %v4018, %v4018
  %v4228 = vmul.f32 %v4023, %v4023
  %v4229 = vmul.f32 %v4028, %v4028
  %v4230 = vsel %vm4031, %v4166, 0.0
  %v4231 = vsel %vm4031, %v4167, 0.0
  %v4232 = vadd.f32 %v4230, %v4231
  %v4233 = vsel %vm4031, %v4168, 0.0
  %v4234 = vadd.f32 %v4232, %v4233
  %v4235 = vsel %vm4031, %v4169, 0.0
  %v4236 = vadd.f32 %v4234, %v4235
  %v4237 = vsel %vm4031, %v4170, 0.0
  %v4238 = vadd.f32 %v4236, %v4237
  %v4239 = vsel %vm4031, %v4171, 0.0
  %v4240 = vadd.f32 %v4238, %v4239
  %v4241 = vsel %vm4031, %v4172, 0.0
  %v4242 = vadd.f32 %v4240, %v4241
  %v4243 = vsel %vm4031, %v4173, 0.0
  %v4244 = vadd.f32 %v4242, %v4243
  %v4245 = vsel %vm4031, %v4174, 0.0
  %v4246 = vadd.f32 %v4244, %v4245
  %v4247 = vsel %vm4031, %v4175, 0.0
  %v4248 = vadd.f32 %v4246, %v4247
  %v4249 = vsel %vm4031, %v4176, 0.0
  %v4250 = vadd.f32 %v4248, %v4249
  %v4251 = vsel %vm4031, %v4177, 0.0
  %v4252 = vadd.f32 %v4250, %v4251
  %v4253 = vsel %vm4031, %v4178, 0.0
  %v4254 = vadd.f32 %v4252, %v4253
  %v4255 = vsel %vm4031, %v4179, 0.0
  %v4256 = vadd.f32 %v4254, %v4255
  %v4257 = vsel %vm4031, %v4180, 0.0
  %v4258 = vadd.f32 %v4256, %v4257
  %v4259 = vsel %vm4031, %v4181, 0.0
  %v4260 = vadd.f32 %v4258, %v4259
  %v4261 = vsel %vm4031, %v4182, 0.0
  %v4262 = vadd.f32 %v4260, %v4261
  %v4263 = vsel %vm4031, %v4183, 0.0
  %v4264 = vadd.f32 %v4262, %v4263
  %v4265 = vsel %vm4031, %v4184, 0.0
  %v4266 = vadd.f32 %v4264, %v4265
  %v4267 = vsel %vm4031, %v4185, 0.0
  %v4268 = vadd.f32 %v4266, %v4267
  %v4269 = vsel %vm4031, %v4186, 0.0
  %v4270 = vadd.f32 %v4268, %v4269
  %v4271 = vsel %vm4031, %v4187, 0.0
  %v4272 = vadd.f32 %v4270, %v4271
  %v4273 = vsel %vm4031, %v4188, 0.0
  %v4274 = vadd.f32 %v4272, %v4273
  %v4275 = vsel %vm4031, %v4189, 0.0
  %v4276 = vadd.f32 %v4274, %v4275
  %v4277 = vsel %vm4031, %v4190, 0.0
  %v4278 = vadd.f32 %v4276, %v4277
  %v4279 = vsel %vm4031, %v4191, 0.0
  %v4280 = vadd.f32 %v4278, %v4279
  %v4281 = vsel %vm4031, %v4192, 0.0
  %v4282 = vadd.f32 %v4280, %v4281
  %v4283 = vsel %vm4031, %v4193, 0.0
  %v4284 = vadd.f32 %v4282, %v4283
  %v4285 = vsel %vm4031, %v4194, 0.0
  %v4286 = vadd.f32 %v4284, %v4285
  %v4287 = vsel %vm4031, %v4195, 0.0
  %v4288 = vadd.f32 %v4286, %v4287
  %v4289 = vsel %vm4031, %v4196, 0.0
  %v4290 = vadd.f32 %v4288, %v4289
  %v4291 = vsel %vm4031, %v4197, 0.0
  %v4292 = vadd.f32 %v4290, %v4291
  %v4293 = vsel %vm4031, %v4198, 0.0
  %v4294 = vadd.f32 %v4292, %v4293
  %v4295 = vsel %vm4031, %v4199, 0.0
  %v4296 = vadd.f32 %v4294, %v4295
  %v4297 = vsel %vm4031, %v4200, 0.0
  %v4298 = vadd.f32 %v4296, %v4297
  %v4299 = vsel %vm4031, %v4201, 0.0
  %v4300 = vadd.f32 %v4298, %v4299
  %v4301 = vsel %vm4031, %v4202, 0.0
  %v4302 = vadd.f32 %v4300, %v4301
  %v4303 = vsel %vm4031, %v4203, 0.0
  %v4304 = vadd.f32 %v4302, %v4303
  %v4305 = vsel %vm4031, %v4204, 0.0
  %v4306 = vadd.f32 %v4304, %v4305
  %v4307 = vsel %vm4031, %v4205, 0.0
  %v4308 = vadd.f32 %v4306, %v4307
  %v4309 = vsel %vm4031, %v4206, 0.0
  %v4310 = vadd.f32 %v4308, %v4309
  %v4311 = vsel %vm4031, %v4207, 0.0
  %v4312 = vadd.f32 %v4310, %v4311
  %v4313 = vsel %vm4031, %v4208, 0.0
  %v4314 = vadd.f32 %v4312, %v4313
  %v4315 = vsel %vm4031, %v4209, 0.0
  %v4316 = vadd.f32 %v4314, %v4315
  %v4317 = vsel %vm4031, %v4210, 0.0
  %v4318 = vadd.f32 %v4316, %v4317
  %v4319 = vsel %vm4031, %v4211, 0.0
  %v4320 = vadd.f32 %v4318, %v4319
  %v4321 = vsel %vm4031, %v4212, 0.0
  %v4322 = vadd.f32 %v4320, %v4321
  %v4323 = vsel %vm4031, %v4213, 0.0
  %v4324 = vadd.f32 %v4322, %v4323
  %v4325 = vsel %vm4031, %v4214, 0.0
  %v4326 = vadd.f32 %v4324, %v4325
  %v4327 = vsel %vm4031, %v4215, 0.0
  %v4328 = vadd.f32 %v4326, %v4327
  %v4329 = vsel %vm4031, %v4216, 0.0
  %v4330 = vadd.f32 %v4328, %v4329
  %v4331 = vsel %vm4031, %v4217, 0.0
  %v4332 = vadd.f32 %v4330, %v4331
  %v4333 = vsel %vm4031, %v4218, 0.0
  %v4334 = vadd.f32 %v4332, %v4333
  %v4335 = vsel %vm4031, %v4219, 0.0
  %v4336 = vadd.f32 %v4334, %v4335
  %v4337 = vsel %vm4031, %v4220, 0.0
  %v4338 = vadd.f32 %v4336, %v4337
  %v4339 = vsel %vm4031, %v4221, 0.0
  %v4340 = vadd.f32 %v4338, %v4339
  %v4341 = vsel %vm4031, %v4222, 0.0
  %v4342 = vadd.f32 %v4340, %v4341
  %v4343 = vsel %vm4031, %v4223, 0.0
  %v4344 = vadd.f32 %v4342, %v4343
  %v4345 = vsel %vm4031, %v4224, 0.0
  %v4346 = vadd.f32 %v4344, %v4345
  %v4347 = vsel %vm4031, %v4225, 0.0
  %v4348 = vadd.f32 %v4346, %v4347
  %v4349 = vsel %vm4031, %v4226, 0.0
  %v4350 = vadd.f32 %v4348, %v4349
  %v4351 = vsel %vm4031, %v4227, 0.0
  %v4352 = vadd.f32 %v4350, %v4351
  %v4353 = vsel %vm4031, %v4228, 0.0
  %v4354 = vadd.f32 %v4352, %v4353
  %v4355 = vsel %vm4031, %v4229, 0.0
  %v4356 = vadd.f32 %v4354, %v4355
  %v4357 = vrot.slane %v4356, 4
  %v4358 = vadd.f32 %v4356, %v4357
  %v4359 = vrot.slane %v4358, 2
  %v4360 = vadd.f32 %v4358, %v4359
  %v4361 = vrot.slane %v4360, 1
  %v4362 = vadd.f32 %v4360, %v4361
  %v4363 = vmul.f32 %v4362, 0.001953125
  %v4364 = vmul.f32 %v4165, %v4165
  %v4365 = vsub.f32 %v4363, %v4364
  %v4366 = vmax.f32 %v4365, 0.0
  %v4367 = vld [vmem:[%s2] sm:$0x1]
  %v4368 = vadd.f32 %v4366, 1e-05
  %v4369 = vrsqrt.pop %v4368
  %v4370 = vmul.f32 %v4367, %v4369
  %v4371 = vld [vmem:[%s3] sm:$0x1]
  %v4372 = vmul.f32 %v4165, %v4370
  %v4373 = vsub.f32 %v4371, %v4372
  %v4375 = vlaneseq
  %v4376 = vshrl.u32 %v4375, 7
  %v4377 = vsub.s32 0, %v4376
  %v4378 = vrot.slane %v4370, %v4377
  %v4380 = vmul.f32 %v3713, %v4378
  %v4381 = vmul.f32 %v3718, %v4378
  %v4382 = vmul.f32 %v3723, %v4378
  %v4383 = vmul.f32 %v3728, %v4378
  %v4384 = vmul.f32 %v3733, %v4378
  %v4385 = vmul.f32 %v3738, %v4378
  %v4386 = vmul.f32 %v3743, %v4378
  %v4387 = vmul.f32 %v3748, %v4378
  %v4388 = vmul.f32 %v3753, %v4378
  %v4389 = vmul.f32 %v3758, %v4378
  %v4390 = vmul.f32 %v3763, %v4378
  %v4391 = vmul.f32 %v3768, %v4378
  %v4392 = vmul.f32 %v3773, %v4378
  %v4393 = vmul.f32 %v3778, %v4378
  %v4394 = vmul.f32 %v3783, %v4378
  %v4395 = vmul.f32 %v3788, %v4378
  %v4396 = vmul.f32 %v3793, %v4378
  %v4397 = vmul.f32 %v3798, %v4378
  %v4398 = vmul.f32 %v3803, %v4378
  %v4399 = vmul.f32 %v3808, %v4378
  %v4400 = vmul.f32 %v3813, %v4378
  %v4401 = vmul.f32 %v3818, %v4378
  %v4402 = vmul.f32 %v3823, %v4378
  %v4403 = vmul.f32 %v3828, %v4378
  %v4404 = vmul.f32 %v3833, %v4378
  %v4405 = vmul.f32 %v3838, %v4378
  %v4406 = vmul.f32 %v3843, %v4378
  %v4407 = vmul.f32 %v3848, %v4378
  %v4408 = vmul.f32 %v3853, %v4378
  %v4409 = vmul.f32 %v3858, %v4378
  %v4410 = vmul.f32 %v3863, %v4378
  %v4411 = vmul.f32 %v3868, %v4378
  %v4412 = vmul.f32 %v3873, %v4378
  %v4413 = vmul.f32 %v3878, %v4378
  %v4414 = vmul.f32 %v3883, %v4378
  %v4415 = vmul.f32 %v3888, %v4378
  %v4416 = vmul.f32 %v3893, %v4378
  %v4417 = vmul.f32 %v3898, %v4378
  %v4418 = vmul.f32 %v3903, %v4378
  %v4419 = vmul.f32 %v3908, %v4378
  %v4420 = vmul.f32 %v3913, %v4378
  %v4421 = vmul.f32 %v3918, %v4378
  %v4422 = vmul.f32 %v3923, %v4378
  %v4423 = vmul.f32 %v3928, %v4378
  %v4424 = vmul.f32 %v3933, %v4378
  %v4425 = vmul.f32 %v3938, %v4378
  %v4426 = vmul.f32 %v3943, %v4378
  %v4427 = vmul.f32 %v3948, %v4378
  %v4428 = vmul.f32 %v3953, %v4378
  %v4429 = vmul.f32 %v3958, %v4378
  %v4430 = vmul.f32 %v3963, %v4378
  %v4431 = vmul.f32 %v3968, %v4378
  %v4432 = vmul.f32 %v3973, %v4378
  %v4433 = vmul.f32 %v3978, %v4378
  %v4434 = vmul.f32 %v3983, %v4378
  %v4435 = vmul.f32 %v3988, %v4378
  %v4436 = vmul.f32 %v3993, %v4378
  %v4437 = vmul.f32 %v3998, %v4378
  %v4438 = vmul.f32 %v4003, %v4378
  %v4439 = vmul.f32 %v4008, %v4378
  %v4440 = vmul.f32 %v4013, %v4378
  %v4441 = vmul.f32 %v4018, %v4378
  %v4442 = vmul.f32 %v4023, %v4378
  %v4443 = vmul.f32 %v4028, %v4378
  %v4445 = vlaneseq
  %v4446 = vshrl.u32 %v4445, 7
  %v4447 = vsub.s32 0, %v4446
  %v4448 = vrot.slane %v4373, %v4447
  %v4450 = vadd.f32 %v4380, %v4448
  %v4451 = vadd.f32 %v4381, %v4448
  %v4452 = vadd.f32 %v4382, %v4448
  %v4453 = vadd.f32 %v4383, %v4448
  %v4454 = vadd.f32 %v4384, %v4448
  %v4455 = vadd.f32 %v4385, %v4448
  %v4456 = vadd.f32 %v4386, %v4448
  %v4457 = vadd.f32 %v4387, %v4448
  %v4458 = vadd.f32 %v4388, %v4448
  %v4459 = vadd.f32 %v4389, %v4448
  %v4460 = vadd.f32 %v4390, %v4448
  %v4461 = vadd.f32 %v4391, %v4448
  %v4462 = vadd.f32 %v4392, %v4448
  %v4463 = vadd.f32 %v4393, %v4448
  %v4464 = vadd.f32 %v4394, %v4448
  %v4465 = vadd.f32 %v4395, %v4448
  %v4466 = vadd.f32 %v4396, %v4448
  %v4467 = vadd.f32 %v4397, %v4448
  %v4468 = vadd.f32 %v4398, %v4448
  %v4469 = vadd.f32 %v4399, %v4448
  %v4470 = vadd.f32 %v4400, %v4448
  %v4471 = vadd.f32 %v4401, %v4448
  %v4472 = vadd.f32 %v4402, %v4448
  %v4473 = vadd.f32 %v4403, %v4448
  %v4474 = vadd.f32 %v4404, %v4448
  %v4475 = vadd.f32 %v4405, %v4448
  %v4476 = vadd.f32 %v4406, %v4448
  %v4477 = vadd.f32 %v4407, %v4448
  %v4478 = vadd.f32 %v4408, %v4448
  %v4479 = vadd.f32 %v4409, %v4448
  %v4480 = vadd.f32 %v4410, %v4448
  %v4481 = vadd.f32 %v4411, %v4448
  %v4482 = vadd.f32 %v4412, %v4448
  %v4483 = vadd.f32 %v4413, %v4448
  %v4484 = vadd.f32 %v4414, %v4448
  %v4485 = vadd.f32 %v4415, %v4448
  %v4486 = vadd.f32 %v4416, %v4448
  %v4487 = vadd.f32 %v4417, %v4448
  %v4488 = vadd.f32 %v4418, %v4448
  %v4489 = vadd.f32 %v4419, %v4448
  %v4490 = vadd.f32 %v4420, %v4448
  %v4491 = vadd.f32 %v4421, %v4448
  %v4492 = vadd.f32 %v4422, %v4448
  %v4493 = vadd.f32 %v4423, %v4448
  %v4494 = vadd.f32 %v4424, %v4448
  %v4495 = vadd.f32 %v4425, %v4448
  %v4496 = vadd.f32 %v4426, %v4448
  %v4497 = vadd.f32 %v4427, %v4448
  %v4498 = vadd.f32 %v4428, %v4448
  %v4499 = vadd.f32 %v4429, %v4448
  %v4500 = vadd.f32 %v4430, %v4448
  %v4501 = vadd.f32 %v4431, %v4448
  %v4502 = vadd.f32 %v4432, %v4448
  %v4503 = vadd.f32 %v4433, %v4448
  %v4504 = vadd.f32 %v4434, %v4448
  %v4505 = vadd.f32 %v4435, %v4448
  %v4506 = vadd.f32 %v4436, %v4448
  %v4507 = vadd.f32 %v4437, %v4448
  %v4508 = vadd.f32 %v4438, %v4448
  %v4509 = vadd.f32 %v4439, %v4448
  %v4510 = vadd.f32 %v4440, %v4448
  %v4511 = vadd.f32 %v4441, %v4448
  %v4512 = vadd.f32 %v4442, %v4448
  %v4513 = vadd.f32 %v4443, %v4448
  %v4514 = vmax.f32 %v4450, 0.0
  %v4515 = vmax.f32 %v4451, 0.0
  %v4516 = vmax.f32 %v4452, 0.0
  %v4517 = vmax.f32 %v4453, 0.0
  %v4518 = vmax.f32 %v4454, 0.0
  %v4519 = vmax.f32 %v4455, 0.0
  %v4520 = vmax.f32 %v4456, 0.0
  %v4521 = vmax.f32 %v4457, 0.0
  %v4522 = vmax.f32 %v4458, 0.0
  %v4523 = vmax.f32 %v4459, 0.0
  %v4524 = vmax.f32 %v4460, 0.0
  %v4525 = vmax.f32 %v4461, 0.0
  %v4526 = vmax.f32 %v4462, 0.0
  %v4527 = vmax.f32 %v4463, 0.0
  %v4528 = vmax.f32 %v4464, 0.0
  %v4529 = vmax.f32 %v4465, 0.0
  %v4530 = vmax.f32 %v4466, 0.0
  %v4531 = vmax.f32 %v4467, 0.0
  %v4532 = vmax.f32 %v4468, 0.0
  %v4533 = vmax.f32 %v4469, 0.0
  %v4534 = vmax.f32 %v4470, 0.0
  %v4535 = vmax.f32 %v4471, 0.0
  %v4536 = vmax.f32 %v4472, 0.0
  %v4537 = vmax.f32 %v4473, 0.0
  %v4538 = vmax.f32 %v4474, 0.0
  %v4539 = vmax.f32 %v4475, 0.0
  %v4540 = vmax.f32 %v4476, 0.0
  %v4541 = vmax.f32 %v4477, 0.0
  %v4542 = vmax.f32 %v4478, 0.0
  %v4543 = vmax.f32 %v4479, 0.0
  %v4544 = vmax.f32 %v4480, 0.0
  %v4545 = vmax.f32 %v4481, 0.0
  %v4546 = vmax.f32 %v4482, 0.0
  %v4547 = vmax.f32 %v4483, 0.0
  %v4548 = vmax.f32 %v4484, 0.0
  %v4549 = vmax.f32 %v4485, 0.0
  %v4550 = vmax.f32 %v4486, 0.0
  %v4551 = vmax.f32 %v4487, 0.0
  %v4552 = vmax.f32 %v4488, 0.0
  %v4553 = vmax.f32 %v4489, 0.0
  %v4554 = vmax.f32 %v4490, 0.0
  %v4555 = vmax.f32 %v4491, 0.0
  %v4556 = vmax.f32 %v4492, 0.0
  %v4557 = vmax.f32 %v4493, 0.0
  %v4558 = vmax.f32 %v4494, 0.0
  %v4559 = vmax.f32 %v4495, 0.0
  %v4560 = vmax.f32 %v4496, 0.0
  %v4561 = vmax.f32 %v4497, 0.0
  %v4562 = vmax.f32 %v4498, 0.0
  %v4563 = vmax.f32 %v4499, 0.0
  %v4564 = vmax.f32 %v4500, 0.0
  %v4565 = vmax.f32 %v4501, 0.0
  %v4566 = vmax.f32 %v4502, 0.0
  %v4567 = vmax.f32 %v4503, 0.0
  %v4568 = vmax.f32 %v4504, 0.0
  %v4569 = vmax.f32 %v4505, 0.0
  %v4570 = vmax.f32 %v4506, 0.0
  %v4571 = vmax.f32 %v4507, 0.0
  %v4572 = vmax.f32 %v4508, 0.0
  %v4573 = vmax.f32 %v4509, 0.0
  %v4574 = vmax.f32 %v4510, 0.0
  %v4575 = vmax.f32 %v4511, 0.0
  %v4576 = vmax.f32 %v4512, 0.0
  %v4577 = vmax.f32 %v4513, 0.0
  %v4578 = vmax.f32 %v4514, %v4516
  %v4579 = vmax.f32 %v4515, %v4517
  %v4580 = vmax.f32 %v4546, %v4548
  %v4581 = vmax.f32 %v4547, %v4549
  %v4582 = vmax.f32 %v4518, %v4520
  %v4583 = vmax.f32 %v4519, %v4521
  %v4584 = vmax.f32 %v4550, %v4552
  %v4585 = vmax.f32 %v4551, %v4553
  %v4586 = vmax.f32 %v4522, %v4524
  %v4587 = vmax.f32 %v4523, %v4525
  %v4588 = vmax.f32 %v4554, %v4556
  %v4589 = vmax.f32 %v4555, %v4557
  %v4590 = vmax.f32 %v4526, %v4528
  %v4591 = vmax.f32 %v4527, %v4529
  %v4592 = vmax.f32 %v4558, %v4560
  %v4593 = vmax.f32 %v4559, %v4561
  %v4594 = vmax.f32 %v4530, %v4532
  %v4595 = vmax.f32 %v4531, %v4533
  %v4596 = vmax.f32 %v4562, %v4564
  %v4597 = vmax.f32 %v4563, %v4565
  %v4598 = vmax.f32 %v4534, %v4536
  %v4599 = vmax.f32 %v4535, %v4537
  %v4600 = vmax.f32 %v4566, %v4568
  %v4601 = vmax.f32 %v4567, %v4569
  %v4602 = vmax.f32 %v4538, %v4540
  %v4603 = vmax.f32 %v4539, %v4541
  %v4604 = vmax.f32 %v4570, %v4572
  %v4605 = vmax.f32 %v4571, %v4573
  %v4606 = vmax.f32 %v4542, %v4544
  %v4607 = vmax.f32 %v4543, %v4545
  %v4608 = vmax.f32 %v4574, %v4576
  %v4609 = vmax.f32 %v4575, %v4577
  %vm4610 = vcmask 254976
  %v4611 = vsel %vm4610, %v4578, -inf
  %v4612 = vrot.slane %v4611, 4
  %v4613 = vmax.f32 %v4611, %v4612
  %v4614 = vrot.slane %v4613, 2
  %v4615 = vmax.f32 %v4613, %v4614
  %v4616 = vrot.slane %v4615, 1
  %v4617 = vmax.f32 %v4615, %v4616
  %v4618 = vsel %vm4610, %v4582, -inf
  %v4619 = vrot.slane %v4618, 4
  %v4620 = vmax.f32 %v4618, %v4619
  %v4621 = vrot.slane %v4620, 2
  %v4622 = vmax.f32 %v4620, %v4621
  %v4623 = vrot.slane %v4622, 1
  %v4624 = vmax.f32 %v4622, %v4623
  %v4625 = vsel %vm4610, %v4586, -inf
  %v4626 = vrot.slane %v4625, 4
  %v4627 = vmax.f32 %v4625, %v4626
  %v4628 = vrot.slane %v4627, 2
  %v4629 = vmax.f32 %v4627, %v4628
  %v4630 = vrot.slane %v4629, 1
  %v4631 = vmax.f32 %v4629, %v4630
  %v4632 = vsel %vm4610, %v4590, -inf
  %v4633 = vrot.slane %v4632, 4
  %v4634 = vmax.f32 %v4632, %v4633
  %v4635 = vrot.slane %v4634, 2
  %v4636 = vmax.f32 %v4634, %v4635
  %v4637 = vrot.slane %v4636, 1
  %v4638 = vmax.f32 %v4636, %v4637
  %v4639 = vsel %vm4610, %v4594, -inf
  %v4640 = vrot.slane %v4639, 4
  %v4641 = vmax.f32 %v4639, %v4640
  %v4642 = vrot.slane %v4641, 2
  %v4643 = vmax.f32 %v4641, %v4642
  %v4644 = vrot.slane %v4643, 1
  %v4645 = vmax.f32 %v4643, %v4644
  %v4646 = vsel %vm4610, %v4598, -inf
  %v4647 = vrot.slane %v4646, 4
  %v4648 = vmax.f32 %v4646, %v4647
  %v4649 = vrot.slane %v4648, 2
  %v4650 = vmax.f32 %v4648, %v4649
  %v4651 = vrot.slane %v4650, 1
  %v4652 = vmax.f32 %v4650, %v4651
  %v4653 = vsel %vm4610, %v4602, -inf
  %v4654 = vrot.slane %v4653, 4
  %v4655 = vmax.f32 %v4653, %v4654
  %v4656 = vrot.slane %v4655, 2
  %v4657 = vmax.f32 %v4655, %v4656
  %v4658 = vrot.slane %v4657, 1
  %v4659 = vmax.f32 %v4657, %v4658
  %v4660 = vsel %vm4610, %v4606, -inf
  %v4661 = vrot.slane %v4660, 4
  %v4662 = vmax.f32 %v4660, %v4661
  %v4663 = vrot.slane %v4662, 2
  %v4664 = vmax.f32 %v4662, %v4663
  %v4665 = vrot.slane %v4664, 1
  %v4666 = vmax.f32 %v4664, %v4665
  %v4667 = vsel %vm4610, %v4580, -inf
  %v4668 = vrot.slane %v4667, 4
  %v4669 = vmax.f32 %v4667, %v4668
  %v4670 = vrot.slane %v4669, 2
  %v4671 = vmax.f32 %v4669, %v4670
  %v4672 = vrot.slane %v4671, 1
  %v4673 = vmax.f32 %v4671, %v4672
  %v4674 = vsel %vm4610, %v4584, -inf
  %v4675 = vrot.slane %v4674, 4
  %v4676 = vmax.f32 %v4674, %v4675
  %v4677 = vrot.slane %v4676, 2
  %v4678 = vmax.f32 %v4676, %v4677
  %v4679 = vrot.slane %v4678, 1
  %v4680 = vmax.f32 %v4678, %v4679
  %v4681 = vsel %vm4610, %v4588, -inf
  %v4682 = vrot.slane %v4681, 4
  %v4683 = vmax.f32 %v4681, %v4682
  %v4684 = vrot.slane %v4683, 2
  %v4685 = vmax.f32 %v4683, %v4684
  %v4686 = vrot.slane %v4685, 1
  %v4687 = vmax.f32 %v4685, %v4686
  %v4688 = vsel %vm4610, %v4592, -inf
  %v4689 = vrot.slane %v4688, 4
  %v4690 = vmax.f32 %v4688, %v4689
  %v4691 = vrot.slane %v4690, 2
  %v4692 = vmax.f32 %v4690, %v4691
  %v4693 = vrot.slane %v4692, 1
  %v4694 = vmax.f32 %v4692, %v4693
  %v4695 = vsel %vm4610, %v4596, -inf
  %v4696 = vrot.slane %v4695, 4
  %v4697 = vmax.f32 %v4695, %v4696
  %v4698 = vrot.slane %v4697, 2
  %v4699 = vmax.f32 %v4697, %v4698
  %v4700 = vrot.slane %v4699, 1
  %v4701 = vmax.f32 %v4699, %v4700
  %v4702 = vsel %vm4610, %v4600, -inf
  %v4703 = vrot.slane %v4702, 4
  %v4704 = vmax.f32 %v4702, %v4703
  %v4705 = vrot.slane %v4704, 2
  %v4706 = vmax.f32 %v4704, %v4705
  %v4707 = vrot.slane %v4706, 1
  %v4708 = vmax.f32 %v4706, %v4707
  %v4709 = vsel %vm4610, %v4604, -inf
  %v4710 = vrot.slane %v4709, 4
  %v4711 = vmax.f32 %v4709, %v4710
  %v4712 = vrot.slane %v4711, 2
  %v4713 = vmax.f32 %v4711, %v4712
  %v4714 = vrot.slane %v4713, 1
  %v4715 = vmax.f32 %v4713, %v4714
  %v4716 = vsel %vm4610, %v4608, -inf
  %v4717 = vrot.slane %v4716, 4
  %v4718 = vmax.f32 %v4716, %v4717
  %v4719 = vrot.slane %v4718, 2
  %v4720 = vmax.f32 %v4718, %v4719
  %v4721 = vrot.slane %v4720, 1
  %v4722 = vmax.f32 %v4720, %v4721
  %vm4723 = vcmask 257026
  %v4724 = vsel %vm4723, %v4578, -inf
  %v4725 = vrot.slane %v4724, 4
  %v4726 = vmax.f32 %v4724, %v4725
  %v4727 = vrot.slane %v4726, 2
  %v4728 = vmax.f32 %v4726, %v4727
  %v4729 = vrot.slane %v4728, 1
  %v4730 = vmax.f32 %v4728, %v4729
  %v4731 = vsel %vm4723, %v4582, -inf
  %v4732 = vrot.slane %v4731, 4
  %v4733 = vmax.f32 %v4731, %v4732
  %v4734 = vrot.slane %v4733, 2
  %v4735 = vmax.f32 %v4733, %v4734
  %v4736 = vrot.slane %v4735, 1
  %v4737 = vmax.f32 %v4735, %v4736
  %v4738 = vsel %vm4723, %v4586, -inf
  %v4739 = vrot.slane %v4738, 4
  %v4740 = vmax.f32 %v4738, %v4739
  %v4741 = vrot.slane %v4740, 2
  %v4742 = vmax.f32 %v4740, %v4741
  %v4743 = vrot.slane %v4742, 1
  %v4744 = vmax.f32 %v4742, %v4743
  %v4745 = vsel %vm4723, %v4590, -inf
  %v4746 = vrot.slane %v4745, 4
  %v4747 = vmax.f32 %v4745, %v4746
  %v4748 = vrot.slane %v4747, 2
  %v4749 = vmax.f32 %v4747, %v4748
  %v4750 = vrot.slane %v4749, 1
  %v4751 = vmax.f32 %v4749, %v4750
  %v4752 = vsel %vm4723, %v4594, -inf
  %v4753 = vrot.slane %v4752, 4
  %v4754 = vmax.f32 %v4752, %v4753
  %v4755 = vrot.slane %v4754, 2
  %v4756 = vmax.f32 %v4754, %v4755
  %v4757 = vrot.slane %v4756, 1
  %v4758 = vmax.f32 %v4756, %v4757
  %v4759 = vsel %vm4723, %v4598, -inf
  %v4760 = vrot.slane %v4759, 4
  %v4761 = vmax.f32 %v4759, %v4760
  %v4762 = vrot.slane %v4761, 2
  %v4763 = vmax.f32 %v4761, %v4762
  %v4764 = vrot.slane %v4763, 1
  %v4765 = vmax.f32 %v4763, %v4764
  %v4766 = vsel %vm4723, %v4602, -inf
  %v4767 = vrot.slane %v4766, 4
  %v4768 = vmax.f32 %v4766, %v4767
  %v4769 = vrot.slane %v4768, 2
  %v4770 = vmax.f32 %v4768, %v4769
  %v4771 = vrot.slane %v4770, 1
  %v4772 = vmax.f32 %v4770, %v4771
  %v4773 = vsel %vm4723, %v4606, -inf
  %v4774 = vrot.slane %v4773, 4
  %v4775 = vmax.f32 %v4773, %v4774
  %v4776 = vrot.slane %v4775, 2
  %v4777 = vmax.f32 %v4775, %v4776
  %v4778 = vrot.slane %v4777, 1
  %v4779 = vmax.f32 %v4777, %v4778
  %v4780 = vsel %vm4723, %v4580, -inf
  %v4781 = vrot.slane %v4780, 4
  %v4782 = vmax.f32 %v4780, %v4781
  %v4783 = vrot.slane %v4782, 2
  %v4784 = vmax.f32 %v4782, %v4783
  %v4785 = vrot.slane %v4784, 1
  %v4786 = vmax.f32 %v4784, %v4785
  %v4787 = vsel %vm4723, %v4584, -inf
  %v4788 = vrot.slane %v4787, 4
  %v4789 = vmax.f32 %v4787, %v4788
  %v4790 = vrot.slane %v4789, 2
  %v4791 = vmax.f32 %v4789, %v4790
  %v4792 = vrot.slane %v4791, 1
  %v4793 = vmax.f32 %v4791, %v4792
  %v4794 = vsel %vm4723, %v4588, -inf
  %v4795 = vrot.slane %v4794, 4
  %v4796 = vmax.f32 %v4794, %v4795
  %v4797 = vrot.slane %v4796, 2
  %v4798 = vmax.f32 %v4796, %v4797
  %v4799 = vrot.slane %v4798, 1
  %v4800 = vmax.f32 %v4798, %v4799
  %v4801 = vsel %vm4723, %v4592, -inf
  %v4802 = vrot.slane %v4801, 4
  %v4803 = vmax.f32 %v4801, %v4802
  %v4804 = vrot.slane %v4803, 2
  %v4805 = vmax.f32 %v4803, %v4804
  %v4806 = vrot.slane %v4805, 1
  %v4807 = vmax.f32 %v4805, %v4806
  %v4808 = vsel %vm4723, %v4596, -inf
  %v4809 = vrot.slane %v4808, 4
  %v4810 = vmax.f32 %v4808, %v4809
  %v4811 = vrot.slane %v4810, 2
  %v4812 = vmax.f32 %v4810, %v4811
  %v4813 = vrot.slane %v4812, 1
  %v4814 = vmax.f32 %v4812, %v4813
  %v4815 = vsel %vm4723, %v4600, -inf
  %v4816 = vrot.slane %v4815, 4
  %v4817 = vmax.f32 %v4815, %v4816
  %v4818 = vrot.slane %v4817, 2
  %v4819 = vmax.f32 %v4817, %v4818
  %v4820 = vrot.slane %v4819, 1
  %v4821 = vmax.f32 %v4819, %v4820
  %v4822 = vsel %vm4723, %v4604, -inf
  %v4823 = vrot.slane %v4822, 4
  %v4824 = vmax.f32 %v4822, %v4823
  %v4825 = vrot.slane %v4824, 2
  %v4826 = vmax.f32 %v4824, %v4825
  %v4827 = vrot.slane %v4826, 1
  %v4828 = vmax.f32 %v4826, %v4827
  %v4829 = vsel %vm4723, %v4608, -inf
  %v4830 = vrot.slane %v4829, 4
  %v4831 = vmax.f32 %v4829, %v4830
  %v4832 = vrot.slane %v4831, 2
  %v4833 = vmax.f32 %v4831, %v4832
  %v4834 = vrot.slane %v4833, 1
  %v4835 = vmax.f32 %v4833, %v4834
  %vm4836 = vcmask 259076
  %v4837 = vsel %vm4836, %v4578, -inf
  %v4838 = vrot.slane %v4837, 4
  %v4839 = vmax.f32 %v4837, %v4838
  %v4840 = vrot.slane %v4839, 2
  %v4841 = vmax.f32 %v4839, %v4840
  %v4842 = vrot.slane %v4841, 1
  %v4843 = vmax.f32 %v4841, %v4842
  %v4844 = vsel %vm4836, %v4582, -inf
  %v4845 = vrot.slane %v4844, 4
  %v4846 = vmax.f32 %v4844, %v4845
  %v4847 = vrot.slane %v4846, 2
  %v4848 = vmax.f32 %v4846, %v4847
  %v4849 = vrot.slane %v4848, 1
  %v4850 = vmax.f32 %v4848, %v4849
  %v4851 = vsel %vm4836, %v4586, -inf
  %v4852 = vrot.slane %v4851, 4
  %v4853 = vmax.f32 %v4851, %v4852
  %v4854 = vrot.slane %v4853, 2
  %v4855 = vmax.f32 %v4853, %v4854
  %v4856 = vrot.slane %v4855, 1
  %v4857 = vmax.f32 %v4855, %v4856
  %v4858 = vsel %vm4836, %v4590, -inf
  %v4859 = vrot.slane %v4858, 4
  %v4860 = vmax.f32 %v4858, %v4859
  %v4861 = vrot.slane %v4860, 2
  %v4862 = vmax.f32 %v4860, %v4861
  %v4863 = vrot.slane %v4862, 1
  %v4864 = vmax.f32 %v4862, %v4863
  %v4865 = vsel %vm4836, %v4594, -inf
  %v4866 = vrot.slane %v4865, 4
  %v4867 = vmax.f32 %v4865, %v4866
  %v4868 = vrot.slane %v4867, 2
  %v4869 = vmax.f32 %v4867, %v4868
  %v4870 = vrot.slane %v4869, 1
  %v4871 = vmax.f32 %v4869, %v4870
  %v4872 = vsel %vm4836, %v4598, -inf
  %v4873 = vrot.slane %v4872, 4
  %v4874 = vmax.f32 %v4872, %v4873
  %v4875 = vrot.slane %v4874, 2
  %v4876 = vmax.f32 %v4874, %v4875
  %v4877 = vrot.slane %v4876, 1
  %v4878 = vmax.f32 %v4876, %v4877
  %v4879 = vsel %vm4836, %v4602, -inf
  %v4880 = vrot.slane %v4879, 4
  %v4881 = vmax.f32 %v4879, %v4880
  %v4882 = vrot.slane %v4881, 2
  %v4883 = vmax.f32 %v4881, %v4882
  %v4884 = vrot.slane %v4883, 1
  %v4885 = vmax.f32 %v4883, %v4884
  %v4886 = vsel %vm4836, %v4606, -inf
  %v4887 = vrot.slane %v4886, 4
  %v4888 = vmax.f32 %v4886, %v4887
  %v4889 = vrot.slane %v4888, 2
  %v4890 = vmax.f32 %v4888, %v4889
  %v4891 = vrot.slane %v4890, 1
  %v4892 = vmax.f32 %v4890, %v4891
  %v4893 = vsel %vm4836, %v4580, -inf
  %v4894 = vrot.slane %v4893, 4
  %v4895 = vmax.f32 %v4893, %v4894
  %v4896 = vrot.slane %v4895, 2
  %v4897 = vmax.f32 %v4895, %v4896
  %v4898 = vrot.slane %v4897, 1
  %v4899 = vmax.f32 %v4897, %v4898
  %v4900 = vsel %vm4836, %v4584, -inf
  %v4901 = vrot.slane %v4900, 4
  %v4902 = vmax.f32 %v4900, %v4901
  %v4903 = vrot.slane %v4902, 2
  %v4904 = vmax.f32 %v4902, %v4903
  %v4905 = vrot.slane %v4904, 1
  %v4906 = vmax.f32 %v4904, %v4905
  %v4907 = vsel %vm4836, %v4588, -inf
  %v4908 = vrot.slane %v4907, 4
  %v4909 = vmax.f32 %v4907, %v4908
  %v4910 = vrot.slane %v4909, 2
  %v4911 = vmax.f32 %v4909, %v4910
  %v4912 = vrot.slane %v4911, 1
  %v4913 = vmax.f32 %v4911, %v4912
  %v4914 = vsel %vm4836, %v4592, -inf
  %v4915 = vrot.slane %v4914, 4
  %v4916 = vmax.f32 %v4914, %v4915
  %v4917 = vrot.slane %v4916, 2
  %v4918 = vmax.f32 %v4916, %v4917
  %v4919 = vrot.slane %v4918, 1
  %v4920 = vmax.f32 %v4918, %v4919
  %v4921 = vsel %vm4836, %v4596, -inf
  %v4922 = vrot.slane %v4921, 4
  %v4923 = vmax.f32 %v4921, %v4922
  %v4924 = vrot.slane %v4923, 2
  %v4925 = vmax.f32 %v4923, %v4924
  %v4926 = vrot.slane %v4925, 1
  %v4927 = vmax.f32 %v4925, %v4926
  %v4928 = vsel %vm4836, %v4600, -inf
  %v4929 = vrot.slane %v4928, 4
  %v4930 = vmax.f32 %v4928, %v4929
  %v4931 = vrot.slane %v4930, 2
  %v4932 = vmax.f32 %v4930, %v4931
  %v4933 = vrot.slane %v4932, 1
  %v4934 = vmax.f32 %v4932, %v4933
  %v4935 = vsel %vm4836, %v4604, -inf
  %v4936 = vrot.slane %v4935, 4
  %v4937 = vmax.f32 %v4935, %v4936
  %v4938 = vrot.slane %v4937, 2
  %v4939 = vmax.f32 %v4937, %v4938
  %v4940 = vrot.slane %v4939, 1
  %v4941 = vmax.f32 %v4939, %v4940
  %v4942 = vsel %vm4836, %v4608, -inf
  %v4943 = vrot.slane %v4942, 4
  %v4944 = vmax.f32 %v4942, %v4943
  %v4945 = vrot.slane %v4944, 2
  %v4946 = vmax.f32 %v4944, %v4945
  %v4947 = vrot.slane %v4946, 1
  %v4948 = vmax.f32 %v4946, %v4947
  %vm4949 = vcmask 261126
  %v4950 = vsel %vm4949, %v4578, -inf
  %v4951 = vrot.slane %v4950, 4
  %v4952 = vmax.f32 %v4950, %v4951
  %v4953 = vrot.slane %v4952, 2
  %v4954 = vmax.f32 %v4952, %v4953
  %v4955 = vrot.slane %v4954, 1
  %v4956 = vmax.f32 %v4954, %v4955
  %v4957 = vsel %vm4949, %v4582, -inf
  %v4958 = vrot.slane %v4957, 4
  %v4959 = vmax.f32 %v4957, %v4958
  %v4960 = vrot.slane %v4959, 2
  %v4961 = vmax.f32 %v4959, %v4960
  %v4962 = vrot.slane %v4961, 1
  %v4963 = vmax.f32 %v4961, %v4962
  %v4964 = vsel %vm4949, %v4586, -inf
  %v4965 = vrot.slane %v4964, 4
  %v4966 = vmax.f32 %v4964, %v4965
  %v4967 = vrot.slane %v4966, 2
  %v4968 = vmax.f32 %v4966, %v4967
  %v4969 = vrot.slane %v4968, 1
  %v4970 = vmax.f32 %v4968, %v4969
  %v4971 = vsel %vm4949, %v4590, -inf
  %v4972 = vrot.slane %v4971, 4
  %v4973 = vmax.f32 %v4971, %v4972
  %v4974 = vrot.slane %v4973, 2
  %v4975 = vmax.f32 %v4973, %v4974
  %v4976 = vrot.slane %v4975, 1
  %v4977 = vmax.f32 %v4975, %v4976
  %v4978 = vsel %vm4949, %v4594, -inf
  %v4979 = vrot.slane %v4978, 4
  %v4980 = vmax.f32 %v4978, %v4979
  %v4981 = vrot.slane %v4980, 2
  %v4982 = vmax.f32 %v4980, %v4981
  %v4983 = vrot.slane %v4982, 1
  %v4984 = vmax.f32 %v4982, %v4983
  %v4985 = vsel %vm4949, %v4598, -inf
  %v4986 = vrot.slane %v4985, 4
  %v4987 = vmax.f32 %v4985, %v4986
  %v4988 = vrot.slane %v4987, 2
  %v4989 = vmax.f32 %v4987, %v4988
  %v4990 = vrot.slane %v4989, 1
  %v4991 = vmax.f32 %v4989, %v4990
  %v4992 = vsel %vm4949, %v4602, -inf
  %v4993 = vrot.slane %v4992, 4
  %v4994 = vmax.f32 %v4992, %v4993
  %v4995 = vrot.slane %v4994, 2
  %v4996 = vmax.f32 %v4994, %v4995
  %v4997 = vrot.slane %v4996, 1
  %v4998 = vmax.f32 %v4996, %v4997
  %v4999 = vsel %vm4949, %v4606, -inf
  %v5000 = vrot.slane %v4999, 4
  %v5001 = vmax.f32 %v4999, %v5000
  %v5002 = vrot.slane %v5001, 2
  %v5003 = vmax.f32 %v5001, %v5002
  %v5004 = vrot.slane %v5003, 1
  %v5005 = vmax.f32 %v5003, %v5004
  %v5006 = vsel %vm4949, %v4580, -inf
  %v5007 = vrot.slane %v5006, 4
  %v5008 = vmax.f32 %v5006, %v5007
  %v5009 = vrot.slane %v5008, 2
  %v5010 = vmax.f32 %v5008, %v5009
  %v5011 = vrot.slane %v5010, 1
  %v5012 = vmax.f32 %v5010, %v5011
  %v5013 = vsel %vm4949, %v4584, -inf
  %v5014 = vrot.slane %v5013, 4
  %v5015 = vmax.f32 %v5013, %v5014
  %v5016 = vrot.slane %v5015, 2
  %v5017 = vmax.f32 %v5015, %v5016
  %v5018 = vrot.slane %v5017, 1
  %v5019 = vmax.f32 %v5017, %v5018
  %v5020 = vsel %vm4949, %v4588, -inf
  %v5021 = vrot.slane %v5020, 4
  %v5022 = vmax.f32 %v5020, %v5021
  %v5023 = vrot.slane %v5022, 2
  %v5024 = vmax.f32 %v5022, %v5023
  %v5025 = vrot.slane %v5024, 1
  %v5026 = vmax.f32 %v5024, %v5025
  %v5027 = vsel %vm4949, %v4592, -inf
  %v5028 = vrot.slane %v5027, 4
  %v5029 = vmax.f32 %v5027, %v5028
  %v5030 = vrot.slane %v5029, 2
  %v5031 = vmax.f32 %v5029, %v5030
  %v5032 = vrot.slane %v5031, 1
  %v5033 = vmax.f32 %v5031, %v5032
  %v5034 = vsel %vm4949, %v4596, -inf
  %v5035 = vrot.slane %v5034, 4
  %v5036 = vmax.f32 %v5034, %v5035
  %v5037 = vrot.slane %v5036, 2
  %v5038 = vmax.f32 %v5036, %v5037
  %v5039 = vrot.slane %v5038, 1
  %v5040 = vmax.f32 %v5038, %v5039
  %v5041 = vsel %vm4949, %v4600, -inf
  %v5042 = vrot.slane %v5041, 4
  %v5043 = vmax.f32 %v5041, %v5042
  %v5044 = vrot.slane %v5043, 2
  %v5045 = vmax.f32 %v5043, %v5044
  %v5046 = vrot.slane %v5045, 1
  %v5047 = vmax.f32 %v5045, %v5046
  %v5048 = vsel %vm4949, %v4604, -inf
  %v5049 = vrot.slane %v5048, 4
  %v5050 = vmax.f32 %v5048, %v5049
  %v5051 = vrot.slane %v5050, 2
  %v5052 = vmax.f32 %v5050, %v5051
  %v5053 = vrot.slane %v5052, 1
  %v5054 = vmax.f32 %v5052, %v5053
  %v5055 = vsel %vm4949, %v4608, -inf
  %v5056 = vrot.slane %v5055, 4
  %v5057 = vmax.f32 %v5055, %v5056
  %v5058 = vrot.slane %v5057, 2
  %v5059 = vmax.f32 %v5057, %v5058
  %v5060 = vrot.slane %v5059, 1
  %v5061 = vmax.f32 %v5059, %v5060
  %v5062 = vsel %vm4610, %v4579, -inf
  %v5063 = vrot.slane %v5062, 4
  %v5064 = vmax.f32 %v5062, %v5063
  %v5065 = vrot.slane %v5064, 2
  %v5066 = vmax.f32 %v5064, %v5065
  %v5067 = vrot.slane %v5066, 1
  %v5068 = vmax.f32 %v5066, %v5067
  %v5069 = vsel %vm4610, %v4583, -inf
  %v5070 = vrot.slane %v5069, 4
  %v5071 = vmax.f32 %v5069, %v5070
  %v5072 = vrot.slane %v5071, 2
  %v5073 = vmax.f32 %v5071, %v5072
  %v5074 = vrot.slane %v5073, 1
  %v5075 = vmax.f32 %v5073, %v5074
  %v5076 = vsel %vm4610, %v4587, -inf
  %v5077 = vrot.slane %v5076, 4
  %v5078 = vmax.f32 %v5076, %v5077
  %v5079 = vrot.slane %v5078, 2
  %v5080 = vmax.f32 %v5078, %v5079
  %v5081 = vrot.slane %v5080, 1
  %v5082 = vmax.f32 %v5080, %v5081
  %v5083 = vsel %vm4610, %v4591, -inf
  %v5084 = vrot.slane %v5083, 4
  %v5085 = vmax.f32 %v5083, %v5084
  %v5086 = vrot.slane %v5085, 2
  %v5087 = vmax.f32 %v5085, %v5086
  %v5088 = vrot.slane %v5087, 1
  %v5089 = vmax.f32 %v5087, %v5088
  %v5090 = vsel %vm4610, %v4595, -inf
  %v5091 = vrot.slane %v5090, 4
  %v5092 = vmax.f32 %v5090, %v5091
  %v5093 = vrot.slane %v5092, 2
  %v5094 = vmax.f32 %v5092, %v5093
  %v5095 = vrot.slane %v5094, 1
  %v5096 = vmax.f32 %v5094, %v5095
  %v5097 = vsel %vm4610, %v4599, -inf
  %v5098 = vrot.slane %v5097, 4
  %v5099 = vmax.f32 %v5097, %v5098
  %v5100 = vrot.slane %v5099, 2
  %v5101 = vmax.f32 %v5099, %v5100
  %v5102 = vrot.slane %v5101, 1
  %v5103 = vmax.f32 %v5101, %v5102
  %v5104 = vsel %vm4610, %v4603, -inf
  %v5105 = vrot.slane %v5104, 4
  %v5106 = vmax.f32 %v5104, %v5105
  %v5107 = vrot.slane %v5106, 2
  %v5108 = vmax.f32 %v5106, %v5107
  %v5109 = vrot.slane %v5108, 1
  %v5110 = vmax.f32 %v5108, %v5109
  %v5111 = vsel %vm4610, %v4607, -inf
  %v5112 = vrot.slane %v5111, 4
  %v5113 = vmax.f32 %v5111, %v5112
  %v5114 = vrot.slane %v5113, 2
  %v5115 = vmax.f32 %v5113, %v5114
  %v5116 = vrot.slane %v5115, 1
  %v5117 = vmax.f32 %v5115, %v5116
  %v5118 = vsel %vm4610, %v4581, -inf
  %v5119 = vrot.slane %v5118, 4
  %v5120 = vmax.f32 %v5118, %v5119
  %v5121 = vrot.slane %v5120, 2
  %v5122 = vmax.f32 %v5120, %v5121
  %v5123 = vrot.slane %v5122, 1
  %v5124 = vmax.f32 %v5122, %v5123
  %v5125 = vsel %vm4610, %v4585, -inf
  %v5126 = vrot.slane %v5125, 4
  %v5127 = vmax.f32 %v5125, %v5126
  %v5128 = vrot.slane %v5127, 2
  %v5129 = vmax.f32 %v5127, %v5128
  %v5130 = vrot.slane %v5129, 1
  %v5131 = vmax.f32 %v5129, %v5130
  %v5132 = vsel %vm4610, %v4589, -inf
  %v5133 = vrot.slane %v5132, 4
  %v5134 = vmax.f32 %v5132, %v5133
  %v5135 = vrot.slane %v5134, 2
  %v5136 = vmax.f32 %v5134, %v5135
  %v5137 = vrot.slane %v5136, 1
  %v5138 = vmax.f32 %v5136, %v5137
  %v5139 = vsel %vm4610, %v4593, -inf
  %v5140 = vrot.slane %v5139, 4
  %v5141 = vmax.f32 %v5139, %v5140
  %v5142 = vrot.slane %v5141, 2
  %v5143 = vmax.f32 %v5141, %v5142
  %v5144 = vrot.slane %v5143, 1
  %v5145 = vmax.f32 %v5143, %v5144
  %v5146 = vsel %vm4610, %v4597, -inf
  %v5147 = vrot.slane %v5146, 4
  %v5148 = vmax.f32 %v5146, %v5147
  %v5149 = vrot.slane %v5148, 2
  %v5150 = vmax.f32 %v5148, %v5149
  %v5151 = vrot.slane %v5150, 1
  %v5152 = vmax.f32 %v5150, %v5151
  %v5153 = vsel %vm4610, %v4601, -inf
  %v5154 = vrot.slane %v5153, 4
  %v5155 = vmax.f32 %v5153, %v5154
  %v5156 = vrot.slane %v5155, 2
  %v5157 = vmax.f32 %v5155, %v5156
  %v5158 = vrot.slane %v5157, 1
  %v5159 = vmax.f32 %v5157, %v5158
  %v5160 = vsel %vm4610, %v4605, -inf
  %v5161 = vrot.slane %v5160, 4
  %v5162 = vmax.f32 %v5160, %v5161
  %v5163 = vrot.slane %v5162, 2
  %v5164 = vmax.f32 %v5162, %v5163
  %v5165 = vrot.slane %v5164, 1
  %v5166 = vmax.f32 %v5164, %v5165
  %v5167 = vsel %vm4610, %v4609, -inf
  %v5168 = vrot.slane %v5167, 4
  %v5169 = vmax.f32 %v5167, %v5168
  %v5170 = vrot.slane %v5169, 2
  %v5171 = vmax.f32 %v5169, %v5170
  %v5172 = vrot.slane %v5171, 1
  %v5173 = vmax.f32 %v5171, %v5172
  %v5174 = vsel %vm4723, %v4579, -inf
  %v5175 = vrot.slane %v5174, 4
  %v5176 = vmax.f32 %v5174, %v5175
  %v5177 = vrot.slane %v5176, 2
  %v5178 = vmax.f32 %v5176, %v5177
  %v5179 = vrot.slane %v5178, 1
  %v5180 = vmax.f32 %v5178, %v5179
  %v5181 = vsel %vm4723, %v4583, -inf
  %v5182 = vrot.slane %v5181, 4
  %v5183 = vmax.f32 %v5181, %v5182
  %v5184 = vrot.slane %v5183, 2
  %v5185 = vmax.f32 %v5183, %v5184
  %v5186 = vrot.slane %v5185, 1
  %v5187 = vmax.f32 %v5185, %v5186
  %v5188 = vsel %vm4723, %v4587, -inf
  %v5189 = vrot.slane %v5188, 4
  %v5190 = vmax.f32 %v5188, %v5189
  %v5191 = vrot.slane %v5190, 2
  %v5192 = vmax.f32 %v5190, %v5191
  %v5193 = vrot.slane %v5192, 1
  %v5194 = vmax.f32 %v5192, %v5193
  %v5195 = vsel %vm4723, %v4591, -inf
  %v5196 = vrot.slane %v5195, 4
  %v5197 = vmax.f32 %v5195, %v5196
  %v5198 = vrot.slane %v5197, 2
  %v5199 = vmax.f32 %v5197, %v5198
  %v5200 = vrot.slane %v5199, 1
  %v5201 = vmax.f32 %v5199, %v5200
  %v5202 = vsel %vm4723, %v4595, -inf
  %v5203 = vrot.slane %v5202, 4
  %v5204 = vmax.f32 %v5202, %v5203
  %v5205 = vrot.slane %v5204, 2
  %v5206 = vmax.f32 %v5204, %v5205
  %v5207 = vrot.slane %v5206, 1
  %v5208 = vmax.f32 %v5206, %v5207
  %v5209 = vsel %vm4723, %v4599, -inf
  %v5210 = vrot.slane %v5209, 4
  %v5211 = vmax.f32 %v5209, %v5210
  %v5212 = vrot.slane %v5211, 2
  %v5213 = vmax.f32 %v5211, %v5212
  %v5214 = vrot.slane %v5213, 1
  %v5215 = vmax.f32 %v5213, %v5214
  %v5216 = vsel %vm4723, %v4603, -inf
  %v5217 = vrot.slane %v5216, 4
  %v5218 = vmax.f32 %v5216, %v5217
  %v5219 = vrot.slane %v5218, 2
  %v5220 = vmax.f32 %v5218, %v5219
  %v5221 = vrot.slane %v5220, 1
  %v5222 = vmax.f32 %v5220, %v5221
  %v5223 = vsel %vm4723, %v4607, -inf
  %v5224 = vrot.slane %v5223, 4
  %v5225 = vmax.f32 %v5223, %v5224
  %v5226 = vrot.slane %v5225, 2
  %v5227 = vmax.f32 %v5225, %v5226
  %v5228 = vrot.slane %v5227, 1
  %v5229 = vmax.f32 %v5227, %v5228
  %v5230 = vsel %vm4723, %v4581, -inf
  %v5231 = vrot.slane %v5230, 4
  %v5232 = vmax.f32 %v5230, %v5231
  %v5233 = vrot.slane %v5232, 2
  %v5234 = vmax.f32 %v5232, %v5233
  %v5235 = vrot.slane %v5234, 1
  %v5236 = vmax.f32 %v5234, %v5235
  %v5237 = vsel %vm4723, %v4585, -inf
  %v5238 = vrot.slane %v5237, 4
  %v5239 = vmax.f32 %v5237, %v5238
  %v5240 = vrot.slane %v5239, 2
  %v5241 = vmax.f32 %v5239, %v5240
  %v5242 = vrot.slane %v5241, 1
  %v5243 = vmax.f32 %v5241, %v5242
  %v5244 = vsel %vm4723, %v4589, -inf
  %v5245 = vrot.slane %v5244, 4
  %v5246 = vmax.f32 %v5244, %v5245
  %v5247 = vrot.slane %v5246, 2
  %v5248 = vmax.f32 %v5246, %v5247
  %v5249 = vrot.slane %v5248, 1
  %v5250 = vmax.f32 %v5248, %v5249
  %v5251 = vsel %vm4723, %v4593, -inf
  %v5252 = vrot.slane %v5251, 4
  %v5253 = vmax.f32 %v5251, %v5252
  %v5254 = vrot.slane %v5253, 2
  %v5255 = vmax.f32 %v5253, %v5254
  %v5256 = vrot.slane %v5255, 1
  %v5257 = vmax.f32 %v5255, %v5256
  %v5258 = vsel %vm4723, %v4597, -inf
  %v5259 = vrot.slane %v5258, 4
  %v5260 = vmax.f32 %v5258, %v5259
  %v5261 = vrot.slane %v5260, 2
  %v5262 = vmax.f32 %v5260, %v5261
  %v5263 = vrot.slane %v5262, 1
  %v5264 = vmax.f32 %v5262, %v5263
  %v5265 = vsel %vm4723, %v4601, -inf
  %v5266 = vrot.slane %v5265, 4
  %v5267 = vmax.f32 %v5265, %v5266
  %v5268 = vrot.slane %v5267, 2
  %v5269 = vmax.f32 %v5267, %v5268
  %v5270 = vrot.slane %v5269, 1
  %v5271 = vmax.f32 %v5269, %v5270
  %v5272 = vsel %vm4723, %v4605, -inf
  %v5273 = vrot.slane %v5272, 4
  %v5274 = vmax.f32 %v5272, %v5273
  %v5275 = vrot.slane %v5274, 2
  %v5276 = vmax.f32 %v5274, %v5275
  %v5277 = vrot.slane %v5276, 1
  %v5278 = vmax.f32 %v5276, %v5277
  %v5279 = vsel %vm4723, %v4609, -inf
  %v5280 = vrot.slane %v5279, 4
  %v5281 = vmax.f32 %v5279, %v5280
  %v5282 = vrot.slane %v5281, 2
  %v5283 = vmax.f32 %v5281, %v5282
  %v5284 = vrot.slane %v5283, 1
  %v5285 = vmax.f32 %v5283, %v5284
  %v5286 = vsel %vm4836, %v4579, -inf
  %v5287 = vrot.slane %v5286, 4
  %v5288 = vmax.f32 %v5286, %v5287
  %v5289 = vrot.slane %v5288, 2
  %v5290 = vmax.f32 %v5288, %v5289
  %v5291 = vrot.slane %v5290, 1
  %v5292 = vmax.f32 %v5290, %v5291
  %v5293 = vsel %vm4836, %v4583, -inf
  %v5294 = vrot.slane %v5293, 4
  %v5295 = vmax.f32 %v5293, %v5294
  %v5296 = vrot.slane %v5295, 2
  %v5297 = vmax.f32 %v5295, %v5296
  %v5298 = vrot.slane %v5297, 1
  %v5299 = vmax.f32 %v5297, %v5298
  %v5300 = vsel %vm4836, %v4587, -inf
  %v5301 = vrot.slane %v5300, 4
  %v5302 = vmax.f32 %v5300, %v5301
  %v5303 = vrot.slane %v5302, 2
  %v5304 = vmax.f32 %v5302, %v5303
  %v5305 = vrot.slane %v5304, 1
  %v5306 = vmax.f32 %v5304, %v5305
  %v5307 = vsel %vm4836, %v4591, -inf
  %v5308 = vrot.slane %v5307, 4
  %v5309 = vmax.f32 %v5307, %v5308
  %v5310 = vrot.slane %v5309, 2
  %v5311 = vmax.f32 %v5309, %v5310
  %v5312 = vrot.slane %v5311, 1
  %v5313 = vmax.f32 %v5311, %v5312
  %v5314 = vsel %vm4836, %v4595, -inf
  %v5315 = vrot.slane %v5314, 4
  %v5316 = vmax.f32 %v5314, %v5315
  %v5317 = vrot.slane %v5316, 2
  %v5318 = vmax.f32 %v5316, %v5317
  %v5319 = vrot.slane %v5318, 1
  %v5320 = vmax.f32 %v5318, %v5319
  %v5321 = vsel %vm4836, %v4599, -inf
  %v5322 = vrot.slane %v5321, 4
  %v5323 = vmax.f32 %v5321, %v5322
  %v5324 = vrot.slane %v5323, 2
  %v5325 = vmax.f32 %v5323, %v5324
  %v5326 = vrot.slane %v5325, 1
  %v5327 = vmax.f32 %v5325, %v5326
  %v5328 = vsel %vm4836, %v4603, -inf
  %v5329 = vrot.slane %v5328, 4
  %v5330 = vmax.f32 %v5328, %v5329
  %v5331 = vrot.slane %v5330, 2
  %v5332 = vmax.f32 %v5330, %v5331
  %v5333 = vrot.slane %v5332, 1
  %v5334 = vmax.f32 %v5332, %v5333
  %v5335 = vsel %vm4836, %v4607, -inf
  %v5336 = vrot.slane %v5335, 4
  %v5337 = vmax.f32 %v5335, %v5336
  %v5338 = vrot.slane %v5337, 2
  %v5339 = vmax.f32 %v5337, %v5338
  %v5340 = vrot.slane %v5339, 1
  %v5341 = vmax.f32 %v5339, %v5340
  %v5342 = vsel %vm4836, %v4581, -inf
  %v5343 = vrot.slane %v5342, 4
  %v5344 = vmax.f32 %v5342, %v5343
  %v5345 = vrot.slane %v5344, 2
  %v5346 = vmax.f32 %v5344, %v5345
  %v5347 = vrot.slane %v5346, 1
  %v5348 = vmax.f32 %v5346, %v5347
  %v5349 = vsel %vm4836, %v4585, -inf
  %v5350 = vrot.slane %v5349, 4
  %v5351 = vmax.f32 %v5349, %v5350
  %v5352 = vrot.slane %v5351, 2
  %v5353 = vmax.f32 %v5351, %v5352
  %v5354 = vrot.slane %v5353, 1
  %v5355 = vmax.f32 %v5353, %v5354
  %v5356 = vsel %vm4836, %v4589, -inf
  %v5357 = vrot.slane %v5356, 4
  %v5358 = vmax.f32 %v5356, %v5357
  %v5359 = vrot.slane %v5358, 2
  %v5360 = vmax.f32 %v5358, %v5359
  %v5361 = vrot.slane %v5360, 1
  %v5362 = vmax.f32 %v5360, %v5361
  %v5363 = vsel %vm4836, %v4593, -inf
  %v5364 = vrot.slane %v5363, 4
  %v5365 = vmax.f32 %v5363, %v5364
  %v5366 = vrot.slane %v5365, 2
  %v5367 = vmax.f32 %v5365, %v5366
  %v5368 = vrot.slane %v5367, 1
  %v5369 = vmax.f32 %v5367, %v5368
  %v5370 = vsel %vm4836, %v4597, -inf
  %v5371 = vrot.slane %v5370, 4
  %v5372 = vmax.f32 %v5370, %v5371
  %v5373 = vrot.slane %v5372, 2
  %v5374 = vmax.f32 %v5372, %v5373
  %v5375 = vrot.slane %v5374, 1
  %v5376 = vmax.f32 %v5374, %v5375
  %v5377 = vsel %vm4836, %v4601, -inf
  %v5378 = vrot.slane %v5377, 4
  %v5379 = vmax.f32 %v5377, %v5378
  %v5380 = vrot.slane %v5379, 2
  %v5381 = vmax.f32 %v5379, %v5380
  %v5382 = vrot.slane %v5381, 1
  %v5383 = vmax.f32 %v5381, %v5382
  %v5384 = vsel %vm4836, %v4605, -inf
  %v5385 = vrot.slane %v5384, 4
  %v5386 = vmax.f32 %v5384, %v5385
  %v5387 = vrot.slane %v5386, 2
  %v5388 = vmax.f32 %v5386, %v5387
  %v5389 = vrot.slane %v5388, 1
  %v5390 = vmax.f32 %v5388, %v5389
  %v5391 = vsel %vm4836, %v4609, -inf
  %v5392 = vrot.slane %v5391, 4
  %v5393 = vmax.f32 %v5391, %v5392
  %v5394 = vrot.slane %v5393, 2
  %v5395 = vmax.f32 %v5393, %v5394
  %v5396 = vrot.slane %v5395, 1
  %v5397 = vmax.f32 %v5395, %v5396
  %v5398 = vsel %vm4949, %v4579, -inf
  %v5399 = vrot.slane %v5398, 4
  %v5400 = vmax.f32 %v5398, %v5399
  %v5401 = vrot.slane %v5400, 2
  %v5402 = vmax.f32 %v5400, %v5401
  %v5403 = vrot.slane %v5402, 1
  %v5404 = vmax.f32 %v5402, %v5403
  %v5405 = vsel %vm4949, %v4583, -inf
  %v5406 = vrot.slane %v5405, 4
  %v5407 = vmax.f32 %v5405, %v5406
  %v5408 = vrot.slane %v5407, 2
  %v5409 = vmax.f32 %v5407, %v5408
  %v5410 = vrot.slane %v5409, 1
  %v5411 = vmax.f32 %v5409, %v5410
  %v5412 = vsel %vm4949, %v4587, -inf
  %v5413 = vrot.slane %v5412, 4
  %v5414 = vmax.f32 %v5412, %v5413
  %v5415 = vrot.slane %v5414, 2
  %v5416 = vmax.f32 %v5414, %v5415
  %v5417 = vrot.slane %v5416, 1
  %v5418 = vmax.f32 %v5416, %v5417
  %v5419 = vsel %vm4949, %v4591, -inf
  %v5420 = vrot.slane %v5419, 4
  %v5421 = vmax.f32 %v5419, %v5420
  %v5422 = vrot.slane %v5421, 2
  %v5423 = vmax.f32 %v5421, %v5422
  %v5424 = vrot.slane %v5423, 1
  %v5425 = vmax.f32 %v5423, %v5424
  %v5426 = vsel %vm4949, %v4595, -inf
  %v5427 = vrot.slane %v5426, 4
  %v5428 = vmax.f32 %v5426, %v5427
  %v5429 = vrot.slane %v5428, 2
  %v5430 = vmax.f32 %v5428, %v5429
  %v5431 = vrot.slane %v5430, 1
  %v5432 = vmax.f32 %v5430, %v5431
  %v5433 = vsel %vm4949, %v4599, -inf
  %v5434 = vrot.slane %v5433, 4
  %v5435 = vmax.f32 %v5433, %v5434
  %v5436 = vrot.slane %v5435, 2
  %v5437 = vmax.f32 %v5435, %v5436
  %v5438 = vrot.slane %v5437, 1
  %v5439 = vmax.f32 %v5437, %v5438
  %v5440 = vsel %vm4949, %v4603, -inf
  %v5441 = vrot.slane %v5440, 4
  %v5442 = vmax.f32 %v5440, %v5441
  %v5443 = vrot.slane %v5442, 2
  %v5444 = vmax.f32 %v5442, %v5443
  %v5445 = vrot.slane %v5444, 1
  %v5446 = vmax.f32 %v5444, %v5445
  %v5447 = vsel %vm4949, %v4607, -inf
  %v5448 = vrot.slane %v5447, 4
  %v5449 = vmax.f32 %v5447, %v5448
  %v5450 = vrot.slane %v5449, 2
  %v5451 = vmax.f32 %v5449, %v5450
  %v5452 = vrot.slane %v5451, 1
  %v5453 = vmax.f32 %v5451, %v5452
  %v5454 = vsel %vm4949, %v4581, -inf
  %v5455 = vrot.slane %v5454, 4
  %v5456 = vmax.f32 %v5454, %v5455
  %v5457 = vrot.slane %v5456, 2
  %v5458 = vmax.f32 %v5456, %v5457
  %v5459 = vrot.slane %v5458, 1
  %v5460 = vmax.f32 %v5458, %v5459
  %v5461 = vsel %vm4949, %v4585, -inf
  %v5462 = vrot.slane %v5461, 4
  %v5463 = vmax.f32 %v5461, %v5462
  %v5464 = vrot.slane %v5463, 2
  %v5465 = vmax.f32 %v5463, %v5464
  %v5466 = vrot.slane %v5465, 1
  %v5467 = vmax.f32 %v5465, %v5466
  %v5468 = vsel %vm4949, %v4589, -inf
  %v5469 = vrot.slane %v5468, 4
  %v5470 = vmax.f32 %v5468, %v5469
  %v5471 = vrot.slane %v5470, 2
  %v5472 = vmax.f32 %v5470, %v5471
  %v5473 = vrot.slane %v5472, 1
  %v5474 = vmax.f32 %v5472, %v5473
  %v5475 = vsel %vm4949, %v4593, -inf
  %v5476 = vrot.slane %v5475, 4
  %v5477 = vmax.f32 %v5475, %v5476
  %v5478 = vrot.slane %v5477, 2
  %v5479 = vmax.f32 %v5477, %v5478
  %v5480 = vrot.slane %v5479, 1
  %v5481 = vmax.f32 %v5479, %v5480
  %v5482 = vsel %vm4949, %v4597, -inf
  %v5483 = vrot.slane %v5482, 4
  %v5484 = vmax.f32 %v5482, %v5483
  %v5485 = vrot.slane %v5484, 2
  %v5486 = vmax.f32 %v5484, %v5485
  %v5487 = vrot.slane %v5486, 1
  %v5488 = vmax.f32 %v5486, %v5487
  %v5489 = vsel %vm4949, %v4601, -inf
  %v5490 = vrot.slane %v5489, 4
  %v5491 = vmax.f32 %v5489, %v5490
  %v5492 = vrot.slane %v5491, 2
  %v5493 = vmax.f32 %v5491, %v5492
  %v5494 = vrot.slane %v5493, 1
  %v5495 = vmax.f32 %v5493, %v5494
  %v5496 = vsel %vm4949, %v4605, -inf
  %v5497 = vrot.slane %v5496, 4
  %v5498 = vmax.f32 %v5496, %v5497
  %v5499 = vrot.slane %v5498, 2
  %v5500 = vmax.f32 %v5498, %v5499
  %v5501 = vrot.slane %v5500, 1
  %v5502 = vmax.f32 %v5500, %v5501
  %v5503 = vsel %vm4949, %v4609, -inf
  %v5504 = vrot.slane %v5503, 4
  %v5505 = vmax.f32 %v5503, %v5504
  %v5506 = vrot.slane %v5505, 2
  %v5507 = vmax.f32 %v5505, %v5506
  %v5508 = vrot.slane %v5507, 1
  %v5509 = vmax.f32 %v5507, %v5508
  %vm5510 = vcmask 1040384
  %v5511 = vsel %vm5510, %v4617, %v4730
  %v5512 = vsel %vm5510, %v4624, %v4737
  %v5513 = vsel %vm5510, %v4631, %v4744
  %v5514 = vsel %vm5510, %v4638, %v4751
  %v5515 = vsel %vm5510, %v4645, %v4758
  %v5516 = vsel %vm5510, %v4652, %v4765
  %v5517 = vsel %vm5510, %v4659, %v4772
  %v5518 = vsel %vm5510, %v4666, %v4779
  %v5519 = vsel %vm5510, %v4673, %v4786
  %v5520 = vsel %vm5510, %v4680, %v4793
  %v5521 = vsel %vm5510, %v4687, %v4800
  %v5522 = vsel %vm5510, %v4694, %v4807
  %v5523 = vsel %vm5510, %v4701, %v4814
  %v5524 = vsel %vm5510, %v4708, %v4821
  %v5525 = vsel %vm5510, %v4715, %v4828
  %v5526 = vsel %vm5510, %v4722, %v4835
  %vm5527 = vcmask 1041408
  %v5528 = vsel %vm5527, %v5511, %v4843
  %v5529 = vsel %vm5527, %v5512, %v4850
  %v5530 = vsel %vm5527, %v5513, %v4857
  %v5531 = vsel %vm5527, %v5514, %v4864
  %v5532 = vsel %vm5527, %v5515, %v4871
  %v5533 = vsel %vm5527, %v5516, %v4878
  %v5534 = vsel %vm5527, %v5517, %v4885
  %v5535 = vsel %vm5527, %v5518, %v4892
  %v5536 = vsel %vm5527, %v5519, %v4899
  %v5537 = vsel %vm5527, %v5520, %v4906
  %v5538 = vsel %vm5527, %v5521, %v4913
  %v5539 = vsel %vm5527, %v5522, %v4920
  %v5540 = vsel %vm5527, %v5523, %v4927
  %v5541 = vsel %vm5527, %v5524, %v4934
  %v5542 = vsel %vm5527, %v5525, %v4941
  %v5543 = vsel %vm5527, %v5526, %v4948
  %v5544 = vsel %vm3642, %v5528, %v4956
  %v5545 = vsel %vm3642, %v5529, %v4963
  %v5546 = vsel %vm3642, %v5530, %v4970
  %v5547 = vsel %vm3642, %v5531, %v4977
  %v5548 = vsel %vm3642, %v5532, %v4984
  %v5549 = vsel %vm3642, %v5533, %v4991
  %v5550 = vsel %vm3642, %v5534, %v4998
  %v5551 = vsel %vm3642, %v5535, %v5005
  %v5552 = vsel %vm3642, %v5536, %v5012
  %v5553 = vsel %vm3642, %v5537, %v5019
  %v5554 = vsel %vm3642, %v5538, %v5026
  %v5555 = vsel %vm3642, %v5539, %v5033
  %v5556 = vsel %vm3642, %v5540, %v5040
  %v5557 = vsel %vm3642, %v5541, %v5047
  %v5558 = vsel %vm3642, %v5542, %v5054
  %v5559 = vsel %vm3642, %v5543, %v5061
  %vm5560 = vcmask 1043456
  %v5561 = vsel %vm5560, %v5544, %v5068
  %v5562 = vsel %vm5560, %v5545, %v5075
  %v5563 = vsel %vm5560, %v5546, %v5082
  %v5564 = vsel %vm5560, %v5547, %v5089
  %v5565 = vsel %vm5560, %v5548, %v5096
  %v5566 = vsel %vm5560, %v5549, %v5103
  %v5567 = vsel %vm5560, %v5550, %v5110
  %v5568 = vsel %vm5560, %v5551, %v5117
  %v5569 = vsel %vm5560, %v5552, %v5124
  %v5570 = vsel %vm5560, %v5553, %v5131
  %v5571 = vsel %vm5560, %v5554, %v5138
  %v5572 = vsel %vm5560, %v5555, %v5145
  %v5573 = vsel %vm5560, %v5556, %v5152
  %v5574 = vsel %vm5560, %v5557, %v5159
  %v5575 = vsel %vm5560, %v5558, %v5166
  %v5576 = vsel %vm5560, %v5559, %v5173
  %vm5577 = vcmask 1044480
  %v5578 = vsel %vm5577, %v5561, %v5180
  %v5579 = vsel %vm5577, %v5562, %v5187
  %v5580 = vsel %vm5577, %v5563, %v5194
  %v5581 = vsel %vm5577, %v5564, %v5201
  %v5582 = vsel %vm5577, %v5565, %v5208
  %v5583 = vsel %vm5577, %v5566, %v5215
  %v5584 = vsel %vm5577, %v5567, %v5222
  %v5585 = vsel %vm5577, %v5568, %v5229
  %v5586 = vsel %vm5577, %v5569, %v5236
  %v5587 = vsel %vm5577, %v5570, %v5243
  %v5588 = vsel %vm5577, %v5571, %v5250
  %v5589 = vsel %vm5577, %v5572, %v5257
  %v5590 = vsel %vm5577, %v5573, %v5264
  %v5591 = vsel %vm5577, %v5574, %v5271
  %v5592 = vsel %vm5577, %v5575, %v5278
  %v5593 = vsel %vm5577, %v5576, %v5285
  %vm5594 = vcmask 1045504
  %v5595 = vsel %vm5594, %v5578, %v5292
  %v5596 = vsel %vm5594, %v5579, %v5299
  %v5597 = vsel %vm5594, %v5580, %v5306
  %v5598 = vsel %vm5594, %v5581, %v5313
  %v5599 = vsel %vm5594, %v5582, %v5320
  %v5600 = vsel %vm5594, %v5583, %v5327
  %v5601 = vsel %vm5594, %v5584, %v5334
  %v5602 = vsel %vm5594, %v5585, %v5341
  %v5603 = vsel %vm5594, %v5586, %v5348
  %v5604 = vsel %vm5594, %v5587, %v5355
  %v5605 = vsel %vm5594, %v5588, %v5362
  %v5606 = vsel %vm5594, %v5589, %v5369
  %v5607 = vsel %vm5594, %v5590, %v5376
  %v5608 = vsel %vm5594, %v5591, %v5383
  %v5609 = vsel %vm5594, %v5592, %v5390
  %v5610 = vsel %vm5594, %v5593, %v5397
  %vm5611 = vcmask 1046528
  %v5612 = vsel %vm5611, %v5595, %v5404
  %v5613 = vsel %vm5611, %v5596, %v5411
  %v5614 = vsel %vm5611, %v5597, %v5418
  %v5615 = vsel %vm5611, %v5598, %v5425
  %v5616 = vsel %vm5611, %v5599, %v5432
  %v5617 = vsel %vm5611, %v5600, %v5439
  %v5618 = vsel %vm5611, %v5601, %v5446
  %v5619 = vsel %vm5611, %v5602, %v5453
  %v5620 = vsel %vm5611, %v5603, %v5460
  %v5621 = vsel %vm5611, %v5604, %v5467
  %v5622 = vsel %vm5611, %v5605, %v5474
  %v5623 = vsel %vm5611, %v5606, %v5481
  %v5624 = vsel %vm5611, %v5607, %v5488
  %v5625 = vsel %vm5611, %v5608, %v5495
  %v5626 = vsel %vm5611, %v5609, %v5502
  %v5627 = vsel %vm5611, %v5610, %v5509
  %5628 = vst.msk [vmem:[#allocation3] sm:$0xff] %vm4031, 0.0
  %5629 = vst.msk [vmem:[#allocation3 + $0x8] sm:$0x3] %vm4610, 0.0
  %5630 = vst.msk [vmem:[#allocation3 + $0x10] sm:$0xff] %vm4031, 0.0
  %5631 = vst.msk [vmem:[#allocation3 + $0x18] sm:$0x3] %vm4610, 0.0
  %5632 = vst.msk [vmem:[#allocation3 + $0x20] sm:$0xff] %vm4031, 0.0
  %5633 = vst.msk [vmem:[#allocation3 + $0x28] sm:$0x3] %vm4610, 0.0
  %5634 = vst.msk [vmem:[#allocation3 + $0x30] sm:$0xff] %vm4031, 0.0
  %5635 = vst.msk [vmem:[#allocation3 + $0x38] sm:$0x3] %vm4610, 0.0
  %5636 = vst.msk [vmem:[#allocation3 + $0x40] sm:$0xff] %vm4031, 0.0
  %5637 = vst.msk [vmem:[#allocation3 + $0x48] sm:$0x3] %vm4610, 0.0
  %5638 = vst.msk [vmem:[#allocation3 + $0x50] sm:$0xff] %vm4031, 0.0
  %5639 = vst.msk [vmem:[#allocation3 + $0x58] sm:$0x3] %vm4610, 0.0
  %5640 = vst.msk [vmem:[#allocation3 + $0x60] sm:$0xff] %vm4031, 0.0
  %5641 = vst.msk [vmem:[#allocation3 + $0x68] sm:$0x3] %vm4610, 0.0
  %5642 = vst.msk [vmem:[#allocation3 + $0x70] sm:$0xff] %vm4031, 0.0
  %5643 = vst.msk [vmem:[#allocation3 + $0x78] sm:$0x3] %vm4610, 0.0
  %5644 = vst.msk [vmem:[#allocation3 + $0x80] sm:$0xff] %vm4031, 0.0
  %5645 = vst.msk [vmem:[#allocation3 + $0x88] sm:$0x3] %vm4610, 0.0
  %5646 = vst.msk [vmem:[#allocation3 + $0x90] sm:$0xff] %vm4031, 0.0
  %5647 = vst.msk [vmem:[#allocation3 + $0x98] sm:$0x3] %vm4610, 0.0
  %5648 = vst.msk [vmem:[#allocation3 + $0xa0] sm:$0xff] %vm4031, 0.0
  %5649 = vst.msk [vmem:[#allocation3 + $0xa8] sm:$0x3] %vm4610, 0.0
  %5650 = vst.msk [vmem:[#allocation3 + $0xb0] sm:$0xff] %vm4031, 0.0
  %5651 = vst.msk [vmem:[#allocation3 + $0xb8] sm:$0x3] %vm4610, 0.0
  %5652 = vst.msk [vmem:[#allocation3 + $0xc0] sm:$0xff] %vm4031, 0.0
  %5653 = vst.msk [vmem:[#allocation3 + $0xc8] sm:$0x3] %vm4610, 0.0
  %5654 = vst.msk [vmem:[#allocation3 + $0xd0] sm:$0xff] %vm4031, 0.0
  %5655 = vst.msk [vmem:[#allocation3 + $0xd8] sm:$0x3] %vm4610, 0.0
  %5656 = vst.msk [vmem:[#allocation3 + $0xe0] sm:$0xff] %vm4031, 0.0
  %5657 = vst.msk [vmem:[#allocation3 + $0xe8] sm:$0x3] %vm4610, 0.0
  %5658 = vst.msk [vmem:[#allocation3 + $0xf0] sm:$0xff] %vm4031, 0.0
  %5659 = vst.msk [vmem:[#allocation3 + $0xf8] sm:$0x3] %vm4610, 0.0
  %5660 = vst.msk [vmem:[#allocation3 + $0x100] sm:$0xff] %vm4031, 0.0
  %5661 = vst.msk [vmem:[#allocation3 + $0x108] sm:$0x3] %vm4610, 0.0
  %5662 = vst.msk [vmem:[#allocation3 + $0x110] sm:$0xff] %vm4031, 0.0
  %5663 = vst.msk [vmem:[#allocation3 + $0x118] sm:$0x3] %vm4610, 0.0
  %5664 = vst.msk [vmem:[#allocation3 + $0x120] sm:$0xff] %vm4031, 0.0
  %5665 = vst.msk [vmem:[#allocation3 + $0x128] sm:$0x3] %vm4610, 0.0
  %5666 = vst.msk [vmem:[#allocation3 + $0x130] sm:$0xff] %vm4031, 0.0
  %5667 = vst.msk [vmem:[#allocation3 + $0x138] sm:$0x3] %vm4610, 0.0
  %s5668 = scalar_lea.vmem [#allocation3], 16
  %5669 = vst.msk [vmem:[%s5668 + $0x1] sm:$0xff] %vm4031, %v5612
  %5670 = vst.msk [vmem:[%s5668 + $0x11] sm:$0xff] %vm4031, %v5613
  %5671 = vst.msk [vmem:[%s5668 + $0x21] sm:$0xff] %vm4031, %v5614
  %5672 = vst.msk [vmem:[%s5668 + $0x31] sm:$0xff] %vm4031, %v5615
  %5673 = vst.msk [vmem:[%s5668 + $0x41] sm:$0xff] %vm4031, %v5616
  %5674 = vst.msk [vmem:[%s5668 + $0x51] sm:$0xff] %vm4031, %v5617
  %5675 = vst.msk [vmem:[%s5668 + $0x61] sm:$0xff] %vm4031, %v5618
  %5676 = vst.msk [vmem:[%s5668 + $0x71] sm:$0xff] %vm4031, %v5619
  %5677 = vst.msk [vmem:[%s5668 + $0xa1] sm:$0xff] %vm4031, %v5620
  %5678 = vst.msk [vmem:[%s5668 + $0xb1] sm:$0xff] %vm4031, %v5621
  %5679 = vst.msk [vmem:[%s5668 + $0xc1] sm:$0xff] %vm4031, %v5622
  %5680 = vst.msk [vmem:[%s5668 + $0xd1] sm:$0xff] %vm4031, %v5623
  %5681 = vst.msk [vmem:[%s5668 + $0xe1] sm:$0xff] %vm4031, %v5624
  %5682 = vst.msk [vmem:[%s5668 + $0xf1] sm:$0xff] %vm4031, %v5625
  %5683 = vst.msk [vmem:[%s5668 + $0x101] sm:$0xff] %vm4031, %v5626
  %5684 = vst.msk [vmem:[%s5668 + $0x111] sm:$0xff] %vm4031, %v5627
  %v5685 = vld [vmem:[#allocation3] sm:$0xff]
  %v5686 = vld [vmem:[#allocation3 + $0x10] sm:$0xff]
  %v5687 = vld [vmem:[#allocation3 + $0x20] sm:$0xff]
  %v5688 = vld [vmem:[#allocation3 + $0x30] sm:$0xff]
  %v5689 = vld [vmem:[#allocation3 + $0x40] sm:$0xff]
  %v5690 = vld [vmem:[#allocation3 + $0x50] sm:$0xff]
  %v5691 = vld [vmem:[#allocation3 + $0x60] sm:$0xff]
  %v5692 = vld [vmem:[#allocation3 + $0x70] sm:$0xff]
  %v5693 = vld [vmem:[#allocation3 + $0xa0] sm:$0xff]
  %v5694 = vld [vmem:[#allocation3 + $0xb0] sm:$0xff]
  %v5695 = vld [vmem:[#allocation3 + $0xc0] sm:$0xff]
  %v5696 = vld [vmem:[#allocation3 + $0xd0] sm:$0xff]
  %v5697 = vld [vmem:[#allocation3 + $0xe0] sm:$0xff]
  %v5698 = vld [vmem:[#allocation3 + $0xf0] sm:$0xff]
  %v5699 = vld [vmem:[#allocation3 + $0x100] sm:$0xff]
  %v5700 = vld [vmem:[#allocation3 + $0x110] sm:$0xff]
  %v5701 = vld [vmem:[#allocation3 + $0x1] sm:$0xff]
  %v5702 = vld [vmem:[#allocation3 + $0x11] sm:$0xff]
  %v5703 = vld [vmem:[#allocation3 + $0x21] sm:$0xff]
  %v5704 = vld [vmem:[#allocation3 + $0x31] sm:$0xff]
  %v5705 = vld [vmem:[#allocation3 + $0x41] sm:$0xff]
  %v5706 = vld [vmem:[#allocation3 + $0x51] sm:$0xff]
  %v5707 = vld [vmem:[#allocation3 + $0x61] sm:$0xff]
  %v5708 = vld [vmem:[#allocation3 + $0x71] sm:$0xff]
  %v5709 = vld [vmem:[#allocation3 + $0xa1] sm:$0xff]
  %v5710 = vld [vmem:[#allocation3 + $0xb1] sm:$0xff]
  %v5711 = vld [vmem:[#allocation3 + $0xc1] sm:$0xff]
  %v5712 = vld [vmem:[#allocation3 + $0xd1] sm:$0xff]
  %v5713 = vld [vmem:[#allocation3 + $0xe1] sm:$0xff]
  %v5714 = vld [vmem:[#allocation3 + $0xf1] sm:$0xff]
  %v5715 = vld [vmem:[#allocation3 + $0x101] sm:$0xff]
  %v5716 = vld [vmem:[#allocation3 + $0x111] sm:$0xff]
  %v5717 = vld [vmem:[#allocation3 + $0x2] sm:$0xff]
  %v5718 = vld [vmem:[#allocation3 + $0x12] sm:$0xff]
  %v5719 = vld [vmem:[#allocation3 + $0x22] sm:$0xff]
  %v5720 = vld [vmem:[#allocation3 + $0x32] sm:$0xff]
  %v5721 = vld [vmem:[#allocation3 + $0x42] sm:$0xff]
  %v5722 = vld [vmem:[#allocation3 + $0x52] sm:$0xff]
  %v5723 = vld [vmem:[#allocation3 + $0x62] sm:$0xff]
  %v5724 = vld [vmem:[#allocation3 + $0x72] sm:$0xff]
  %v5725 = vld [vmem:[#allocation3 + $0xa2] sm:$0xff]
  %v5726 = vld [vmem:[#allocation3 + $0xb2] sm:$0xff]
  %v5727 = vld [vmem:[#allocation3 + $0xc2] sm:$0xff]
  %v5728 = vld [vmem:[#allocation3 + $0xd2] sm:$0xff]
  %v5729 = vld [vmem:[#allocation3 + $0xe2] sm:$0xff]
  %v5730 = vld [vmem:[#allocation3 + $0xf2] sm:$0xff]
  %v5731 = vld [vmem:[#allocation3 + $0x102] sm:$0xff]
  %v5732 = vld [vmem:[#allocation3 + $0x112] sm:$0xff]
  %v5733 = vld [vmem:[%s5668] sm:$0xff]
  %v5734 = vld [vmem:[%s5668 + $0x10] sm:$0xff]
  %v5735 = vld [vmem:[%s5668 + $0x20] sm:$0xff]
  %v5736 = vld [vmem:[%s5668 + $0x30] sm:$0xff]
  %v5737 = vld [vmem:[%s5668 + $0x40] sm:$0xff]
  %v5738 = vld [vmem:[%s5668 + $0x50] sm:$0xff]
  %v5739 = vld [vmem:[%s5668 + $0x60] sm:$0xff]
  %v5740 = vld [vmem:[%s5668 + $0x70] sm:$0xff]
  %v5741 = vld [vmem:[%s5668 + $0xa0] sm:$0xff]
  %v5742 = vld [vmem:[%s5668 + $0xb0] sm:$0xff]
  %v5743 = vld [vmem:[%s5668 + $0xc0] sm:$0xff]
  %v5744 = vld [vmem:[%s5668 + $0xd0] sm:$0xff]
  %v5745 = vld [vmem:[%s5668 + $0xe0] sm:$0xff]
  %v5746 = vld [vmem:[%s5668 + $0xf0] sm:$0xff]
  %v5747 = vld [vmem:[%s5668 + $0x100] sm:$0xff]
  %v5748 = vld [vmem:[%s5668 + $0x110] sm:$0xff]
  %v5749 = vld [vmem:[%s5668 + $0x1] sm:$0xff]
  %v5750 = vld [vmem:[%s5668 + $0x11] sm:$0xff]
  %v5751 = vld [vmem:[%s5668 + $0x21] sm:$0xff]
  %v5752 = vld [vmem:[%s5668 + $0x31] sm:$0xff]
  %v5753 = vld [vmem:[%s5668 + $0x41] sm:$0xff]
  %v5754 = vld [vmem:[%s5668 + $0x51] sm:$0xff]
  %v5755 = vld [vmem:[%s5668 + $0x61] sm:$0xff]
  %v5756 = vld [vmem:[%s5668 + $0x71] sm:$0xff]
  %v5757 = vld [vmem:[%s5668 + $0xa1] sm:$0xff]
  %v5758 = vld [vmem:[%s5668 + $0xb1] sm:$0xff]
  %v5759 = vld [vmem:[%s5668 + $0xc1] sm:$0xff]
  %v5760 = vld [vmem:[%s5668 + $0xd1] sm:$0xff]
  %v5761 = vld [vmem:[%s5668 + $0xe1] sm:$0xff]
  %v5762 = vld [vmem:[%s5668 + $0xf1] sm:$0xff]
  %v5763 = vld [vmem:[%s5668 + $0x101] sm:$0xff]
  %v5764 = vld [vmem:[%s5668 + $0x111] sm:$0xff]
  %v5765 = vld [vmem:[%s5668 + $0x2] sm:$0xff]
  %v5766 = vld [vmem:[%s5668 + $0x12] sm:$0xff]
  %v5767 = vld [vmem:[%s5668 + $0x22] sm:$0xff]
  %v5768 = vld [vmem:[%s5668 + $0x32] sm:$0xff]
  %v5769 = vld [vmem:[%s5668 + $0x42] sm:$0xff]
  %v5770 = vld [vmem:[%s5668 + $0x52] sm:$0xff]
  %v5771 = vld [vmem:[%s5668 + $0x62] sm:$0xff]
  %v5772 = vld [vmem:[%s5668 + $0x72] sm:$0xff]
  %v5773 = vld [vmem:[%s5668 + $0xa2] sm:$0xff]
  %v5774 = vld [vmem:[%s5668 + $0xb2] sm:$0xff]
  %v5775 = vld [vmem:[%s5668 + $0xc2] sm:$0xff]
  %v5776 = vld [vmem:[%s5668 + $0xd2] sm:$0xff]
  %v5777 = vld [vmem:[%s5668 + $0xe2] sm:$0xff]
  %v5778 = vld [vmem:[%s5668 + $0xf2] sm:$0xff]
  %v5779 = vld [vmem:[%s5668 + $0x102] sm:$0xff]
  %v5780 = vld [vmem:[%s5668 + $0x112] sm:$0xff]
  %s5781 = scalar_lea.vmem [#allocation3], 32
  %v5782 = vld [vmem:[%s5781] sm:$0xff]
  %v5783 = vld [vmem:[%s5781 + $0x10] sm:$0xff]
  %v5784 = vld [vmem:[%s5781 + $0x20] sm:$0xff]
  %v5785 = vld [vmem:[%s5781 + $0x30] sm:$0xff]
  %v5786 = vld [vmem:[%s5781 + $0x40] sm:$0xff]
  %v5787 = vld [vmem:[%s5781 + $0x50] sm:$0xff]
  %v5788 = vld [vmem:[%s5781 + $0x60] sm:$0xff]
  %v5789 = vld [vmem:[%s5781 + $0x70] sm:$0xff]
  %v5790 = vld [vmem:[%s5781 + $0xa0] sm:$0xff]
  %v5791 = vld [vmem:[%s5781 + $0xb0] sm:$0xff]
  %v5792 = vld [vmem:[%s5781 + $0xc0] sm:$0xff]
  %v5793 = vld [vmem:[%s5781 + $0xd0] sm:$0xff]
  %v5794 = vld [vmem:[%s5781 + $0xe0] sm:$0xff]
  %v5795 = vld [vmem:[%s5781 + $0xf0] sm:$0xff]
  %v5796 = vld [vmem:[%s5781 + $0x100] sm:$0xff]
  %v5797 = vld [vmem:[%s5781 + $0x110] sm:$0xff]
  %v5798 = vld [vmem:[%s5781 + $0x1] sm:$0xff]
  %v5799 = vld [vmem:[%s5781 + $0x11] sm:$0xff]
  %v5800 = vld [vmem:[%s5781 + $0x21] sm:$0xff]
  %v5801 = vld [vmem:[%s5781 + $0x31] sm:$0xff]
  %v5802 = vld [vmem:[%s5781 + $0x41] sm:$0xff]
  %v5803 = vld [vmem:[%s5781 + $0x51] sm:$0xff]
  %v5804 = vld [vmem:[%s5781 + $0x61] sm:$0xff]
  %v5805 = vld [vmem:[%s5781 + $0x71] sm:$0xff]
  %v5806 = vld [vmem:[%s5781 + $0xa1] sm:$0xff]
  %v5807 = vld [vmem:[%s5781 + $0xb1] sm:$0xff]
  %v5808 = vld [vmem:[%s5781 + $0xc1] sm:$0xff]
  %v5809 = vld [vmem:[%s5781 + $0xd1] sm:$0xff]
  %v5810 = vld [vmem:[%s5781 + $0xe1] sm:$0xff]
  %v5811 = vld [vmem:[%s5781 + $0xf1] sm:$0xff]
  %v5812 = vld [vmem:[%s5781 + $0x101] sm:$0xff]
  %v5813 = vld [vmem:[%s5781 + $0x111] sm:$0xff]
  %v5814 = vld [vmem:[%s5781 + $0x2] sm:$0xff]
  %v5815 = vld [vmem:[%s5781 + $0x12] sm:$0xff]
  %v5816 = vld [vmem:[%s5781 + $0x22] sm:$0xff]
  %v5817 = vld [vmem:[%s5781 + $0x32] sm:$0xff]
  %v5818 = vld [vmem:[%s5781 + $0x42] sm:$0xff]
  %v5819 = vld [vmem:[%s5781 + $0x52] sm:$0xff]
  %v5820 = vld [vmem:[%s5781 + $0x62] sm:$0xff]
  %v5821 = vld [vmem:[%s5781 + $0x72] sm:$0xff]
  %v5822 = vld [vmem:[%s5781 + $0xa2] sm:$0xff]
  %v5823 = vld [vmem:[%s5781 + $0xb2] sm:$0xff]
  %v5824 = vld [vmem:[%s5781 + $0xc2] sm:$0xff]
  %v5825 = vld [vmem:[%s5781 + $0xd2] sm:$0xff]
  %v5826 = vld [vmem:[%s5781 + $0xe2] sm:$0xff]
  %v5827 = vld [vmem:[%s5781 + $0xf2] sm:$0xff]
  %v5828 = vld [vmem:[%s5781 + $0x102] sm:$0xff]
  %v5829 = vld [vmem:[%s5781 + $0x112] sm:$0xff]
  %5846 = vrot.lane.b32.xlu0 %v5701, 32
  %v5847 = vpop.permute.xlu0 %5846
  %5848 = vrot.lane.b32.xlu0 %v5702, 32
  %v5849 = vpop.permute.xlu0 %5848
  %5850 = vrot.lane.b32.xlu0 %v5703, 32
  %v5851 = vpop.permute.xlu0 %5850
  %5852 = vrot.lane.b32.xlu0 %v5704, 32
  %v5853 = vpop.permute.xlu0 %5852
  %5854 = vrot.lane.b32.xlu0 %v5705, 32
  %v5855 = vpop.permute.xlu0 %5854
  %5856 = vrot.lane.b32.xlu0 %v5706, 32
  %v5857 = vpop.permute.xlu0 %5856
  %5858 = vrot.lane.b32.xlu0 %v5707, 32
  %v5859 = vpop.permute.xlu0 %5858
  %5860 = vrot.lane.b32.xlu0 %v5708, 32
  %v5861 = vpop.permute.xlu0 %5860
  %5862 = vrot.lane.b32.xlu0 %v5709, 32
  %v5863 = vpop.permute.xlu0 %5862
  %5864 = vrot.lane.b32.xlu0 %v5710, 32
  %v5865 = vpop.permute.xlu0 %5864
  %5866 = vrot.lane.b32.xlu0 %v5711, 32
  %v5867 = vpop.permute.xlu0 %5866
  %5868 = vrot.lane.b32.xlu0 %v5712, 32
  %v5869 = vpop.permute.xlu0 %5868
  %5870 = vrot.lane.b32.xlu0 %v5713, 32
  %v5871 = vpop.permute.xlu0 %5870
  %5872 = vrot.lane.b32.xlu0 %v5714, 32
  %v5873 = vpop.permute.xlu0 %5872
  %5874 = vrot.lane.b32.xlu0 %v5715, 32
  %v5875 = vpop.permute.xlu0 %5874
  %5876 = vrot.lane.b32.xlu0 %v5716, 32
  %v5877 = vpop.permute.xlu0 %5876
  %5910 = vrot.lane.b32.xlu0 %v5717, 64
  %v5911 = vpop.permute.xlu0 %5910
  %5912 = vrot.lane.b32.xlu0 %v5718, 64
  %v5913 = vpop.permute.xlu0 %5912
  %5914 = vrot.lane.b32.xlu0 %v5719, 64
  %v5915 = vpop.permute.xlu0 %5914
  %5916 = vrot.lane.b32.xlu0 %v5720, 64
  %v5917 = vpop.permute.xlu0 %5916
  %5918 = vrot.lane.b32.xlu0 %v5721, 64
  %v5919 = vpop.permute.xlu0 %5918
  %5920 = vrot.lane.b32.xlu0 %v5722, 64
  %v5921 = vpop.permute.xlu0 %5920
  %5922 = vrot.lane.b32.xlu0 %v5723, 64
  %v5923 = vpop.permute.xlu0 %5922
  %5924 = vrot.lane.b32.xlu0 %v5724, 64
  %v5925 = vpop.permute.xlu0 %5924
  %5926 = vrot.lane.b32.xlu0 %v5725, 64
  %v5927 = vpop.permute.xlu0 %5926
  %5928 = vrot.lane.b32.xlu0 %v5726, 64
  %v5929 = vpop.permute.xlu0 %5928
  %5930 = vrot.lane.b32.xlu0 %v5727, 64
  %v5931 = vpop.permute.xlu0 %5930
  %5932 = vrot.lane.b32.xlu0 %v5728, 64
  %v5933 = vpop.permute.xlu0 %5932
  %5934 = vrot.lane.b32.xlu0 %v5729, 64
  %v5935 = vpop.permute.xlu0 %5934
  %5936 = vrot.lane.b32.xlu0 %v5730, 64
  %v5937 = vpop.permute.xlu0 %5936
  %5938 = vrot.lane.b32.xlu0 %v5731, 64
  %v5939 = vpop.permute.xlu0 %5938
  %5940 = vrot.lane.b32.xlu0 %v5732, 64
  %v5941 = vpop.permute.xlu0 %5940
  %5974 = vrot.lane.b32.xlu0 %v5733, 96
  %v5975 = vpop.permute.xlu0 %5974
  %5976 = vrot.lane.b32.xlu0 %v5734, 96
  %v5977 = vpop.permute.xlu0 %5976
  %5978 = vrot.lane.b32.xlu0 %v5735, 96
  %v5979 = vpop.permute.xlu0 %5978
  %5980 = vrot.lane.b32.xlu0 %v5736, 96
  %v5981 = vpop.permute.xlu0 %5980
  %5982 = vrot.lane.b32.xlu0 %v5737, 96
  %v5983 = vpop.permute.xlu0 %5982
  %5984 = vrot.lane.b32.xlu0 %v5738, 96
  %v5985 = vpop.permute.xlu0 %5984
  %5986 = vrot.lane.b32.xlu0 %v5739, 96
  %v5987 = vpop.permute.xlu0 %5986
  %5988 = vrot.lane.b32.xlu0 %v5740, 96
  %v5989 = vpop.permute.xlu0 %5988
  %5990 = vrot.lane.b32.xlu0 %v5741, 96
  %v5991 = vpop.permute.xlu0 %5990
  %5992 = vrot.lane.b32.xlu0 %v5742, 96
  %v5993 = vpop.permute.xlu0 %5992
  %5994 = vrot.lane.b32.xlu0 %v5743, 96
  %v5995 = vpop.permute.xlu0 %5994
  %5996 = vrot.lane.b32.xlu0 %v5744, 96
  %v5997 = vpop.permute.xlu0 %5996
  %5998 = vrot.lane.b32.xlu0 %v5745, 96
  %v5999 = vpop.permute.xlu0 %5998
  %6000 = vrot.lane.b32.xlu0 %v5746, 96
  %v6001 = vpop.permute.xlu0 %6000
  %6002 = vrot.lane.b32.xlu0 %v5747, 96
  %v6003 = vpop.permute.xlu0 %6002
  %6004 = vrot.lane.b32.xlu0 %v5748, 96
  %v6005 = vpop.permute.xlu0 %6004
  %6038 = vrot.lane.b32.xlu0 %v5765, 32
  %v6039 = vpop.permute.xlu0 %6038
  %6040 = vrot.lane.b32.xlu0 %v5766, 32
  %v6041 = vpop.permute.xlu0 %6040
  %6042 = vrot.lane.b32.xlu0 %v5767, 32
  %v6043 = vpop.permute.xlu0 %6042
  %6044 = vrot.lane.b32.xlu0 %v5768, 32
  %v6045 = vpop.permute.xlu0 %6044
  %6046 = vrot.lane.b32.xlu0 %v5769, 32
  %v6047 = vpop.permute.xlu0 %6046
  %6048 = vrot.lane.b32.xlu0 %v5770, 32
  %v6049 = vpop.permute.xlu0 %6048
  %6050 = vrot.lane.b32.xlu0 %v5771, 32
  %v6051 = vpop.permute.xlu0 %6050
  %6052 = vrot.lane.b32.xlu0 %v5772, 32
  %v6053 = vpop.permute.xlu0 %6052
  %6054 = vrot.lane.b32.xlu0 %v5773, 32
  %v6055 = vpop.permute.xlu0 %6054
  %6056 = vrot.lane.b32.xlu0 %v5774, 32
  %v6057 = vpop.permute.xlu0 %6056
  %6058 = vrot.lane.b32.xlu0 %v5775, 32
  %v6059 = vpop.permute.xlu0 %6058
  %6060 = vrot.lane.b32.xlu0 %v5776, 32
  %v6061 = vpop.permute.xlu0 %6060
  %6062 = vrot.lane.b32.xlu0 %v5777, 32
  %v6063 = vpop.permute.xlu0 %6062
  %6064 = vrot.lane.b32.xlu0 %v5778, 32
  %v6065 = vpop.permute.xlu0 %6064
  %6066 = vrot.lane.b32.xlu0 %v5779, 32
  %v6067 = vpop.permute.xlu0 %6066
  %6068 = vrot.lane.b32.xlu0 %v5780, 32
  %v6069 = vpop.permute.xlu0 %6068
  %6102 = vrot.lane.b32.xlu0 %v5782, 64
  %v6103 = vpop.permute.xlu0 %6102
  %6104 = vrot.lane.b32.xlu0 %v5783, 64
  %v6105 = vpop.permute.xlu0 %6104
  %6106 = vrot.lane.b32.xlu0 %v5784, 64
  %v6107 = vpop.permute.xlu0 %6106
  %6108 = vrot.lane.b32.xlu0 %v5785, 64
  %v6109 = vpop.permute.xlu0 %6108
  %6110 = vrot.lane.b32.xlu0 %v5786, 64
  %v6111 = vpop.permute.xlu0 %6110
  %6112 = vrot.lane.b32.xlu0 %v5787, 64
  %v6113 = vpop.permute.xlu0 %6112
  %6114 = vrot.lane.b32.xlu0 %v5788, 64
  %v6115 = vpop.permute.xlu0 %6114
  %6116 = vrot.lane.b32.xlu0 %v5789, 64
  %v6117 = vpop.permute.xlu0 %6116
  %6118 = vrot.lane.b32.xlu0 %v5790, 64
  %v6119 = vpop.permute.xlu0 %6118
  %6120 = vrot.lane.b32.xlu0 %v5791, 64
  %v6121 = vpop.permute.xlu0 %6120
  %6122 = vrot.lane.b32.xlu0 %v5792, 64
  %v6123 = vpop.permute.xlu0 %6122
  %6124 = vrot.lane.b32.xlu0 %v5793, 64
  %v6125 = vpop.permute.xlu0 %6124
  %6126 = vrot.lane.b32.xlu0 %v5794, 64
  %v6127 = vpop.permute.xlu0 %6126
  %6128 = vrot.lane.b32.xlu0 %v5795, 64
  %v6129 = vpop.permute.xlu0 %6128
  %6130 = vrot.lane.b32.xlu0 %v5796, 64
  %v6131 = vpop.permute.xlu0 %6130
  %6132 = vrot.lane.b32.xlu0 %v5797, 64
  %v6133 = vpop.permute.xlu0 %6132
  %6166 = vrot.lane.b32.xlu0 %v5798, 96
  %v6167 = vpop.permute.xlu0 %6166
  %6168 = vrot.lane.b32.xlu0 %v5799, 96
  %v6169 = vpop.permute.xlu0 %6168
  %6170 = vrot.lane.b32.xlu0 %v5800, 96
  %v6171 = vpop.permute.xlu0 %6170
  %6172 = vrot.lane.b32.xlu0 %v5801, 96
  %v6173 = vpop.permute.xlu0 %6172
  %6174 = vrot.lane.b32.xlu0 %v5802, 96
  %v6175 = vpop.permute.xlu0 %6174
  %6176 = vrot.lane.b32.xlu0 %v5803, 96
  %v6177 = vpop.permute.xlu0 %6176
  %6178 = vrot.lane.b32.xlu0 %v5804, 96
  %v6179 = vpop.permute.xlu0 %6178
  %6180 = vrot.lane.b32.xlu0 %v5805, 96
  %v6181 = vpop.permute.xlu0 %6180
  %6182 = vrot.lane.b32.xlu0 %v5806, 96
  %v6183 = vpop.permute.xlu0 %6182
  %6184 = vrot.lane.b32.xlu0 %v5807, 96
  %v6185 = vpop.permute.xlu0 %6184
  %6186 = vrot.lane.b32.xlu0 %v5808, 96
  %v6187 = vpop.permute.xlu0 %6186
  %6188 = vrot.lane.b32.xlu0 %v5809, 96
  %v6189 = vpop.permute.xlu0 %6188
  %6190 = vrot.lane.b32.xlu0 %v5810, 96
  %v6191 = vpop.permute.xlu0 %6190
  %6192 = vrot.lane.b32.xlu0 %v5811, 96
  %v6193 = vpop.permute.xlu0 %6192
  %6194 = vrot.lane.b32.xlu0 %v5812, 96
  %v6195 = vpop.permute.xlu0 %6194
  %6196 = vrot.lane.b32.xlu0 %v5813, 96
  %v6197 = vpop.permute.xlu0 %6196
  %v6214 = vsel %vm4031, %v5685, %v5847
  %v6215 = vsel %vm4031, %v5686, %v5849
  %v6216 = vsel %vm4031, %v5687, %v5851
  %v6217 = vsel %vm4031, %v5688, %v5853
  %v6218 = vsel %vm4031, %v5689, %v5855
  %v6219 = vsel %vm4031, %v5690, %v5857
  %v6220 = vsel %vm4031, %v5691, %v5859
  %v6221 = vsel %vm4031, %v5692, %v5861
  %v6222 = vsel %vm4031, %v5693, %v5863
  %v6223 = vsel %vm4031, %v5694, %v5865
  %v6224 = vsel %vm4031, %v5695, %v5867
  %v6225 = vsel %vm4031, %v5696, %v5869
  %v6226 = vsel %vm4031, %v5697, %v5871
  %v6227 = vsel %vm4031, %v5698, %v5873
  %v6228 = vsel %vm4031, %v5699, %v5875
  %v6229 = vsel %vm4031, %v5700, %v5877
  %vm6230 = vcmask 523264
  %v6231 = vsel %vm6230, %v6214, %v5911
  %v6232 = vsel %vm6230, %v6215, %v5913
  %v6233 = vsel %vm6230, %v6216, %v5915
  %v6234 = vsel %vm6230, %v6217, %v5917
  %v6235 = vsel %vm6230, %v6218, %v5919
  %v6236 = vsel %vm6230, %v6219, %v5921
  %v6237 = vsel %vm6230, %v6220, %v5923
  %v6238 = vsel %vm6230, %v6221, %v5925
  %v6239 = vsel %vm6230, %v6222, %v5927
  %v6240 = vsel %vm6230, %v6223, %v5929
  %v6241 = vsel %vm6230, %v6224, %v5931
  %v6242 = vsel %vm6230, %v6225, %v5933
  %v6243 = vsel %vm6230, %v6226, %v5935
  %v6244 = vsel %vm6230, %v6227, %v5937
  %v6245 = vsel %vm6230, %v6228, %v5939
  %v6246 = vsel %vm6230, %v6229, %v5941
  %vm6247 = vcmask 785408
  %v6248 = vsel %vm6247, %v6231, %v5975
  %v6249 = vsel %vm6247, %v6232, %v5977
  %v6250 = vsel %vm6247, %v6233, %v5979
  %v6251 = vsel %vm6247, %v6234, %v5981
  %v6252 = vsel %vm6247, %v6235, %v5983
  %v6253 = vsel %vm6247, %v6236, %v5985
  %v6254 = vsel %vm6247, %v6237, %v5987
  %v6255 = vsel %vm6247, %v6238, %v5989
  %v6256 = vsel %vm6247, %v6239, %v5991
  %v6257 = vsel %vm6247, %v6240, %v5993
  %v6258 = vsel %vm6247, %v6241, %v5995
  %v6259 = vsel %vm6247, %v6242, %v5997
  %v6260 = vsel %vm6247, %v6243, %v5999
  %v6261 = vsel %vm6247, %v6244, %v6001
  %v6262 = vsel %vm6247, %v6245, %v6003
  %v6263 = vsel %vm6247, %v6246, %v6005
  %v6264 = vsel %vm4031, %v5749, %v6039
  %v6265 = vsel %vm4031, %v5750, %v6041
  %v6266 = vsel %vm4031, %v5751, %v6043
  %v6267 = vsel %vm4031, %v5752, %v6045
  %v6268 = vsel %vm4031, %v5753, %v6047
  %v6269 = vsel %vm4031, %v5754, %v6049
  %v6270 = vsel %vm4031, %v5755, %v6051
  %v6271 = vsel %vm4031, %v5756, %v6053
  %v6272 = vsel %vm4031, %v5757, %v6055
  %v6273 = vsel %vm4031, %v5758, %v6057
  %v6274 = vsel %vm4031, %v5759, %v6059
  %v6275 = vsel %vm4031, %v5760, %v6061
  %v6276 = vsel %vm4031, %v5761, %v6063
  %v6277 = vsel %vm4031, %v5762, %v6065
  %v6278 = vsel %vm4031, %v5763, %v6067
  %v6279 = vsel %vm4031, %v5764, %v6069
  %v6280 = vsel %vm6230, %v6264, %v6103
  %v6281 = vsel %vm6230, %v6265, %v6105
  %v6282 = vsel %vm6230, %v6266, %v6107
  %v6283 = vsel %vm6230, %v6267, %v6109
  %v6284 = vsel %vm6230, %v6268, %v6111
  %v6285 = vsel %vm6230, %v6269, %v6113
  %v6286 = vsel %vm6230, %v6270, %v6115
  %v6287 = vsel %vm6230, %v6271, %v6117
  %v6288 = vsel %vm6230, %v6272, %v6119
  %v6289 = vsel %vm6230, %v6273, %v6121
  %v6290 = vsel %vm6230, %v6274, %v6123
  %v6291 = vsel %vm6230, %v6275, %v6125
  %v6292 = vsel %vm6230, %v6276, %v6127
  %v6293 = vsel %vm6230, %v6277, %v6129
  %v6294 = vsel %vm6230, %v6278, %v6131
  %v6295 = vsel %vm6230, %v6279, %v6133
  %v6296 = vsel %vm6247, %v6280, %v6167
  %v6297 = vsel %vm6247, %v6281, %v6169
  %v6298 = vsel %vm6247, %v6282, %v6171
  %v6299 = vsel %vm6247, %v6283, %v6173
  %v6300 = vsel %vm6247, %v6284, %v6175
  %v6301 = vsel %vm6247, %v6285, %v6177
  %v6302 = vsel %vm6247, %v6286, %v6179
  %v6303 = vsel %vm6247, %v6287, %v6181
  %v6304 = vsel %vm6247, %v6288, %v6183
  %v6305 = vsel %vm6247, %v6289, %v6185
  %v6306 = vsel %vm6247, %v6290, %v6187
  %v6307 = vsel %vm6247, %v6291, %v6189
  %v6308 = vsel %vm6247, %v6292, %v6191
  %v6309 = vsel %vm6247, %v6293, %v6193
  %v6310 = vsel %vm6247, %v6294, %v6195
  %v6311 = vsel %vm6247, %v6295, %v6197
  %v6312 = vld [vmem:[%s4] sm:$0xff]
  %v6313 = vld [vmem:[%s4 + $0x8] sm:$0xff]
  %v6314 = vld [vmem:[%s4 + $0x10] sm:$0xff]
  %v6315 = vld [vmem:[%s4 + $0x18] sm:$0xff]
  %v6316 = vld [vmem:[%s4 + $0x20] sm:$0xff]
  %v6317 = vld [vmem:[%s4 + $0x28] sm:$0xff]
  %v6318 = vld [vmem:[%s4 + $0x30] sm:$0xff]
  %v6319 = vld [vmem:[%s4 + $0x38] sm:$0xff]
  %v6320 = vld [vmem:[%s4 + $0x40] sm:$0xff]
  %v6321 = vld [vmem:[%s4 + $0x48] sm:$0xff]
  %v6322 = vld [vmem:[%s4 + $0x50] sm:$0xff]
  %v6323 = vld [vmem:[%s4 + $0x58] sm:$0xff]
  %v6324 = vld [vmem:[%s4 + $0x60] sm:$0xff]
  %v6325 = vld [vmem:[%s4 + $0x68] sm:$0xff]
  %v6326 = vld [vmem:[%s4 + $0x70] sm:$0xff]
  %v6327 = vld [vmem:[%s4 + $0x78] sm:$0xff]
  %v6328 = vld [vmem:[%s4 + $0x80] sm:$0xff]
  %v6329 = vld [vmem:[%s4 + $0x88] sm:$0xff]
  %v6330 = vld [vmem:[%s4 + $0x90] sm:$0xff]
  %v6331 = vld [vmem:[%s4 + $0x98] sm:$0xff]
  %v6332 = vld [vmem:[%s4 + $0xa0] sm:$0xff]
  %v6333 = vld [vmem:[%s4 + $0xa8] sm:$0xff]
  %v6334 = vld [vmem:[%s4 + $0xb0] sm:$0xff]
  %v6335 = vld [vmem:[%s4 + $0xb8] sm:$0xff]
  %v6336 = vld [vmem:[%s4 + $0xc0] sm:$0xff]
  %v6337 = vld [vmem:[%s4 + $0xc8] sm:$0xff]
  %v6338 = vld [vmem:[%s4 + $0xd0] sm:$0xff]
  %v6339 = vld [vmem:[%s4 + $0xd8] sm:$0xff]
  %v6340 = vld [vmem:[%s4 + $0xe0] sm:$0xff]
  %v6341 = vld [vmem:[%s4 + $0xe8] sm:$0xff]
  %v6342 = vld [vmem:[%s4 + $0xf0] sm:$0xff]
  %v6343 = vld [vmem:[%s4 + $0xf8] sm:$0xff]
  %v6344 = vld [vmem:[%s4 + $0x100] sm:$0xff]
  %v6345 = vld [vmem:[%s4 + $0x108] sm:$0xff]
  %v6346 = vld [vmem:[%s4 + $0x110] sm:$0xff]
  %v6347 = vld [vmem:[%s4 + $0x118] sm:$0xff]
  %v6349 = vsel %vm4031, %v5814, 0
  %v6352 = vsel %vm4031, %v5815, 0
  %v6355 = vsel %vm4031, %v5816, 0
  %v6358 = vsel %vm4031, %v5817, 0
  %v6361 = vsel %vm4031, %v5818, 0
  %v6364 = vsel %vm4031, %v5819, 0
  %v6367 = vsel %vm4031, %v5820, 0
  %v6370 = vsel %vm4031, %v5821, 0
  %v6373 = vsel %vm4031, %v5822, 0
  %v6376 = vsel %vm4031, %v5823, 0
  %v6379 = vsel %vm4031, %v5824, 0
  %v6382 = vsel %vm4031, %v5825, 0
  %v6385 = vsel %vm4031, %v5826, 0
  %v6388 = vsel %vm4031, %v5827, 0
  %v6391 = vsel %vm4031, %v5828, 0
  %v6394 = vsel %vm4031, %v5829, 0
  %6396 = vmatprep.subr.mxu0 0.0
  %6397 = vmatpush1.msra.mxu0 %v6312
  %6398 = vmatprep.subr.mxu0 0.0
  %6399 = vmatpush1.msra.mxu0 %v6313
  %6400 = vmatprep.subr.mxu0 0.0
  %6401 = vmatpush1.msra.mxu0 %v6314
  %6402 = vmatprep.subr.mxu0 0.0
  %6403 = vmatpush1.msra.mxu0 %v6315
  %6404 = vmatprep.subr.mxu0 0.0
  %6405 = vmatpush1.msra.mxu0 %v6316
  %6406 = vmatprep.subr.mxu0 0.0
  %6407 = vmatpush1.msra.mxu0 %v6317
  %6408 = vmatprep.subr.mxu0 0.0
  %6409 = vmatpush1.msra.mxu0 %v6318
  %6410 = vmatprep.subr.mxu0 0.0
  %6411 = vmatpush1.msra.mxu0 %v6319
  %6412 = vmatprep.subr.mxu0 0.0
  %6413 = vmatpush1.msra.mxu0 %v6320
  %6414 = vmatprep.subr.mxu0 0.0
  %6415 = vmatpush1.msra.mxu0 %v6321
  %6416 = vmatprep.subr.mxu0 0.0
  %6417 = vmatpush1.msra.mxu0 %v6322
  %6418 = vmatprep.subr.mxu0 0.0
  %6419 = vmatpush1.msra.mxu0 %v6323
  %6420 = vmatprep.subr.mxu0 0.0
  %6421 = vmatpush1.msra.mxu0 %v6324
  %6422 = vmatprep.subr.mxu0 0.0
  %6423 = vmatpush1.msra.mxu0 %v6325
  %6424 = vmatprep.subr.mxu0 0.0
  %6425 = vmatpush1.msra.mxu0 %v6326
  %6426 = vmatprep.subr.mxu0 0.0
  %6427 = vmatpush1.msra.mxu0 %v6327
  %6428 = vmatprep.subr.mxu0 0.0
  %6429 = vmatpush1.msra.mxu0 %v6328
  %6430 = vmatprep.subr.mxu0 0.0
  %6431 = vmatpush1.msra.mxu0 %v6329
  %6432 = vmatprep.subr.mxu0 0.0
  %6433 = vmatpush1.msra.mxu0 %v6330
  %6434 = vmatprep.subr.mxu0 0.0
  %6435 = vmatpush1.msra.mxu0 %v6331
  %6436 = vmatprep.subr.mxu0 0.0
  %6437 = vmatpush1.msra.mxu0 %v6332
  %6438 = vmatprep.subr.mxu0 0.0
  %6439 = vmatpush1.msra.mxu0 %v6333
  %6440 = vmatprep.subr.mxu0 0.0
  %6441 = vmatpush1.msra.mxu0 %v6334
  %6442 = vmatprep.subr.mxu0 0.0
  %6443 = vmatpush1.msra.mxu0 %v6335
  %6444 = vmatprep.subr.mxu0 0.0
  %6445 = vmatpush1.msra.mxu0 %v6336
  %6446 = vmatprep.subr.mxu0 0.0
  %6447 = vmatpush1.msra.mxu0 %v6337
  %6448 = vmatprep.subr.mxu0 0.0
  %6449 = vmatpush1.msra.mxu0 %v6338
  %6450 = vmatprep.subr.mxu0 0.0
  %6451 = vmatpush1.msra.mxu0 %v6339
  %6452 = vmatprep.subr.mxu0 0.0
  %6453 = vmatpush1.msra.mxu0 %v6340
  %6454 = vmatprep.subr.mxu0 0.0
  %6455 = vmatpush1.msra.mxu0 %v6341
  %6456 = vmatprep.subr.mxu0 0.0
  %6457 = vmatpush1.msra.mxu0 %v6342
  %6458 = vmatprep.subr.mxu0 0.0
  %6459 = vmatpush1.msra.mxu0 %v6343
  %6460 = vmatprep.mubr.f32.mxu0 %v6296
  %6461 = vmatmul.mubr.f32.gmra.mrb[0].mxu0 %v6248
  %v6462 = vpop.f32.mrb[0].mxu0
  %v6463 = vadd.f32 0.0, %v6462
  %v6464 = vpop.f32.mrb[0].mxu0
  %6465 = vmatprep.mubr.f32.mxu0 %v6297
  %6466 = vmatmul.mubr.f32.gmra.mrb[0].mxu0 %v6249
  %v6467 = vpop.f32.mrb[0].mxu0
  %v6468 = vadd.f32 0.0, %v6467
  %v6469 = vpop.f32.mrb[0].mxu0
  %6470 = vmatprep.mubr.f32.mxu0 %v6298
  %6471 = vmatmul.mubr.f32.gmra.mrb[0].mxu0 %v6250
  %v6472 = vpop.f32.mrb[0].mxu0
  %v6473 = vadd.f32 0.0, %v6472
  %v6474 = vpop.f32.mrb[0].mxu0
  %6475 = vmatprep.mubr.f32.mxu0 %v6299
  %6476 = vmatmul.mubr.f32.gmra.mrb[0].mxu0 %v6251
  %v6477 = vpop.f32.mrb[0].mxu0
  %v6478 = vadd.f32 0.0, %v6477
  %v6479 = vpop.f32.mrb[0].mxu0
  %6480 = vmatprep.mubr.f32.mxu0 %v6300
  %6481 = vmatmul.mubr.f32.gmra.mrb[0].mxu0 %v6252
  %v6482 = vpop.f32.mrb[0].mxu0
  %v6483 = vadd.f32 0.0, %v6482
  %v6484 = vpop.f32.mrb[0].mxu0
  %6485 = vmatprep.mubr.f32.mxu0 %v6301
  %6486 = vmatmul.mubr.f32.gmra.mrb[0].mxu0 %v6253
  %v6487 = vpop.f32.mrb[0].mxu0
  %v6488 = vadd.f32 0.0, %v6487
  %v6489 = vpop.f32.mrb[0].mxu0
  %6490 = vmatprep.mubr.f32.mxu0 %v6302
  %6491 = vmatmul.mubr.f32.gmra.mrb[0].mxu0 %v6254
  %v6492 = vpop.f32.mrb[0].mxu0
  %v6493 = vadd.f32 0.0, %v6492
  %v6494 = vpop.f32.mrb[0].mxu0
  %6495 = vmatprep.mubr.f32.mxu0 %v6303
  %6496 = vmatmul.mubr.f32.gmra.mrb[0].mxu0 %v6255
  %v6497 = vpop.f32.mrb[0].mxu0
  %v6498 = vadd.f32 0.0, %v6497
  %v6499 = vpop.f32.mrb[0].mxu0
  %6500 = vmatprep.mubr.f32.mxu0 %v6304
  %6501 = vmatmul.mubr.f32.gmra.mrb[0].mxu0 %v6256
  %v6502 = vpop.f32.mrb[0].mxu0
  %v6503 = vadd.f32 0.0, %v6502
  %v6504 = vpop.f32.mrb[0].mxu0
  %6505 = vmatprep.mubr.f32.mxu0 %v6305
  %6506 = vmatmul.mubr.f32.gmra.mrb[0].mxu0 %v6257
  %v6507 = vpop.f32.mrb[0].mxu0
  %v6508 = vadd.f32 0.0, %v6507
  %v6509 = vpop.f32.mrb[0].mxu0
  %6510 = vmatprep.mubr.f32.mxu0 %v6306
  %6511 = vmatmul.mubr.f32.gmra.mrb[0].mxu0 %v6258
  %v6512 = vpop.f32.mrb[0].mxu0
  %v6513 = vadd.f32 0.0, %v6512
  %v6514 = vpop.f32.mrb[0].mxu0
  %6515 = vmatprep.mubr.f32.mxu0 %v6307
  %6516 = vmatmul.mubr.f32.gmra.mrb[0].mxu0 %v6259
  %v6517 = vpop.f32.mrb[0].mxu0
  %v6518 = vadd.f32 0.0, %v6517
  %v6519 = vpop.f32.mrb[0].mxu0
  %6520 = vmatprep.mubr.f32.mxu0 %v6308
  %6521 = vmatmul.mubr.f32.gmra.mrb[0].mxu0 %v6260
  %v6522 = vpop.f32.mrb[0].mxu0
  %v6523 = vadd.f32 0.0, %v6522
  %v6524 = vpop.f32.mrb[0].mxu0
  %6525 = vmatprep.mubr.f32.mxu0 %v6309
  %6526 = vmatmul.mubr.f32.gmra.mrb[0].mxu0 %v6261
  %v6527 = vpop.f32.mrb[0].mxu0
  %v6528 = vadd.f32 0.0, %v6527
  %v6529 = vpop.f32.mrb[0].mxu0
  %6530 = vmatprep.mubr.f32.mxu0 %v6310
  %6531 = vmatmul.mubr.f32.gmra.mrb[0].mxu0 %v6262
  %v6532 = vpop.f32.mrb[0].mxu0
  %v6533 = vadd.f32 0.0, %v6532
  %v6534 = vpop.f32.mrb[0].mxu0
  %6535 = vmatprep.mubr.f32.mxu0 %v6311
  %6536 = vmatmul.mubr.f32.gmra.mrb[0].mxu0 %v6263
  %v6537 = vpop.f32.mrb[0].mxu0
  %v6538 = vadd.f32 0.0, %v6537
  %v6539 = vpop.f32.mrb[0].mxu0
  %6540 = vdwg.mxu0
  %6541 = vmatprep.subr.mxu0 0.0
  %6542 = vmatpush1.msra.mxu0 %v6344
  %6543 = vmatprep.subr.mxu0 0.0
  %6544 = vmatpush1.msra.mxu0 %v6345
  %6545 = vmatprep.subr.mxu0 0.0
  %6546 = vmatpush1.msra.mxu0 %v6346
  %6547 = vmatprep.subr.mxu0 0.0
  %6548 = vmatpush1.msra.mxu0 %v6347
  %6549 = vmatprep.subr.mxu0 0.0
  %6550 = vmatpush1.msra.mxu0 0.0
  %6551 = vmatprep.subr.mxu0 0.0
  %6552 = vmatpush1.msra.mxu0 0.0
  %6553 = vmatprep.subr.mxu0 0.0
  %6554 = vmatpush1.msra.mxu0 0.0
  %6555 = vmatprep.subr.mxu0 0.0
  %6556 = vmatpush1.msra.mxu0 0.0
  %6557 = vmatprep.subr.mxu0 0.0
  %6558 = vmatpush1.msra.mxu0 0.0
  %6559 = vmatprep.subr.mxu0 0.0
  %6560 = vmatpush1.msra.mxu0 0.0
  %6561 = vmatprep.subr.mxu0 0.0
  %6562 = vmatpush1.msra.mxu0 0.0
  %6563 = vmatprep.subr.mxu0 0.0
  %6564 = vmatpush1.msra.mxu0 0.0
  %6565 = vmatprep.subr.mxu0 0.0
  %6566 = vmatpush1.msra.mxu0 0.0
  %6567 = vmatprep.subr.mxu0 0.0
  %6568 = vmatpush1.msra.mxu0 0.0
  %6569 = vmatprep.subr.mxu0 0.0
  %6570 = vmatpush1.msra.mxu0 0.0
  %6571 = vmatprep.subr.mxu0 0.0
  %6572 = vmatpush1.msra.mxu0 0.0
  %6573 = vmatprep.subr.mxu0 0.0
  %6574 = vmatpush1.msra.mxu0 0.0
  %6575 = vmatprep.subr.mxu0 0.0
  %6576 = vmatpush1.msra.mxu0 0.0
  %6577 = vmatprep.subr.mxu0 0.0
  %6578 = vmatpush1.msra.mxu0 0.0
  %6579 = vmatprep.subr.mxu0 0.0
  %6580 = vmatpush1.msra.mxu0 0.0
  %6581 = vmatprep.subr.mxu0 0.0
  %6582 = vmatpush1.msra.mxu0 0.0
  %6583 = vmatprep.subr.mxu0 0.0
  %6584 = vmatpush1.msra.mxu0 0.0
  %6585 = vmatprep.subr.mxu0 0.0
  %6586 = vmatpush1.msra.mxu0 0.0
  %6587 = vmatprep.subr.mxu0 0.0
  %6588 = vmatpush1.msra.mxu0 0.0
  %6589 = vmatprep.subr.mxu0 0.0
  %6590 = vmatpush1.msra.mxu0 0.0
  %6591 = vmatprep.subr.mxu0 0.0
  %6592 = vmatpush1.msra.mxu0 0.0
  %6593 = vmatprep.subr.mxu0 0.0
  %6594 = vmatpush1.msra.mxu0 0.0
  %6595 = vmatprep.subr.mxu0 0.0
  %6596 = vmatpush1.msra.mxu0 0.0
  %6597 = vmatprep.subr.mxu0 0.0
  %6598 = vmatpush1.msra.mxu0 0.0
  %6599 = vmatprep.subr.mxu0 0.0
  %6600 = vmatpush1.msra.mxu0 0.0
  %6601 = vmatprep.subr.mxu0 0.0
  %6602 = vmatpush1.msra.mxu0 0.0
  %6603 = vmatprep.subr.mxu0 0.0
  %6604 = vmatpush1.msra.mxu0 0.0
  %6605 = vmatprep.mubr.f32.mxu0 0.0
  %6606 = vmatmul.mubr.f32.gmra.mrb[0].mxu0 %v6349
  %v6607 = vpop.f32.mrb[0].mxu0
  %v6608 = vadd.f32 %v6463, %v6607
  %v6609 = vpop.f32.mrb[0].mxu0
  %6610 = vmatprep.mubr.f32.mxu0 0.0
  %6611 = vmatmul.mubr.f32.gmra.mrb[0].mxu0 %v6352
  %v6612 = vpop.f32.mrb[0].mxu0
  %v6613 = vadd.f32 %v6468, %v6612
  %v6614 = vpop.f32.mrb[0].mxu0
  %6615 = vmatprep.mubr.f32.mxu0 0.0
  %6616 = vmatmul.mubr.f32.gmra.mrb[0].mxu0 %v6355
  %v6617 = vpop.f32.mrb[0].mxu0
  %v6618 = vadd.f32 %v6473, %v6617
  %v6619 = vpop.f32.mrb[0].mxu0
  %6620 = vmatprep.mubr.f32.mxu0 0.0
  %6621 = vmatmul.mubr.f32.gmra.mrb[0].mxu0 %v6358
  %v6622 = vpop.f32.mrb[0].mxu0
  %v6623 = vadd.f32 %v6478, %v6622
  %v6624 = vpop.f32.mrb[0].mxu0
  %6625 = vmatprep.mubr.f32.mxu0 0.0
  %6626 = vmatmul.mubr.f32.gmra.mrb[0].mxu0 %v6361
  %v6627 = vpop.f32.mrb[0].mxu0
  %v6628 = vadd.f32 %v6483, %v6627
  %v6629 = vpop.f32.mrb[0].mxu0
  %6630 = vmatprep.mubr.f32.mxu0 0.0
  %6631 = vmatmul.mubr.f32.gmra.mrb[0].mxu0 %v6364
  %v6632 = vpop.f32.mrb[0].mxu0
  %v6633 = vadd.f32 %v6488, %v6632
  %v6634 = vpop.f32.mrb[0].mxu0
  %6635 = vmatprep.mubr.f32.mxu0 0.0
  %6636 = vmatmul.mubr.f32.gmra.mrb[0].mxu0 %v6367
  %v6637 = vpop.f32.mrb[0].mxu0
  %v6638 = vadd.f32 %v6493, %v6637
  %v6639 = vpop.f32.mrb[0].mxu0
  %6640 = vmatprep.mubr.f32.mxu0 0.0
  %6641 = vmatmul.mubr.f32.gmra.mrb[0].mxu0 %v6370
  %v6642 = vpop.f32.mrb[0].mxu0
  %v6643 = vadd.f32 %v6498, %v6642
  %v6644 = vpop.f32.mrb[0].mxu0
  %6645 = vmatprep.mubr.f32.mxu0 0.0
  %6646 = vmatmul.mubr.f32.gmra.mrb[0].mxu0 %v6373
  %v6647 = vpop.f32.mrb[0].mxu0
  %v6648 = vadd.f32 %v6503, %v6647
  %v6649 = vpop.f32.mrb[0].mxu0
  %6650 = vmatprep.mubr.f32.mxu0 0.0
  %6651 = vmatmul.mubr.f32.gmra.mrb[0].mxu0 %v6376
  %v6652 = vpop.f32.mrb[0].mxu0
  %v6653 = vadd.f32 %v6508, %v6652
  %v6654 = vpop.f32.mrb[0].mxu0
  %6655 = vmatprep.mubr.f32.mxu0 0.0
  %6656 = vmatmul.mubr.f32.gmra.mrb[0].mxu0 %v6379
  %v6657 = vpop.f32.mrb[0].mxu0
  %v6658 = vadd.f32 %v6513, %v6657
  %v6659 = vpop.f32.mrb[0].mxu0
  %6660 = vmatprep.mubr.f32.mxu0 0.0
  %6661 = vmatmul.mubr.f32.gmra.mrb[0].mxu0 %v6382
  %v6662 = vpop.f32.mrb[0].mxu0
  %v6663 = vadd.f32 %v6518, %v6662
  %v6664 = vpop.f32.mrb[0].mxu0
  %6665 = vmatprep.mubr.f32.mxu0 0.0
  %6666 = vmatmul.mubr.f32.gmra.mrb[0].mxu0 %v6385
  %v6667 = vpop.f32.mrb[0].mxu0
  %v6668 = vadd.f32 %v6523, %v6667
  %v6669 = vpop.f32.mrb[0].mxu0
  %6670 = vmatprep.mubr.f32.mxu0 0.0
  %6671 = vmatmul.mubr.f32.gmra.mrb[0].mxu0 %v6388
  %v6672 = vpop.f32.mrb[0].mxu0
  %v6673 = vadd.f32 %v6528, %v6672
  %v6674 = vpop.f32.mrb[0].mxu0
  %6675 = vmatprep.mubr.f32.mxu0 0.0
  %6676 = vmatmul.mubr.f32.gmra.mrb[0].mxu0 %v6391
  %v6677 = vpop.f32.mrb[0].mxu0
  %v6678 = vadd.f32 %v6533, %v6677
  %v6679 = vpop.f32.mrb[0].mxu0
  %6680 = vmatprep.mubr.f32.mxu0 0.0
  %6681 = vmatmul.mubr.f32.gmra.mrb[0].mxu0 %v6394
  %v6682 = vpop.f32.mrb[0].mxu0
  %v6683 = vadd.f32 %v6538, %v6682
  %v6684 = vpop.f32.mrb[0].mxu0
  %6685 = vdwg.mxu0
  %v6686 = vsel %vm6230, %v6608, 0.0
  %v6687 = vsel %vm6230, %v6613, 0.0
  %v6688 = vadd.f32 %v6686, %v6687
  %v6689 = vsel %vm6230, %v6618, 0.0
  %v6690 = vadd.f32 %v6688, %v6689
  %v6691 = vsel %vm6230, %v6623, 0.0
  %v6692 = vadd.f32 %v6690, %v6691
  %v6693 = vsel %vm6230, %v6628, 0.0
  %v6694 = vadd.f32 %v6692, %v6693
  %v6695 = vsel %vm6230, %v6633, 0.0
  %v6696 = vadd.f32 %v6694, %v6695
  %v6697 = vsel %vm6230, %v6638, 0.0
  %v6698 = vadd.f32 %v6696, %v6697
  %v6699 = vsel %vm6230, %v6643, 0.0
  %v6700 = vadd.f32 %v6698, %v6699
  %v6701 = vsel %vm6230, %v6648, 0.0
  %v6702 = vadd.f32 %v6700, %v6701
  %v6703 = vsel %vm6230, %v6653, 0.0
  %v6704 = vadd.f32 %v6702, %v6703
  %v6705 = vsel %vm6230, %v6658, 0.0
  %v6706 = vadd.f32 %v6704, %v6705
  %v6707 = vsel %vm6230, %v6663, 0.0
  %v6708 = vadd.f32 %v6706, %v6707
  %v6709 = vsel %vm6230, %v6668, 0.0
  %v6710 = vadd.f32 %v6708, %v6709
  %v6711 = vsel %vm6230, %v6673, 0.0
  %v6712 = vadd.f32 %v6710, %v6711
  %v6713 = vsel %vm6230, %v6678, 0.0
  %v6714 = vadd.f32 %v6712, %v6713
  %v6715 = vsel %vm6230, %v6683, 0.0
  %v6716 = vadd.f32 %v6714, %v6715
  %v6717 = vrot.slane %v6716, 4
  %v6718 = vadd.f32 %v6716, %v6717
  %v6719 = vrot.slane %v6718, 2
  %v6720 = vadd.f32 %v6718, %v6719
  %v6721 = vrot.slane %v6720, 1
  %v6722 = vadd.f32 %v6720, %v6721
  %v6723 = vmul.f32 %v6722, 0.0078125
  %v6724 = vmul.f32 %v6608, %v6608
  %v6725 = vmul.f32 %v6613, %v6613
  %v6726 = vmul.f32 %v6618, %v6618
  %v6727 = vmul.f32 %v6623, %v6623
  %v6728 = vmul.f32 %v6628, %v6628
  %v6729 = vmul.f32 %v6633, %v6633
  %v6730 = vmul.f32 %v6638, %v6638
  %v6731 = vmul.f32 %v6643, %v6643
  %v6732 = vmul.f32 %v6648, %v6648
  %v6733 = vmul.f32 %v6653, %v6653
  %v6734 = vmul.f32 %v6658, %v6658
  %v6735 = vmul.f32 %v6663, %v6663
  %v6736 = vmul.f32 %v6668, %v6668
  %v6737 = vmul.f32 %v6673, %v6673
  %v6738 = vmul.f32 %v6678, %v6678
  %v6739 = vmul.f32 %v6683, %v6683
  %v6740 = vsel %vm6230, %v6724, 0.0
  %v6741 = vsel %vm6230, %v6725, 0.0
  %v6742 = vadd.f32 %v6740, %v6741
  %v6743 = vsel %vm6230, %v6726, 0.0
  %v6744 = vadd.f32 %v6742, %v6743
  %v6745 = vsel %vm6230, %v6727, 0.0
  %v6746 = vadd.f32 %v6744, %v6745
  %v6747 = vsel %vm6230, %v6728, 0.0
  %v6748 = vadd.f32 %v6746, %v6747
  %v6749 = vsel %vm6230, %v6729, 0.0
  %v6750 = vadd.f32 %v6748, %v6749
  %v6751 = vsel %vm6230, %v6730, 0.0
  %v6752 = vadd.f32 %v6750, %v6751
  %v6753 = vsel %vm6230, %v6731, 0.0
  %v6754 = vadd.f32 %v6752, %v6753
  %v6755 = vsel %vm6230, %v6732, 0.0
  %v6756 = vadd.f32 %v6754, %v6755
  %v6757 = vsel %vm6230, %v6733, 0.0
  %v6758 = vadd.f32 %v6756, %v6757
  %v6759 = vsel %vm6230, %v6734, 0.0
  %v6760 = vadd.f32 %v6758, %v6759
  %v6761 = vsel %vm6230, %v6735, 0.0
  %v6762 = vadd.f32 %v6760, %v6761
  %v6763 = vsel %vm6230, %v6736, 0.0
  %v6764 = vadd.f32 %v6762, %v6763
  %v6765 = vsel %vm6230, %v6737, 0.0
  %v6766 = vadd.f32 %v6764, %v6765
  %v6767 = vsel %vm6230, %v6738, 0.0
  %v6768 = vadd.f32 %v6766, %v6767
  %v6769 = vsel %vm6230, %v6739, 0.0
  %v6770 = vadd.f32 %v6768, %v6769
  %v6771 = vrot.slane %v6770, 4
  %v6772 = vadd.f32 %v6770, %v6771
  %v6773 = vrot.slane %v6772, 2
  %v6774 = vadd.f32 %v6772, %v6773
  %v6775 = vrot.slane %v6774, 1
  %v6776 = vadd.f32 %v6774, %v6775
  %v6777 = vmul.f32 %v6776, 0.0078125
  %v6778 = vmul.f32 %v6723, %v6723
  %v6779 = vsub.f32 %v6777, %v6778
  %v6780 = vmax.f32 %v6779, 0.0
  %v6781 = vld [vmem:[%s5] sm:$0x1]
  %v6782 = vadd.f32 %v6780, 1e-05
  %v6783 = vrsqrt.pop %v6782
  %v6784 = vmul.f32 %v6781, %v6783
  %v6785 = vld [vmem:[%s6] sm:$0x1]
  %v6786 = vmul.f32 %v6723, %v6784
  %v6787 = vsub.f32 %v6785, %v6786
  %v6789 = vlaneseq
  %v6790 = vshrl.u32 %v6789, 7
  %v6791 = vsub.s32 0, %v6790
  %v6792 = vrot.slane %v6784, %v6791
  %v6794 = vmul.f32 %v6608, %v6792
  %v6795 = vmul.f32 %v6613, %v6792
  %v6796 = vmul.f32 %v6618, %v6792
  %v6797 = vmul.f32 %v6623, %v6792
  %v6798 = vmul.f32 %v6628, %v6792
  %v6799 = vmul.f32 %v6633, %v6792
  %v6800 = vmul.f32 %v6638, %v6792
  %v6801 = vmul.f32 %v6643, %v6792
  %v6802 = vmul.f32 %v6648, %v6792
  %v6803 = vmul.f32 %v6653, %v6792
  %v6804 = vmul.f32 %v6658, %v6792
  %v6805 = vmul.f32 %v6663, %v6792
  %v6806 = vmul.f32 %v6668, %v6792
  %v6807 = vmul.f32 %v6673, %v6792
  %v6808 = vmul.f32 %v6678, %v6792
  %v6809 = vmul.f32 %v6683, %v6792
  %v6811 = vlaneseq
  %v6812 = vshrl.u32 %v6811, 7
  %v6813 = vsub.s32 0, %v6812
  %v6814 = vrot.slane %v6787, %v6813
  %v6816 = vadd.f32 %v6794, %v6814
  %v6817 = vadd.f32 %v6795, %v6814
  %v6818 = vadd.f32 %v6796, %v6814
  %v6819 = vadd.f32 %v6797, %v6814
  %v6820 = vadd.f32 %v6798, %v6814
  %v6821 = vadd.f32 %v6799, %v6814
  %v6822 = vadd.f32 %v6800, %v6814
  %v6823 = vadd.f32 %v6801, %v6814
  %v6824 = vadd.f32 %v6802, %v6814
  %v6825 = vadd.f32 %v6803, %v6814
  %v6826 = vadd.f32 %v6804, %v6814
  %v6827 = vadd.f32 %v6805, %v6814
  %v6828 = vadd.f32 %v6806, %v6814
  %v6829 = vadd.f32 %v6807, %v6814
  %v6830 = vadd.f32 %v6808, %v6814
  %v6831 = vadd.f32 %v6809, %v6814
  %v6832 = vmax.f32 %v6816, 0.0
  %v6833 = vmax.f32 %v6817, 0.0
  %v6834 = vmax.f32 %v6818, 0.0
  %v6835 = vmax.f32 %v6819, 0.0
  %v6836 = vmax.f32 %v6820, 0.0
  %v6837 = vmax.f32 %v6821, 0.0
  %v6838 = vmax.f32 %v6822, 0.0
  %v6839 = vmax.f32 %v6823, 0.0
  %v6840 = vmax.f32 %v6824, 0.0
  %v6841 = vmax.f32 %v6825, 0.0
  %v6842 = vmax.f32 %v6826, 0.0
  %v6843 = vmax.f32 %v6827, 0.0
  %v6844 = vmax.f32 %v6828, 0.0
  %v6845 = vmax.f32 %v6829, 0.0
  %v6846 = vmax.f32 %v6830, 0.0
  %v6847 = vmax.f32 %v6831, 0.0
  %v6848 = vmax.f32 %v6832, %v6833
  %v6849 = vmax.f32 %v6840, %v6841
  %v6850 = vmax.f32 %v6834, %v6835
  %v6851 = vmax.f32 %v6842, %v6843
  %v6852 = vmax.f32 %v6836, %v6837
  %v6853 = vmax.f32 %v6844, %v6845
  %v6854 = vmax.f32 %v6838, %v6839
  %v6855 = vmax.f32 %v6846, %v6847
  %vm6856 = vcmask 517120
  %v6857 = vsel %vm6856, %v6848, -inf
  %v6858 = vrot.slane %v6857, 4
  %v6859 = vmax.f32 %v6857, %v6858
  %v6860 = vrot.slane %v6859, 2
  %v6861 = vmax.f32 %v6859, %v6860
  %v6862 = vrot.slane %v6861, 1
  %v6863 = vmax.f32 %v6861, %v6862
  %v6864 = vsel %vm6856, %v6850, -inf
  %v6865 = vrot.slane %v6864, 4
  %v6866 = vmax.f32 %v6864, %v6865
  %v6867 = vrot.slane %v6866, 2
  %v6868 = vmax.f32 %v6866, %v6867
  %v6869 = vrot.slane %v6868, 1
  %v6870 = vmax.f32 %v6868, %v6869
  %v6871 = vsel %vm6856, %v6852, -inf
  %v6872 = vrot.slane %v6871, 4
  %v6873 = vmax.f32 %v6871, %v6872
  %v6874 = vrot.slane %v6873, 2
  %v6875 = vmax.f32 %v6873, %v6874
  %v6876 = vrot.slane %v6875, 1
  %v6877 = vmax.f32 %v6875, %v6876
  %v6878 = vsel %vm6856, %v6854, -inf
  %v6879 = vrot.slane %v6878, 4
  %v6880 = vmax.f32 %v6878, %v6879
  %v6881 = vrot.slane %v6880, 2
  %v6882 = vmax.f32 %v6880, %v6881
  %v6883 = vrot.slane %v6882, 1
  %v6884 = vmax.f32 %v6882, %v6883
  %v6885 = vsel %vm6856, %v6849, -inf
  %v6886 = vrot.slane %v6885, 4
  %v6887 = vmax.f32 %v6885, %v6886
  %v6888 = vrot.slane %v6887, 2
  %v6889 = vmax.f32 %v6887, %v6888
  %v6890 = vrot.slane %v6889, 1
  %v6891 = vmax.f32 %v6889, %v6890
  %v6892 = vsel %vm6856, %v6851, -inf
  %v6893 = vrot.slane %v6892, 4
  %v6894 = vmax.f32 %v6892, %v6893
  %v6895 = vrot.slane %v6894, 2
  %v6896 = vmax.f32 %v6894, %v6895
  %v6897 = vrot.slane %v6896, 1
  %v6898 = vmax.f32 %v6896, %v6897
  %v6899 = vsel %vm6856, %v6853, -inf
  %v6900 = vrot.slane %v6899, 4
  %v6901 = vmax.f32 %v6899, %v6900
  %v6902 = vrot.slane %v6901, 2
  %v6903 = vmax.f32 %v6901, %v6902
  %v6904 = vrot.slane %v6903, 1
  %v6905 = vmax.f32 %v6903, %v6904
  %v6906 = vsel %vm6856, %v6855, -inf
  %v6907 = vrot.slane %v6906, 4
  %v6908 = vmax.f32 %v6906, %v6907
  %v6909 = vrot.slane %v6908, 2
  %v6910 = vmax.f32 %v6908, %v6909
  %v6911 = vrot.slane %v6910, 1
  %v6912 = vmax.f32 %v6910, %v6911
  %vm6913 = vcmask 519170
  %v6914 = vsel %vm6913, %v6848, -inf
  %v6915 = vrot.slane %v6914, 4
  %v6916 = vmax.f32 %v6914, %v6915
  %v6917 = vrot.slane %v6916, 2
  %v6918 = vmax.f32 %v6916, %v6917
  %v6919 = vrot.slane %v6918, 1
  %v6920 = vmax.f32 %v6918, %v6919
  %v6921 = vsel %vm6913, %v6850, -inf
  %v6922 = vrot.slane %v6921, 4
  %v6923 = vmax.f32 %v6921, %v6922
  %v6924 = vrot.slane %v6923, 2
  %v6925 = vmax.f32 %v6923, %v6924
  %v6926 = vrot.slane %v6925, 1
  %v6927 = vmax.f32 %v6925, %v6926
  %v6928 = vsel %vm6913, %v6852, -inf
  %v6929 = vrot.slane %v6928, 4
  %v6930 = vmax.f32 %v6928, %v6929
  %v6931 = vrot.slane %v6930, 2
  %v6932 = vmax.f32 %v6930, %v6931
  %v6933 = vrot.slane %v6932, 1
  %v6934 = vmax.f32 %v6932, %v6933
  %v6935 = vsel %vm6913, %v6854, -inf
  %v6936 = vrot.slane %v6935, 4
  %v6937 = vmax.f32 %v6935, %v6936
  %v6938 = vrot.slane %v6937, 2
  %v6939 = vmax.f32 %v6937, %v6938
  %v6940 = vrot.slane %v6939, 1
  %v6941 = vmax.f32 %v6939, %v6940
  %v6942 = vsel %vm6913, %v6849, -inf
  %v6943 = vrot.slane %v6942, 4
  %v6944 = vmax.f32 %v6942, %v6943
  %v6945 = vrot.slane %v6944, 2
  %v6946 = vmax.f32 %v6944, %v6945
  %v6947 = vrot.slane %v6946, 1
  %v6948 = vmax.f32 %v6946, %v6947
  %v6949 = vsel %vm6913, %v6851, -inf
  %v6950 = vrot.slane %v6949, 4
  %v6951 = vmax.f32 %v6949, %v6950
  %v6952 = vrot.slane %v6951, 2
  %v6953 = vmax.f32 %v6951, %v6952
  %v6954 = vrot.slane %v6953, 1
  %v6955 = vmax.f32 %v6953, %v6954
  %v6956 = vsel %vm6913, %v6853, -inf
  %v6957 = vrot.slane %v6956, 4
  %v6958 = vmax.f32 %v6956, %v6957
  %v6959 = vrot.slane %v6958, 2
  %v6960 = vmax.f32 %v6958, %v6959
  %v6961 = vrot.slane %v6960, 1
  %v6962 = vmax.f32 %v6960, %v6961
  %v6963 = vsel %vm6913, %v6855, -inf
  %v6964 = vrot.slane %v6963, 4
  %v6965 = vmax.f32 %v6963, %v6964
  %v6966 = vrot.slane %v6965, 2
  %v6967 = vmax.f32 %v6965, %v6966
  %v6968 = vrot.slane %v6967, 1
  %v6969 = vmax.f32 %v6967, %v6968
  %vm6970 = vcmask 521220
  %v6971 = vsel %vm6970, %v6848, -inf
  %v6972 = vrot.slane %v6971, 4
  %v6973 = vmax.f32 %v6971, %v6972
  %v6974 = vrot.slane %v6973, 2
  %v6975 = vmax.f32 %v6973, %v6974
  %v6976 = vrot.slane %v6975, 1
  %v6977 = vmax.f32 %v6975, %v6976
  %v6978 = vsel %vm6970, %v6850, -inf
  %v6979 = vrot.slane %v6978, 4
  %v6980 = vmax.f32 %v6978, %v6979
  %v6981 = vrot.slane %v6980, 2
  %v6982 = vmax.f32 %v6980, %v6981
  %v6983 = vrot.slane %v6982, 1
  %v6984 = vmax.f32 %v6982, %v6983
  %v6985 = vsel %vm6970, %v6852, -inf
  %v6986 = vrot.slane %v6985, 4
  %v6987 = vmax.f32 %v6985, %v6986
  %v6988 = vrot.slane %v6987, 2
  %v6989 = vmax.f32 %v6987, %v6988
  %v6990 = vrot.slane %v6989, 1
  %v6991 = vmax.f32 %v6989, %v6990
  %v6992 = vsel %vm6970, %v6854, -inf
  %v6993 = vrot.slane %v6992, 4
  %v6994 = vmax.f32 %v6992, %v6993
  %v6995 = vrot.slane %v6994, 2
  %v6996 = vmax.f32 %v6994, %v6995
  %v6997 = vrot.slane %v6996, 1
  %v6998 = vmax.f32 %v6996, %v6997
  %v6999 = vsel %vm6970, %v6849, -inf
  %v7000 = vrot.slane %v6999, 4
  %v7001 = vmax.f32 %v6999, %v7000
  %v7002 = vrot.slane %v7001, 2
  %v7003 = vmax.f32 %v7001, %v7002
  %v7004 = vrot.slane %v7003, 1
  %v7005 = vmax.f32 %v7003, %v7004
  %v7006 = vsel %vm6970, %v6851, -inf
  %v7007 = vrot.slane %v7006, 4
  %v7008 = vmax.f32 %v7006, %v7007
  %v7009 = vrot.slane %v7008, 2
  %v7010 = vmax.f32 %v7008, %v7009
  %v7011 = vrot.slane %v7010, 1
  %v7012 = vmax.f32 %v7010, %v7011
  %v7013 = vsel %vm6970, %v6853, -inf
  %v7014 = vrot.slane %v7013, 4
  %v7015 = vmax.f32 %v7013, %v7014
  %v7016 = vrot.slane %v7015, 2
  %v7017 = vmax.f32 %v7015, %v7016
  %v7018 = vrot.slane %v7017, 1
  %v7019 = vmax.f32 %v7017, %v7018
  %v7020 = vsel %vm6970, %v6855, -inf
  %v7021 = vrot.slane %v7020, 4
  %v7022 = vmax.f32 %v7020, %v7021
  %v7023 = vrot.slane %v7022, 2
  %v7024 = vmax.f32 %v7022, %v7023
  %v7025 = vrot.slane %v7024, 1
  %v7026 = vmax.f32 %v7024, %v7025
  %vm7027 = vcmask 523270
  %v7028 = vsel %vm7027, %v6848, -inf
  %v7029 = vrot.slane %v7028, 4
  %v7030 = vmax.f32 %v7028, %v7029
  %v7031 = vrot.slane %v7030, 2
  %v7032 = vmax.f32 %v7030, %v7031
  %v7033 = vrot.slane %v7032, 1
  %v7034 = vmax.f32 %v7032, %v7033
  %v7035 = vsel %vm7027, %v6850, -inf
  %v7036 = vrot.slane %v7035, 4
  %v7037 = vmax.f32 %v7035, %v7036
  %v7038 = vrot.slane %v7037, 2
  %v7039 = vmax.f32 %v7037, %v7038
  %v7040 = vrot.slane %v7039, 1
  %v7041 = vmax.f32 %v7039, %v7040
  %v7042 = vsel %vm7027, %v6852, -inf
  %v7043 = vrot.slane %v7042, 4
  %v7044 = vmax.f32 %v7042, %v7043
  %v7045 = vrot.slane %v7044, 2
  %v7046 = vmax.f32 %v7044, %v7045
  %v7047 = vrot.slane %v7046, 1
  %v7048 = vmax.f32 %v7046, %v7047
  %v7049 = vsel %vm7027, %v6854, -inf
  %v7050 = vrot.slane %v7049, 4
  %v7051 = vmax.f32 %v7049, %v7050
  %v7052 = vrot.slane %v7051, 2
  %v7053 = vmax.f32 %v7051, %v7052
  %v7054 = vrot.slane %v7053, 1
  %v7055 = vmax.f32 %v7053, %v7054
  %v7056 = vsel %vm7027, %v6849, -inf
  %v7057 = vrot.slane %v7056, 4
  %v7058 = vmax.f32 %v7056, %v7057
  %v7059 = vrot.slane %v7058, 2
  %v7060 = vmax.f32 %v7058, %v7059
  %v7061 = vrot.slane %v7060, 1
  %v7062 = vmax.f32 %v7060, %v7061
  %v7063 = vsel %vm7027, %v6851, -inf
  %v7064 = vrot.slane %v7063, 4
  %v7065 = vmax.f32 %v7063, %v7064
  %v7066 = vrot.slane %v7065, 2
  %v7067 = vmax.f32 %v7065, %v7066
  %v7068 = vrot.slane %v7067, 1
  %v7069 = vmax.f32 %v7067, %v7068
  %v7070 = vsel %vm7027, %v6853, -inf
  %v7071 = vrot.slane %v7070, 4
  %v7072 = vmax.f32 %v7070, %v7071
  %v7073 = vrot.slane %v7072, 2
  %v7074 = vmax.f32 %v7072, %v7073
  %v7075 = vrot.slane %v7074, 1
  %v7076 = vmax.f32 %v7074, %v7075
  %v7077 = vsel %vm7027, %v6855, -inf
  %v7078 = vrot.slane %v7077, 4
  %v7079 = vmax.f32 %v7077, %v7078
  %v7080 = vrot.slane %v7079, 2
  %v7081 = vmax.f32 %v7079, %v7080
  %v7082 = vrot.slane %v7081, 1
  %v7083 = vmax.f32 %v7081, %v7082
  %v7084 = vsel %vm5510, %v6863, %v6920
  %v7085 = vsel %vm5510, %v6870, %v6927
  %v7086 = vsel %vm5510, %v6877, %v6934
  %v7087 = vsel %vm5510, %v6884, %v6941
  %v7088 = vsel %vm5510, %v6891, %v6948
  %v7089 = vsel %vm5510, %v6898, %v6955
  %v7090 = vsel %vm5510, %v6905, %v6962
  %v7091 = vsel %vm5510, %v6912, %v6969
  %v7092 = vsel %vm5527, %v7084, %v6977
  %v7093 = vsel %vm5527, %v7085, %v6984
  %v7094 = vsel %vm5527, %v7086, %v6991
  %v7095 = vsel %vm5527, %v7087, %v6998
  %v7096 = vsel %vm5527, %v7088, %v7005
  %v7097 = vsel %vm5527, %v7089, %v7012
  %v7098 = vsel %vm5527, %v7090, %v7019
  %v7099 = vsel %vm5527, %v7091, %v7026
  %v7100 = vsel %vm3642, %v7092, %v7034
  %v7101 = vsel %vm3642, %v7093, %v7041
  %v7102 = vsel %vm3642, %v7094, %v7048
  %v7103 = vsel %vm3642, %v7095, %v7055
  %v7104 = vsel %vm3642, %v7096, %v7062
  %v7105 = vsel %vm3642, %v7097, %v7069
  %v7106 = vsel %vm3642, %v7098, %v7076
  %v7107 = vsel %vm3642, %v7099, %v7083
  %vm7108 = vcmask 521216
  %7109 = vst.msk [vmem:[#allocation4] sm:$0x3f] %vm7108, 0.0
  %7110 = vst.msk [vmem:[#allocation4 + $0x8] sm:$0x3f] %vm7108, 0.0
  %7111 = vst.msk [vmem:[#allocation4 + $0x10] sm:$0x3f] %vm7108, 0.0
  %7112 = vst.msk [vmem:[#allocation4 + $0x18] sm:$0x3f] %vm7108, 0.0
  %7113 = vst.msk [vmem:[#allocation4 + $0x20] sm:$0x3f] %vm7108, 0.0
  %7114 = vst.msk [vmem:[#allocation4 + $0x28] sm:$0x3f] %vm7108, 0.0
  %7115 = vst.msk [vmem:[#allocation4 + $0x30] sm:$0x3f] %vm7108, 0.0
  %7116 = vst.msk [vmem:[#allocation4 + $0x38] sm:$0x3f] %vm7108, 0.0
  %7117 = vst.msk [vmem:[#allocation4 + $0x40] sm:$0x3f] %vm7108, 0.0
  %7118 = vst.msk [vmem:[#allocation4 + $0x48] sm:$0x3f] %vm7108, 0.0
  %7119 = vst.msk [vmem:[#allocation4 + $0x50] sm:$0x3f] %vm7108, 0.0
  %7120 = vst.msk [vmem:[#allocation4 + $0x58] sm:$0x3f] %vm7108, 0.0
  %s7121 = scalar_lea.vmem [#allocation4], 8
  %vm7122 = vcmask 519168
  %7123 = vst.msk [vmem:[%s7121 + $0x1] sm:$0xf] %vm7122, %v7100
  %7124 = vst.msk [vmem:[%s7121 + $0x9] sm:$0xf] %vm7122, %v7101
  %7125 = vst.msk [vmem:[%s7121 + $0x11] sm:$0xf] %vm7122, %v7102
  %7126 = vst.msk [vmem:[%s7121 + $0x19] sm:$0xf] %vm7122, %v7103
  %7127 = vst.msk [vmem:[%s7121 + $0x31] sm:$0xf] %vm7122, %v7104
  %7128 = vst.msk [vmem:[%s7121 + $0x39] sm:$0xf] %vm7122, %v7105
  %7129 = vst.msk [vmem:[%s7121 + $0x41] sm:$0xf] %vm7122, %v7106
  %7130 = vst.msk [vmem:[%s7121 + $0x49] sm:$0xf] %vm7122, %v7107
  %v7131 = vld [vmem:[#allocation4] sm:$0xf]
  %v7132 = vld [vmem:[#allocation4 + $0x8] sm:$0xf]
  %v7133 = vld [vmem:[#allocation4 + $0x10] sm:$0xf]
  %v7134 = vld [vmem:[#allocation4 + $0x18] sm:$0xf]
  %v7135 = vld [vmem:[#allocation4 + $0x30] sm:$0xf]
  %v7136 = vld [vmem:[#allocation4 + $0x38] sm:$0xf]
  %v7137 = vld [vmem:[#allocation4 + $0x40] sm:$0xf]
  %v7138 = vld [vmem:[#allocation4 + $0x48] sm:$0xf]
  %v7139 = vld [vmem:[#allocation4 + $0x1] sm:$0xf]
  %v7140 = vld [vmem:[#allocation4 + $0x9] sm:$0xf]
  %v7141 = vld [vmem:[#allocation4 + $0x11] sm:$0xf]
  %v7142 = vld [vmem:[#allocation4 + $0x19] sm:$0xf]
  %v7143 = vld [vmem:[#allocation4 + $0x31] sm:$0xf]
  %v7144 = vld [vmem:[#allocation4 + $0x39] sm:$0xf]
  %v7145 = vld [vmem:[#allocation4 + $0x41] sm:$0xf]
  %v7146 = vld [vmem:[#allocation4 + $0x49] sm:$0xf]
  %v7147 = vld [vmem:[#allocation4 + $0x2] sm:$0xf]
  %v7148 = vld [vmem:[#allocation4 + $0xa] sm:$0xf]
  %v7149 = vld [vmem:[#allocation4 + $0x12] sm:$0xf]
  %v7150 = vld [vmem:[#allocation4 + $0x1a] sm:$0xf]
  %v7151 = vld [vmem:[#allocation4 + $0x32] sm:$0xf]
  %v7152 = vld [vmem:[#allocation4 + $0x3a] sm:$0xf]
  %v7153 = vld [vmem:[#allocation4 + $0x42] sm:$0xf]
  %v7154 = vld [vmem:[#allocation4 + $0x4a] sm:$0xf]
  %v7155 = vld [vmem:[%s7121] sm:$0xf]
  %v7156 = vld [vmem:[%s7121 + $0x8] sm:$0xf]
  %v7157 = vld [vmem:[%s7121 + $0x10] sm:$0xf]
  %v7158 = vld [vmem:[%s7121 + $0x18] sm:$0xf]
  %v7159 = vld [vmem:[%s7121 + $0x30] sm:$0xf]
  %v7160 = vld [vmem:[%s7121 + $0x38] sm:$0xf]
  %v7161 = vld [vmem:[%s7121 + $0x40] sm:$0xf]
  %v7162 = vld [vmem:[%s7121 + $0x48] sm:$0xf]
  %v7163 = vld [vmem:[%s7121 + $0x1] sm:$0xf]
  %v7164 = vld [vmem:[%s7121 + $0x9] sm:$0xf]
  %v7165 = vld [vmem:[%s7121 + $0x11] sm:$0xf]
  %v7166 = vld [vmem:[%s7121 + $0x19] sm:$0xf]
  %v7167 = vld [vmem:[%s7121 + $0x31] sm:$0xf]
  %v7168 = vld [vmem:[%s7121 + $0x39] sm:$0xf]
  %v7169 = vld [vmem:[%s7121 + $0x41] sm:$0xf]
  %v7170 = vld [vmem:[%s7121 + $0x49] sm:$0xf]
  %v7171 = vld [vmem:[%s7121 + $0x2] sm:$0xf]
  %v7172 = vld [vmem:[%s7121 + $0xa] sm:$0xf]
  %v7173 = vld [vmem:[%s7121 + $0x12] sm:$0xf]
  %v7174 = vld [vmem:[%s7121 + $0x1a] sm:$0xf]
  %v7175 = vld [vmem:[%s7121 + $0x32] sm:$0xf]
  %v7176 = vld [vmem:[%s7121 + $0x3a] sm:$0xf]
  %v7177 = vld [vmem:[%s7121 + $0x42] sm:$0xf]
  %v7178 = vld [vmem:[%s7121 + $0x4a] sm:$0xf]
  %s7179 = scalar_lea.vmem [#allocation4], 16
  %v7180 = vld [vmem:[%s7179] sm:$0xf]
  %v7181 = vld [vmem:[%s7179 + $0x8] sm:$0xf]
  %v7182 = vld [vmem:[%s7179 + $0x10] sm:$0xf]
  %v7183 = vld [vmem:[%s7179 + $0x18] sm:$0xf]
  %v7184 = vld [vmem:[%s7179 + $0x30] sm:$0xf]
  %v7185 = vld [vmem:[%s7179 + $0x38] sm:$0xf]
  %v7186 = vld [vmem:[%s7179 + $0x40] sm:$0xf]
  %v7187 = vld [vmem:[%s7179 + $0x48] sm:$0xf]
  %v7188 = vld [vmem:[%s7179 + $0x1] sm:$0xf]
  %v7189 = vld [vmem:[%s7179 + $0x9] sm:$0xf]
  %v7190 = vld [vmem:[%s7179 + $0x11] sm:$0xf]
  %v7191 = vld [vmem:[%s7179 + $0x19] sm:$0xf]
  %v7192 = vld [vmem:[%s7179 + $0x31] sm:$0xf]
  %v7193 = vld [vmem:[%s7179 + $0x39] sm:$0xf]
  %v7194 = vld [vmem:[%s7179 + $0x41] sm:$0xf]
  %v7195 = vld [vmem:[%s7179 + $0x49] sm:$0xf]
  %v7196 = vld [vmem:[%s7179 + $0x2] sm:$0xf]
  %v7197 = vld [vmem:[%s7179 + $0xa] sm:$0xf]
  %v7198 = vld [vmem:[%s7179 + $0x12] sm:$0xf]
  %v7199 = vld [vmem:[%s7179 + $0x1a] sm:$0xf]
  %v7200 = vld [vmem:[%s7179 + $0x32] sm:$0xf]
  %v7201 = vld [vmem:[%s7179 + $0x3a] sm:$0xf]
  %v7202 = vld [vmem:[%s7179 + $0x42] sm:$0xf]
  %v7203 = vld [vmem:[%s7179 + $0x4a] sm:$0xf]
  %v7212 = vcombine.low %v7131, %v7132
  %v7213 = vcombine.low %v7133, %v7134
  %v7214 = vcombine.low %v7135, %v7136
  %v7215 = vcombine.low %v7137, %v7138
  %v7228 = vcombine.low %v7139, %v7140
  %v7229 = vcombine.low %v7141, %v7142
  %v7230 = vcombine.low %v7143, %v7144
  %v7231 = vcombine.low %v7145, %v7146
  %7232 = vrot.lane.b32.xlu0 %v7228, 64
  %v7233 = vpop.permute.xlu0 %7232
  %7234 = vrot.lane.b32.xlu0 %v7229, 64
  %v7235 = vpop.permute.xlu0 %7234
  %7236 = vrot.lane.b32.xlu0 %v7230, 64
  %v7237 = vpop.permute.xlu0 %7236
  %7238 = vrot.lane.b32.xlu0 %v7231, 64
  %v7239 = vpop.permute.xlu0 %7238
  %v7252 = vcombine.low %v7147, %v7148
  %v7253 = vcombine.low %v7149, %v7150
  %v7254 = vcombine.low %v7151, %v7152
  %v7255 = vcombine.low %v7153, %v7154
  %v7268 = vcombine.low %v7155, %v7156
  %v7269 = vcombine.low %v7157, %v7158
  %v7270 = vcombine.low %v7159, %v7160
  %v7271 = vcombine.low %v7161, %v7162
  %7272 = vrot.lane.b32.xlu0 %v7268, 64
  %v7273 = vpop.permute.xlu0 %7272
  %7274 = vrot.lane.b32.xlu0 %v7269, 64
  %v7275 = vpop.permute.xlu0 %7274
  %7276 = vrot.lane.b32.xlu0 %v7270, 64
  %v7277 = vpop.permute.xlu0 %7276
  %7278 = vrot.lane.b32.xlu0 %v7271, 64
  %v7279 = vpop.permute.xlu0 %7278
  %v7292 = vcombine.low %v7163, %v7164
  %v7293 = vcombine.low %v7165, %v7166
  %v7294 = vcombine.low %v7167, %v7168
  %v7295 = vcombine.low %v7169, %v7170
  %v7308 = vcombine.low %v7171, %v7172
  %v7309 = vcombine.low %v7173, %v7174
  %v7310 = vcombine.low %v7175, %v7176
  %v7311 = vcombine.low %v7177, %v7178
  %7312 = vrot.lane.b32.xlu0 %v7308, 64
  %v7313 = vpop.permute.xlu0 %7312
  %7314 = vrot.lane.b32.xlu0 %v7309, 64
  %v7315 = vpop.permute.xlu0 %7314
  %7316 = vrot.lane.b32.xlu0 %v7310, 64
  %v7317 = vpop.permute.xlu0 %7316
  %7318 = vrot.lane.b32.xlu0 %v7311, 64
  %v7319 = vpop.permute.xlu0 %7318
  %v7332 = vcombine.low %v7180, %v7181
  %v7333 = vcombine.low %v7182, %v7183
  %v7334 = vcombine.low %v7184, %v7185
  %v7335 = vcombine.low %v7186, %v7187
  %v7348 = vcombine.low %v7188, %v7189
  %v7349 = vcombine.low %v7190, %v7191
  %v7350 = vcombine.low %v7192, %v7193
  %v7351 = vcombine.low %v7194, %v7195
  %7352 = vrot.lane.b32.xlu0 %v7348, 64
  %v7353 = vpop.permute.xlu0 %7352
  %7354 = vrot.lane.b32.xlu0 %v7349, 64
  %v7355 = vpop.permute.xlu0 %7354
  %7356 = vrot.lane.b32.xlu0 %v7350, 64
  %v7357 = vpop.permute.xlu0 %7356
  %7358 = vrot.lane.b32.xlu0 %v7351, 64
  %v7359 = vpop.permute.xlu0 %7358
  %v7372 = vcombine.low %v7196, %v7197
  %v7373 = vcombine.low %v7198, %v7199
  %v7374 = vcombine.low %v7200, %v7201
  %v7375 = vcombine.low %v7202, %v7203
  %v7376 = vsel %vm6230, %v7212, %v7233
  %v7377 = vsel %vm6230, %v7213, %v7235
  %v7378 = vsel %vm6230, %v7214, %v7237
  %v7379 = vsel %vm6230, %v7215, %v7239
  %v7380 = vsel %vm6230, %v7252, %v7273
  %v7381 = vsel %vm6230, %v7253, %v7275
  %v7382 = vsel %vm6230, %v7254, %v7277
  %v7383 = vsel %vm6230, %v7255, %v7279
  %v7384 = vsel %vm6230, %v7292, %v7313
  %v7385 = vsel %vm6230, %v7293, %v7315
  %v7386 = vsel %vm6230, %v7294, %v7317
  %v7387 = vsel %vm6230, %v7295, %v7319
  %v7388 = vsel %vm6230, %v7332, %v7353
  %v7389 = vsel %vm6230, %v7333, %v7355
  %v7390 = vsel %vm6230, %v7334, %v7357
  %v7391 = vsel %vm6230, %v7335, %v7359
  %v7392 = vld [vmem:[%s7] sm:$0xff]
  %v7393 = vld [vmem:[%s7 + $0x8] sm:$0xff]
  %v7394 = vld [vmem:[%s7 + $0x10] sm:$0xff]
  %v7395 = vld [vmem:[%s7 + $0x18] sm:$0xff]
  %v7396 = vld [vmem:[%s7 + $0x20] sm:$0xff]
  %v7397 = vld [vmem:[%s7 + $0x28] sm:$0xff]
  %v7398 = vld [vmem:[%s7 + $0x30] sm:$0xff]
  %v7399 = vld [vmem:[%s7 + $0x38] sm:$0xff]
  %v7400 = vld [vmem:[%s7 + $0x40] sm:$0xff]
  %v7401 = vld [vmem:[%s7 + $0x48] sm:$0xff]
  %v7402 = vld [vmem:[%s7 + $0x50] sm:$0xff]
  %v7403 = vld [vmem:[%s7 + $0x58] sm:$0xff]
  %v7404 = vld [vmem:[%s7 + $0x60] sm:$0xff]
  %v7405 = vld [vmem:[%s7 + $0x68] sm:$0xff]
  %v7406 = vld [vmem:[%s7 + $0x70] sm:$0xff]
  %v7407 = vld [vmem:[%s7 + $0x78] sm:$0xff]
  %v7408 = vld [vmem:[%s7 + $0x80] sm:$0xff]
  %v7409 = vld [vmem:[%s7 + $0x88] sm:$0xff]
  %v7410 = vld [vmem:[%s7 + $0x90] sm:$0xff]
  %v7411 = vld [vmem:[%s7 + $0x98] sm:$0xff]
  %v7412 = vld [vmem:[%s7 + $0xa0] sm:$0xff]
  %v7413 = vld [vmem:[%s7 + $0xa8] sm:$0xff]
  %v7414 = vld [vmem:[%s7 + $0xb0] sm:$0xff]
  %v7415 = vld [vmem:[%s7 + $0xb8] sm:$0xff]
  %v7416 = vld [vmem:[%s7 + $0xc0] sm:$0xff]
  %v7417 = vld [vmem:[%s7 + $0xc8] sm:$0xff]
  %v7418 = vld [vmem:[%s7 + $0xd0] sm:$0xff]
  %v7419 = vld [vmem:[%s7 + $0xd8] sm:$0xff]
  %v7420 = vld [vmem:[%s7 + $0xe0] sm:$0xff]
  %v7421 = vld [vmem:[%s7 + $0xe8] sm:$0xff]
  %v7422 = vld [vmem:[%s7 + $0xf0] sm:$0xff]
  %v7423 = vld [vmem:[%s7 + $0xf8] sm:$0xff]
  %v7424 = vld [vmem:[%s7 + $0x100] sm:$0xff]
  %v7425 = vld [vmem:[%s7 + $0x108] sm:$0xff]
  %v7426 = vld [vmem:[%s7 + $0x110] sm:$0xff]
  %v7427 = vld [vmem:[%s7 + $0x118] sm:$0xff]
  %v7428 = vld [vmem:[%s7 + $0x120] sm:$0xff]
  %v7429 = vld [vmem:[%s7 + $0x128] sm:$0xff]
  %v7430 = vld [vmem:[%s7 + $0x130] sm:$0xff]
  %v7431 = vld [vmem:[%s7 + $0x138] sm:$0xff]
  %v7432 = vld [vmem:[%s7 + $0x140] sm:$0xff]
  %v7433 = vld [vmem:[%s7 + $0x148] sm:$0xff]
  %v7434 = vld [vmem:[%s7 + $0x150] sm:$0xff]
  %v7435 = vld [vmem:[%s7 + $0x158] sm:$0xff]
  %v7436 = vld [vmem:[%s7 + $0x160] sm:$0xff]
  %v7437 = vld [vmem:[%s7 + $0x168] sm:$0xff]
  %v7438 = vld [vmem:[%s7 + $0x170] sm:$0xff]
  %v7439 = vld [vmem:[%s7 + $0x178] sm:$0xff]
  %v7440 = vld [vmem:[%s7 + $0x180] sm:$0xff]
  %v7441 = vld [vmem:[%s7 + $0x188] sm:$0xff]
  %v7442 = vld [vmem:[%s7 + $0x190] sm:$0xff]
  %v7443 = vld [vmem:[%s7 + $0x198] sm:$0xff]
  %v7444 = vld [vmem:[%s7 + $0x1a0] sm:$0xff]
  %v7445 = vld [vmem:[%s7 + $0x1a8] sm:$0xff]
  %v7446 = vld [vmem:[%s7 + $0x1b0] sm:$0xff]
  %v7447 = vld [vmem:[%s7 + $0x1b8] sm:$0xff]
  %v7448 = vld [vmem:[%s7 + $0x1c0] sm:$0xff]
  %v7449 = vld [vmem:[%s7 + $0x1c8] sm:$0xff]
  %v7450 = vld [vmem:[%s7 + $0x1d0] sm:$0xff]
  %v7451 = vld [vmem:[%s7 + $0x1d8] sm:$0xff]
  %v7452 = vld [vmem:[%s7 + $0x1e0] sm:$0xff]
  %v7453 = vld [vmem:[%s7 + $0x1e8] sm:$0xff]
  %v7454 = vld [vmem:[%s7 + $0x1f0] sm:$0xff]
  %v7455 = vld [vmem:[%s7 + $0x1f8] sm:$0xff]
  %v7456 = vld [vmem:[%s7 + $0x200] sm:$0xff]
  %v7457 = vld [vmem:[%s7 + $0x208] sm:$0xff]
  %v7458 = vld [vmem:[%s7 + $0x210] sm:$0xff]
  %v7459 = vld [vmem:[%s7 + $0x218] sm:$0xff]
  %v7460 = vld [vmem:[%s7 + $0x220] sm:$0xff]
  %v7461 = vld [vmem:[%s7 + $0x228] sm:$0xff]
  %v7462 = vld [vmem:[%s7 + $0x230] sm:$0xff]
  %v7463 = vld [vmem:[%s7 + $0x238] sm:$0xff]
  %v7464 = vsel %vm6230, %v7372, 0
  %v7466 = vsel %vm6230, %v7373, 0
  %v7468 = vsel %vm6230, %v7374, 0
  %v7470 = vsel %vm6230, %v7375, 0
  %7472 = vmatprep.subr.mxu0 0.0
  %7473 = vmatpush1.msra.mxu0 %v7392
  %7474 = vmatprep.subr.mxu0 0.0
  %7475 = vmatpush1.msra.mxu0 %v7393
  %7476 = vmatprep.subr.mxu0 0.0
  %7477 = vmatpush1.msra.mxu0 %v7394
  %7478 = vmatprep.subr.mxu0 0.0
  %7479 = vmatpush1.msra.mxu0 %v7395
  %7480 = vmatprep.subr.mxu0 0.0
  %7481 = vmatpush1.msra.mxu0 %v7396
  %7482 = vmatprep.subr.mxu0 0.0
  %7483 = vmatpush1.msra.mxu0 %v7397
  %7484 = vmatprep.subr.mxu0 0.0
  %7485 = vmatpush1.msra.mxu0 %v7398
  %7486 = vmatprep.subr.mxu0 0.0
  %7487 = vmatpush1.msra.mxu0 %v7399
  %7488 = vmatprep.subr.mxu0 0.0
  %7489 = vmatpush1.msra.mxu0 %v7400
  %7490 = vmatprep.subr.mxu0 0.0
  %7491 = vmatpush1.msra.mxu0 %v7401
  %7492 = vmatprep.subr.mxu0 0.0
  %7493 = vmatpush1.msra.mxu0 %v7402
  %7494 = vmatprep.subr.mxu0 0.0
  %7495 = vmatpush1.msra.mxu0 %v7403
  %7496 = vmatprep.subr.mxu0 0.0
  %7497 = vmatpush1.msra.mxu0 %v7404
  %7498 = vmatprep.subr.mxu0 0.0
  %7499 = vmatpush1.msra.mxu0 %v7405
  %7500 = vmatprep.subr.mxu0 0.0
  %7501 = vmatpush1.msra.mxu0 %v7406
  %7502 = vmatprep.subr.mxu0 0.0
  %7503 = vmatpush1.msra.mxu0 %v7407
  %7504 = vmatprep.subr.mxu0 0.0
  %7505 = vmatpush1.msra.mxu0 %v7408
  %7506 = vmatprep.subr.mxu0 0.0
  %7507 = vmatpush1.msra.mxu0 %v7409
  %7508 = vmatprep.subr.mxu0 0.0
  %7509 = vmatpush1.msra.mxu0 %v7410
  %7510 = vmatprep.subr.mxu0 0.0
  %7511 = vmatpush1.msra.mxu0 %v7411
  %7512 = vmatprep.subr.mxu0 0.0
  %7513 = vmatpush1.msra.mxu0 %v7412
  %7514 = vmatprep.subr.mxu0 0.0
  %7515 = vmatpush1.msra.mxu0 %v7413
  %7516 = vmatprep.subr.mxu0 0.0
  %7517 = vmatpush1.msra.mxu0 %v7414
  %7518 = vmatprep.subr.mxu0 0.0
  %7519 = vmatpush1.msra.mxu0 %v7415
  %7520 = vmatprep.subr.mxu0 0.0
  %7521 = vmatpush1.msra.mxu0 %v7416
  %7522 = vmatprep.subr.mxu0 0.0
  %7523 = vmatpush1.msra.mxu0 %v7417
  %7524 = vmatprep.subr.mxu0 0.0
  %7525 = vmatpush1.msra.mxu0 %v7418
  %7526 = vmatprep.subr.mxu0 0.0
  %7527 = vmatpush1.msra.mxu0 %v7419
  %7528 = vmatprep.subr.mxu0 0.0
  %7529 = vmatpush1.msra.mxu0 %v7420
  %7530 = vmatprep.subr.mxu0 0.0
  %7531 = vmatpush1.msra.mxu0 %v7421
  %7532 = vmatprep.subr.mxu0 0.0
  %7533 = vmatpush1.msra.mxu0 %v7422
  %7534 = vmatprep.subr.mxu0 0.0
  %7535 = vmatpush1.msra.mxu0 %v7423
  %7536 = vmatprep.mubr.f32.mxu0 %v7380
  %7537 = vmatmul.mubr.f32.gmra.mrb[0].mxu0 %v7376
  %v7538 = vpop.f32.mrb[0].mxu0
  %v7539 = vadd.f32 0.0, %v7538
  %v7540 = vpop.f32.mrb[0].mxu0
  %7541 = vmatprep.mubr.f32.mxu0 %v7381
  %7542 = vmatmul.mubr.f32.gmra.mrb[0].mxu0 %v7377
  %v7543 = vpop.f32.mrb[0].mxu0
  %v7544 = vadd.f32 0.0, %v7543
  %v7545 = vpop.f32.mrb[0].mxu0
  %7546 = vmatprep.mubr.f32.mxu0 %v7382
  %7547 = vmatmul.mubr.f32.gmra.mrb[0].mxu0 %v7378
  %v7548 = vpop.f32.mrb[0].mxu0
  %v7549 = vadd.f32 0.0, %v7548
  %v7550 = vpop.f32.mrb[0].mxu0
  %7551 = vmatprep.mubr.f32.mxu0 %v7383
  %7552 = vmatmul.mubr.f32.gmra.mrb[0].mxu0 %v7379
  %v7553 = vpop.f32.mrb[0].mxu0
  %v7554 = vadd.f32 0.0, %v7553
  %v7555 = vpop.f32.mrb[0].mxu0
  %7556 = vdwg.mxu0
  %7557 = vmatprep.subr.mxu0 0.0
  %7558 = vmatpush1.msra.mxu0 %v7424
  %7559 = vmatprep.subr.mxu0 0.0
  %7560 = vmatpush1.msra.mxu0 %v7425
  %7561 = vmatprep.subr.mxu0 0.0
  %7562 = vmatpush1.msra.mxu0 %v7426
  %7563 = vmatprep.subr.mxu0 0.0
  %7564 = vmatpush1.msra.mxu0 %v7427
  %7565 = vmatprep.subr.mxu0 0.0
  %7566 = vmatpush1.msra.mxu0 %v7428
  %7567 = vmatprep.subr.mxu0 0.0
  %7568 = vmatpush1.msra.mxu0 %v7429
  %7569 = vmatprep.subr.mxu0 0.0
  %7570 = vmatpush1.msra.mxu0 %v7430
  %7571 = vmatprep.subr.mxu0 0.0
  %7572 = vmatpush1.msra.mxu0 %v7431
  %7573 = vmatprep.subr.mxu0 0.0
  %7574 = vmatpush1.msra.mxu0 %v7432
  %7575 = vmatprep.subr.mxu0 0.0
  %7576 = vmatpush1.msra.mxu0 %v7433
  %7577 = vmatprep.subr.mxu0 0.0
  %7578 = vmatpush1.msra.mxu0 %v7434
  %7579 = vmatprep.subr.mxu0 0.0
  %7580 = vmatpush1.msra.mxu0 %v7435
  %7581 = vmatprep.subr.mxu0 0.0
  %7582 = vmatpush1.msra.mxu0 %v7436
  %7583 = vmatprep.subr.mxu0 0.0
  %7584 = vmatpush1.msra.mxu0 %v7437
  %7585 = vmatprep.subr.mxu0 0.0
  %7586 = vmatpush1.msra.mxu0 %v7438
  %7587 = vmatprep.subr.mxu0 0.0
  %7588 = vmatpush1.msra.mxu0 %v7439
  %7589 = vmatprep.subr.mxu0 0.0
  %7590 = vmatpush1.msra.mxu0 %v7440
  %7591 = vmatprep.subr.mxu0 0.0
  %7592 = vmatpush1.msra.mxu0 %v7441
  %7593 = vmatprep.subr.mxu0 0.0
  %7594 = vmatpush1.msra.mxu0 %v7442
  %7595 = vmatprep.subr.mxu0 0.0
  %7596 = vmatpush1.msra.mxu0 %v7443
  %7597 = vmatprep.subr.mxu0 0.0
  %7598 = vmatpush1.msra.mxu0 %v7444
  %7599 = vmatprep.subr.mxu0 0.0
  %7600 = vmatpush1.msra.mxu0 %v7445
  %7601 = vmatprep.subr.mxu0 0.0
  %7602 = vmatpush1.msra.mxu0 %v7446
  %7603 = vmatprep.subr.mxu0 0.0
  %7604 = vmatpush1.msra.mxu0 %v7447
  %7605 = vmatprep.subr.mxu0 0.0
  %7606 = vmatpush1.msra.mxu0 %v7448
  %7607 = vmatprep.subr.mxu0 0.0
  %7608 = vmatpush1.msra.mxu0 %v7449
  %7609 = vmatprep.subr.mxu0 0.0
  %7610 = vmatpush1.msra.mxu0 %v7450
  %7611 = vmatprep.subr.mxu0 0.0
  %7612 = vmatpush1.msra.mxu0 %v7451
  %7613 = vmatprep.subr.mxu0 0.0
  %7614 = vmatpush1.msra.mxu0 %v7452
  %7615 = vmatprep.subr.mxu0 0.0
  %7616 = vmatpush1.msra.mxu0 %v7453
  %7617 = vmatprep.subr.mxu0 0.0
  %7618 = vmatpush1.msra.mxu0 %v7454
  %7619 = vmatprep.subr.mxu0 0.0
  %7620 = vmatpush1.msra.mxu0 %v7455
  %7621 = vmatprep.mubr.f32.mxu0 %v7388
  %7622 = vmatmul.mubr.f32.gmra.mrb[0].mxu0 %v7384
  %v7623 = vpop.f32.mrb[0].mxu0
  %v7624 = vadd.f32 %v7539, %v7623
  %v7625 = vpop.f32.mrb[0].mxu0
  %7626 = vmatprep.mubr.f32.mxu0 %v7389
  %7627 = vmatmul.mubr.f32.gmra.mrb[0].mxu0 %v7385
  %v7628 = vpop.f32.mrb[0].mxu0
  %v7629 = vadd.f32 %v7544, %v7628
  %v7630 = vpop.f32.mrb[0].mxu0
  %7631 = vmatprep.mubr.f32.mxu0 %v7390
  %7632 = vmatmul.mubr.f32.gmra.mrb[0].mxu0 %v7386
  %v7633 = vpop.f32.mrb[0].mxu0
  %v7634 = vadd.f32 %v7549, %v7633
  %v7635 = vpop.f32.mrb[0].mxu0
  %7636 = vmatprep.mubr.f32.mxu0 %v7391
  %7637 = vmatmul.mubr.f32.gmra.mrb[0].mxu0 %v7387
  %v7638 = vpop.f32.mrb[0].mxu0
  %v7639 = vadd.f32 %v7554, %v7638
  %v7640 = vpop.f32.mrb[0].mxu0
  %7641 = vdwg.mxu0
  %7642 = vmatprep.subr.mxu0 0.0
  %7643 = vmatpush1.msra.mxu0 %v7456
  %7644 = vmatprep.subr.mxu0 0.0
  %7645 = vmatpush1.msra.mxu0 %v7457
  %7646 = vmatprep.subr.mxu0 0.0
  %7647 = vmatpush1.msra.mxu0 %v7458
  %7648 = vmatprep.subr.mxu0 0.0
  %7649 = vmatpush1.msra.mxu0 %v7459
  %7650 = vmatprep.subr.mxu0 0.0
  %7651 = vmatpush1.msra.mxu0 %v7460
  %7652 = vmatprep.subr.mxu0 0.0
  %7653 = vmatpush1.msra.mxu0 %v7461
  %7654 = vmatprep.subr.mxu0 0.0
  %7655 = vmatpush1.msra.mxu0 %v7462
  %7656 = vmatprep.subr.mxu0 0.0
  %7657 = vmatpush1.msra.mxu0 %v7463
  %7658 = vmatprep.subr.mxu0 0.0
  %7659 = vmatpush1.msra.mxu0 0.0
  %7660 = vmatprep.subr.mxu0 0.0
  %7661 = vmatpush1.msra.mxu0 0.0
  %7662 = vmatprep.subr.mxu0 0.0
  %7663 = vmatpush1.msra.mxu0 0.0
  %7664 = vmatprep.subr.mxu0 0.0
  %7665 = vmatpush1.msra.mxu0 0.0
  %7666 = vmatprep.subr.mxu0 0.0
  %7667 = vmatpush1.msra.mxu0 0.0
  %7668 = vmatprep.subr.mxu0 0.0
  %7669 = vmatpush1.msra.mxu0 0.0
  %7670 = vmatprep.subr.mxu0 0.0
  %7671 = vmatpush1.msra.mxu0 0.0
  %7672 = vmatprep.subr.mxu0 0.0
  %7673 = vmatpush1.msra.mxu0 0.0
  %7674 = vmatprep.subr.mxu0 0.0
  %7675 = vmatpush1.msra.mxu0 0.0
  %7676 = vmatprep.subr.mxu0 0.0
  %7677 = vmatpush1.msra.mxu0 0.0
  %7678 = vmatprep.subr.mxu0 0.0
  %7679 = vmatpush1.msra.mxu0 0.0
  %7680 = vmatprep.subr.mxu0 0.0
  %7681 = vmatpush1.msra.mxu0 0.0
  %7682 = vmatprep.subr.mxu0 0.0
  %7683 = vmatpush1.msra.mxu0 0.0
  %7684 = vmatprep.subr.mxu0 0.0
  %7685 = vmatpush1.msra.mxu0 0.0
  %7686 = vmatprep.subr.mxu0 0.0
  %7687 = vmatpush1.msra.mxu0 0.0
  %7688 = vmatprep.subr.mxu0 0.0
  %7689 = vmatpush1.msra.mxu0 0.0
  %7690 = vmatprep.subr.mxu0 0.0
  %7691 = vmatpush1.msra.mxu0 0.0
  %7692 = vmatprep.subr.mxu0 0.0
  %7693 = vmatpush1.msra.mxu0 0.0
  %7694 = vmatprep.subr.mxu0 0.0
  %7695 = vmatpush1.msra.mxu0 0.0
  %7696 = vmatprep.subr.mxu0 0.0
  %7697 = vmatpush1.msra.mxu0 0.0
  %7698 = vmatprep.subr.mxu0 0.0
  %7699 = vmatpush1.msra.mxu0 0.0
  %7700 = vmatprep.subr.mxu0 0.0
  %7701 = vmatpush1.msra.mxu0 0.0
  %7702 = vmatprep.subr.mxu0 0.0
  %7703 = vmatpush1.msra.mxu0 0.0
  %7704 = vmatprep.subr.mxu0 0.0
  %7705 = vmatpush1.msra.mxu0 0.0
  %7706 = vmatprep.mubr.f32.mxu0 0.0
  %7707 = vmatmul.mubr.f32.gmra.mrb[0].mxu0 %v7464
  %v7708 = vpop.f32.mrb[0].mxu0
  %v7709 = vadd.f32 %v7624, %v7708
  %v7710 = vpop.f32.mrb[0].mxu0
  %7711 = vmatprep.mubr.f32.mxu0 0.0
  %7712 = vmatmul.mubr.f32.gmra.mrb[0].mxu0 %v7466
  %v7713 = vpop.f32.mrb[0].mxu0
  %v7714 = vadd.f32 %v7629, %v7713
  %v7715 = vpop.f32.mrb[0].mxu0
  %7716 = vmatprep.mubr.f32.mxu0 0.0
  %7717 = vmatmul.mubr.f32.gmra.mrb[0].mxu0 %v7468
  %v7718 = vpop.f32.mrb[0].mxu0
  %v7719 = vadd.f32 %v7634, %v7718
  %v7720 = vpop.f32.mrb[0].mxu0
  %7721 = vmatprep.mubr.f32.mxu0 0.0
  %7722 = vmatmul.mubr.f32.gmra.mrb[0].mxu0 %v7470
  %v7723 = vpop.f32.mrb[0].mxu0
  %v7724 = vadd.f32 %v7639, %v7723
  %v7725 = vpop.f32.mrb[0].mxu0
  %7726 = vdwg.mxu0
  %v7727 = vadd.f32 %v7709, %v7714
  %v7728 = vadd.f32 %v7727, %v7719
  %v7729 = vadd.f32 %v7728, %v7724
  %v7730 = vrot.slane %v7729, 4
  %v7731 = vadd.f32 %v7729, %v7730
  %v7732 = vrot.slane %v7731, 2
  %v7733 = vadd.f32 %v7731, %v7732
  %v7734 = vrot.slane %v7733, 1
  %v7735 = vadd.f32 %v7733, %v7734
  %v7736 = vmul.f32 %v7735, 0.03125
  %v7737 = vmul.f32 %v7709, %v7709
  %v7738 = vmul.f32 %v7714, %v7714
  %v7739 = vmul.f32 %v7719, %v7719
  %v7740 = vmul.f32 %v7724, %v7724
  %v7741 = vadd.f32 %v7737, %v7738
  %v7742 = vadd.f32 %v7741, %v7739
  %v7743 = vadd.f32 %v7742, %v7740
  %v7744 = vrot.slane %v7743, 4
  %v7745 = vadd.f32 %v7743, %v7744
  %v7746 = vrot.slane %v7745, 2
  %v7747 = vadd.f32 %v7745, %v7746
  %v7748 = vrot.slane %v7747, 1
  %v7749 = vadd.f32 %v7747, %v7748
  %v7750 = vmul.f32 %v7749, 0.03125
  %v7751 = vmul.f32 %v7736, %v7736
  %v7752 = vsub.f32 %v7750, %v7751
  %v7753 = vmax.f32 %v7752, 0.0
  %v7754 = vld [vmem:[%s8] sm:$0x1]
  %v7755 = vadd.f32 %v7753, 1e-05
  %v7756 = vrsqrt.pop %v7755
  %v7757 = vmul.f32 %v7754, %v7756
  %v7758 = vld [vmem:[%s9] sm:$0x1]
  %v7759 = vmul.f32 %v7736, %v7757
  %v7760 = vsub.f32 %v7758, %v7759
  %v7762 = vlaneseq
  %v7763 = vshrl.u32 %v7762, 7
  %v7764 = vsub.s32 0, %v7763
  %v7765 = vrot.slane %v7757, %v7764
  %v7767 = vmul.f32 %v7709, %v7765
  %v7768 = vmul.f32 %v7714, %v7765
  %v7769 = vmul.f32 %v7719, %v7765
  %v7770 = vmul.f32 %v7724, %v7765
  %v7772 = vlaneseq
  %v7773 = vshrl.u32 %v7772, 7
  %v7774 = vsub.s32 0, %v7773
  %v7775 = vrot.slane %v7760, %v7774
  %v7777 = vadd.f32 %v7767, %v7775
  %v7778 = vadd.f32 %v7768, %v7775
  %v7779 = vadd.f32 %v7769, %v7775
  %v7780 = vadd.f32 %v7770, %v7775
  %v7781 = vmax.f32 %v7777, 0.0
  %v7782 = vmax.f32 %v7778, 0.0
  %v7783 = vmax.f32 %v7779, 0.0
  %v7784 = vmax.f32 %v7780, 0.0
  %v7789 = vcombine.high %v7781, %v7781
  %v7790 = vcombine.high %v7782, %v7782
  %v7791 = vcombine.high %v7783, %v7783
  %v7792 = vcombine.high %v7784, %v7784
  %7797 = vst [vmem:[#allocation5] sm:$0x3f] 0.0
  %7798 = vst [vmem:[#allocation5 + $0x8] sm:$0x3f] 0.0
  %7799 = vst [vmem:[#allocation5 + $0x10] sm:$0x3f] 0.0
  %7800 = vst [vmem:[#allocation5 + $0x18] sm:$0x3f] 0.0
  %7801 = vst [vmem:[#allocation5 + $0x20] sm:$0x3f] 0.0
  %7802 = vst [vmem:[#allocation5 + $0x28] sm:$0x3f] 0.0
  %7803 = vst [vmem:[#allocation5 + $0x30] sm:$0x3f] 0.0
  %7804 = vst [vmem:[#allocation5 + $0x38] sm:$0x3f] 0.0
  %7805 = vst [vmem:[#allocation5 + $0x40] sm:$0x3f] 0.0
  %7806 = vst [vmem:[#allocation5 + $0x48] sm:$0x3f] 0.0
  %7807 = vst [vmem:[#allocation5 + $0x50] sm:$0x3f] 0.0
  %7808 = vst [vmem:[#allocation5 + $0x58] sm:$0x3f] 0.0
  %s7809 = scalar_lea.vmem [#allocation5], 8
  %7810 = vst [vmem:[%s7809 + $0x1] sm:$0xf] %v7781
  %7811 = vst [vmem:[%s7809 + $0x9] sm:$0xf] %v7789
  %7812 = vst [vmem:[%s7809 + $0x11] sm:$0xf] %v7782
  %7813 = vst [vmem:[%s7809 + $0x19] sm:$0xf] %v7790
  %7814 = vst [vmem:[%s7809 + $0x31] sm:$0xf] %v7783
  %7815 = vst [vmem:[%s7809 + $0x39] sm:$0xf] %v7791
  %7816 = vst [vmem:[%s7809 + $0x41] sm:$0xf] %v7784
  %7817 = vst [vmem:[%s7809 + $0x49] sm:$0xf] %v7792
  %v7818 = vld [vmem:[#allocation5] sm:$0xf]
  %v7819 = vld [vmem:[#allocation5 + $0x8] sm:$0xf]
  %v7820 = vld [vmem:[#allocation5 + $0x10] sm:$0xf]
  %v7821 = vld [vmem:[#allocation5 + $0x18] sm:$0xf]
  %v7822 = vld [vmem:[#allocation5 + $0x30] sm:$0xf]
  %v7823 = vld [vmem:[#allocation5 + $0x38] sm:$0xf]
  %v7824 = vld [vmem:[#allocation5 + $0x40] sm:$0xf]
  %v7825 = vld [vmem:[#allocation5 + $0x48] sm:$0xf]
  %v7826 = vld [vmem:[#allocation5 + $0x1] sm:$0xf]
  %v7827 = vld [vmem:[#allocation5 + $0x9] sm:$0xf]
  %v7828 = vld [vmem:[#allocation5 + $0x11] sm:$0xf]
  %v7829 = vld [vmem:[#allocation5 + $0x19] sm:$0xf]
  %v7830 = vld [vmem:[#allocation5 + $0x31] sm:$0xf]
  %v7831 = vld [vmem:[#allocation5 + $0x39] sm:$0xf]
  %v7832 = vld [vmem:[#allocation5 + $0x41] sm:$0xf]
  %v7833 = vld [vmem:[#allocation5 + $0x49] sm:$0xf]
  %v7834 = vld [vmem:[#allocation5 + $0x2] sm:$0xf]
  %v7835 = vld [vmem:[#allocation5 + $0xa] sm:$0xf]
  %v7836 = vld [vmem:[#allocation5 + $0x12] sm:$0xf]
  %v7837 = vld [vmem:[#allocation5 + $0x1a] sm:$0xf]
  %v7838 = vld [vmem:[#allocation5 + $0x32] sm:$0xf]
  %v7839 = vld [vmem:[#allocation5 + $0x3a] sm:$0xf]
  %v7840 = vld [vmem:[#allocation5 + $0x42] sm:$0xf]
  %v7841 = vld [vmem:[#allocation5 + $0x4a] sm:$0xf]
  %v7842 = vld [vmem:[%s7809] sm:$0xf]
  %v7843 = vld [vmem:[%s7809 + $0x8] sm:$0xf]
  %v7844 = vld [vmem:[%s7809 + $0x10] sm:$0xf]
  %v7845 = vld [vmem:[%s7809 + $0x18] sm:$0xf]
  %v7846 = vld [vmem:[%s7809 + $0x30] sm:$0xf]
  %v7847 = vld [vmem:[%s7809 + $0x38] sm:$0xf]
  %v7848 = vld [vmem:[%s7809 + $0x40] sm:$0xf]
  %v7849 = vld [vmem:[%s7809 + $0x48] sm:$0xf]
  %v7850 = vld [vmem:[%s7809 + $0x1] sm:$0xf]
  %v7851 = vld [vmem:[%s7809 + $0x9] sm:$0xf]
  %v7852 = vld [vmem:[%s7809 + $0x11] sm:$0xf]
  %v7853 = vld [vmem:[%s7809 + $0x19] sm:$0xf]
  %v7854 = vld [vmem:[%s7809 + $0x31] sm:$0xf]
  %v7855 = vld [vmem:[%s7809 + $0x39] sm:$0xf]
  %v7856 = vld [vmem:[%s7809 + $0x41] sm:$0xf]
  %v7857 = vld [vmem:[%s7809 + $0x49] sm:$0xf]
  %v7858 = vld [vmem:[%s7809 + $0x2] sm:$0xf]
  %v7859 = vld [vmem:[%s7809 + $0xa] sm:$0xf]
  %v7860 = vld [vmem:[%s7809 + $0x12] sm:$0xf]
  %v7861 = vld [vmem:[%s7809 + $0x1a] sm:$0xf]
  %v7862 = vld [vmem:[%s7809 + $0x32] sm:$0xf]
  %v7863 = vld [vmem:[%s7809 + $0x3a] sm:$0xf]
  %v7864 = vld [vmem:[%s7809 + $0x42] sm:$0xf]
  %v7865 = vld [vmem:[%s7809 + $0x4a] sm:$0xf]
  %s7866 = scalar_lea.vmem [#allocation5], 16
  %v7867 = vld [vmem:[%s7866] sm:$0xf]
  %v7868 = vld [vmem:[%s7866 + $0x8] sm:$0xf]
  %v7869 = vld [vmem:[%s7866 + $0x10] sm:$0xf]
  %v7870 = vld [vmem:[%s7866 + $0x18] sm:$0xf]
  %v7871 = vld [vmem:[%s7866 + $0x30] sm:$0xf]
  %v7872 = vld [vmem:[%s7866 + $0x38] sm:$0xf]
  %v7873 = vld [vmem:[%s7866 + $0x40] sm:$0xf]
  %v7874 = vld [vmem:[%s7866 + $0x48] sm:$0xf]
  %v7875 = vld [vmem:[%s7866 + $0x1] sm:$0xf]
  %v7876 = vld [vmem:[%s7866 + $0x9] sm:$0xf]
  %v7877 = vld [vmem:[%s7866 + $0x11] sm:$0xf]
  %v7878 = vld [vmem:[%s7866 + $0x19] sm:$0xf]
  %v7879 = vld [vmem:[%s7866 + $0x31] sm:$0xf]
  %v7880 = vld [vmem:[%s7866 + $0x39] sm:$0xf]
  %v7881 = vld [vmem:[%s7866 + $0x41] sm:$0xf]
  %v7882 = vld [vmem:[%s7866 + $0x49] sm:$0xf]
  %v7883 = vld [vmem:[%s7866 + $0x2] sm:$0xf]
  %v7884 = vld [vmem:[%s7866 + $0xa] sm:$0xf]
  %v7885 = vld [vmem:[%s7866 + $0x12] sm:$0xf]
  %v7886 = vld [vmem:[%s7866 + $0x1a] sm:$0xf]
  %v7887 = vld [vmem:[%s7866 + $0x32] sm:$0xf]
  %v7888 = vld [vmem:[%s7866 + $0x3a] sm:$0xf]
  %v7889 = vld [vmem:[%s7866 + $0x42] sm:$0xf]
  %v7890 = vld [vmem:[%s7866 + $0x4a] sm:$0xf]
  %v7899 = vcombine.low %v7818, %v7819
  %v7900 = vcombine.low %v7820, %v7821
  %v7901 = vcombine.low %v7822, %v7823
  %v7902 = vcombine.low %v7824, %v7825
  %v7915 = vcombine.low %v7826, %v7827
  %v7916 = vcombine.low %v7828, %v7829
  %v7917 = vcombine.low %v7830, %v7831
  %v7918 = vcombine.low %v7832, %v7833
  %v7931 = vcombine.low %v7834, %v7835
  %v7932 = vcombine.low %v7836, %v7837
  %v7933 = vcombine.low %v7838, %v7839
  %v7934 = vcombine.low %v7840, %v7841
  %v7947 = vcombine.low %v7842, %v7843
  %v7948 = vcombine.low %v7844, %v7845
  %v7949 = vcombine.low %v7846, %v7847
  %v7950 = vcombine.low %v7848, %v7849
  %v7963 = vcombine.low %v7850, %v7851
  %v7964 = vcombine.low %v7852, %v7853
  %v7965 = vcombine.low %v7854, %v7855
  %v7966 = vcombine.low %v7856, %v7857
  %v7979 = vcombine.low %v7858, %v7859
  %v7980 = vcombine.low %v7860, %v7861
  %v7981 = vcombine.low %v7862, %v7863
  %v7982 = vcombine.low %v7864, %v7865
  %v7995 = vcombine.low %v7867, %v7868
  %v7996 = vcombine.low %v7869, %v7870
  %v7997 = vcombine.low %v7871, %v7872
  %v7998 = vcombine.low %v7873, %v7874
  %v8011 = vcombine.low %v7875, %v7876
  %v8012 = vcombine.low %v7877, %v7878
  %v8013 = vcombine.low %v7879, %v7880
  %v8014 = vcombine.low %v7881, %v7882
  %v8027 = vcombine.low %v7883, %v7884
  %v8028 = vcombine.low %v7885, %v7886
  %v8029 = vcombine.low %v7887, %v7888
  %v8030 = vcombine.low %v7889, %v7890
  %v8035 = vld [vmem:[%s10] sm:$0xff]
  %v8036 = vld [vmem:[%s10 + $0x8] sm:$0xff]
  %v8037 = vld [vmem:[%s10 + $0x10] sm:$0xff]
  %v8038 = vld [vmem:[%s10 + $0x18] sm:$0xff]
  %v8039 = vld [vmem:[%s10 + $0x20] sm:$0xff]
  %v8040 = vld [vmem:[%s10 + $0x28] sm:$0xff]
  %v8041 = vld [vmem:[%s10 + $0x30] sm:$0xff]
  %v8042 = vld [vmem:[%s10 + $0x38] sm:$0xff]
  %v8043 = vld [vmem:[%s10 + $0x40] sm:$0xff]
  %v8044 = vld [vmem:[%s10 + $0x48] sm:$0xff]
  %v8045 = vld [vmem:[%s10 + $0x50] sm:$0xff]
  %v8046 = vld [vmem:[%s10 + $0x58] sm:$0xff]
  %v8047 = vld [vmem:[%s10 + $0x60] sm:$0xff]
  %v8048 = vld [vmem:[%s10 + $0x68] sm:$0xff]
  %v8049 = vld [vmem:[%s10 + $0x70] sm:$0xff]
  %v8050 = vld [vmem:[%s10 + $0x78] sm:$0xff]
  %v8051 = vld [vmem:[%s10 + $0x80] sm:$0xff]
  %v8052 = vld [vmem:[%s10 + $0x88] sm:$0xff]
  %v8053 = vld [vmem:[%s10 + $0x90] sm:$0xff]
  %v8054 = vld [vmem:[%s10 + $0x98] sm:$0xff]
  %v8055 = vld [vmem:[%s10 + $0xa0] sm:$0xff]
  %v8056 = vld [vmem:[%s10 + $0xa8] sm:$0xff]
  %v8057 = vld [vmem:[%s10 + $0xb0] sm:$0xff]
  %v8058 = vld [vmem:[%s10 + $0xb8] sm:$0xff]
  %v8059 = vld [vmem:[%s10 + $0xc0] sm:$0xff]
  %v8060 = vld [vmem:[%s10 + $0xc8] sm:$0xff]
  %v8061 = vld [vmem:[%s10 + $0xd0] sm:$0xff]
  %v8062 = vld [vmem:[%s10 + $0xd8] sm:$0xff]
  %v8063 = vld [vmem:[%s10 + $0xe0] sm:$0xff]
  %v8064 = vld [vmem:[%s10 + $0xe8] sm:$0xff]
  %v8065 = vld [vmem:[%s10 + $0xf0] sm:$0xff]
  %v8066 = vld [vmem:[%s10 + $0xf8] sm:$0xff]
  %v8067 = vld [vmem:[%s10 + $0x100] sm:$0xff]
  %v8068 = vld [vmem:[%s10 + $0x108] sm:$0xff]
  %v8069 = vld [vmem:[%s10 + $0x110] sm:$0xff]
  %v8070 = vld [vmem:[%s10 + $0x118] sm:$0xff]
  %v8071 = vld [vmem:[%s10 + $0x120] sm:$0xff]
  %v8072 = vld [vmem:[%s10 + $0x128] sm:$0xff]
  %v8073 = vld [vmem:[%s10 + $0x130] sm:$0xff]
  %v8074 = vld [vmem:[%s10 + $0x138] sm:$0xff]
  %v8075 = vld [vmem:[%s10 + $0x140] sm:$0xff]
  %v8076 = vld [vmem:[%s10 + $0x148] sm:$0xff]
  %v8077 = vld [vmem:[%s10 + $0x150] sm:$0xff]
  %v8078 = vld [vmem:[%s10 + $0x158] sm:$0xff]
  %v8079 = vld [vmem:[%s10 + $0x160] sm:$0xff]
  %v8080 = vld [vmem:[%s10 + $0x168] sm:$0xff]
  %v8081 = vld [vmem:[%s10 + $0x170] sm:$0xff]
  %v8082 = vld [vmem:[%s10 + $0x178] sm:$0xff]
  %v8083 = vld [vmem:[%s10 + $0x180] sm:$0xff]
  %v8084 = vld [vmem:[%s10 + $0x188] sm:$0xff]
  %v8085 = vld [vmem:[%s10 + $0x190] sm:$0xff]
  %v8086 = vld [vmem:[%s10 + $0x198] sm:$0xff]
  %v8087 = vld [vmem:[%s10 + $0x1a0] sm:$0xff]
  %v8088 = vld [vmem:[%s10 + $0x1a8] sm:$0xff]
  %v8089 = vld [vmem:[%s10 + $0x1b0] sm:$0xff]
  %v8090 = vld [vmem:[%s10 + $0x1b8] sm:$0xff]
  %v8091 = vld [vmem:[%s10 + $0x1c0] sm:$0xff]
  %v8092 = vld [vmem:[%s10 + $0x1c8] sm:$0xff]
  %v8093 = vld [vmem:[%s10 + $0x1d0] sm:$0xff]
  %v8094 = vld [vmem:[%s10 + $0x1d8] sm:$0xff]
  %v8095 = vld [vmem:[%s10 + $0x1e0] sm:$0xff]
  %v8096 = vld [vmem:[%s10 + $0x1e8] sm:$0xff]
  %v8097 = vld [vmem:[%s10 + $0x1f0] sm:$0xff]
  %v8098 = vld [vmem:[%s10 + $0x1f8] sm:$0xff]
  %v8099 = vld [vmem:[%s10 + $0x200] sm:$0xff]
  %v8100 = vld [vmem:[%s10 + $0x208] sm:$0xff]
  %v8101 = vld [vmem:[%s10 + $0x210] sm:$0xff]
  %v8102 = vld [vmem:[%s10 + $0x218] sm:$0xff]
  %v8103 = vld [vmem:[%s10 + $0x220] sm:$0xff]
  %v8104 = vld [vmem:[%s10 + $0x228] sm:$0xff]
  %v8105 = vld [vmem:[%s10 + $0x230] sm:$0xff]
  %v8106 = vld [vmem:[%s10 + $0x238] sm:$0xff]
  %v8107 = vld [vmem:[%s10 + $0x240] sm:$0xff]
  %v8108 = vld [vmem:[%s10 + $0x248] sm:$0xff]
  %v8109 = vld [vmem:[%s10 + $0x250] sm:$0xff]
  %v8110 = vld [vmem:[%s10 + $0x258] sm:$0xff]
  %v8111 = vld [vmem:[%s10 + $0x260] sm:$0xff]
  %v8112 = vld [vmem:[%s10 + $0x268] sm:$0xff]
  %v8113 = vld [vmem:[%s10 + $0x270] sm:$0xff]
  %v8114 = vld [vmem:[%s10 + $0x278] sm:$0xff]
  %v8115 = vld [vmem:[%s10 + $0x280] sm:$0xff]
  %v8116 = vld [vmem:[%s10 + $0x288] sm:$0xff]
  %v8117 = vld [vmem:[%s10 + $0x290] sm:$0xff]
  %v8118 = vld [vmem:[%s10 + $0x298] sm:$0xff]
  %v8119 = vld [vmem:[%s10 + $0x2a0] sm:$0xff]
  %v8120 = vld [vmem:[%s10 + $0x2a8] sm:$0xff]
  %v8121 = vld [vmem:[%s10 + $0x2b0] sm:$0xff]
  %v8122 = vld [vmem:[%s10 + $0x2b8] sm:$0xff]
  %v8123 = vld [vmem:[%s10 + $0x2c0] sm:$0xff]
  %v8124 = vld [vmem:[%s10 + $0x2c8] sm:$0xff]
  %v8125 = vld [vmem:[%s10 + $0x2d0] sm:$0xff]
  %v8126 = vld [vmem:[%s10 + $0x2d8] sm:$0xff]
  %v8127 = vld [vmem:[%s10 + $0x2e0] sm:$0xff]
  %v8128 = vld [vmem:[%s10 + $0x2e8] sm:$0xff]
  %v8129 = vld [vmem:[%s10 + $0x2f0] sm:$0xff]
  %v8130 = vld [vmem:[%s10 + $0x2f8] sm:$0xff]
  %v8131 = vld [vmem:[%s10 + $0x300] sm:$0xff]
  %v8132 = vld [vmem:[%s10 + $0x308] sm:$0xff]
  %v8133 = vld [vmem:[%s10 + $0x310] sm:$0xff]
  %v8134 = vld [vmem:[%s10 + $0x318] sm:$0xff]
  %v8135 = vld [vmem:[%s10 + $0x320] sm:$0xff]
  %v8136 = vld [vmem:[%s10 + $0x328] sm:$0xff]
  %v8137 = vld [vmem:[%s10 + $0x330] sm:$0xff]
  %v8138 = vld [vmem:[%s10 + $0x338] sm:$0xff]
  %v8139 = vld [vmem:[%s10 + $0x340] sm:$0xff]
  %v8140 = vld [vmem:[%s10 + $0x348] sm:$0xff]
  %v8141 = vld [vmem:[%s10 + $0x350] sm:$0xff]
  %v8142 = vld [vmem:[%s10 + $0x358] sm:$0xff]
  %v8143 = vld [vmem:[%s10 + $0x360] sm:$0xff]
  %v8144 = vld [vmem:[%s10 + $0x368] sm:$0xff]
  %v8145 = vld [vmem:[%s10 + $0x370] sm:$0xff]
  %v8146 = vld [vmem:[%s10 + $0x378] sm:$0xff]
  %v8147 = vld [vmem:[%s10 + $0x380] sm:$0xff]
  %v8148 = vld [vmem:[%s10 + $0x388] sm:$0xff]
  %v8149 = vld [vmem:[%s10 + $0x390] sm:$0xff]
  %v8150 = vld [vmem:[%s10 + $0x398] sm:$0xff]
  %v8151 = vld [vmem:[%s10 + $0x3a0] sm:$0xff]
  %v8152 = vld [vmem:[%s10 + $0x3a8] sm:$0xff]
  %v8153 = vld [vmem:[%s10 + $0x3b0] sm:$0xff]
  %v8154 = vld [vmem:[%s10 + $0x3b8] sm:$0xff]
  %v8155 = vld [vmem:[%s10 + $0x3c0] sm:$0xff]
  %v8156 = vld [vmem:[%s10 + $0x3c8] sm:$0xff]
  %v8157 = vld [vmem:[%s10 + $0x3d0] sm:$0xff]
  %v8158 = vld [vmem:[%s10 + $0x3d8] sm:$0xff]
  %v8159 = vld [vmem:[%s10 + $0x3e0] sm:$0xff]
  %v8160 = vld [vmem:[%s10 + $0x3e8] sm:$0xff]
  %v8161 = vld [vmem:[%s10 + $0x3f0] sm:$0xff]
  %v8162 = vld [vmem:[%s10 + $0x3f8] sm:$0xff]
  %v8163 = vld [vmem:[%s10 + $0x400] sm:$0xff]
  %v8164 = vld [vmem:[%s10 + $0x408] sm:$0xff]
  %v8165 = vld [vmem:[%s10 + $0x410] sm:$0xff]
  %v8166 = vld [vmem:[%s10 + $0x418] sm:$0xff]
  %v8167 = vld [vmem:[%s10 + $0x420] sm:$0xff]
  %v8168 = vld [vmem:[%s10 + $0x428] sm:$0xff]
  %v8169 = vld [vmem:[%s10 + $0x430] sm:$0xff]
  %v8170 = vld [vmem:[%s10 + $0x438] sm:$0xff]
  %v8171 = vld [vmem:[%s10 + $0x440] sm:$0xff]
  %v8172 = vld [vmem:[%s10 + $0x448] sm:$0xff]
  %v8173 = vld [vmem:[%s10 + $0x450] sm:$0xff]
  %v8174 = vld [vmem:[%s10 + $0x458] sm:$0xff]
  %v8175 = vld [vmem:[%s10 + $0x460] sm:$0xff]
  %v8176 = vld [vmem:[%s10 + $0x468] sm:$0xff]
  %v8177 = vld [vmem:[%s10 + $0x470] sm:$0xff]
  %v8178 = vld [vmem:[%s10 + $0x478] sm:$0xff]
  %8179 = vmatprep.subr.mxu0 0.0
  %8180 = vmatpush1.msra.mxu0 %v8035
  %8181 = vmatprep.subr.mxu0 0.0
  %8182 = vmatpush1.msra.mxu0 %v8036
  %8183 = vmatprep.subr.mxu0 0.0
  %8184 = vmatpush1.msra.mxu0 %v8037
  %8185 = vmatprep.subr.mxu0 0.0
  %8186 = vmatpush1.msra.mxu0 %v8038
  %8187 = vmatprep.subr.mxu0 0.0
  %8188 = vmatpush1.msra.mxu0 %v8039
  %8189 = vmatprep.subr.mxu0 0.0
  %8190 = vmatpush1.msra.mxu0 %v8040
  %8191 = vmatprep.subr.mxu0 0.0
  %8192 = vmatpush1.msra.mxu0 %v8041
  %8193 = vmatprep.subr.mxu0 0.0
  %8194 = vmatpush1.msra.mxu0 %v8042
  %8195 = vmatprep.subr.mxu0 0.0
  %8196 = vmatpush1.msra.mxu0 %v8043
  %8197 = vmatprep.subr.mxu0 0.0
  %8198 = vmatpush1.msra.mxu0 %v8044
  %8199 = vmatprep.subr.mxu0 0.0
  %8200 = vmatpush1.msra.mxu0 %v8045
  %8201 = vmatprep.subr.mxu0 0.0
  %8202 = vmatpush1.msra.mxu0 %v8046
  %8203 = vmatprep.subr.mxu0 0.0
  %8204 = vmatpush1.msra.mxu0 %v8047
  %8205 = vmatprep.subr.mxu0 0.0
  %8206 = vmatpush1.msra.mxu0 %v8048
  %8207 = vmatprep.subr.mxu0 0.0
  %8208 = vmatpush1.msra.mxu0 %v8049
  %8209 = vmatprep.subr.mxu0 0.0
  %8210 = vmatpush1.msra.mxu0 %v8050
  %8211 = vmatprep.subr.mxu0 0.0
  %8212 = vmatpush1.msra.mxu0 %v8051
  %8213 = vmatprep.subr.mxu0 0.0
  %8214 = vmatpush1.msra.mxu0 %v8052
  %8215 = vmatprep.subr.mxu0 0.0
  %8216 = vmatpush1.msra.mxu0 %v8053
  %8217 = vmatprep.subr.mxu0 0.0
  %8218 = vmatpush1.msra.mxu0 %v8054
  %8219 = vmatprep.subr.mxu0 0.0
  %8220 = vmatpush1.msra.mxu0 %v8055
  %8221 = vmatprep.subr.mxu0 0.0
  %8222 = vmatpush1.msra.mxu0 %v8056
  %8223 = vmatprep.subr.mxu0 0.0
  %8224 = vmatpush1.msra.mxu0 %v8057
  %8225 = vmatprep.subr.mxu0 0.0
  %8226 = vmatpush1.msra.mxu0 %v8058
  %8227 = vmatprep.subr.mxu0 0.0
  %8228 = vmatpush1.msra.mxu0 %v8059
  %8229 = vmatprep.subr.mxu0 0.0
  %8230 = vmatpush1.msra.mxu0 %v8060
  %8231 = vmatprep.subr.mxu0 0.0
  %8232 = vmatpush1.msra.mxu0 %v8061
  %8233 = vmatprep.subr.mxu0 0.0
  %8234 = vmatpush1.msra.mxu0 %v8062
  %8235 = vmatprep.subr.mxu0 0.0
  %8236 = vmatpush1.msra.mxu0 %v8063
  %8237 = vmatprep.subr.mxu0 0.0
  %8238 = vmatpush1.msra.mxu0 %v8064
  %8239 = vmatprep.subr.mxu0 0.0
  %8240 = vmatpush1.msra.mxu0 %v8065
  %8241 = vmatprep.subr.mxu0 0.0
  %8242 = vmatpush1.msra.mxu0 %v8066
  %8243 = vmatprep.mubr.f32.mxu0 %v7915
  %8244 = vmatmul.mubr.f32.gmra.mrb[0].mxu0 %v7899
  %v8245 = vpop.f32.mrb[0].mxu0
  %v8246 = vadd.f32 0.0, %v8245
  %v8247 = vpop.f32.mrb[0].mxu0
  %8248 = vmatprep.mubr.f32.mxu0 %v7916
  %8249 = vmatmul.mubr.f32.gmra.mrb[0].mxu0 %v7900
  %v8250 = vpop.f32.mrb[0].mxu0
  %v8251 = vadd.f32 0.0, %v8250
  %v8252 = vpop.f32.mrb[0].mxu0
  %8253 = vmatprep.mubr.f32.mxu0 %v7917
  %8254 = vmatmul.mubr.f32.gmra.mrb[0].mxu0 %v7901
  %v8255 = vpop.f32.mrb[0].mxu0
  %v8256 = vadd.f32 0.0, %v8255
  %v8257 = vpop.f32.mrb[0].mxu0
  %8258 = vmatprep.mubr.f32.mxu0 %v7918
  %8259 = vmatmul.mubr.f32.gmra.mrb[0].mxu0 %v7902
  %v8260 = vpop.f32.mrb[0].mxu0
  %v8261 = vadd.f32 0.0, %v8260
  %v8262 = vpop.f32.mrb[0].mxu0
  %8263 = vdwg.mxu0
  %8264 = vmatprep.subr.mxu0 0.0
  %8265 = vmatpush1.msra.mxu0 %v8067
  %8266 = vmatprep.subr.mxu0 0.0
  %8267 = vmatpush1.msra.mxu0 %v8068
  %8268 = vmatprep.subr.mxu0 0.0
  %8269 = vmatpush1.msra.mxu0 %v8069
  %8270 = vmatprep.subr.mxu0 0.0
  %8271 = vmatpush1.msra.mxu0 %v8070
  %8272 = vmatprep.subr.mxu0 0.0
  %8273 = vmatpush1.msra.mxu0 %v8071
  %8274 = vmatprep.subr.mxu0 0.0
  %8275 = vmatpush1.msra.mxu0 %v8072
  %8276 = vmatprep.subr.mxu0 0.0
  %8277 = vmatpush1.msra.mxu0 %v8073
  %8278 = vmatprep.subr.mxu0 0.0
  %8279 = vmatpush1.msra.mxu0 %v8074
  %8280 = vmatprep.subr.mxu0 0.0
  %8281 = vmatpush1.msra.mxu0 %v8075
  %8282 = vmatprep.subr.mxu0 0.0
  %8283 = vmatpush1.msra.mxu0 %v8076
  %8284 = vmatprep.subr.mxu0 0.0
  %8285 = vmatpush1.msra.mxu0 %v8077
  %8286 = vmatprep.subr.mxu0 0.0
  %8287 = vmatpush1.msra.mxu0 %v8078
  %8288 = vmatprep.subr.mxu0 0.0
  %8289 = vmatpush1.msra.mxu0 %v8079
  %8290 = vmatprep.subr.mxu0 0.0
  %8291 = vmatpush1.msra.mxu0 %v8080
  %8292 = vmatprep.subr.mxu0 0.0
  %8293 = vmatpush1.msra.mxu0 %v8081
  %8294 = vmatprep.subr.mxu0 0.0
  %8295 = vmatpush1.msra.mxu0 %v8082
  %8296 = vmatprep.subr.mxu0 0.0
  %8297 = vmatpush1.msra.mxu0 %v8083
  %8298 = vmatprep.subr.mxu0 0.0
  %8299 = vmatpush1.msra.mxu0 %v8084
  %8300 = vmatprep.subr.mxu0 0.0
  %8301 = vmatpush1.msra.mxu0 %v8085
  %8302 = vmatprep.subr.mxu0 0.0
  %8303 = vmatpush1.msra.mxu0 %v8086
  %8304 = vmatprep.subr.mxu0 0.0
  %8305 = vmatpush1.msra.mxu0 %v8087
  %8306 = vmatprep.subr.mxu0 0.0
  %8307 = vmatpush1.msra.mxu0 %v8088
  %8308 = vmatprep.subr.mxu0 0.0
  %8309 = vmatpush1.msra.mxu0 %v8089
  %8310 = vmatprep.subr.mxu0 0.0
  %8311 = vmatpush1.msra.mxu0 %v8090
  %8312 = vmatprep.subr.mxu0 0.0
  %8313 = vmatpush1.msra.mxu0 %v8091
  %8314 = vmatprep.subr.mxu0 0.0
  %8315 = vmatpush1.msra.mxu0 %v8092
  %8316 = vmatprep.subr.mxu0 0.0
  %8317 = vmatpush1.msra.mxu0 %v8093
  %8318 = vmatprep.subr.mxu0 0.0
  %8319 = vmatpush1.msra.mxu0 %v8094
  %8320 = vmatprep.subr.mxu0 0.0
  %8321 = vmatpush1.msra.mxu0 %v8095
  %8322 = vmatprep.subr.mxu0 0.0
  %8323 = vmatpush1.msra.mxu0 %v8096
  %8324 = vmatprep.subr.mxu0 0.0
  %8325 = vmatpush1.msra.mxu0 %v8097
  %8326 = vmatprep.subr.mxu0 0.0
  %8327 = vmatpush1.msra.mxu0 %v8098
  %8328 = vmatprep.mubr.f32.mxu0 %v7947
  %8329 = vmatmul.mubr.f32.gmra.mrb[0].mxu0 %v7931
  %v8330 = vpop.f32.mrb[0].mxu0
  %v8331 = vadd.f32 %v8246, %v8330
  %v8332 = vpop.f32.mrb[0].mxu0
  %8333 = vmatprep.mubr.f32.mxu0 %v7948
  %8334 = vmatmul.mubr.f32.gmra.mrb[0].mxu0 %v7932
  %v8335 = vpop.f32.mrb[0].mxu0
  %v8336 = vadd.f32 %v8251, %v8335
  %v8337 = vpop.f32.mrb[0].mxu0
  %8338 = vmatprep.mubr.f32.mxu0 %v7949
  %8339 = vmatmul.mubr.f32.gmra.mrb[0].mxu0 %v7933
  %v8340 = vpop.f32.mrb[0].mxu0
  %v8341 = vadd.f32 %v8256, %v8340
  %v8342 = vpop.f32.mrb[0].mxu0
  %8343 = vmatprep.mubr.f32.mxu0 %v7950
  %8344 = vmatmul.mubr.f32.gmra.mrb[0].mxu0 %v7934
  %v8345 = vpop.f32.mrb[0].mxu0
  %v8346 = vadd.f32 %v8261, %v8345
  %v8347 = vpop.f32.mrb[0].mxu0
  %8348 = vdwg.mxu0
  %8349 = vmatprep.subr.mxu0 0.0
  %8350 = vmatpush1.msra.mxu0 %v8099
  %8351 = vmatprep.subr.mxu0 0.0
  %8352 = vmatpush1.msra.mxu0 %v8100
  %8353 = vmatprep.subr.mxu0 0.0
  %8354 = vmatpush1.msra.mxu0 %v8101
  %8355 = vmatprep.subr.mxu0 0.0
  %8356 = vmatpush1.msra.mxu0 %v8102
  %8357 = vmatprep.subr.mxu0 0.0
  %8358 = vmatpush1.msra.mxu0 %v8103
  %8359 = vmatprep.subr.mxu0 0.0
  %8360 = vmatpush1.msra.mxu0 %v8104
  %8361 = vmatprep.subr.mxu0 0.0
  %8362 = vmatpush1.msra.mxu0 %v8105
  %8363 = vmatprep.subr.mxu0 0.0
  %8364 = vmatpush1.msra.mxu0 %v8106
  %8365 = vmatprep.subr.mxu0 0.0
  %8366 = vmatpush1.msra.mxu0 %v8107
  %8367 = vmatprep.subr.mxu0 0.0
  %8368 = vmatpush1.msra.mxu0 %v8108
  %8369 = vmatprep.subr.mxu0 0.0
  %8370 = vmatpush1.msra.mxu0 %v8109
  %8371 = vmatprep.subr.mxu0 0.0
  %8372 = vmatpush1.msra.mxu0 %v8110
  %8373 = vmatprep.subr.mxu0 0.0
  %8374 = vmatpush1.msra.mxu0 %v8111
  %8375 = vmatprep.subr.mxu0 0.0
  %8376 = vmatpush1.msra.mxu0 %v8112
  %8377 = vmatprep.subr.mxu0 0.0
  %8378 = vmatpush1.msra.mxu0 %v8113
  %8379 = vmatprep.subr.mxu0 0.0
  %8380 = vmatpush1.msra.mxu0 %v8114
  %8381 = vmatprep.subr.mxu0 0.0
  %8382 = vmatpush1.msra.mxu0 %v8115
  %8383 = vmatprep.subr.mxu0 0.0
  %8384 = vmatpush1.msra.mxu0 %v8116
  %8385 = vmatprep.subr.mxu0 0.0
  %8386 = vmatpush1.msra.mxu0 %v8117
  %8387 = vmatprep.subr.mxu0 0.0
  %8388 = vmatpush1.msra.mxu0 %v8118
  %8389 = vmatprep.subr.mxu0 0.0
  %8390 = vmatpush1.msra.mxu0 %v8119
  %8391 = vmatprep.subr.mxu0 0.0
  %8392 = vmatpush1.msra.mxu0 %v8120
  %8393 = vmatprep.subr.mxu0 0.0
  %8394 = vmatpush1.msra.mxu0 %v8121
  %8395 = vmatprep.subr.mxu0 0.0
  %8396 = vmatpush1.msra.mxu0 %v8122
  %8397 = vmatprep.subr.mxu0 0.0
  %8398 = vmatpush1.msra.mxu0 %v8123
  %8399 = vmatprep.subr.mxu0 0.0
  %8400 = vmatpush1.msra.mxu0 %v8124
  %8401 = vmatprep.subr.mxu0 0.0
  %8402 = vmatpush1.msra.mxu0 %v8125
  %8403 = vmatprep.subr.mxu0 0.0
  %8404 = vmatpush1.msra.mxu0 %v8126
  %8405 = vmatprep.subr.mxu0 0.0
  %8406 = vmatpush1.msra.mxu0 %v8127
  %8407 = vmatprep.subr.mxu0 0.0
  %8408 = vmatpush1.msra.mxu0 %v8128
  %8409 = vmatprep.subr.mxu0 0.0
  %8410 = vmatpush1.msra.mxu0 %v8129
  %8411 = vmatprep.subr.mxu0 0.0
  %8412 = vmatpush1.msra.mxu0 %v8130
  %8413 = vmatprep.mubr.f32.mxu0 %v7979
  %8414 = vmatmul.mubr.f32.gmra.mrb[0].mxu0 %v7963
  %v8415 = vpop.f32.mrb[0].mxu0
  %v8416 = vadd.f32 %v8331, %v8415
  %v8417 = vpop.f32.mrb[0].mxu0
  %8418 = vmatprep.mubr.f32.mxu0 %v7980
  %8419 = vmatmul.mubr.f32.gmra.mrb[0].mxu0 %v7964
  %v8420 = vpop.f32.mrb[0].mxu0
  %v8421 = vadd.f32 %v8336, %v8420
  %v8422 = vpop.f32.mrb[0].mxu0
  %8423 = vmatprep.mubr.f32.mxu0 %v7981
  %8424 = vmatmul.mubr.f32.gmra.mrb[0].mxu0 %v7965
  %v8425 = vpop.f32.mrb[0].mxu0
  %v8426 = vadd.f32 %v8341, %v8425
  %v8427 = vpop.f32.mrb[0].mxu0
  %8428 = vmatprep.mubr.f32.mxu0 %v7982
  %8429 = vmatmul.mubr.f32.gmra.mrb[0].mxu0 %v7966
  %v8430 = vpop.f32.mrb[0].mxu0
  %v8431 = vadd.f32 %v8346, %v8430
  %v8432 = vpop.f32.mrb[0].mxu0
  %8433 = vdwg.mxu0
  %8434 = vmatprep.subr.mxu0 0.0
  %8435 = vmatpush1.msra.mxu0 %v8131
  %8436 = vmatprep.subr.mxu0 0.0
  %8437 = vmatpush1.msra.mxu0 %v8132
  %8438 = vmatprep.subr.mxu0 0.0
  %8439 = vmatpush1.msra.mxu0 %v8133
  %8440 = vmatprep.subr.mxu0 0.0
  %8441 = vmatpush1.msra.mxu0 %v8134
  %8442 = vmatprep.subr.mxu0 0.0
  %8443 = vmatpush1.msra.mxu0 %v8135
  %8444 = vmatprep.subr.mxu0 0.0
  %8445 = vmatpush1.msra.mxu0 %v8136
  %8446 = vmatprep.subr.mxu0 0.0
  %8447 = vmatpush1.msra.mxu0 %v8137
  %8448 = vmatprep.subr.mxu0 0.0
  %8449 = vmatpush1.msra.mxu0 %v8138
  %8450 = vmatprep.subr.mxu0 0.0
  %8451 = vmatpush1.msra.mxu0 %v8139
  %8452 = vmatprep.subr.mxu0 0.0
  %8453 = vmatpush1.msra.mxu0 %v8140
  %8454 = vmatprep.subr.mxu0 0.0
  %8455 = vmatpush1.msra.mxu0 %v8141
  %8456 = vmatprep.subr.mxu0 0.0
  %8457 = vmatpush1.msra.mxu0 %v8142
  %8458 = vmatprep.subr.mxu0 0.0
  %8459 = vmatpush1.msra.mxu0 %v8143
  %8460 = vmatprep.subr.mxu0 0.0
  %8461 = vmatpush1.msra.mxu0 %v8144
  %8462 = vmatprep.subr.mxu0 0.0
  %8463 = vmatpush1.msra.mxu0 %v8145
  %8464 = vmatprep.subr.mxu0 0.0
  %8465 = vmatpush1.msra.mxu0 %v8146
  %8466 = vmatprep.subr.mxu0 0.0
  %8467 = vmatpush1.msra.mxu0 %v8147
  %8468 = vmatprep.subr.mxu0 0.0
  %8469 = vmatpush1.msra.mxu0 %v8148
  %8470 = vmatprep.subr.mxu0 0.0
  %8471 = vmatpush1.msra.mxu0 %v8149
  %8472 = vmatprep.subr.mxu0 0.0
  %8473 = vmatpush1.msra.mxu0 %v8150
  %8474 = vmatprep.subr.mxu0 0.0
  %8475 = vmatpush1.msra.mxu0 %v8151
  %8476 = vmatprep.subr.mxu0 0.0
  %8477 = vmatpush1.msra.mxu0 %v8152
  %8478 = vmatprep.subr.mxu0 0.0
  %8479 = vmatpush1.msra.mxu0 %v8153
  %8480 = vmatprep.subr.mxu0 0.0
  %8481 = vmatpush1.msra.mxu0 %v8154
  %8482 = vmatprep.subr.mxu0 0.0
  %8483 = vmatpush1.msra.mxu0 %v8155
  %8484 = vmatprep.subr.mxu0 0.0
  %8485 = vmatpush1.msra.mxu0 %v8156
  %8486 = vmatprep.subr.mxu0 0.0
  %8487 = vmatpush1.msra.mxu0 %v8157
  %8488 = vmatprep.subr.mxu0 0.0
  %8489 = vmatpush1.msra.mxu0 %v8158
  %8490 = vmatprep.subr.mxu0 0.0
  %8491 = vmatpush1.msra.mxu0 %v8159
  %8492 = vmatprep.subr.mxu0 0.0
  %8493 = vmatpush1.msra.mxu0 %v8160
  %8494 = vmatprep.subr.mxu0 0.0
  %8495 = vmatpush1.msra.mxu0 %v8161
  %8496 = vmatprep.subr.mxu0 0.0
  %8497 = vmatpush1.msra.mxu0 %v8162
  %8498 = vmatprep.mubr.f32.mxu0 %v8011
  %8499 = vmatmul.mubr.f32.gmra.mrb[0].mxu0 %v7995
  %v8500 = vpop.f32.mrb[0].mxu0
  %v8501 = vadd.f32 %v8416, %v8500
  %v8502 = vpop.f32.mrb[0].mxu0
  %8503 = vmatprep.mubr.f32.mxu0 %v8012
  %8504 = vmatmul.mubr.f32.gmra.mrb[0].mxu0 %v7996
  %v8505 = vpop.f32.mrb[0].mxu0
  %v8506 = vadd.f32 %v8421, %v8505
  %v8507 = vpop.f32.mrb[0].mxu0
  %8508 = vmatprep.mubr.f32.mxu0 %v8013
  %8509 = vmatmul.mubr.f32.gmra.mrb[0].mxu0 %v7997
  %v8510 = vpop.f32.mrb[0].mxu0
  %v8511 = vadd.f32 %v8426, %v8510
  %v8512 = vpop.f32.mrb[0].mxu0
  %8513 = vmatprep.mubr.f32.mxu0 %v8014
  %8514 = vmatmul.mubr.f32.gmra.mrb[0].mxu0 %v7998
  %v8515 = vpop.f32.mrb[0].mxu0
  %v8516 = vadd.f32 %v8431, %v8515
  %v8517 = vpop.f32.mrb[0].mxu0
  %8518 = vdwg.mxu0
  %8519 = vmatprep.subr.mxu0 0.0
  %8520 = vmatpush1.msra.mxu0 %v8163
  %8521 = vmatprep.subr.mxu0 0.0
  %8522 = vmatpush1.msra.mxu0 %v8164
  %8523 = vmatprep.subr.mxu0 0.0
  %8524 = vmatpush1.msra.mxu0 %v8165
  %8525 = vmatprep.subr.mxu0 0.0
  %8526 = vmatpush1.msra.mxu0 %v8166
  %8527 = vmatprep.subr.mxu0 0.0
  %8528 = vmatpush1.msra.mxu0 %v8167
  %8529 = vmatprep.subr.mxu0 0.0
  %8530 = vmatpush1.msra.mxu0 %v8168
  %8531 = vmatprep.subr.mxu0 0.0
  %8532 = vmatpush1.msra.mxu0 %v8169
  %8533 = vmatprep.subr.mxu0 0.0
  %8534 = vmatpush1.msra.mxu0 %v8170
  %8535 = vmatprep.subr.mxu0 0.0
  %8536 = vmatpush1.msra.mxu0 %v8171
  %8537 = vmatprep.subr.mxu0 0.0
  %8538 = vmatpush1.msra.mxu0 %v8172
  %8539 = vmatprep.subr.mxu0 0.0
  %8540 = vmatpush1.msra.mxu0 %v8173
  %8541 = vmatprep.subr.mxu0 0.0
  %8542 = vmatpush1.msra.mxu0 %v8174
  %8543 = vmatprep.subr.mxu0 0.0
  %8544 = vmatpush1.msra.mxu0 %v8175
  %8545 = vmatprep.subr.mxu0 0.0
  %8546 = vmatpush1.msra.mxu0 %v8176
  %8547 = vmatprep.subr.mxu0 0.0
  %8548 = vmatpush1.msra.mxu0 %v8177
  %8549 = vmatprep.subr.mxu0 0.0
  %8550 = vmatpush1.msra.mxu0 %v8178
  %8551 = vmatprep.subr.mxu0 0.0
  %8552 = vmatpush1.msra.mxu0 0.0
  %8553 = vmatprep.subr.mxu0 0.0
  %8554 = vmatpush1.msra.mxu0 0.0
  %8555 = vmatprep.subr.mxu0 0.0
  %8556 = vmatpush1.msra.mxu0 0.0
  %8557 = vmatprep.subr.mxu0 0.0
  %8558 = vmatpush1.msra.mxu0 0.0
  %8559 = vmatprep.subr.mxu0 0.0
  %8560 = vmatpush1.msra.mxu0 0.0
  %8561 = vmatprep.subr.mxu0 0.0
  %8562 = vmatpush1.msra.mxu0 0.0
  %8563 = vmatprep.subr.mxu0 0.0
  %8564 = vmatpush1.msra.mxu0 0.0
  %8565 = vmatprep.subr.mxu0 0.0
  %8566 = vmatpush1.msra.mxu0 0.0
  %8567 = vmatprep.subr.mxu0 0.0
  %8568 = vmatpush1.msra.mxu0 0.0
  %8569 = vmatprep.subr.mxu0 0.0
  %8570 = vmatpush1.msra.mxu0 0.0
  %8571 = vmatprep.subr.mxu0 0.0
  %8572 = vmatpush1.msra.mxu0 0.0
  %8573 = vmatprep.subr.mxu0 0.0
  %8574 = vmatpush1.msra.mxu0 0.0
  %8575 = vmatprep.subr.mxu0 0.0
  %8576 = vmatpush1.msra.mxu0 0.0
  %8577 = vmatprep.subr.mxu0 0.0
  %8578 = vmatpush1.msra.mxu0 0.0
  %8579 = vmatprep.subr.mxu0 0.0
  %8580 = vmatpush1.msra.mxu0 0.0
  %8581 = vmatprep.subr.mxu0 0.0
  %8582 = vmatpush1.msra.mxu0 0.0
  %8583 = vmatprep.mubr.f32.mxu0 0.0
  %8584 = vmatmul.mubr.f32.gmra.mrb[0].mxu0 %v8027
  %v8585 = vpop.f32.mrb[0].mxu0
  %v8586 = vadd.f32 %v8501, %v8585
  %v8587 = vpop.f32.mrb[0].mxu0
  %8588 = vmatprep.mubr.f32.mxu0 0.0
  %8589 = vmatmul.mubr.f32.gmra.mrb[0].mxu0 %v8028
  %v8590 = vpop.f32.mrb[0].mxu0
  %v8591 = vadd.f32 %v8506, %v8590
  %v8592 = vpop.f32.mrb[0].mxu0
  %8593 = vmatprep.mubr.f32.mxu0 0.0
  %8594 = vmatmul.mubr.f32.gmra.mrb[0].mxu0 %v8029
  %v8595 = vpop.f32.mrb[0].mxu0
  %v8596 = vadd.f32 %v8511, %v8595
  %v8597 = vpop.f32.mrb[0].mxu0
  %8598 = vmatprep.mubr.f32.mxu0 0.0
  %8599 = vmatmul.mubr.f32.gmra.mrb[0].mxu0 %v8030
  %v8600 = vpop.f32.mrb[0].mxu0
  %v8601 = vadd.f32 %v8516, %v8600
  %v8602 = vpop.f32.mrb[0].mxu0
  %8603 = vdwg.mxu0
  %v8604 = vsel %vm6230, %v8586, 0.0
  %v8605 = vsel %vm6230, %v8591, 0.0
  %v8606 = vadd.f32 %v8604, %v8605
  %v8607 = vsel %vm6230, %v8596, 0.0
  %v8608 = vadd.f32 %v8606, %v8607
  %v8609 = vsel %vm6230, %v8601, 0.0
  %v8610 = vadd.f32 %v8608, %v8609
  %v8611 = vrot.slane %v8610, 4
  %v8612 = vadd.f32 %v8610, %v8611
  %v8613 = vrot.slane %v8612, 2
  %v8614 = vadd.f32 %v8612, %v8613
  %v8615 = vrot.slane %v8614, 1
  %v8616 = vadd.f32 %v8614, %v8615
  %v8617 = vmul.f32 %v8616, 0.03125
  %v8618 = vmul.f32 %v8586, %v8586
  %v8619 = vmul.f32 %v8591, %v8591
  %v8620 = vmul.f32 %v8596, %v8596
  %v8621 = vmul.f32 %v8601, %v8601
  %v8622 = vsel %vm6230, %v8618, 0.0
  %v8623 = vsel %vm6230, %v8619, 0.0
  %v8624 = vadd.f32 %v8622, %v8623
  %v8625 = vsel %vm6230, %v8620, 0.0
  %v8626 = vadd.f32 %v8624, %v8625
  %v8627 = vsel %vm6230, %v8621, 0.0
  %v8628 = vadd.f32 %v8626, %v8627
  %v8629 = vrot.slane %v8628, 4
  %v8630 = vadd.f32 %v8628, %v8629
  %v8631 = vrot.slane %v8630, 2
  %v8632 = vadd.f32 %v8630, %v8631
  %v8633 = vrot.slane %v8632, 1
  %v8634 = vadd.f32 %v8632, %v8633
  %v8635 = vmul.f32 %v8634, 0.03125
  %v8636 = vmul.f32 %v8617, %v8617
  %v8637 = vsub.f32 %v8635, %v8636
  %v8638 = vmax.f32 %v8637, 0.0
  %v8639 = vld [vmem:[%s11] sm:$0x1]
  %v8640 = vadd.f32 %v8638, 1e-05
  %v8641 = vrsqrt.pop %v8640
  %v8642 = vmul.f32 %v8639, %v8641
  %v8643 = vld [vmem:[%s12] sm:$0x1]
  %v8644 = vmul.f32 %v8617, %v8642
  %v8645 = vsub.f32 %v8643, %v8644
  %v8647 = vlaneseq
  %v8648 = vshrl.u32 %v8647, 7
  %v8649 = vsub.s32 0, %v8648
  %v8650 = vrot.slane %v8642, %v8649
  %v8652 = vmul.f32 %v8586, %v8650
  %v8653 = vmul.f32 %v8591, %v8650
  %v8654 = vmul.f32 %v8596, %v8650
  %v8655 = vmul.f32 %v8601, %v8650
  %v8657 = vlaneseq
  %v8658 = vshrl.u32 %v8657, 7
  %v8659 = vsub.s32 0, %v8658
  %v8660 = vrot.slane %v8645, %v8659
  %v8662 = vadd.f32 %v8652, %v8660
  %v8663 = vadd.f32 %v8653, %v8660
  %v8664 = vadd.f32 %v8654, %v8660
  %v8665 = vadd.f32 %v8655, %v8660
  %v8666 = vmax.f32 %v8662, 0.0
  %v8667 = vmax.f32 %v8663, 0.0
  %v8668 = vmax.f32 %v8664, 0.0
  %v8669 = vmax.f32 %v8665, 0.0
  %v8674 = vcombine.high %v8666, %v8666
  %v8675 = vcombine.high %v8667, %v8667
  %v8676 = vcombine.high %v8668, %v8668
  %v8677 = vcombine.high %v8669, %v8669
  %8682 = vst.msk [vmem:[#allocation6] sm:$0x3f] %vm7108, 0.0
  %8683 = vst.msk [vmem:[#allocation6 + $0x8] sm:$0x3f] %vm7108, 0.0
  %8684 = vst.msk [vmem:[#allocation6 + $0x10] sm:$0x3f] %vm7108, 0.0
  %8685 = vst.msk [vmem:[#allocation6 + $0x18] sm:$0x3f] %vm7108, 0.0
  %8686 = vst.msk [vmem:[#allocation6 + $0x20] sm:$0x3f] %vm7108, 0.0
  %8687 = vst.msk [vmem:[#allocation6 + $0x28] sm:$0x3f] %vm7108, 0.0
  %8688 = vst.msk [vmem:[#allocation6 + $0x30] sm:$0x3f] %vm7108, 0.0
  %8689 = vst.msk [vmem:[#allocation6 + $0x38] sm:$0x3f] %vm7108, 0.0
  %8690 = vst.msk [vmem:[#allocation6 + $0x40] sm:$0x3f] %vm7108, 0.0
  %8691 = vst.msk [vmem:[#allocation6 + $0x48] sm:$0x3f] %vm7108, 0.0
  %8692 = vst.msk [vmem:[#allocation6 + $0x50] sm:$0x3f] %vm7108, 0.0
  %8693 = vst.msk [vmem:[#allocation6 + $0x58] sm:$0x3f] %vm7108, 0.0
  %s8694 = scalar_lea.vmem [#allocation6], 8
  %8695 = vst.msk [vmem:[%s8694 + $0x1] sm:$0xf] %vm7122, %v8666
  %8696 = vst.msk [vmem:[%s8694 + $0x9] sm:$0xf] %vm7122, %v8674
  %8697 = vst.msk [vmem:[%s8694 + $0x11] sm:$0xf] %vm7122, %v8667
  %8698 = vst.msk [vmem:[%s8694 + $0x19] sm:$0xf] %vm7122, %v8675
  %8699 = vst.msk [vmem:[%s8694 + $0x31] sm:$0xf] %vm7122, %v8668
  %8700 = vst.msk [vmem:[%s8694 + $0x39] sm:$0xf] %vm7122, %v8676
  %8701 = vst.msk [vmem:[%s8694 + $0x41] sm:$0xf] %vm7122, %v8669
  %8702 = vst.msk [vmem:[%s8694 + $0x49] sm:$0xf] %vm7122, %v8677
  %v8703 = vld [vmem:[#allocation6] sm:$0xf]
  %v8704 = vld [vmem:[#allocation6 + $0x8] sm:$0xf]
  %v8705 = vld [vmem:[#allocation6 + $0x10] sm:$0xf]
  %v8706 = vld [vmem:[#allocation6 + $0x18] sm:$0xf]
  %v8707 = vld [vmem:[#allocation6 + $0x30] sm:$0xf]
  %v8708 = vld [vmem:[#allocation6 + $0x38] sm:$0xf]
  %v8709 = vld [vmem:[#allocation6 + $0x40] sm:$0xf]
  %v8710 = vld [vmem:[#allocation6 + $0x48] sm:$0xf]
  %v8711 = vld [vmem:[#allocation6 + $0x1] sm:$0xf]
  %v8712 = vld [vmem:[#allocation6 + $0x9] sm:$0xf]
  %v8713 = vld [vmem:[#allocation6 + $0x11] sm:$0xf]
  %v8714 = vld [vmem:[#allocation6 + $0x19] sm:$0xf]
  %v8715 = vld [vmem:[#allocation6 + $0x31] sm:$0xf]
  %v8716 = vld [vmem:[#allocation6 + $0x39] sm:$0xf]
  %v8717 = vld [vmem:[#allocation6 + $0x41] sm:$0xf]
  %v8718 = vld [vmem:[#allocation6 + $0x49] sm:$0xf]
  %v8719 = vld [vmem:[#allocation6 + $0x2] sm:$0xf]
  %v8720 = vld [vmem:[#allocation6 + $0xa] sm:$0xf]
  %v8721 = vld [vmem:[#allocation6 + $0x12] sm:$0xf]
  %v8722 = vld [vmem:[#allocation6 + $0x1a] sm:$0xf]
  %v8723 = vld [vmem:[#allocation6 + $0x32] sm:$0xf]
  %v8724 = vld [vmem:[#allocation6 + $0x3a] sm:$0xf]
  %v8725 = vld [vmem:[#allocation6 + $0x42] sm:$0xf]
  %v8726 = vld [vmem:[#allocation6 + $0x4a] sm:$0xf]
  %v8727 = vld [vmem:[%s8694] sm:$0xf]
  %v8728 = vld [vmem:[%s8694 + $0x8] sm:$0xf]
  %v8729 = vld [vmem:[%s8694 + $0x10] sm:$0xf]
  %v8730 = vld [vmem:[%s8694 + $0x18] sm:$0xf]
  %v8731 = vld [vmem:[%s8694 + $0x30] sm:$0xf]
  %v8732 = vld [vmem:[%s8694 + $0x38] sm:$0xf]
  %v8733 = vld [vmem:[%s8694 + $0x40] sm:$0xf]
  %v8734 = vld [vmem:[%s8694 + $0x48] sm:$0xf]
  %v8735 = vld [vmem:[%s8694 + $0x1] sm:$0xf]
  %v8736 = vld [vmem:[%s8694 + $0x9] sm:$0xf]
  %v8737 = vld [vmem:[%s8694 + $0x11] sm:$0xf]
  %v8738 = vld [vmem:[%s8694 + $0x19] sm:$0xf]
  %v8739 = vld [vmem:[%s8694 + $0x31] sm:$0xf]
  %v8740 = vld [vmem:[%s8694 + $0x39] sm:$0xf]
  %v8741 = vld [vmem:[%s8694 + $0x41] sm:$0xf]
  %v8742 = vld [vmem:[%s8694 + $0x49] sm:$0xf]
  %v8743 = vld [vmem:[%s8694 + $0x2] sm:$0xf]
  %v8744 = vld [vmem:[%s8694 + $0xa] sm:$0xf]
  %v8745 = vld [vmem:[%s8694 + $0x12] sm:$0xf]
  %v8746 = vld [vmem:[%s8694 + $0x1a] sm:$0xf]
  %v8747 = vld [vmem:[%s8694 + $0x32] sm:$0xf]
  %v8748 = vld [vmem:[%s8694 + $0x3a] sm:$0xf]
  %v8749 = vld [vmem:[%s8694 + $0x42] sm:$0xf]
  %v8750 = vld [vmem:[%s8694 + $0x4a] sm:$0xf]
  %s8751 = scalar_lea.vmem [#allocation6], 16
  %v8752 = vld [vmem:[%s8751] sm:$0xf]
  %v8753 = vld [vmem:[%s8751 + $0x8] sm:$0xf]
  %v8754 = vld [vmem:[%s8751 + $0x10] sm:$0xf]
  %v8755 = vld [vmem:[%s8751 + $0x18] sm:$0xf]
  %v8756 = vld [vmem:[%s8751 + $0x30] sm:$0xf]
  %v8757 = vld [vmem:[%s8751 + $0x38] sm:$0xf]
  %v8758 = vld [vmem:[%s8751 + $0x40] sm:$0xf]
  %v8759 = vld [vmem:[%s8751 + $0x48] sm:$0xf]
  %v8760 = vld [vmem:[%s8751 + $0x1] sm:$0xf]
  %v8761 = vld [vmem:[%s8751 + $0x9] sm:$0xf]
  %v8762 = vld [vmem:[%s8751 + $0x11] sm:$0xf]
  %v8763 = vld [vmem:[%s8751 + $0x19] sm:$0xf]
  %v8764 = vld [vmem:[%s8751 + $0x31] sm:$0xf]
  %v8765 = vld [vmem:[%s8751 + $0x39] sm:$0xf]
  %v8766 = vld [vmem:[%s8751 + $0x41] sm:$0xf]
  %v8767 = vld [vmem:[%s8751 + $0x49] sm:$0xf]
  %v8768 = vld [vmem:[%s8751 + $0x2] sm:$0xf]
  %v8769 = vld [vmem:[%s8751 + $0xa] sm:$0xf]
  %v8770 = vld [vmem:[%s8751 + $0x12] sm:$0xf]
  %v8771 = vld [vmem:[%s8751 + $0x1a] sm:$0xf]
  %v8772 = vld [vmem:[%s8751 + $0x32] sm:$0xf]
  %v8773 = vld [vmem:[%s8751 + $0x3a] sm:$0xf]
  %v8774 = vld [vmem:[%s8751 + $0x42] sm:$0xf]
  %v8775 = vld [vmem:[%s8751 + $0x4a] sm:$0xf]
  %v8784 = vcombine.low %v8703, %v8704
  %v8785 = vcombine.low %v8705, %v8706
  %v8786 = vcombine.low %v8707, %v8708
  %v8787 = vcombine.low %v8709, %v8710
  %v8800 = vcombine.low %v8711, %v8712
  %v8801 = vcombine.low %v8713, %v8714
  %v8802 = vcombine.low %v8715, %v8716
  %v8803 = vcombine.low %v8717, %v8718
  %8804 = vrot.lane.b32.xlu0 %v8800, 64
  %v8805 = vpop.permute.xlu0 %8804
  %8806 = vrot.lane.b32.xlu0 %v8801, 64
  %v8807 = vpop.permute.xlu0 %8806
  %8808 = vrot.lane.b32.xlu0 %v8802, 64
  %v8809 = vpop.permute.xlu0 %8808
  %8810 = vrot.lane.b32.xlu0 %v8803, 64
  %v8811 = vpop.permute.xlu0 %8810
  %v8824 = vcombine.low %v8719, %v8720
  %v8825 = vcombine.low %v8721, %v8722
  %v8826 = vcombine.low %v8723, %v8724
  %v8827 = vcombine.low %v8725, %v8726
  %v8840 = vcombine.low %v8727, %v8728
  %v8841 = vcombine.low %v8729, %v8730
  %v8842 = vcombine.low %v8731, %v8732
  %v8843 = vcombine.low %v8733, %v8734
  %8844 = vrot.lane.b32.xlu0 %v8840, 64
  %v8845 = vpop.permute.xlu0 %8844
  %8846 = vrot.lane.b32.xlu0 %v8841, 64
  %v8847 = vpop.permute.xlu0 %8846
  %8848 = vrot.lane.b32.xlu0 %v8842, 64
  %v8849 = vpop.permute.xlu0 %8848
  %8850 = vrot.lane.b32.xlu0 %v8843, 64
  %v8851 = vpop.permute.xlu0 %8850
  %v8864 = vcombine.low %v8735, %v8736
  %v8865 = vcombine.low %v8737, %v8738
  %v8866 = vcombine.low %v8739, %v8740
  %v8867 = vcombine.low %v8741, %v8742
  %v8880 = vcombine.low %v8743, %v8744
  %v8881 = vcombine.low %v8745, %v8746
  %v8882 = vcombine.low %v8747, %v8748
  %v8883 = vcombine.low %v8749, %v8750
  %8884 = vrot.lane.b32.xlu0 %v8880, 64
  %v8885 = vpop.permute.xlu0 %8884
  %8886 = vrot.lane.b32.xlu0 %v8881, 64
  %v8887 = vpop.permute.xlu0 %8886
  %8888 = vrot.lane.b32.xlu0 %v8882, 64
  %v8889 = vpop.permute.xlu0 %8888
  %8890 = vrot.lane.b32.xlu0 %v8883, 64
  %v8891 = vpop.permute.xlu0 %8890
  %v8904 = vcombine.low %v8752, %v8753
  %v8905 = vcombine.low %v8754, %v8755
  %v8906 = vcombine.low %v8756, %v8757
  %v8907 = vcombine.low %v8758, %v8759
  %v8920 = vcombine.low %v8760, %v8761
  %v8921 = vcombine.low %v8762, %v8763
  %v8922 = vcombine.low %v8764, %v8765
  %v8923 = vcombine.low %v8766, %v8767
  %8924 = vrot.lane.b32.xlu0 %v8920, 64
  %v8925 = vpop.permute.xlu0 %8924
  %8926 = vrot.lane.b32.xlu0 %v8921, 64
  %v8927 = vpop.permute.xlu0 %8926
  %8928 = vrot.lane.b32.xlu0 %v8922, 64
  %v8929 = vpop.permute.xlu0 %8928
  %8930 = vrot.lane.b32.xlu0 %v8923, 64
  %v8931 = vpop.permute.xlu0 %8930
  %v8944 = vcombine.low %v8768, %v8769
  %v8945 = vcombine.low %v8770, %v8771
  %v8946 = vcombine.low %v8772, %v8773
  %v8947 = vcombine.low %v8774, %v8775
  %v8948 = vsel %vm6230, %v8784, %v8805
  %v8949 = vsel %vm6230, %v8785, %v8807
  %v8950 = vsel %vm6230, %v8786, %v8809
  %v8951 = vsel %vm6230, %v8787, %v8811
  %v8952 = vsel %vm6230, %v8824, %v8845
  %v8953 = vsel %vm6230, %v8825, %v8847
  %v8954 = vsel %vm6230, %v8826, %v8849
  %v8955 = vsel %vm6230, %v8827, %v8851
  %v8956 = vsel %vm6230, %v8864, %v8885
  %v8957 = vsel %vm6230, %v8865, %v8887
  %v8958 = vsel %vm6230, %v8866, %v8889
  %v8959 = vsel %vm6230, %v8867, %v8891
  %v8960 = vsel %vm6230, %v8904, %v8925
  %v8961 = vsel %vm6230, %v8905, %v8927
  %v8962 = vsel %vm6230, %v8906, %v8929
  %v8963 = vsel %vm6230, %v8907, %v8931
  %v8964 = vld [vmem:[%s13] sm:$0xff]
  %v8965 = vld [vmem:[%s13 + $0x8] sm:$0xff]
  %v8966 = vld [vmem:[%s13 + $0x10] sm:$0xff]
  %v8967 = vld [vmem:[%s13 + $0x18] sm:$0xff]
  %v8968 = vld [vmem:[%s13 + $0x20] sm:$0xff]
  %v8969 = vld [vmem:[%s13 + $0x28] sm:$0xff]
  %v8970 = vld [vmem:[%s13 + $0x30] sm:$0xff]
  %v8971 = vld [vmem:[%s13 + $0x38] sm:$0xff]
  %v8972 = vld [vmem:[%s13 + $0x40] sm:$0xff]
  %v8973 = vld [vmem:[%s13 + $0x48] sm:$0xff]
  %v8974 = vld [vmem:[%s13 + $0x50] sm:$0xff]
  %v8975 = vld [vmem:[%s13 + $0x58] sm:$0xff]
  %v8976 = vld [vmem:[%s13 + $0x60] sm:$0xff]
  %v8977 = vld [vmem:[%s13 + $0x68] sm:$0xff]
  %v8978 = vld [vmem:[%s13 + $0x70] sm:$0xff]
  %v8979 = vld [vmem:[%s13 + $0x78] sm:$0xff]
  %v8980 = vld [vmem:[%s13 + $0x80] sm:$0xff]
  %v8981 = vld [vmem:[%s13 + $0x88] sm:$0xff]
  %v8982 = vld [vmem:[%s13 + $0x90] sm:$0xff]
  %v8983 = vld [vmem:[%s13 + $0x98] sm:$0xff]
  %v8984 = vld [vmem:[%s13 + $0xa0] sm:$0xff]
  %v8985 = vld [vmem:[%s13 + $0xa8] sm:$0xff]
  %v8986 = vld [vmem:[%s13 + $0xb0] sm:$0xff]
  %v8987 = vld [vmem:[%s13 + $0xb8] sm:$0xff]
  %v8988 = vld [vmem:[%s13 + $0xc0] sm:$0xff]
  %v8989 = vld [vmem:[%s13 + $0xc8] sm:$0xff]
  %v8990 = vld [vmem:[%s13 + $0xd0] sm:$0xff]
  %v8991 = vld [vmem:[%s13 + $0xd8] sm:$0xff]
  %v8992 = vld [vmem:[%s13 + $0xe0] sm:$0xff]
  %v8993 = vld [vmem:[%s13 + $0xe8] sm:$0xff]
  %v8994 = vld [vmem:[%s13 + $0xf0] sm:$0xff]
  %v8995 = vld [vmem:[%s13 + $0xf8] sm:$0xff]
  %v8996 = vld [vmem:[%s13 + $0x100] sm:$0xff]
  %v8997 = vld [vmem:[%s13 + $0x108] sm:$0xff]
  %v8998 = vld [vmem:[%s13 + $0x110] sm:$0xff]
  %v8999 = vld [vmem:[%s13 + $0x118] sm:$0xff]
  %v9000 = vld [vmem:[%s13 + $0x120] sm:$0xff]
  %v9001 = vld [vmem:[%s13 + $0x128] sm:$0xff]
  %v9002 = vld [vmem:[%s13 + $0x130] sm:$0xff]
  %v9003 = vld [vmem:[%s13 + $0x138] sm:$0xff]
  %v9004 = vld [vmem:[%s13 + $0x140] sm:$0xff]
  %v9005 = vld [vmem:[%s13 + $0x148] sm:$0xff]
  %v9006 = vld [vmem:[%s13 + $0x150] sm:$0xff]
  %v9007 = vld [vmem:[%s13 + $0x158] sm:$0xff]
  %v9008 = vld [vmem:[%s13 + $0x160] sm:$0xff]
  %v9009 = vld [vmem:[%s13 + $0x168] sm:$0xff]
  %v9010 = vld [vmem:[%s13 + $0x170] sm:$0xff]
  %v9011 = vld [vmem:[%s13 + $0x178] sm:$0xff]
  %v9012 = vld [vmem:[%s13 + $0x180] sm:$0xff]
  %v9013 = vld [vmem:[%s13 + $0x188] sm:$0xff]
  %v9014 = vld [vmem:[%s13 + $0x190] sm:$0xff]
  %v9015 = vld [vmem:[%s13 + $0x198] sm:$0xff]
  %v9016 = vld [vmem:[%s13 + $0x1a0] sm:$0xff]
  %v9017 = vld [vmem:[%s13 + $0x1a8] sm:$0xff]
  %v9018 = vld [vmem:[%s13 + $0x1b0] sm:$0xff]
  %v9019 = vld [vmem:[%s13 + $0x1b8] sm:$0xff]
  %v9020 = vld [vmem:[%s13 + $0x1c0] sm:$0xff]
  %v9021 = vld [vmem:[%s13 + $0x1c8] sm:$0xff]
  %v9022 = vld [vmem:[%s13 + $0x1d0] sm:$0xff]
  %v9023 = vld [vmem:[%s13 + $0x1d8] sm:$0xff]
  %v9024 = vld [vmem:[%s13 + $0x1e0] sm:$0xff]
  %v9025 = vld [vmem:[%s13 + $0x1e8] sm:$0xff]
  %v9026 = vld [vmem:[%s13 + $0x1f0] sm:$0xff]
  %v9027 = vld [vmem:[%s13 + $0x1f8] sm:$0xff]
  %v9028 = vld [vmem:[%s13 + $0x200] sm:$0xff]
  %v9029 = vld [vmem:[%s13 + $0x208] sm:$0xff]
  %v9030 = vld [vmem:[%s13 + $0x210] sm:$0xff]
  %v9031 = vld [vmem:[%s13 + $0x218] sm:$0xff]
  %v9032 = vld [vmem:[%s13 + $0x220] sm:$0xff]
  %v9033 = vld [vmem:[%s13 + $0x228] sm:$0xff]
  %v9034 = vld [vmem:[%s13 + $0x230] sm:$0xff]
  %v9035 = vld [vmem:[%s13 + $0x238] sm:$0xff]
  %v9036 = vsel %vm6230, %v8944, 0
  %v9038 = vsel %vm6230, %v8945, 0
  %v9040 = vsel %vm6230, %v8946, 0
  %v9042 = vsel %vm6230, %v8947, 0
  %9044 = vmatprep.subr.mxu0 0.0
  %9045 = vmatpush1.msra.mxu0 %v8964
  %9046 = vmatprep.subr.mxu0 0.0
  %9047 = vmatpush1.msra.mxu0 %v8965
  %9048 = vmatprep.subr.mxu0 0.0
  %9049 = vmatpush1.msra.mxu0 %v8966
  %9050 = vmatprep.subr.mxu0 0.0
  %9051 = vmatpush1.msra.mxu0 %v8967
  %9052 = vmatprep.subr.mxu0 0.0
  %9053 = vmatpush1.msra.mxu0 %v8968
  %9054 = vmatprep.subr.mxu0 0.0
  %9055 = vmatpush1.msra.mxu0 %v8969
  %9056 = vmatprep.subr.mxu0 0.0
  %9057 = vmatpush1.msra.mxu0 %v8970
  %9058 = vmatprep.subr.mxu0 0.0
  %9059 = vmatpush1.msra.mxu0 %v8971
  %9060 = vmatprep.subr.mxu0 0.0
  %9061 = vmatpush1.msra.mxu0 %v8972
  %9062 = vmatprep.subr.mxu0 0.0
  %9063 = vmatpush1.msra.mxu0 %v8973
  %9064 = vmatprep.subr.mxu0 0.0
  %9065 = vmatpush1.msra.mxu0 %v8974
  %9066 = vmatprep.subr.mxu0 0.0
  %9067 = vmatpush1.msra.mxu0 %v8975
  %9068 = vmatprep.subr.mxu0 0.0
  %9069 = vmatpush1.msra.mxu0 %v8976
  %9070 = vmatprep.subr.mxu0 0.0
  %9071 = vmatpush1.msra.mxu0 %v8977
  %9072 = vmatprep.subr.mxu0 0.0
  %9073 = vmatpush1.msra.mxu0 %v8978
  %9074 = vmatprep.subr.mxu0 0.0
  %9075 = vmatpush1.msra.mxu0 %v8979
  %9076 = vmatprep.subr.mxu0 0.0
  %9077 = vmatpush1.msra.mxu0 %v8980
  %9078 = vmatprep.subr.mxu0 0.0
  %9079 = vmatpush1.msra.mxu0 %v8981
  %9080 = vmatprep.subr.mxu0 0.0
  %9081 = vmatpush1.msra.mxu0 %v8982
  %9082 = vmatprep.subr.mxu0 0.0
  %9083 = vmatpush1.msra.mxu0 %v8983
  %9084 = vmatprep.subr.mxu0 0.0
  %9085 = vmatpush1.msra.mxu0 %v8984
  %9086 = vmatprep.subr.mxu0 0.0
  %9087 = vmatpush1.msra.mxu0 %v8985
  %9088 = vmatprep.subr.mxu0 0.0
  %9089 = vmatpush1.msra.mxu0 %v8986
  %9090 = vmatprep.subr.mxu0 0.0
  %9091 = vmatpush1.msra.mxu0 %v8987
  %9092 = vmatprep.subr.mxu0 0.0
  %9093 = vmatpush1.msra.mxu0 %v8988
  %9094 = vmatprep.subr.mxu0 0.0
  %9095 = vmatpush1.msra.mxu0 %v8989
  %9096 = vmatprep.subr.mxu0 0.0
  %9097 = vmatpush1.msra.mxu0 %v8990
  %9098 = vmatprep.subr.mxu0 0.0
  %9099 = vmatpush1.msra.mxu0 %v8991
  %9100 = vmatprep.subr.mxu0 0.0
  %9101 = vmatpush1.msra.mxu0 %v8992
  %9102 = vmatprep.subr.mxu0 0.0
  %9103 = vmatpush1.msra.mxu0 %v8993
  %9104 = vmatprep.subr.mxu0 0.0
  %9105 = vmatpush1.msra.mxu0 %v8994
  %9106 = vmatprep.subr.mxu0 0.0
  %9107 = vmatpush1.msra.mxu0 %v8995
  %9108 = vmatprep.mubr.f32.mxu0 %v8952
  %9109 = vmatmul.mubr.f32.gmra.mrb[0].mxu0 %v8948
  %v9110 = vpop.f32.mrb[0].mxu0
  %v9111 = vadd.f32 0.0, %v9110
  %v9112 = vpop.f32.mrb[0].mxu0
  %9113 = vmatprep.mubr.f32.mxu0 %v8953
  %9114 = vmatmul.mubr.f32.gmra.mrb[0].mxu0 %v8949
  %v9115 = vpop.f32.mrb[0].mxu0
  %v9116 = vadd.f32 0.0, %v9115
  %v9117 = vpop.f32.mrb[0].mxu0
  %9118 = vmatprep.mubr.f32.mxu0 %v8954
  %9119 = vmatmul.mubr.f32.gmra.mrb[0].mxu0 %v8950
  %v9120 = vpop.f32.mrb[0].mxu0
  %v9121 = vadd.f32 0.0, %v9120
  %v9122 = vpop.f32.mrb[0].mxu0
  %9123 = vmatprep.mubr.f32.mxu0 %v8955
  %9124 = vmatmul.mubr.f32.gmra.mrb[0].mxu0 %v8951
  %v9125 = vpop.f32.mrb[0].mxu0
  %v9126 = vadd.f32 0.0, %v9125
  %v9127 = vpop.f32.mrb[0].mxu0
  %9128 = vdwg.mxu0
  %9129 = vmatprep.subr.mxu0 0.0
  %9130 = vmatpush1.msra.mxu0 %v8996
  %9131 = vmatprep.subr.mxu0 0.0
  %9132 = vmatpush1.msra.mxu0 %v8997
  %9133 = vmatprep.subr.mxu0 0.0
  %9134 = vmatpush1.msra.mxu0 %v8998
  %9135 = vmatprep.subr.mxu0 0.0
  %9136 = vmatpush1.msra.mxu0 %v8999
  %9137 = vmatprep.subr.mxu0 0.0
  %9138 = vmatpush1.msra.mxu0 %v9000
  %9139 = vmatprep.subr.mxu0 0.0
  %9140 = vmatpush1.msra.mxu0 %v9001
  %9141 = vmatprep.subr.mxu0 0.0
  %9142 = vmatpush1.msra.mxu0 %v9002
  %9143 = vmatprep.subr.mxu0 0.0
  %9144 = vmatpush1.msra.mxu0 %v9003
  %9145 = vmatprep.subr.mxu0 0.0
  %9146 = vmatpush1.msra.mxu0 %v9004
  %9147 = vmatprep.subr.mxu0 0.0
  %9148 = vmatpush1.msra.mxu0 %v9005
  %9149 = vmatprep.subr.mxu0 0.0
  %9150 = vmatpush1.msra.mxu0 %v9006
  %9151 = vmatprep.subr.mxu0 0.0
  %9152 = vmatpush1.msra.mxu0 %v9007
  %9153 = vmatprep.subr.mxu0 0.0
  %9154 = vmatpush1.msra.mxu0 %v9008
  %9155 = vmatprep.subr.mxu0 0.0
  %9156 = vmatpush1.msra.mxu0 %v9009
  %9157 = vmatprep.subr.mxu0 0.0
  %9158 = vmatpush1.msra.mxu0 %v9010
  %9159 = vmatprep.subr.mxu0 0.0
  %9160 = vmatpush1.msra.mxu0 %v9011
  %9161 = vmatprep.subr.mxu0 0.0
  %9162 = vmatpush1.msra.mxu0 %v9012
  %9163 = vmatprep.subr.mxu0 0.0
  %9164 = vmatpush1.msra.mxu0 %v9013
  %9165 = vmatprep.subr.mxu0 0.0
  %9166 = vmatpush1.msra.mxu0 %v9014
  %9167 = vmatprep.subr.mxu0 0.0
  %9168 = vmatpush1.msra.mxu0 %v9015
  %9169 = vmatprep.subr.mxu0 0.0
  %9170 = vmatpush1.msra.mxu0 %v9016
  %9171 = vmatprep.subr.mxu0 0.0
  %9172 = vmatpush1.msra.mxu0 %v9017
  %9173 = vmatprep.subr.mxu0 0.0
  %9174 = vmatpush1.msra.mxu0 %v9018
  %9175 = vmatprep.subr.mxu0 0.0
  %9176 = vmatpush1.msra.mxu0 %v9019
  %9177 = vmatprep.subr.mxu0 0.0
  %9178 = vmatpush1.msra.mxu0 %v9020
  %9179 = vmatprep.subr.mxu0 0.0
  %9180 = vmatpush1.msra.mxu0 %v9021
  %9181 = vmatprep.subr.mxu0 0.0
  %9182 = vmatpush1.msra.mxu0 %v9022
  %9183 = vmatprep.subr.mxu0 0.0
  %9184 = vmatpush1.msra.mxu0 %v9023
  %9185 = vmatprep.subr.mxu0 0.0
  %9186 = vmatpush1.msra.mxu0 %v9024
  %9187 = vmatprep.subr.mxu0 0.0
  %9188 = vmatpush1.msra.mxu0 %v9025
  %9189 = vmatprep.subr.mxu0 0.0
  %9190 = vmatpush1.msra.mxu0 %v9026
  %9191 = vmatprep.subr.mxu0 0.0
  %9192 = vmatpush1.msra.mxu0 %v9027
  %9193 = vmatprep.mubr.f32.mxu0 %v8960
  %9194 = vmatmul.mubr.f32.gmra.mrb[0].mxu0 %v8956
  %v9195 = vpop.f32.mrb[0].mxu0
  %v9196 = vadd.f32 %v9111, %v9195
  %v9197 = vpop.f32.mrb[0].mxu0
  %9198 = vmatprep.mubr.f32.mxu0 %v8961
  %9199 = vmatmul.mubr.f32.gmra.mrb[0].mxu0 %v8957
  %v9200 = vpop.f32.mrb[0].mxu0
  %v9201 = vadd.f32 %v9116, %v9200
  %v9202 = vpop.f32.mrb[0].mxu0
  %9203 = vmatprep.mubr.f32.mxu0 %v8962
  %9204 = vmatmul.mubr.f32.gmra.mrb[0].mxu0 %v8958
  %v9205 = vpop.f32.mrb[0].mxu0
  %v9206 = vadd.f32 %v9121, %v9205
  %v9207 = vpop.f32.mrb[0].mxu0
  %9208 = vmatprep.mubr.f32.mxu0 %v8963
  %9209 = vmatmul.mubr.f32.gmra.mrb[0].mxu0 %v8959
  %v9210 = vpop.f32.mrb[0].mxu0
  %v9211 = vadd.f32 %v9126, %v9210
  %v9212 = vpop.f32.mrb[0].mxu0
  %9213 = vdwg.mxu0
  %9214 = vmatprep.subr.mxu0 0.0
  %9215 = vmatpush1.msra.mxu0 %v9028
  %9216 = vmatprep.subr.mxu0 0.0
  %9217 = vmatpush1.msra.mxu0 %v9029
  %9218 = vmatprep.subr.mxu0 0.0
  %9219 = vmatpush1.msra.mxu0 %v9030
  %9220 = vmatprep.subr.mxu0 0.0
  %9221 = vmatpush1.msra.mxu0 %v9031
  %9222 = vmatprep.subr.mxu0 0.0
  %9223 = vmatpush1.msra.mxu0 %v9032
  %9224 = vmatprep.subr.mxu0 0.0
  %9225 = vmatpush1.msra.mxu0 %v9033
  %9226 = vmatprep.subr.mxu0 0.0
  %9227 = vmatpush1.msra.mxu0 %v9034
  %9228 = vmatprep.subr.mxu0 0.0
  %9229 = vmatpush1.msra.mxu0 %v9035
  %9230 = vmatprep.subr.mxu0 0.0
  %9231 = vmatpush1.msra.mxu0 0.0
  %9232 = vmatprep.subr.mxu0 0.0
  %9233 = vmatpush1.msra.mxu0 0.0
  %9234 = vmatprep.subr.mxu0 0.0
  %9235 = vmatpush1.msra.mxu0 0.0
  %9236 = vmatprep.subr.mxu0 0.0
  %9237 = vmatpush1.msra.mxu0 0.0
  %9238 = vmatprep.subr.mxu0 0.0
  %9239 = vmatpush1.msra.mxu0 0.0
  %9240 = vmatprep.subr.mxu0 0.0
  %9241 = vmatpush1.msra.mxu0 0.0
  %9242 = vmatprep.subr.mxu0 0.0
  %9243 = vmatpush1.msra.mxu0 0.0
  %9244 = vmatprep.subr.mxu0 0.0
  %9245 = vmatpush1.msra.mxu0 0.0
  %9246 = vmatprep.subr.mxu0 0.0
  %9247 = vmatpush1.msra.mxu0 0.0
  %9248 = vmatprep.subr.mxu0 0.0
  %9249 = vmatpush1.msra.mxu0 0.0
  %9250 = vmatprep.subr.mxu0 0.0
  %9251 = vmatpush1.msra.mxu0 0.0
  %9252 = vmatprep.subr.mxu0 0.0
  %9253 = vmatpush1.msra.mxu0 0.0
  %9254 = vmatprep.subr.mxu0 0.0
  %9255 = vmatpush1.msra.mxu0 0.0
  %9256 = vmatprep.subr.mxu0 0.0
  %9257 = vmatpush1.msra.mxu0 0.0
  %9258 = vmatprep.subr.mxu0 0.0
  %9259 = vmatpush1.msra.mxu0 0.0
  %9260 = vmatprep.subr.mxu0 0.0
  %9261 = vmatpush1.msra.mxu0 0.0
  %9262 = vmatprep.subr.mxu0 0.0
  %9263 = vmatpush1.msra.mxu0 0.0
  %9264 = vmatprep.subr.mxu0 0.0
  %9265 = vmatpush1.msra.mxu0 0.0
  %9266 = vmatprep.subr.mxu0 0.0
  %9267 = vmatpush1.msra.mxu0 0.0
  %9268 = vmatprep.subr.mxu0 0.0
  %9269 = vmatpush1.msra.mxu0 0.0
  %9270 = vmatprep.subr.mxu0 0.0
  %9271 = vmatpush1.msra.mxu0 0.0
  %9272 = vmatprep.subr.mxu0 0.0
  %9273 = vmatpush1.msra.mxu0 0.0
  %9274 = vmatprep.subr.mxu0 0.0
  %9275 = vmatpush1.msra.mxu0 0.0
  %9276 = vmatprep.subr.mxu0 0.0
  %9277 = vmatpush1.msra.mxu0 0.0
  %9278 = vmatprep.mubr.f32.mxu0 0.0
  %9279 = vmatmul.mubr.f32.gmra.mrb[0].mxu0 %v9036
  %v9280 = vpop.f32.mrb[0].mxu0
  %v9281 = vadd.f32 %v9196, %v9280
  %v9282 = vpop.f32.mrb[0].mxu0
  %9283 = vmatprep.mubr.f32.mxu0 0.0
  %9284 = vmatmul.mubr.f32.gmra.mrb[0].mxu0 %v9038
  %v9285 = vpop.f32.mrb[0].mxu0
  %v9286 = vadd.f32 %v9201, %v9285
  %v9287 = vpop.f32.mrb[0].mxu0
  %9288 = vmatprep.mubr.f32.mxu0 0.0
  %9289 = vmatmul.mubr.f32.gmra.mrb[0].mxu0 %v9040
  %v9290 = vpop.f32.mrb[0].mxu0
  %v9291 = vadd.f32 %v9206, %v9290
  %v9292 = vpop.f32.mrb[0].mxu0
  %9293 = vmatprep.mubr.f32.mxu0 0.0
  %9294 = vmatmul.mubr.f32.gmra.mrb[0].mxu0 %v9042
  %v9295 = vpop.f32.mrb[0].mxu0
  %v9296 = vadd.f32 %v9211, %v9295
  %v9297 = vpop.f32.mrb[0].mxu0
  %9298 = vdwg.mxu0
  %v9299 = vsel %vm4031, %v9281, 0.0
  %v9300 = vsel %vm4031, %v9286, 0.0
  %v9301 = vadd.f32 %v9299, %v9300
  %v9302 = vsel %vm4031, %v9291, 0.0
  %v9303 = vadd.f32 %v9301, %v9302
  %v9304 = vsel %vm4031, %v9296, 0.0
  %v9305 = vadd.f32 %v9303, %v9304
  %v9306 = vrot.slane %v9305, 4
  %v9307 = vadd.f32 %v9305, %v9306
  %v9308 = vrot.slane %v9307, 2
  %v9309 = vadd.f32 %v9307, %v9308
  %v9310 = vrot.slane %v9309, 1
  %v9311 = vadd.f32 %v9309, %v9310
  %v9312 = vmul.f32 %v9311, 0.03125
  %v9313 = vmul.f32 %v9281, %v9281
  %v9314 = vmul.f32 %v9286, %v9286
  %v9315 = vmul.f32 %v9291, %v9291
  %v9316 = vmul.f32 %v9296, %v9296
  %v9317 = vsel %vm4031, %v9313, 0.0
  %v9318 = vsel %vm4031, %v9314, 0.0
  %v9319 = vadd.f32 %v9317, %v9318
  %v9320 = vsel %vm4031, %v9315, 0.0
  %v9321 = vadd.f32 %v9319, %v9320
  %v9322 = vsel %vm4031, %v9316, 0.0
  %v9323 = vadd.f32 %v9321, %v9322
  %v9324 = vrot.slane %v9323, 4
  %v9325 = vadd.f32 %v9323, %v9324
  %v9326 = vrot.slane %v9325, 2
  %v9327 = vadd.f32 %v9325, %v9326
  %v9328 = vrot.slane %v9327, 1
  %v9329 = vadd.f32 %v9327, %v9328
  %v9330 = vmul.f32 %v9329, 0.03125
  %v9331 = vmul.f32 %v9312, %v9312
  %v9332 = vsub.f32 %v9330, %v9331
  %v9333 = vmax.f32 %v9332, 0.0
  %v9334 = vld [vmem:[%s14] sm:$0x1]
  %v9335 = vadd.f32 %v9333, 1e-05
  %v9336 = vrsqrt.pop %v9335
  %v9337 = vmul.f32 %v9334, %v9336
  %v9338 = vld [vmem:[%s15] sm:$0x1]
  %v9339 = vmul.f32 %v9312, %v9337
  %v9340 = vsub.f32 %v9338, %v9339
  %v9342 = vlaneseq
  %v9343 = vshrl.u32 %v9342, 7
  %v9344 = vsub.s32 0, %v9343
  %v9345 = vrot.slane %v9337, %v9344
  %v9347 = vmul.f32 %v9281, %v9345
  %v9348 = vmul.f32 %v9286, %v9345
  %v9349 = vmul.f32 %v9291, %v9345
  %v9350 = vmul.f32 %v9296, %v9345
  %v9352 = vlaneseq
  %v9353 = vshrl.u32 %v9352, 7
  %v9354 = vsub.s32 0, %v9353
  %v9355 = vrot.slane %v9340, %v9354
  %v9357 = vadd.f32 %v9347, %v9355
  %v9358 = vadd.f32 %v9348, %v9355
  %v9359 = vadd.f32 %v9349, %v9355
  %v9360 = vadd.f32 %v9350, %v9355
  %v9361 = vmax.f32 %v9357, 0.0
  %v9362 = vmax.f32 %v9358, 0.0
  %v9363 = vmax.f32 %v9359, 0.0
  %v9364 = vmax.f32 %v9360, 0.0
  %v9369 = vcombine.high %v9361, %v9361
  %v9370 = vcombine.high %v9362, %v9362
  %v9371 = vcombine.high %v9363, %v9363
  %v9372 = vcombine.high %v9364, %v9364
  %vm9377 = vcmask 259072
  %9378 = vst.msk [vmem:[#allocation7] sm:$0x3f] %vm9377, 0.0
  %9379 = vst.msk [vmem:[#allocation7 + $0x8] sm:$0x3f] %vm9377, 0.0
  %9380 = vst.msk [vmem:[#allocation7 + $0x10] sm:$0x3f] %vm9377, 0.0
  %9381 = vst.msk [vmem:[#allocation7 + $0x18] sm:$0x3f] %vm9377, 0.0
  %9382 = vst.msk [vmem:[#allocation7 + $0x20] sm:$0x3f] %vm9377, 0.0
  %9383 = vst.msk [vmem:[#allocation7 + $0x28] sm:$0x3f] %vm9377, 0.0
  %9384 = vst.msk [vmem:[#allocation7 + $0x30] sm:$0x3f] %vm9377, 0.0
  %9385 = vst.msk [vmem:[#allocation7 + $0x38] sm:$0x3f] %vm9377, 0.0
  %9386 = vst.msk [vmem:[#allocation7 + $0x40] sm:$0x3f] %vm9377, 0.0
  %9387 = vst.msk [vmem:[#allocation7 + $0x48] sm:$0x3f] %vm9377, 0.0
  %9388 = vst.msk [vmem:[#allocation7 + $0x50] sm:$0x3f] %vm9377, 0.0
  %9389 = vst.msk [vmem:[#allocation7 + $0x58] sm:$0x3f] %vm9377, 0.0
  %s9390 = scalar_lea.vmem [#allocation7], 8
  %vm9391 = vcmask 257024
  %9392 = vst.msk [vmem:[%s9390 + $0x1] sm:$0xf] %vm9391, %v9361
  %9393 = vst.msk [vmem:[%s9390 + $0x9] sm:$0xf] %vm9391, %v9369
  %9394 = vst.msk [vmem:[%s9390 + $0x11] sm:$0xf] %vm9391, %v9362
  %9395 = vst.msk [vmem:[%s9390 + $0x19] sm:$0xf] %vm9391, %v9370
  %9396 = vst.msk [vmem:[%s9390 + $0x31] sm:$0xf] %vm9391, %v9363
  %9397 = vst.msk [vmem:[%s9390 + $0x39] sm:$0xf] %vm9391, %v9371
  %9398 = vst.msk [vmem:[%s9390 + $0x41] sm:$0xf] %vm9391, %v9364
  %9399 = vst.msk [vmem:[%s9390 + $0x49] sm:$0xf] %vm9391, %v9372
  %v9400 = vld [vmem:[#allocation7] sm:$0xf]
  %v9401 = vld [vmem:[#allocation7 + $0x8] sm:$0xf]
  %v9402 = vld [vmem:[#allocation7 + $0x10] sm:$0xf]
  %v9403 = vld [vmem:[#allocation7 + $0x18] sm:$0xf]
  %v9404 = vld [vmem:[#allocation7 + $0x30] sm:$0xf]
  %v9405 = vld [vmem:[#allocation7 + $0x38] sm:$0xf]
  %v9406 = vld [vmem:[#allocation7 + $0x40] sm:$0xf]
  %v9407 = vld [vmem:[#allocation7 + $0x48] sm:$0xf]
  %v9408 = vld [vmem:[#allocation7 + $0x1] sm:$0xf]
  %v9409 = vld [vmem:[#allocation7 + $0x9] sm:$0xf]
  %v9410 = vld [vmem:[#allocation7 + $0x11] sm:$0xf]
  %v9411 = vld [vmem:[#allocation7 + $0x19] sm:$0xf]
  %v9412 = vld [vmem:[#allocation7 + $0x31] sm:$0xf]
  %v9413 = vld [vmem:[#allocation7 + $0x39] sm:$0xf]
  %v9414 = vld [vmem:[#allocation7 + $0x41] sm:$0xf]
  %v9415 = vld [vmem:[#allocation7 + $0x49] sm:$0xf]
  %v9416 = vld [vmem:[#allocation7 + $0x2] sm:$0xf]
  %v9417 = vld [vmem:[#allocation7 + $0xa] sm:$0xf]
  %v9418 = vld [vmem:[#allocation7 + $0x12] sm:$0xf]
  %v9419 = vld [vmem:[#allocation7 + $0x1a] sm:$0xf]
  %v9420 = vld [vmem:[#allocation7 + $0x32] sm:$0xf]
  %v9421 = vld [vmem:[#allocation7 + $0x3a] sm:$0xf]
  %v9422 = vld [vmem:[#allocation7 + $0x42] sm:$0xf]
  %v9423 = vld [vmem:[#allocation7 + $0x4a] sm:$0xf]
  %v9424 = vld [vmem:[%s9390] sm:$0xf]
  %v9425 = vld [vmem:[%s9390 + $0x8] sm:$0xf]
  %v9426 = vld [vmem:[%s9390 + $0x10] sm:$0xf]
  %v9427 = vld [vmem:[%s9390 + $0x18] sm:$0xf]
  %v9428 = vld [vmem:[%s9390 + $0x30] sm:$0xf]
  %v9429 = vld [vmem:[%s9390 + $0x38] sm:$0xf]
  %v9430 = vld [vmem:[%s9390 + $0x40] sm:$0xf]
  %v9431 = vld [vmem:[%s9390 + $0x48] sm:$0xf]
  %v9432 = vld [vmem:[%s9390 + $0x1] sm:$0xf]
  %v9433 = vld [vmem:[%s9390 + $0x9] sm:$0xf]
  %v9434 = vld [vmem:[%s9390 + $0x11] sm:$0xf]
  %v9435 = vld [vmem:[%s9390 + $0x19] sm:$0xf]
  %v9436 = vld [vmem:[%s9390 + $0x31] sm:$0xf]
  %v9437 = vld [vmem:[%s9390 + $0x39] sm:$0xf]
  %v9438 = vld [vmem:[%s9390 + $0x41] sm:$0xf]
  %v9439 = vld [vmem:[%s9390 + $0x49] sm:$0xf]
  %v9440 = vld [vmem:[%s9390 + $0x2] sm:$0xf]
  %v9441 = vld [vmem:[%s9390 + $0xa] sm:$0xf]
  %v9442 = vld [vmem:[%s9390 + $0x12] sm:$0xf]
  %v9443 = vld [vmem:[%s9390 + $0x1a] sm:$0xf]
  %v9444 = vld [vmem:[%s9390 + $0x32] sm:$0xf]
  %v9445 = vld [vmem:[%s9390 + $0x3a] sm:$0xf]
  %v9446 = vld [vmem:[%s9390 + $0x42] sm:$0xf]
  %v9447 = vld [vmem:[%s9390 + $0x4a] sm:$0xf]
  %s9448 = scalar_lea.vmem [#allocation7], 16
  %v9449 = vld [vmem:[%s9448] sm:$0xf]
  %v9450 = vld [vmem:[%s9448 + $0x8] sm:$0xf]
  %v9451 = vld [vmem:[%s9448 + $0x10] sm:$0xf]
  %v9452 = vld [vmem:[%s9448 + $0x18] sm:$0xf]
  %v9453 = vld [vmem:[%s9448 + $0x30] sm:$0xf]
  %v9454 = vld [vmem:[%s9448 + $0x38] sm:$0xf]
  %v9455 = vld [vmem:[%s9448 + $0x40] sm:$0xf]
  %v9456 = vld [vmem:[%s9448 + $0x48] sm:$0xf]
  %v9457 = vld [vmem:[%s9448 + $0x1] sm:$0xf]
  %v9458 = vld [vmem:[%s9448 + $0x9] sm:$0xf]
  %v9459 = vld [vmem:[%s9448 + $0x11] sm:$0xf]
  %v9460 = vld [vmem:[%s9448 + $0x19] sm:$0xf]
  %v9461 = vld [vmem:[%s9448 + $0x31] sm:$0xf]
  %v9462 = vld [vmem:[%s9448 + $0x39] sm:$0xf]
  %v9463 = vld [vmem:[%s9448 + $0x41] sm:$0xf]
  %v9464 = vld [vmem:[%s9448 + $0x49] sm:$0xf]
  %v9465 = vld [vmem:[%s9448 + $0x2] sm:$0xf]
  %v9466 = vld [vmem:[%s9448 + $0xa] sm:$0xf]
  %v9467 = vld [vmem:[%s9448 + $0x12] sm:$0xf]
  %v9468 = vld [vmem:[%s9448 + $0x1a] sm:$0xf]
  %v9469 = vld [vmem:[%s9448 + $0x32] sm:$0xf]
  %v9470 = vld [vmem:[%s9448 + $0x3a] sm:$0xf]
  %v9471 = vld [vmem:[%s9448 + $0x42] sm:$0xf]
  %v9472 = vld [vmem:[%s9448 + $0x4a] sm:$0xf]
  %v9481 = vcombine.low %v9400, %v9401
  %v9482 = vcombine.low %v9402, %v9403
  %v9483 = vcombine.low %v9404, %v9405
  %v9484 = vcombine.low %v9406, %v9407
  %v9497 = vcombine.low %v9408, %v9409
  %v9498 = vcombine.low %v9410, %v9411
  %v9499 = vcombine.low %v9412, %v9413
  %v9500 = vcombine.low %v9414, %v9415
  %9501 = vrot.lane.b32.xlu0 %v9497, 32
  %v9502 = vpop.permute.xlu0 %9501
  %9503 = vrot.lane.b32.xlu0 %v9498, 32
  %v9504 = vpop.permute.xlu0 %9503
  %9505 = vrot.lane.b32.xlu0 %v9499, 32
  %v9506 = vpop.permute.xlu0 %9505
  %9507 = vrot.lane.b32.xlu0 %v9500, 32
  %v9508 = vpop.permute.xlu0 %9507
  %v9521 = vcombine.low %v9416, %v9417
  %v9522 = vcombine.low %v9418, %v9419
  %v9523 = vcombine.low %v9420, %v9421
  %v9524 = vcombine.low %v9422, %v9423
  %9525 = vrot.lane.b32.xlu0 %v9521, 64
  %v9526 = vpop.permute.xlu0 %9525
  %9527 = vrot.lane.b32.xlu0 %v9522, 64
  %v9528 = vpop.permute.xlu0 %9527
  %9529 = vrot.lane.b32.xlu0 %v9523, 64
  %v9530 = vpop.permute.xlu0 %9529
  %9531 = vrot.lane.b32.xlu0 %v9524, 64
  %v9532 = vpop.permute.xlu0 %9531
  %v9545 = vcombine.low %v9424, %v9425
  %v9546 = vcombine.low %v9426, %v9427
  %v9547 = vcombine.low %v9428, %v9429
  %v9548 = vcombine.low %v9430, %v9431
  %9549 = vrot.lane.b32.xlu0 %v9545, 96
  %v9550 = vpop.permute.xlu0 %9549
  %9551 = vrot.lane.b32.xlu0 %v9546, 96
  %v9552 = vpop.permute.xlu0 %9551
  %9553 = vrot.lane.b32.xlu0 %v9547, 96
  %v9554 = vpop.permute.xlu0 %9553
  %9555 = vrot.lane.b32.xlu0 %v9548, 96
  %v9556 = vpop.permute.xlu0 %9555
  %v9569 = vcombine.low %v9432, %v9433
  %v9570 = vcombine.low %v9434, %v9435
  %v9571 = vcombine.low %v9436, %v9437
  %v9572 = vcombine.low %v9438, %v9439
  %v9585 = vcombine.low %v9440, %v9441
  %v9586 = vcombine.low %v9442, %v9443
  %v9587 = vcombine.low %v9444, %v9445
  %v9588 = vcombine.low %v9446, %v9447
  %9589 = vrot.lane.b32.xlu0 %v9585, 32
  %v9590 = vpop.permute.xlu0 %9589
  %9591 = vrot.lane.b32.xlu0 %v9586, 32
  %v9592 = vpop.permute.xlu0 %9591
  %9593 = vrot.lane.b32.xlu0 %v9587, 32
  %v9594 = vpop.permute.xlu0 %9593
  %9595 = vrot.lane.b32.xlu0 %v9588, 32
  %v9596 = vpop.permute.xlu0 %9595
  %v9609 = vcombine.low %v9449, %v9450
  %v9610 = vcombine.low %v9451, %v9452
  %v9611 = vcombine.low %v9453, %v9454
  %v9612 = vcombine.low %v9455, %v9456
  %9613 = vrot.lane.b32.xlu0 %v9609, 64
  %v9614 = vpop.permute.xlu0 %9613
  %9615 = vrot.lane.b32.xlu0 %v9610, 64
  %v9616 = vpop.permute.xlu0 %9615
  %9617 = vrot.lane.b32.xlu0 %v9611, 64
  %v9618 = vpop.permute.xlu0 %9617
  %9619 = vrot.lane.b32.xlu0 %v9612, 64
  %v9620 = vpop.permute.xlu0 %9619
  %v9633 = vcombine.low %v9457, %v9458
  %v9634 = vcombine.low %v9459, %v9460
  %v9635 = vcombine.low %v9461, %v9462
  %v9636 = vcombine.low %v9463, %v9464
  %9637 = vrot.lane.b32.xlu0 %v9633, 96
  %v9638 = vpop.permute.xlu0 %9637
  %9639 = vrot.lane.b32.xlu0 %v9634, 96
  %v9640 = vpop.permute.xlu0 %9639
  %9641 = vrot.lane.b32.xlu0 %v9635, 96
  %v9642 = vpop.permute.xlu0 %9641
  %9643 = vrot.lane.b32.xlu0 %v9636, 96
  %v9644 = vpop.permute.xlu0 %9643
  %v9657 = vcombine.low %v9465, %v9466
  %v9658 = vcombine.low %v9467, %v9468
  %v9659 = vcombine.low %v9469, %v9470
  %v9660 = vcombine.low %v9471, %v9472
  %v9661 = vsel %vm4031, %v9481, %v9502
  %v9662 = vsel %vm4031, %v9482, %v9504
  %v9663 = vsel %vm4031, %v9483, %v9506
  %v9664 = vsel %vm4031, %v9484, %v9508
  %v9665 = vsel %vm6230, %v9661, %v9526
  %v9666 = vsel %vm6230, %v9662, %v9528
  %v9667 = vsel %vm6230, %v9663, %v9530
  %v9668 = vsel %vm6230, %v9664, %v9532
  %v9669 = vsel %vm6247, %v9665, %v9550
  %v9670 = vsel %vm6247, %v9666, %v9552
  %v9671 = vsel %vm6247, %v9667, %v9554
  %v9672 = vsel %vm6247, %v9668, %v9556
  %v9673 = vsel %vm4031, %v9569, %v9590
  %v9674 = vsel %vm4031, %v9570, %v9592
  %v9675 = vsel %vm4031, %v9571, %v9594
  %v9676 = vsel %vm4031, %v9572, %v9596
  %v9677 = vsel %vm6230, %v9673, %v9614
  %v9678 = vsel %vm6230, %v9674, %v9616
  %v9679 = vsel %vm6230, %v9675, %v9618
  %v9680 = vsel %vm6230, %v9676, %v9620
  %v9681 = vsel %vm6247, %v9677, %v9638
  %v9682 = vsel %vm6247, %v9678, %v9640
  %v9683 = vsel %vm6247, %v9679, %v9642
  %v9684 = vsel %vm6247, %v9680, %v9644
  %v9685 = vld [vmem:[%s16] sm:$0xff]
  %v9686 = vld [vmem:[%s16 + $0x8] sm:$0xff]
  %v9687 = vld [vmem:[%s16 + $0x10] sm:$0xff]
  %v9688 = vld [vmem:[%s16 + $0x18] sm:$0xff]
  %v9689 = vld [vmem:[%s16 + $0x20] sm:$0xff]
  %v9690 = vld [vmem:[%s16 + $0x28] sm:$0xff]
  %v9691 = vld [vmem:[%s16 + $0x30] sm:$0xff]
  %v9692 = vld [vmem:[%s16 + $0x38] sm:$0xff]
  %v9693 = vld [vmem:[%s16 + $0x40] sm:$0xff]
  %v9694 = vld [vmem:[%s16 + $0x48] sm:$0xff]
  %v9695 = vld [vmem:[%s16 + $0x50] sm:$0xff]
  %v9696 = vld [vmem:[%s16 + $0x58] sm:$0xff]
  %v9697 = vld [vmem:[%s16 + $0x60] sm:$0xff]
  %v9698 = vld [vmem:[%s16 + $0x68] sm:$0xff]
  %v9699 = vld [vmem:[%s16 + $0x70] sm:$0xff]
  %v9700 = vld [vmem:[%s16 + $0x78] sm:$0xff]
  %v9701 = vld [vmem:[%s16 + $0x80] sm:$0xff]
  %v9702 = vld [vmem:[%s16 + $0x88] sm:$0xff]
  %v9703 = vld [vmem:[%s16 + $0x90] sm:$0xff]
  %v9704 = vld [vmem:[%s16 + $0x98] sm:$0xff]
  %v9705 = vld [vmem:[%s16 + $0xa0] sm:$0xff]
  %v9706 = vld [vmem:[%s16 + $0xa8] sm:$0xff]
  %v9707 = vld [vmem:[%s16 + $0xb0] sm:$0xff]
  %v9708 = vld [vmem:[%s16 + $0xb8] sm:$0xff]
  %v9709 = vld [vmem:[%s16 + $0xc0] sm:$0xff]
  %v9710 = vld [vmem:[%s16 + $0xc8] sm:$0xff]
  %v9711 = vld [vmem:[%s16 + $0xd0] sm:$0xff]
  %v9712 = vld [vmem:[%s16 + $0xd8] sm:$0xff]
  %v9713 = vld [vmem:[%s16 + $0xe0] sm:$0xff]
  %v9714 = vld [vmem:[%s16 + $0xe8] sm:$0xff]
  %v9715 = vld [vmem:[%s16 + $0xf0] sm:$0xff]
  %v9716 = vld [vmem:[%s16 + $0xf8] sm:$0xff]
  %v9717 = vld [vmem:[%s16 + $0x100] sm:$0xff]
  %v9718 = vld [vmem:[%s16 + $0x108] sm:$0xff]
  %v9719 = vld [vmem:[%s16 + $0x110] sm:$0xff]
  %v9720 = vld [vmem:[%s16 + $0x118] sm:$0xff]
  %v9721 = vsel %vm4031, %v9657, 0
  %v9723 = vsel %vm4031, %v9658, 0
  %v9725 = vsel %vm4031, %v9659, 0
  %v9727 = vsel %vm4031, %v9660, 0
  %9729 = vmatprep.subr.mxu0 0.0
  %9730 = vmatpush1.msra.mxu0 %v9685
  %9731 = vmatprep.subr.mxu0 0.0
  %9732 = vmatpush1.msra.mxu0 %v9686
  %9733 = vmatprep.subr.mxu0 0.0
  %9734 = vmatpush1.msra.mxu0 %v9687
  %9735 = vmatprep.subr.mxu0 0.0
  %9736 = vmatpush1.msra.mxu0 %v9688
  %9737 = vmatprep.subr.mxu0 0.0
  %9738 = vmatpush1.msra.mxu0 %v9689
  %9739 = vmatprep.subr.mxu0 0.0
  %9740 = vmatpush1.msra.mxu0 %v9690
  %9741 = vmatprep.subr.mxu0 0.0
  %9742 = vmatpush1.msra.mxu0 %v9691
  %9743 = vmatprep.subr.mxu0 0.0
  %9744 = vmatpush1.msra.mxu0 %v9692
  %9745 = vmatprep.subr.mxu0 0.0
  %9746 = vmatpush1.msra.mxu0 %v9693
  %9747 = vmatprep.subr.mxu0 0.0
  %9748 = vmatpush1.msra.mxu0 %v9694
  %9749 = vmatprep.subr.mxu0 0.0
  %9750 = vmatpush1.msra.mxu0 %v9695
  %9751 = vmatprep.subr.mxu0 0.0
  %9752 = vmatpush1.msra.mxu0 %v9696
  %9753 = vmatprep.subr.mxu0 0.0
  %9754 = vmatpush1.msra.mxu0 %v9697
  %9755 = vmatprep.subr.mxu0 0.0
  %9756 = vmatpush1.msra.mxu0 %v9698
  %9757 = vmatprep.subr.mxu0 0.0
  %9758 = vmatpush1.msra.mxu0 %v9699
  %9759 = vmatprep.subr.mxu0 0.0
  %9760 = vmatpush1.msra.mxu0 %v9700
  %9761 = vmatprep.subr.mxu0 0.0
  %9762 = vmatpush1.msra.mxu0 %v9701
  %9763 = vmatprep.subr.mxu0 0.0
  %9764 = vmatpush1.msra.mxu0 %v9702
  %9765 = vmatprep.subr.mxu0 0.0
  %9766 = vmatpush1.msra.mxu0 %v9703
  %9767 = vmatprep.subr.mxu0 0.0
  %9768 = vmatpush1.msra.mxu0 %v9704
  %9769 = vmatprep.subr.mxu0 0.0
  %9770 = vmatpush1.msra.mxu0 %v9705
  %9771 = vmatprep.subr.mxu0 0.0
  %9772 = vmatpush1.msra.mxu0 %v9706
  %9773 = vmatprep.subr.mxu0 0.0
  %9774 = vmatpush1.msra.mxu0 %v9707
  %9775 = vmatprep.subr.mxu0 0.0
  %9776 = vmatpush1.msra.mxu0 %v9708
  %9777 = vmatprep.subr.mxu0 0.0
  %9778 = vmatpush1.msra.mxu0 %v9709
  %9779 = vmatprep.subr.mxu0 0.0
  %9780 = vmatpush1.msra.mxu0 %v9710
  %9781 = vmatprep.subr.mxu0 0.0
  %9782 = vmatpush1.msra.mxu0 %v9711
  %9783 = vmatprep.subr.mxu0 0.0
  %9784 = vmatpush1.msra.mxu0 %v9712
  %9785 = vmatprep.subr.mxu0 0.0
  %9786 = vmatpush1.msra.mxu0 %v9713
  %9787 = vmatprep.subr.mxu0 0.0
  %9788 = vmatpush1.msra.mxu0 %v9714
  %9789 = vmatprep.subr.mxu0 0.0
  %9790 = vmatpush1.msra.mxu0 %v9715
  %9791 = vmatprep.subr.mxu0 0.0
  %9792 = vmatpush1.msra.mxu0 %v9716
  %9793 = vmatprep.mubr.f32.mxu0 %v9681
  %9794 = vmatmul.mubr.f32.gmra.mrb[0].mxu0 %v9669
  %v9795 = vpop.f32.mrb[0].mxu0
  %v9796 = vadd.f32 0.0, %v9795
  %v9797 = vpop.f32.mrb[0].mxu0
  %9798 = vmatprep.mubr.f32.mxu0 %v9682
  %9799 = vmatmul.mubr.f32.gmra.mrb[0].mxu0 %v9670
  %v9800 = vpop.f32.mrb[0].mxu0
  %v9801 = vadd.f32 0.0, %v9800
  %v9802 = vpop.f32.mrb[0].mxu0
  %9803 = vmatprep.mubr.f32.mxu0 %v9683
  %9804 = vmatmul.mubr.f32.gmra.mrb[0].mxu0 %v9671
  %v9805 = vpop.f32.mrb[0].mxu0
  %v9806 = vadd.f32 0.0, %v9805
  %v9807 = vpop.f32.mrb[0].mxu0
  %9808 = vmatprep.mubr.f32.mxu0 %v9684
  %9809 = vmatmul.mubr.f32.gmra.mrb[0].mxu0 %v9672
  %v9810 = vpop.f32.mrb[0].mxu0
  %v9811 = vadd.f32 0.0, %v9810
  %v9812 = vpop.f32.mrb[0].mxu0
  %9813 = vdwg.mxu0
  %9814 = vmatprep.subr.mxu0 0.0
  %9815 = vmatpush1.msra.mxu0 %v9717
  %9816 = vmatprep.subr.mxu0 0.0
  %9817 = vmatpush1.msra.mxu0 %v9718
  %9818 = vmatprep.subr.mxu0 0.0
  %9819 = vmatpush1.msra.mxu0 %v9719
  %9820 = vmatprep.subr.mxu0 0.0
  %9821 = vmatpush1.msra.mxu0 %v9720
  %9822 = vmatprep.subr.mxu0 0.0
  %9823 = vmatpush1.msra.mxu0 0.0
  %9824 = vmatprep.subr.mxu0 0.0
  %9825 = vmatpush1.msra.mxu0 0.0
  %9826 = vmatprep.subr.mxu0 0.0
  %9827 = vmatpush1.msra.mxu0 0.0
  %9828 = vmatprep.subr.mxu0 0.0
  %9829 = vmatpush1.msra.mxu0 0.0
  %9830 = vmatprep.subr.mxu0 0.0
  %9831 = vmatpush1.msra.mxu0 0.0
  %9832 = vmatprep.subr.mxu0 0.0
  %9833 = vmatpush1.msra.mxu0 0.0
  %9834 = vmatprep.subr.mxu0 0.0
  %9835 = vmatpush1.msra.mxu0 0.0
  %9836 = vmatprep.subr.mxu0 0.0
  %9837 = vmatpush1.msra.mxu0 0.0
  %9838 = vmatprep.subr.mxu0 0.0
  %9839 = vmatpush1.msra.mxu0 0.0
  %9840 = vmatprep.subr.mxu0 0.0
  %9841 = vmatpush1.msra.mxu0 0.0
  %9842 = vmatprep.subr.mxu0 0.0
  %9843 = vmatpush1.msra.mxu0 0.0
  %9844 = vmatprep.subr.mxu0 0.0
  %9845 = vmatpush1.msra.mxu0 0.0
  %9846 = vmatprep.subr.mxu0 0.0
  %9847 = vmatpush1.msra.mxu0 0.0
  %9848 = vmatprep.subr.mxu0 0.0
  %9849 = vmatpush1.msra.mxu0 0.0
  %9850 = vmatprep.subr.mxu0 0.0
  %9851 = vmatpush1.msra.mxu0 0.0
  %9852 = vmatprep.subr.mxu0 0.0
  %9853 = vmatpush1.msra.mxu0 0.0
  %9854 = vmatprep.subr.mxu0 0.0
  %9855 = vmatpush1.msra.mxu0 0.0
  %9856 = vmatprep.subr.mxu0 0.0
  %9857 = vmatpush1.msra.mxu0 0.0
  %9858 = vmatprep.subr.mxu0 0.0
  %9859 = vmatpush1.msra.mxu0 0.0
  %9860 = vmatprep.subr.mxu0 0.0
  %9861 = vmatpush1.msra.mxu0 0.0
  %9862 = vmatprep.subr.mxu0 0.0
  %9863 = vmatpush1.msra.mxu0 0.0
  %9864 = vmatprep.subr.mxu0 0.0
  %9865 = vmatpush1.msra.mxu0 0.0
  %9866 = vmatprep.subr.mxu0 0.0
  %9867 = vmatpush1.msra.mxu0 0.0
  %9868 = vmatprep.subr.mxu0 0.0
  %9869 = vmatpush1.msra.mxu0 0.0
  %9870 = vmatprep.subr.mxu0 0.0
  %9871 = vmatpush1.msra.mxu0 0.0
  %9872 = vmatprep.subr.mxu0 0.0
  %9873 = vmatpush1.msra.mxu0 0.0
  %9874 = vmatprep.subr.mxu0 0.0
  %9875 = vmatpush1.msra.mxu0 0.0
  %9876 = vmatprep.subr.mxu0 0.0
  %9877 = vmatpush1.msra.mxu0 0.0
  %9878 = vmatprep.mubr.f32.mxu0 0.0
  %9879 = vmatmul.mubr.f32.gmra.mrb[0].mxu0 %v9721
  %v9880 = vpop.f32.mrb[0].mxu0
  %v9881 = vadd.f32 %v9796, %v9880
  %v9882 = vpop.f32.mrb[0].mxu0
  %9883 = vmatprep.mubr.f32.mxu0 0.0
  %9884 = vmatmul.mubr.f32.gmra.mrb[0].mxu0 %v9723
  %v9885 = vpop.f32.mrb[0].mxu0
  %v9886 = vadd.f32 %v9801, %v9885
  %v9887 = vpop.f32.mrb[0].mxu0
  %9888 = vmatprep.mubr.f32.mxu0 0.0
  %9889 = vmatmul.mubr.f32.gmra.mrb[0].mxu0 %v9725
  %v9890 = vpop.f32.mrb[0].mxu0
  %v9891 = vadd.f32 %v9806, %v9890
  %v9892 = vpop.f32.mrb[0].mxu0
  %9893 = vmatprep.mubr.f32.mxu0 0.0
  %9894 = vmatmul.mubr.f32.gmra.mrb[0].mxu0 %v9727
  %v9895 = vpop.f32.mrb[0].mxu0
  %v9896 = vadd.f32 %v9811, %v9895
  %v9897 = vpop.f32.mrb[0].mxu0
  %9898 = vdwg.mxu0
  %v9899 = vsel %vm126, %v9881, 0.0
  %v9900 = vsel %vm126, %v9886, 0.0
  %v9901 = vadd.f32 %v9899, %v9900
  %v9902 = vsel %vm126, %v9891, 0.0
  %v9903 = vadd.f32 %v9901, %v9902
  %v9904 = vsel %vm126, %v9896, 0.0
  %v9905 = vadd.f32 %v9903, %v9904
  %v9906 = vrot.slane %v9905, 4
  %v9907 = vadd.f32 %v9905, %v9906
  %v9908 = vrot.slane %v9907, 2
  %v9909 = vadd.f32 %v9907, %v9908
  %v9910 = vrot.slane %v9909, 1
  %v9911 = vadd.f32 %v9909, %v9910
  %v9912 = vmul.f32 %v9911, 0.03125
  %v9913 = vmul.f32 %v9881, %v9881
  %v9914 = vmul.f32 %v9886, %v9886
  %v9915 = vmul.f32 %v9891, %v9891
  %v9916 = vmul.f32 %v9896, %v9896
  %v9917 = vsel %vm126, %v9913, 0.0
  %v9918 = vsel %vm126, %v9914, 0.0
  %v9919 = vadd.f32 %v9917, %v9918
  %v9920 = vsel %vm126, %v9915, 0.0
  %v9921 = vadd.f32 %v9919, %v9920
  %v9922 = vsel %vm126, %v9916, 0.0
  %v9923 = vadd.f32 %v9921, %v9922
  %v9924 = vrot.slane %v9923, 4
  %v9925 = vadd.f32 %v9923, %v9924
  %v9926 = vrot.slane %v9925, 2
  %v9927 = vadd.f32 %v9925, %v9926
  %v9928 = vrot.slane %v9927, 1
  %v9929 = vadd.f32 %v9927, %v9928
  %v9930 = vmul.f32 %v9929, 0.03125
  %v9931 = vmul.f32 %v9912, %v9912
  %v9932 = vsub.f32 %v9930, %v9931
  %v9933 = vmax.f32 %v9932, 0.0
  %v9934 = vld [vmem:[%s17] sm:$0x1]
  %v9935 = vadd.f32 %v9933, 1e-05
  %v9936 = vrsqrt.pop %v9935
  %v9937 = vmul.f32 %v9934, %v9936
  %v9938 = vld [vmem:[%s18] sm:$0x1]
  %v9939 = vmul.f32 %v9912, %v9937
  %v9940 = vsub.f32 %v9938, %v9939
  %v9942 = vlaneseq
  %v9943 = vshrl.u32 %v9942, 7
  %v9944 = vsub.s32 0, %v9943
  %v9945 = vrot.slane %v9937, %v9944
  %v9947 = vmul.f32 %v9881, %v9945
  %v9948 = vmul.f32 %v9886, %v9945
  %v9949 = vmul.f32 %v9891, %v9945
  %v9950 = vmul.f32 %v9896, %v9945
  %v9952 = vlaneseq
  %v9953 = vshrl.u32 %v9952, 7
  %v9954 = vsub.s32 0, %v9953
  %v9955 = vrot.slane %v9940, %v9954
  %v9957 = vadd.f32 %v9947, %v9955
  %v9958 = vadd.f32 %v9948, %v9955
  %v9959 = vadd.f32 %v9949, %v9955
  %v9960 = vadd.f32 %v9950, %v9955
  %v9961 = vmax.f32 %v9957, 0.0
  %v9962 = vmax.f32 %v9958, 0.0
  %v9963 = vmax.f32 %v9959, 0.0
  %v9964 = vmax.f32 %v9960, 0.0
  %v9969 = vcombine.high %v9961, %v9961
  %v9970 = vcombine.high %v9962, %v9962
  %v9971 = vcombine.high %v9963, %v9963
  %v9972 = vcombine.high %v9964, %v9964
  %vm9977 = vcmask 19456
  %9978 = vst.msk [vmem:[%s19] sm:$0xf] %vm9977, %v9961
  %9979 = vst.msk [vmem:[%s19 + $0x4] sm:$0xf] %vm9977, %v9969
  %9980 = vst.msk [vmem:[%s19 + $0x8] sm:$0xf] %vm9977, %v9962
  %9981 = vst.msk [vmem:[%s19 + $0xc] sm:$0xf] %vm9977, %v9970
  %9982 = vst.msk [vmem:[%s19 + $0x10] sm:$0xf] %vm9977, %v9963
  %9983 = vst.msk [vmem:[%s19 + $0x14] sm:$0xf] %vm9977, %v9971
  %9984 = vst.msk [vmem:[%s19 + $0x18] sm:$0xf] %vm9977, %v9964
  %9985 = vst.msk [vmem:[%s19 + $0x1c] sm:$0xf] %vm9977, %v9972
  // Predicated region
  $region78: #{improved_simple_ae_forward.1} parent=0 // pred_check
    _
  $region79: #{improved_simple_ae_forward.1} parent=0 // pred_check_branch
    %9987 = sbr.rel (0) target = $region81
  $region80: #{improved_simple_ae_forward.1} parent=0 // pred_region
    _
  $region81: #{improved_simple_ae_forward.1} parent=0 // pred_fallthru
    _
  // Predicated region
  $region82: #{improved_simple_ae_forward.1} parent=0 // pred_check
    _
  $region83: #{improved_simple_ae_forward.1} parent=0 // pred_check_branch
    %9989 = sbr.rel (0) target = $region85
  $region84: #{improved_simple_ae_forward.1} parent=0 // pred_region
    _
  $region85: #{improved_simple_ae_forward.1} parent=0 // pred_fallthru
    _

</llo_original>
